<compile_context>
chip_gen: v7x
topology: tpu7x:2x2x1
jax: 0.10.0
libtpu: 0.0.40
codegen_flags: <defaults>
</compile_context>

<pallas_src>
import functools

import jax
import jax.numpy as jnp
from jax.experimental import pallas as pl
from jax.experimental.pallas import tpu as pltpu

_LN_EPS = 1e-6
_COMPUTE_DTYPE = jnp.bfloat16     # MXU input / inter-layer activation dtype


def _layer_norm(x, w, b, eps=_LN_EPS):
  mu = jnp.mean(x, axis=-1, keepdims=True)
  xc = x - mu
  var = jnp.mean(xc * xc, axis=-1, keepdims=True)
  return xc * jax.lax.rsqrt(var + eps) * w + b


def encoder_layer_kernel(x_ref, wqkv_ref, wo_ref,
                         ln1w_ref, ln1b_ref, ln2w_ref, ln2b_ref,
                         w1_ref, b1_ref, w2_ref, b2_ref,
                         fnw_ref, fnb_ref, o_ref,
                         *, nhead, apply_final_norm, conservative):
  """One pre-LN transformer encoder layer for a single batch element."""
  x = x_ref[0].astype(jnp.float32)                       # (S, D), f32 vector math
  S, D = x.shape
  hd = D // nhead
  scale = 1.0 / float(hd) ** 0.5

  if conservative:
    # Fallback head plumbing (per-head slices / stack / concat); known-good lowering path.
    def _split_heads(z):                                   # (S, D) -> (H, S, hd)
      return jnp.stack([z[:, h * hd:(h + 1) * hd] for h in range(nhead)], axis=0)

    def _merge_heads(z):                                   # (H, S, hd) -> (S, D)
      return jnp.concatenate([z[h] for h in range(nhead)], axis=-1)
  else:
    # Review item: one reshape + one leading-axis transpose instead of 2*H small copies.
    def _split_heads(z):                                   # (S, D) -> (H, S, hd)
      return jnp.swapaxes(z.reshape(S, nhead, hd), 0, 1)

    def _merge_heads(z):                                   # (H, S, hd) -> (S, D)
      return jnp.swapaxes(z, 0, 1).reshape(S, D)

  # ---- self-attention block: x = x + (softmax(q k^T / sqrt(hd)) v) @ Wo, on LN1(x) ----
  y = _layer_norm(x, ln1w_ref[0], ln1b_ref[0])
  qkv = jnp.dot(y.astype(_COMPUTE_DTYPE), wqkv_ref[...],   # fused QKV projection
                preferred_element_type=jnp.float32)        # (S, 3D) f32
  qkv = qkv.astype(_COMPUTE_DTYPE)                          # single cast of the whole tensor
  q, k, v = qkv[:, :D], qkv[:, D:2 * D], qkv[:, 2 * D:]

  qh = _split_heads(q) * scale          # fold 1/sqrt(hd) into q (H,S,hd), not into (H,S,S) s
  kh = _split_heads(k)
  vh = _split_heads(v)

  s = jnp.einsum('hqd,hkd->hqk', qh, kh,
                 preferred_element_type=jnp.float32)                  # (H, S, S) f32
  s = s - jnp.max(s, axis=-1, keepdims=True)
  p = jnp.exp(s)
  p = p * pl.reciprocal(jnp.sum(p, axis=-1, keepdims=True), approx=True)
  ctx = jnp.einsum('hqk,hkd->hqd', p.astype(_COMPUTE_DTYPE), vh,
                   preferred_element_type=jnp.float32)                # (H, S, hd) f32
  ctx = _merge_heads(ctx)                                             # (S, D)
  x = x + jnp.dot(ctx.astype(_COMPUTE_DTYPE), wo_ref[...],            # single (S,D)@(D,D)
                  preferred_element_type=jnp.float32)

  # ---- feed-forward block: x = x + W2 relu(W1 LN2(x) + b1) + b2 ----
  y = _layer_norm(x, ln2w_ref[0], ln2b_ref[0])
  h1 = jnp.dot(y.astype(_COMPUTE_DTYPE), w1_ref[...],
               preferred_element_type=jnp.float32) + b1_ref[0]
  h1 = jnp.maximum(h1, 0.0)
  h2 = jnp.dot(h1.astype(_COMPUTE_DTYPE), w2_ref[...],
               preferred_element_type=jnp.float32) + b2_ref[0]
  x = x + h2

  # ---- optional fused final LayerNorm (TransformerEncoder.norm) ----
  if apply_final_norm:
    x = _layer_norm(x, fnw_ref[0], fnb_ref[0])

  o_ref[0] = x.astype(o_ref.dtype)


def _weight_spec(shape, single_buffer):
  """BlockSpec for a grid-invariant (weight/bias/LN) input."""
  n = len(shape)

  def idx(b):
    return (0,) * n

  if single_buffer:
    # Constant index_map => the block never changes; one VMEM buffer is enough.
    return pl.BlockSpec(shape, idx, pipeline_mode=pl.Buffered(1))
  return pl.BlockSpec(shape, idx)


def _vmem_limit_bytes():
  """Generation-aware VMEM budget: ~0.8x physical per-core VMEM."""
  try:
    cap = int(pltpu.get_tpu_info().vmem_capacity_bytes)
    return int(cap * 0.8)
  except Exception:
    return 64 * 1024 * 1024


def encoder_layer(x, p, fn_w, fn_b, *, nhead, apply_final_norm, out_dtype,
                  conservative):
  B, S, D = x.shape
  Dff = p["w1"].shape[1]
  kernel = functools.partial(encoder_layer_kernel, nhead=nhead,
                             apply_final_norm=apply_final_norm,
                             conservative=conservative)
  # In-place residual update of the activation buffer when dtypes allow.
  io_alias = {0: 0} if jnp.dtype(out_dtype) == x.dtype else {}
  single_buffer = not conservative

  # Advisory cost estimate so XLA can overlap the next layer's weight prefetch.
  flops = 2 * B * S * (4 * D * D + 2 * S * D + 2 * D * Dff)
  transcendentals = B * nhead * S * S + 4 * B * S
  weight_bytes = (4 * D * D + 2 * D * Dff) * 2            # bf16 weights
  act_bytes = B * S * D * (x.dtype.itemsize + jnp.dtype(out_dtype).itemsize)
  cost = pl.CostEstimate(flops=flops, transcendentals=transcendentals,
                         bytes_accessed=weight_bytes + act_bytes)

  return pl.pallas_call(
      kernel,
      out_shape=jax.ShapeDtypeStruct((B, S, D), out_dtype),
      grid=(B,),
      in_specs=[
          pl.BlockSpec((1, S, D), lambda b: (b, 0, 0)),
          _weight_spec((D, 3 * D), single_buffer),
          _weight_spec((D, D), single_buffer),
          _weight_spec((1, D), single_buffer),
          _weight_spec((1, D), single_buffer),
          _weight_spec((1, D), single_buffer),
          _weight_spec((1, D), single_buffer),
          _weight_spec((D, Dff), single_buffer),
          _weight_spec((1, Dff), single_buffer),
          _weight_spec((Dff, D), single_buffer),
          _weight_spec((1, D), single_buffer),
          _weight_spec((1, D), single_buffer),
          _weight_spec((1, D), single_buffer),
      ],
      out_specs=pl.BlockSpec((1, S, D), lambda b: (b, 0, 0)),
      input_output_aliases=io_alias,
      compiler_params=pltpu.CompilerParams(
          dimension_semantics=("parallel",),
          vmem_limit_bytes=_vmem_limit_bytes()),
      cost_estimate=cost,
  )(x, p["wqkv"], p["wo"],
    p["ln1_w"], p["ln1_b"], p["ln2_w"], p["ln2_b"],
    p["w1"], p["b1"], p["w2"], p["b2"], fn_w, fn_b)


@functools.partial(jax.jit, static_argnames=("nhead", "conservative"))
def transformer_encoder(src, layer_params, final_norm, *, nhead,
                        conservative=False):
  """TransformerEncoder.forward(src, mask=None, src_key_padding_mask=None)."""
  D = src.shape[-1]

  def _prep(p):
    # Kernel-ready params: fused bf16 QKV weight, bf16 matmul weights, f32 LN/biases.
    return {
        "wqkv": jnp.concatenate([p["wq"], p["wk"], p["wv"]],
                                axis=1).astype(_COMPUTE_DTYPE),
        "wo": p["wo"].astype(_COMPUTE_DTYPE),
        "w1": p["w1"].astype(_COMPUTE_DTYPE),
        "w2": p["w2"].astype(_COMPUTE_DTYPE),
        "ln1_w": p["ln1_w"].astype(jnp.float32),
        "ln1_b": p["ln1_b"].astype(jnp.float32),
        "ln2_w": p["ln2_w"].astype(jnp.float32),
        "ln2_b": p["ln2_b"].astype(jnp.float32),
        "b1": p["b1"].astype(jnp.float32),
        "b2": p["b2"].astype(jnp.float32),
    }

  if final_norm is not None:
    fn_w = final_norm["w"].astype(jnp.float32)
    fn_b = final_norm["b"].astype(jnp.float32)
  else:
    fn_w = jnp.ones((1, D), jnp.float32)
    fn_b = jnp.zeros((1, D), jnp.float32)

  n = len(layer_params)
  if n == 0:                                   # degenerate stack: just the optional norm
    out = src
    if final_norm is not None:
      out = _layer_norm(src.astype(jnp.float32), fn_w[0], fn_b[0]).astype(src.dtype)
    return out

  out = src.astype(_COMPUTE_DTYPE)             # inter-layer activations carried in bf16
  for i, p in enumerate(layer_params):
    last = i == n - 1
    out = encoder_layer(
        out, _prep(p), fn_w, fn_b, nhead=nhead,
        apply_final_norm=last and (final_norm is not None),
        out_dtype=src.dtype if last else _COMPUTE_DTYPE,
        conservative=conservative)
  return out


def _xavier(key, shape):
  fan_in, fan_out = shape[0], shape[1]
  lim = (6.0 / (fan_in + fan_out)) ** 0.5
  return jax.random.uniform(key, shape, jnp.float32, -lim, lim)


def init_params(key, num_layers, d_model, dff):
  layers = []
  for _ in range(num_layers):
    keys = jax.random.split(key, 8)
    key = keys[-1]
    layers.append({
        "wq": _xavier(keys[0], (d_model, d_model)),
        "wk": _xavier(keys[1], (d_model, d_model)),
        "wv": _xavier(keys[2], (d_model, d_model)),
        "wo": _xavier(keys[3], (d_model, d_model)),
        "ln1_w": jnp.ones((1, d_model), jnp.float32),
        "ln1_b": jnp.zeros((1, d_model), jnp.float32),
        "ln2_w": jnp.ones((1, d_model), jnp.float32),
        "ln2_b": jnp.zeros((1, d_model), jnp.float32),
        "w1": _xavier(keys[4], (d_model, dff)),
        "b1": jnp.zeros((1, dff), jnp.float32),
        "w2": _xavier(keys[5], (dff, d_model)),
        "b2": jnp.zeros((1, d_model), jnp.float32),
    })
  final_norm = {"w": jnp.ones((1, d_model), jnp.float32),
                "b": jnp.zeros((1, d_model), jnp.float32)}
  return layers, final_norm, key


if __name__ == "__main__":
  # NOTE: toy dims for a correctness smoke test only (D=32 < 128 lanes). Do NOT
  # benchmark/tune here; use WMT dims (S=256, D=1024, Dff=4096) for performance work.
  B, S, D, H, DFF, L = 2, 8, 32, 4, 64, 2      # batch, seq, d_model, nhead, dim_ff, num_layers

  root = jax.random.PRNGKey(0)
  layer_params, final_norm, root = init_params(root, L, D, DFF)
  src = jax.random.normal(root, (B, S, D), jnp.float32)

  try:
    out = transformer_encoder(src, layer_params, final_norm, nhead=H)
    out = jax.block_until_ready(out)
  except Exception:
    # Safety net: retry with the conservative lowering path (double-buffered weight
    # specs, per-head slice/stack) in case pipeline_mode=pl.Buffered(1) or the
    # reshape+transpose head plumbing is unsupported by the local JAX/Mosaic build.
    out = transformer_encoder(src, layer_params, final_norm, nhead=H,
                              conservative=True)
    out = jax.block_until_ready(out)

  assert out.shape == (B, S, D) and out.dtype == jnp.float32
  print("KERNEL_OK")
</pallas_src>

<mosaic_0001>
module attributes {stable_mosaic.version = 11 : i64} {
  func.func @encoder_layer_kernel(%arg0: i32, %arg1: memref<1x8x32xbf16, #tpu.memory_space<vmem>>, %arg2: memref<32x96xbf16, #tpu.memory_space<vmem>>, %arg3: memref<32x32xbf16, #tpu.memory_space<vmem>>, %arg4: memref<1x32xf32, #tpu.memory_space<vmem>>, %arg5: memref<1x32xf32, #tpu.memory_space<vmem>>, %arg6: memref<1x32xf32, #tpu.memory_space<vmem>>, %arg7: memref<1x32xf32, #tpu.memory_space<vmem>>, %arg8: memref<32x64xbf16, #tpu.memory_space<vmem>>, %arg9: memref<1x64xf32, #tpu.memory_space<vmem>>, %arg10: memref<64x32xbf16, #tpu.memory_space<vmem>>, %arg11: memref<1x32xf32, #tpu.memory_space<vmem>>, %arg12: memref<1x32xf32, #tpu.memory_space<vmem>>, %arg13: memref<1x32xf32, #tpu.memory_space<vmem>>, %arg14: memref<1x8x32xbf16, #tpu.memory_space<vmem>>) attributes {dimension_semantics = [#tpu.dimension_semantics<parallel>], iteration_bounds = array<i64: 2>, scalar_prefetch = 0 : i64, scratch_operands = 0 : i64, tpu.core_type = #tpu.core_type<tc>, window_params = [{transform_indices = @transform_0, window_bounds = array<i64: 1, 8, 32>}, {pipeline_mode = #tpu.pipeline_mode<synchronous>, transform_indices = @transform_1, window_bounds = array<i64: 32, 96>}, {pipeline_mode = #tpu.pipeline_mode<synchronous>, transform_indices = @transform_2, window_bounds = array<i64: 32, 32>}, {pipeline_mode = #tpu.pipeline_mode<synchronous>, transform_indices = @transform_3, window_bounds = array<i64: 1, 32>}, {pipeline_mode = #tpu.pipeline_mode<synchronous>, transform_indices = @transform_4, window_bounds = array<i64: 1, 32>}, {pipeline_mode = #tpu.pipeline_mode<synchronous>, transform_indices = @transform_5, window_bounds = array<i64: 1, 32>}, {pipeline_mode = #tpu.pipeline_mode<synchronous>, transform_indices = @transform_6, window_bounds = array<i64: 1, 32>}, {pipeline_mode = #tpu.pipeline_mode<synchronous>, transform_indices = @transform_7, window_bounds = array<i64: 32, 64>}, {pipeline_mode = #tpu.pipeline_mode<synchronous>, transform_indices = @transform_8, window_bounds = array<i64: 1, 64>}, {pipeline_mode = #tpu.pipeline_mode<synchronous>, transform_indices = @transform_9, window_bounds = array<i64: 64, 32>}, {pipeline_mode = #tpu.pipeline_mode<synchronous>, transform_indices = @transform_10, window_bounds = array<i64: 1, 32>}, {pipeline_mode = #tpu.pipeline_mode<synchronous>, transform_indices = @transform_11, window_bounds = array<i64: 1, 32>}, {pipeline_mode = #tpu.pipeline_mode<synchronous>, transform_indices = @transform_12, window_bounds = array<i64: 1, 32>}, {transform_indices = @transform_13, window_bounds = array<i64: 1, 8, 32>}]} {
    %c0 = arith.constant 0 : index
    %c0_0 = arith.constant 0 : index
    %c0_1 = arith.constant 0 : index
    %0 = vector.load %arg1[%c0, %c0_0, %c0_1] : memref<1x8x32xbf16, #tpu.memory_space<vmem>>, vector<1x8x32xbf16>
    %1 = vector.shape_cast %0 : vector<1x8x32xbf16> to vector<8x32xbf16>
    %2 = arith.extf %1 : vector<8x32xbf16> to vector<8x32xf32>
    %c0_2 = arith.constant 0 : index
    %c0_3 = arith.constant 0 : index
    %3 = vector.load %arg4[%c0_2, %c0_3] : memref<1x32xf32, #tpu.memory_space<vmem>>, vector<1x32xf32>
    %4 = vector.shape_cast %3 : vector<1x32xf32> to vector<32xf32>
    %c0_4 = arith.constant 0 : index
    %c0_5 = arith.constant 0 : index
    %5 = vector.load %arg5[%c0_4, %c0_5] : memref<1x32xf32, #tpu.memory_space<vmem>>, vector<1x32xf32>
    %6 = vector.shape_cast %5 : vector<1x32xf32> to vector<32xf32>
    %cst = arith.constant dense<0.000000e+00> : vector<8xf32>
    %7 = vector.multi_reduction <add>, %2, %cst [1] : vector<8x32xf32> to vector<8xf32>
    %8 = vector.shape_cast %7 : vector<8xf32> to vector<8x1xf32>
    %cst_6 = arith.constant 3.200000e+01 : f32
    %9 = vector.broadcast %cst_6 : f32 to vector<8x1xf32>
    %10 = arith.divf %8, %9 : vector<8x1xf32>
    %11 = vector.broadcast %10 : vector<8x1xf32> to vector<8x32xf32>
    %12 = arith.subf %2, %11 : vector<8x32xf32>
    %13 = arith.mulf %12, %12 : vector<8x32xf32>
    %cst_7 = arith.constant dense<0.000000e+00> : vector<8xf32>
    %14 = vector.multi_reduction <add>, %13, %cst_7 [1] : vector<8x32xf32> to vector<8xf32>
    %15 = vector.shape_cast %14 : vector<8xf32> to vector<8x1xf32>
    %cst_8 = arith.constant 3.200000e+01 : f32
    %16 = vector.broadcast %cst_8 : f32 to vector<8x1xf32>
    %17 = arith.divf %15, %16 : vector<8x1xf32>
    %cst_9 = arith.constant 9.99999997E-7 : f32
    %18 = vector.broadcast %cst_9 : f32 to vector<8x1xf32>
    %19 = arith.addf %17, %18 : vector<8x1xf32>
    %20 = math.rsqrt %19 : vector<8x1xf32>
    %21 = vector.broadcast %20 : vector<8x1xf32> to vector<8x32xf32>
    %22 = arith.mulf %12, %21 : vector<8x32xf32>
    %23 = vector.shape_cast %4 : vector<32xf32> to vector<1x32xf32>
    %24 = vector.broadcast %23 : vector<1x32xf32> to vector<8x32xf32>
    %25 = arith.mulf %22, %24 : vector<8x32xf32>
    %26 = vector.shape_cast %6 : vector<32xf32> to vector<1x32xf32>
    %27 = vector.broadcast %26 : vector<1x32xf32> to vector<8x32xf32>
    %28 = arith.addf %25, %27 : vector<8x32xf32>
    %29 = arith.truncf %28 : vector<8x32xf32> to vector<8x32xbf16>
    %c0_10 = arith.constant 0 : index
    %c0_11 = arith.constant 0 : index
    %30 = vector.load %arg2[%c0_10, %c0_11] : memref<32x96xbf16, #tpu.memory_space<vmem>>, vector<32x96xbf16>
    %cst_12 = arith.constant dense<0.000000e+00> : vector<8x96xf32>
    %31 = tpu.matmul %29, %30, %cst_12 {dimension_numbers = #tpu.dot_dimension_numbers<[1], [0], [0], [1], [0, 0, 1, 1], [], []>} : vector<8x32xbf16>, vector<32x96xbf16>, vector<8x96xf32> -> vector<8x96xf32>
    %32 = arith.truncf %31 : vector<8x96xf32> to vector<8x96xbf16>
    %33 = vector.extract_strided_slice %32 {offsets = [0, 0], sizes = [8, 32], strides = [1, 1]} : vector<8x96xbf16> to vector<8x32xbf16>
    %34 = vector.extract_strided_slice %32 {offsets = [0, 32], sizes = [8, 32], strides = [1, 1]} : vector<8x96xbf16> to vector<8x32xbf16>
    %35 = vector.extract_strided_slice %32 {offsets = [0, 64], sizes = [8, 32], strides = [1, 1]} : vector<8x96xbf16> to vector<8x32xbf16>
    %36 = vector.shape_cast %33 : vector<8x32xbf16> to vector<8x4x8xbf16>
    %37 = tpu.transpose %36, [1, 0, 2] : vector<8x4x8xbf16> -> vector<4x8x8xbf16>
    %cst_13 = arith.constant 3.535160e-01 : bf16
    %38 = vector.broadcast %cst_13 : bf16 to vector<4x8x8xbf16>
    %39 = arith.mulf %37, %38 : vector<4x8x8xbf16>
    %40 = vector.shape_cast %34 : vector<8x32xbf16> to vector<8x4x8xbf16>
    %41 = tpu.transpose %40, [1, 0, 2] : vector<8x4x8xbf16> -> vector<4x8x8xbf16>
    %42 = vector.shape_cast %35 : vector<8x32xbf16> to vector<8x4x8xbf16>
    %43 = tpu.transpose %42, [1, 0, 2] : vector<8x4x8xbf16> -> vector<4x8x8xbf16>
    "tpu.trace_start"() <{level = 10 : i32, message = "hqd,hkd->hqk"}> : () -> ()
    %cst_14 = arith.constant dense<0.000000e+00> : vector<4x8x8xf32>
    %44 = tpu.matmul %39, %41, %cst_14 {dimension_numbers = #tpu.dot_dimension_numbers<[2], [2], [1], [1], [0, 0, 0, 1, 1, 1], [0], [0]>} : vector<4x8x8xbf16>, vector<4x8x8xbf16>, vector<4x8x8xf32> -> vector<4x8x8xf32>
    "tpu.trace_stop"() : () -> ()
    %cst_15 = arith.constant dense<0xFF800000> : vector<4x8xf32>
    %45 = vector.multi_reduction <maximumf>, %44, %cst_15 [2] : vector<4x8x8xf32> to vector<4x8xf32>
    %46 = vector.shape_cast %45 : vector<4x8xf32> to vector<4x8x1xf32>
    %47 = vector.broadcast %46 : vector<4x8x1xf32> to vector<4x8x8xf32>
    %48 = arith.subf %44, %47 : vector<4x8x8xf32>
    %49 = math.exp %48 : vector<4x8x8xf32>
    %cst_16 = arith.constant dense<0.000000e+00> : vector<4x8xf32>
    %50 = vector.multi_reduction <add>, %49, %cst_16 [2] : vector<4x8x8xf32> to vector<4x8xf32>
    %51 = vector.shape_cast %50 : vector<4x8xf32> to vector<4x8x1xf32>
    %52 = tpu.reciprocal %51 {approx = true} : vector<4x8x1xf32> -> vector<4x8x1xf32>
    %53 = vector.broadcast %52 : vector<4x8x1xf32> to vector<4x8x8xf32>
    %54 = arith.mulf %49, %53 : vector<4x8x8xf32>
    %55 = arith.truncf %54 : vector<4x8x8xf32> to vector<4x8x8xbf16>
    "tpu.trace_start"() <{level = 10 : i32, message = "hqk,hkd->hqd"}> : () -> ()
    %cst_17 = arith.constant dense<0.000000e+00> : vector<4x8x8xf32>
    %56 = tpu.matmul %55, %43, %cst_17 {dimension_numbers = #tpu.dot_dimension_numbers<[2], [1], [1], [2], [0, 0, 0, 1, 1, 2], [0], [0]>} : vector<4x8x8xbf16>, vector<4x8x8xbf16>, vector<4x8x8xf32> -> vector<4x8x8xf32>
    "tpu.trace_stop"() : () -> ()
    %57 = tpu.transpose %56, [1, 0, 2] : vector<4x8x8xf32> -> vector<8x4x8xf32>
    %58 = vector.shape_cast %57 : vector<8x4x8xf32> to vector<8x32xf32>
    %59 = arith.truncf %58 : vector<8x32xf32> to vector<8x32xbf16>
    %c0_18 = arith.constant 0 : index
    %c0_19 = arith.constant 0 : index
    %60 = vector.load %arg3[%c0_18, %c0_19] : memref<32x32xbf16, #tpu.memory_space<vmem>>, vector<32x32xbf16>
    %cst_20 = arith.constant dense<0.000000e+00> : vector<8x32xf32>
    %61 = tpu.matmul %59, %60, %cst_20 {dimension_numbers = #tpu.dot_dimension_numbers<[1], [0], [0], [1], [0, 0, 1, 1], [], []>} : vector<8x32xbf16>, vector<32x32xbf16>, vector<8x32xf32> -> vector<8x32xf32>
    %62 = arith.addf %2, %61 : vector<8x32xf32>
    %c0_21 = arith.constant 0 : index
    %c0_22 = arith.constant 0 : index
    %63 = vector.load %arg6[%c0_21, %c0_22] : memref<1x32xf32, #tpu.memory_space<vmem>>, vector<1x32xf32>
    %64 = vector.shape_cast %63 : vector<1x32xf32> to vector<32xf32>
    %c0_23 = arith.constant 0 : index
    %c0_24 = arith.constant 0 : index
    %65 = vector.load %arg7[%c0_23, %c0_24] : memref<1x32xf32, #tpu.memory_space<vmem>>, vector<1x32xf32>
    %66 = vector.shape_cast %65 : vector<1x32xf32> to vector<32xf32>
    %cst_25 = arith.constant dense<0.000000e+00> : vector<8xf32>
    %67 = vector.multi_reduction <add>, %62, %cst_25 [1] : vector<8x32xf32> to vector<8xf32>
    %68 = vector.shape_cast %67 : vector<8xf32> to vector<8x1xf32>
    %cst_26 = arith.constant 3.200000e+01 : f32
    %69 = vector.broadcast %cst_26 : f32 to vector<8x1xf32>
    %70 = arith.divf %68, %69 : vector<8x1xf32>
    %71 = vector.broadcast %70 : vector<8x1xf32> to vector<8x32xf32>
    %72 = arith.subf %62, %71 : vector<8x32xf32>
    %73 = arith.mulf %72, %72 : vector<8x32xf32>
    %cst_27 = arith.constant dense<0.000000e+00> : vector<8xf32>
    %74 = vector.multi_reduction <add>, %73, %cst_27 [1] : vector<8x32xf32> to vector<8xf32>
    %75 = vector.shape_cast %74 : vector<8xf32> to vector<8x1xf32>
    %cst_28 = arith.constant 3.200000e+01 : f32
    %76 = vector.broadcast %cst_28 : f32 to vector<8x1xf32>
    %77 = arith.divf %75, %76 : vector<8x1xf32>
    %cst_29 = arith.constant 9.99999997E-7 : f32
    %78 = vector.broadcast %cst_29 : f32 to vector<8x1xf32>
    %79 = arith.addf %77, %78 : vector<8x1xf32>
    %80 = math.rsqrt %79 : vector<8x1xf32>
    %81 = vector.broadcast %80 : vector<8x1xf32> to vector<8x32xf32>
    %82 = arith.mulf %72, %81 : vector<8x32xf32>
    %83 = vector.shape_cast %64 : vector<32xf32> to vector<1x32xf32>
    %84 = vector.broadcast %83 : vector<1x32xf32> to vector<8x32xf32>
    %85 = arith.mulf %82, %84 : vector<8x32xf32>
    %86 = vector.shape_cast %66 : vector<32xf32> to vector<1x32xf32>
    %87 = vector.broadcast %86 : vector<1x32xf32> to vector<8x32xf32>
    %88 = arith.addf %85, %87 : vector<8x32xf32>
    %89 = arith.truncf %88 : vector<8x32xf32> to vector<8x32xbf16>
    %c0_30 = arith.constant 0 : index
    %c0_31 = arith.constant 0 : index
    %90 = vector.load %arg8[%c0_30, %c0_31] : memref<32x64xbf16, #tpu.memory_space<vmem>>, vector<32x64xbf16>
    %cst_32 = arith.constant dense<0.000000e+00> : vector<8x64xf32>
    %91 = tpu.matmul %89, %90, %cst_32 {dimension_numbers = #tpu.dot_dimension_numbers<[1], [0], [0], [1], [0, 0, 1, 1], [], []>} : vector<8x32xbf16>, vector<32x64xbf16>, vector<8x64xf32> -> vector<8x64xf32>
    %c0_33 = arith.constant 0 : index
    %c0_34 = arith.constant 0 : index
    %92 = vector.load %arg9[%c0_33, %c0_34] : memref<1x64xf32, #tpu.memory_space<vmem>>, vector<1x64xf32>
    %93 = vector.shape_cast %92 : vector<1x64xf32> to vector<64xf32>
    %94 = vector.shape_cast %93 : vector<64xf32> to vector<1x64xf32>
    %95 = vector.broadcast %94 : vector<1x64xf32> to vector<8x64xf32>
    %96 = arith.addf %91, %95 : vector<8x64xf32>
    %cst_35 = arith.constant 0.000000e+00 : f32
    %97 = vector.broadcast %cst_35 : f32 to vector<8x64xf32>
    %98 = arith.maximumf %96, %97 : vector<8x64xf32>
    %99 = arith.truncf %98 : vector<8x64xf32> to vector<8x64xbf16>
    %c0_36 = arith.constant 0 : index
    %c0_37 = arith.constant 0 : index
    %100 = vector.load %arg10[%c0_36, %c0_37] : memref<64x32xbf16, #tpu.memory_space<vmem>>, vector<64x32xbf16>
    %cst_38 = arith.constant dense<0.000000e+00> : vector<8x32xf32>
    %101 = tpu.matmul %99, %100, %cst_38 {dimension_numbers = #tpu.dot_dimension_numbers<[1], [0], [0], [1], [0, 0, 1, 1], [], []>} : vector<8x64xbf16>, vector<64x32xbf16>, vector<8x32xf32> -> vector<8x32xf32>
    %c0_39 = arith.constant 0 : index
    %c0_40 = arith.constant 0 : index
    %102 = vector.load %arg11[%c0_39, %c0_40] : memref<1x32xf32, #tpu.memory_space<vmem>>, vector<1x32xf32>
    %103 = vector.shape_cast %102 : vector<1x32xf32> to vector<32xf32>
    %104 = vector.shape_cast %103 : vector<32xf32> to vector<1x32xf32>
    %105 = vector.broadcast %104 : vector<1x32xf32> to vector<8x32xf32>
    %106 = arith.addf %101, %105 : vector<8x32xf32>
    %107 = arith.addf %62, %106 : vector<8x32xf32>
    %108 = arith.truncf %107 : vector<8x32xf32> to vector<8x32xbf16>
    %c0_41 = arith.constant 0 : index
    %c0_42 = arith.constant 0 : index
    %c0_43 = arith.constant 0 : index
    %109 = vector.load %arg14[%c0_41, %c0_42, %c0_43] : memref<1x8x32xbf16, #tpu.memory_space<vmem>>, vector<1x8x32xbf16>
    %110 = vector.shape_cast %109 : vector<1x8x32xbf16> to vector<8x32xbf16>
    %111 = vector.shape_cast %108 : vector<8x32xbf16> to vector<1x8x32xbf16>
    tpu.vector_store %arg14[%c0_41, %c0_42, %c0_43], %111 {strides = array<i32>} : memref<1x8x32xbf16, #tpu.memory_space<vmem>>, vector<1x8x32xbf16>,
    return
  }
  func.func @transform_0(%arg0: i32) -> (i32, i32, i32) {
    %c0_i32 = arith.constant 0 : i32
    %c0_i32_0 = arith.constant 0 : i32
    %c0_i32_1 = arith.constant 0 : i32
    return %arg0, %c0_i32, %c0_i32_0 : i32, i32, i32
  }
  func.func @transform_1(%arg0: i32) -> (i32, i32) {
    %c0_i32 = arith.constant 0 : i32
    %c0_i32_0 = arith.constant 0 : i32
    %c0_i32_1 = arith.constant 0 : i32
    return %c0_i32, %c0_i32_0 : i32, i32
  }
  func.func @transform_2(%arg0: i32) -> (i32, i32) {
    %c0_i32 = arith.constant 0 : i32
    %c0_i32_0 = arith.constant 0 : i32
    %c0_i32_1 = arith.constant 0 : i32
    return %c0_i32, %c0_i32_0 : i32, i32
  }
  func.func @transform_3(%arg0: i32) -> (i32, i32) {
    %c0_i32 = arith.constant 0 : i32
    %c0_i32_0 = arith.constant 0 : i32
    %c0_i32_1 = arith.constant 0 : i32
    return %c0_i32, %c0_i32_0 : i32, i32
  }
  func.func @transform_4(%arg0: i32) -> (i32, i32) {
    %c0_i32 = arith.constant 0 : i32
    %c0_i32_0 = arith.constant 0 : i32
    %c0_i32_1 = arith.constant 0 : i32
    return %c0_i32, %c0_i32_0 : i32, i32
  }
  func.func @transform_5(%arg0: i32) -> (i32, i32) {
    %c0_i32 = arith.constant 0 : i32
    %c0_i32_0 = arith.constant 0 : i32
    %c0_i32_1 = arith.constant 0 : i32
    return %c0_i32, %c0_i32_0 : i32, i32
  }
  func.func @transform_6(%arg0: i32) -> (i32, i32) {
    %c0_i32 = arith.constant 0 : i32
    %c0_i32_0 = arith.constant 0 : i32
    %c0_i32_1 = arith.constant 0 : i32
    return %c0_i32, %c0_i32_0 : i32, i32
  }
  func.func @transform_7(%arg0: i32) -> (i32, i32) {
    %c0_i32 = arith.constant 0 : i32
    %c0_i32_0 = arith.constant 0 : i32
    %c0_i32_1 = arith.constant 0 : i32
    return %c0_i32, %c0_i32_0 : i32, i32
  }
  func.func @transform_8(%arg0: i32) -> (i32, i32) {
    %c0_i32 = arith.constant 0 : i32
    %c0_i32_0 = arith.constant 0 : i32
    %c0_i32_1 = arith.constant 0 : i32
    return %c0_i32, %c0_i32_0 : i32, i32
  }
  func.func @transform_9(%arg0: i32) -> (i32, i32) {
    %c0_i32 = arith.constant 0 : i32
    %c0_i32_0 = arith.constant 0 : i32
    %c0_i32_1 = arith.constant 0 : i32
    return %c0_i32, %c0_i32_0 : i32, i32
  }
  func.func @transform_10(%arg0: i32) -> (i32, i32) {
    %c0_i32 = arith.constant 0 : i32
    %c0_i32_0 = arith.constant 0 : i32
    %c0_i32_1 = arith.constant 0 : i32
    return %c0_i32, %c0_i32_0 : i32, i32
  }
  func.func @transform_11(%arg0: i32) -> (i32, i32) {
    %c0_i32 = arith.constant 0 : i32
    %c0_i32_0 = arith.constant 0 : i32
    %c0_i32_1 = arith.constant 0 : i32
    return %c0_i32, %c0_i32_0 : i32, i32
  }
  func.func @transform_12(%arg0: i32) -> (i32, i32) {
    %c0_i32 = arith.constant 0 : i32
    %c0_i32_0 = arith.constant 0 : i32
    %c0_i32_1 = arith.constant 0 : i32
    return %c0_i32, %c0_i32_0 : i32, i32
  }
  func.func @transform_13(%arg0: i32) -> (i32, i32, i32) {
    %c0_i32 = arith.constant 0 : i32
    %c0_i32_0 = arith.constant 0 : i32
    %c0_i32_1 = arith.constant 0 : i32
    return %arg0, %c0_i32, %c0_i32_0 : i32, i32, i32
  }
}

module attributes {stable_mosaic.version = 11 : i64} {
  func.func @encoder_layer_kernel(%arg0: i32, %arg1: memref<1x8x32xbf16, #tpu.memory_space<vmem>>, %arg2: memref<32x96xbf16, #tpu.memory_space<vmem>>, %arg3: memref<32x32xbf16, #tpu.memory_space<vmem>>, %arg4: memref<1x32xf32, #tpu.memory_space<vmem>>, %arg5: memref<1x32xf32, #tpu.memory_space<vmem>>, %arg6: memref<1x32xf32, #tpu.memory_space<vmem>>, %arg7: memref<1x32xf32, #tpu.memory_space<vmem>>, %arg8: memref<32x64xbf16, #tpu.memory_space<vmem>>, %arg9: memref<1x64xf32, #tpu.memory_space<vmem>>, %arg10: memref<64x32xbf16, #tpu.memory_space<vmem>>, %arg11: memref<1x32xf32, #tpu.memory_space<vmem>>, %arg12: memref<1x32xf32, #tpu.memory_space<vmem>>, %arg13: memref<1x32xf32, #tpu.memory_space<vmem>>, %arg14: memref<1x8x32xf32, #tpu.memory_space<vmem>>) attributes {dimension_semantics = [#tpu.dimension_semantics<parallel>], iteration_bounds = array<i64: 2>, scalar_prefetch = 0 : i64, scratch_operands = 0 : i64, tpu.core_type = #tpu.core_type<tc>, window_params = [{transform_indices = @transform_0, window_bounds = array<i64: 1, 8, 32>}, {pipeline_mode = #tpu.pipeline_mode<synchronous>, transform_indices = @transform_1, window_bounds = array<i64: 32, 96>}, {pipeline_mode = #tpu.pipeline_mode<synchronous>, transform_indices = @transform_2, window_bounds = array<i64: 32, 32>}, {pipeline_mode = #tpu.pipeline_mode<synchronous>, transform_indices = @transform_3, window_bounds = array<i64: 1, 32>}, {pipeline_mode = #tpu.pipeline_mode<synchronous>, transform_indices = @transform_4, window_bounds = array<i64: 1, 32>}, {pipeline_mode = #tpu.pipeline_mode<synchronous>, transform_indices = @transform_5, window_bounds = array<i64: 1, 32>}, {pipeline_mode = #tpu.pipeline_mode<synchronous>, transform_indices = @transform_6, window_bounds = array<i64: 1, 32>}, {pipeline_mode = #tpu.pipeline_mode<synchronous>, transform_indices = @transform_7, window_bounds = array<i64: 32, 64>}, {pipeline_mode = #tpu.pipeline_mode<synchronous>, transform_indices = @transform_8, window_bounds = array<i64: 1, 64>}, {pipeline_mode = #tpu.pipeline_mode<synchronous>, transform_indices = @transform_9, window_bounds = array<i64: 64, 32>}, {pipeline_mode = #tpu.pipeline_mode<synchronous>, transform_indices = @transform_10, window_bounds = array<i64: 1, 32>}, {pipeline_mode = #tpu.pipeline_mode<synchronous>, transform_indices = @transform_11, window_bounds = array<i64: 1, 32>}, {pipeline_mode = #tpu.pipeline_mode<synchronous>, transform_indices = @transform_12, window_bounds = array<i64: 1, 32>}, {transform_indices = @transform_13, window_bounds = array<i64: 1, 8, 32>}]} {
    %c0 = arith.constant 0 : index
    %c0_0 = arith.constant 0 : index
    %c0_1 = arith.constant 0 : index
    %0 = vector.load %arg1[%c0, %c0_0, %c0_1] : memref<1x8x32xbf16, #tpu.memory_space<vmem>>, vector<1x8x32xbf16>
    %1 = vector.shape_cast %0 : vector<1x8x32xbf16> to vector<8x32xbf16>
    %2 = arith.extf %1 : vector<8x32xbf16> to vector<8x32xf32>
    %c0_2 = arith.constant 0 : index
    %c0_3 = arith.constant 0 : index
    %3 = vector.load %arg4[%c0_2, %c0_3] : memref<1x32xf32, #tpu.memory_space<vmem>>, vector<1x32xf32>
    %4 = vector.shape_cast %3 : vector<1x32xf32> to vector<32xf32>
    %c0_4 = arith.constant 0 : index
    %c0_5 = arith.constant 0 : index
    %5 = vector.load %arg5[%c0_4, %c0_5] : memref<1x32xf32, #tpu.memory_space<vmem>>, vector<1x32xf32>
    %6 = vector.shape_cast %5 : vector<1x32xf32> to vector<32xf32>
    %cst = arith.constant dense<0.000000e+00> : vector<8xf32>
    %7 = vector.multi_reduction <add>, %2, %cst [1] : vector<8x32xf32> to vector<8xf32>
    %8 = vector.shape_cast %7 : vector<8xf32> to vector<8x1xf32>
    %cst_6 = arith.constant 3.200000e+01 : f32
    %9 = vector.broadcast %cst_6 : f32 to vector<8x1xf32>
    %10 = arith.divf %8, %9 : vector<8x1xf32>
    %11 = vector.broadcast %10 : vector<8x1xf32> to vector<8x32xf32>
    %12 = arith.subf %2, %11 : vector<8x32xf32>
    %13 = arith.mulf %12, %12 : vector<8x32xf32>
    %cst_7 = arith.constant dense<0.000000e+00> : vector<8xf32>
    %14 = vector.multi_reduction <add>, %13, %cst_7 [1] : vector<8x32xf32> to vector<8xf32>
    %15 = vector.shape_cast %14 : vector<8xf32> to vector<8x1xf32>
    %cst_8 = arith.constant 3.200000e+01 : f32
    %16 = vector.broadcast %cst_8 : f32 to vector<8x1xf32>
    %17 = arith.divf %15, %16 : vector<8x1xf32>
    %cst_9 = arith.constant 9.99999997E-7 : f32
    %18 = vector.broadcast %cst_9 : f32 to vector<8x1xf32>
    %19 = arith.addf %17, %18 : vector<8x1xf32>
    %20 = math.rsqrt %19 : vector<8x1xf32>
    %21 = vector.broadcast %20 : vector<8x1xf32> to vector<8x32xf32>
    %22 = arith.mulf %12, %21 : vector<8x32xf32>
    %23 = vector.shape_cast %4 : vector<32xf32> to vector<1x32xf32>
    %24 = vector.broadcast %23 : vector<1x32xf32> to vector<8x32xf32>
    %25 = arith.mulf %22, %24 : vector<8x32xf32>
    %26 = vector.shape_cast %6 : vector<32xf32> to vector<1x32xf32>
    %27 = vector.broadcast %26 : vector<1x32xf32> to vector<8x32xf32>
    %28 = arith.addf %25, %27 : vector<8x32xf32>
    %29 = arith.truncf %28 : vector<8x32xf32> to vector<8x32xbf16>
    %c0_10 = arith.constant 0 : index
    %c0_11 = arith.constant 0 : index
    %30 = vector.load %arg2[%c0_10, %c0_11] : memref<32x96xbf16, #tpu.memory_space<vmem>>, vector<32x96xbf16>
    %cst_12 = arith.constant dense<0.000000e+00> : vector<8x96xf32>
    %31 = tpu.matmul %29, %30, %cst_12 {dimension_numbers = #tpu.dot_dimension_numbers<[1], [0], [0], [1], [0, 0, 1, 1], [], []>} : vector<8x32xbf16>, vector<32x96xbf16>, vector<8x96xf32> -> vector<8x96xf32>
    %32 = arith.truncf %31 : vector<8x96xf32> to vector<8x96xbf16>
    %33 = vector.extract_strided_slice %32 {offsets = [0, 0], sizes = [8, 32], strides = [1, 1]} : vector<8x96xbf16> to vector<8x32xbf16>
    %34 = vector.extract_strided_slice %32 {offsets = [0, 32], sizes = [8, 32], strides = [1, 1]} : vector<8x96xbf16> to vector<8x32xbf16>
    %35 = vector.extract_strided_slice %32 {offsets = [0, 64], sizes = [8, 32], strides = [1, 1]} : vector<8x96xbf16> to vector<8x32xbf16>
    %36 = vector.shape_cast %33 : vector<8x32xbf16> to vector<8x4x8xbf16>
    %37 = tpu.transpose %36, [1, 0, 2] : vector<8x4x8xbf16> -> vector<4x8x8xbf16>
    %cst_13 = arith.constant 3.535160e-01 : bf16
    %38 = vector.broadcast %cst_13 : bf16 to vector<4x8x8xbf16>
    %39 = arith.mulf %37, %38 : vector<4x8x8xbf16>
    %40 = vector.shape_cast %34 : vector<8x32xbf16> to vector<8x4x8xbf16>
    %41 = tpu.transpose %40, [1, 0, 2] : vector<8x4x8xbf16> -> vector<4x8x8xbf16>
    %42 = vector.shape_cast %35 : vector<8x32xbf16> to vector<8x4x8xbf16>
    %43 = tpu.transpose %42, [1, 0, 2] : vector<8x4x8xbf16> -> vector<4x8x8xbf16>
    "tpu.trace_start"() <{level = 10 : i32, message = "hqd,hkd->hqk"}> : () -> ()
    %cst_14 = arith.constant dense<0.000000e+00> : vector<4x8x8xf32>
    %44 = tpu.matmul %39, %41, %cst_14 {dimension_numbers = #tpu.dot_dimension_numbers<[2], [2], [1], [1], [0, 0, 0, 1, 1, 1], [0], [0]>} : vector<4x8x8xbf16>, vector<4x8x8xbf16>, vector<4x8x8xf32> -> vector<4x8x8xf32>
    "tpu.trace_stop"() : () -> ()
    %cst_15 = arith.constant dense<0xFF800000> : vector<4x8xf32>
    %45 = vector.multi_reduction <maximumf>, %44, %cst_15 [2] : vector<4x8x8xf32> to vector<4x8xf32>
    %46 = vector.shape_cast %45 : vector<4x8xf32> to vector<4x8x1xf32>
    %47 = vector.broadcast %46 : vector<4x8x1xf32> to vector<4x8x8xf32>
    %48 = arith.subf %44, %47 : vector<4x8x8xf32>
    %49 = math.exp %48 : vector<4x8x8xf32>
    %cst_16 = arith.constant dense<0.000000e+00> : vector<4x8xf32>
    %50 = vector.multi_reduction <add>, %49, %cst_16 [2] : vector<4x8x8xf32> to vector<4x8xf32>
    %51 = vector.shape_cast %50 : vector<4x8xf32> to vector<4x8x1xf32>
    %52 = tpu.reciprocal %51 {approx = true} : vector<4x8x1xf32> -> vector<4x8x1xf32>
    %53 = vector.broadcast %52 : vector<4x8x1xf32> to vector<4x8x8xf32>
    %54 = arith.mulf %49, %53 : vector<4x8x8xf32>
    %55 = arith.truncf %54 : vector<4x8x8xf32> to vector<4x8x8xbf16>
    "tpu.trace_start"() <{level = 10 : i32, message = "hqk,hkd->hqd"}> : () -> ()
    %cst_17 = arith.constant dense<0.000000e+00> : vector<4x8x8xf32>
    %56 = tpu.matmul %55, %43, %cst_17 {dimension_numbers = #tpu.dot_dimension_numbers<[2], [1], [1], [2], [0, 0, 0, 1, 1, 2], [0], [0]>} : vector<4x8x8xbf16>, vector<4x8x8xbf16>, vector<4x8x8xf32> -> vector<4x8x8xf32>
    "tpu.trace_stop"() : () -> ()
    %57 = tpu.transpose %56, [1, 0, 2] : vector<4x8x8xf32> -> vector<8x4x8xf32>
    %58 = vector.shape_cast %57 : vector<8x4x8xf32> to vector<8x32xf32>
    %59 = arith.truncf %58 : vector<8x32xf32> to vector<8x32xbf16>
    %c0_18 = arith.constant 0 : index
    %c0_19 = arith.constant 0 : index
    %60 = vector.load %arg3[%c0_18, %c0_19] : memref<32x32xbf16, #tpu.memory_space<vmem>>, vector<32x32xbf16>
    %cst_20 = arith.constant dense<0.000000e+00> : vector<8x32xf32>
    %61 = tpu.matmul %59, %60, %cst_20 {dimension_numbers = #tpu.dot_dimension_numbers<[1], [0], [0], [1], [0, 0, 1, 1], [], []>} : vector<8x32xbf16>, vector<32x32xbf16>, vector<8x32xf32> -> vector<8x32xf32>
    %62 = arith.addf %2, %61 : vector<8x32xf32>
    %c0_21 = arith.constant 0 : index
    %c0_22 = arith.constant 0 : index
    %63 = vector.load %arg6[%c0_21, %c0_22] : memref<1x32xf32, #tpu.memory_space<vmem>>, vector<1x32xf32>
    %64 = vector.shape_cast %63 : vector<1x32xf32> to vector<32xf32>
    %c0_23 = arith.constant 0 : index
    %c0_24 = arith.constant 0 : index
    %65 = vector.load %arg7[%c0_23, %c0_24] : memref<1x32xf32, #tpu.memory_space<vmem>>, vector<1x32xf32>
    %66 = vector.shape_cast %65 : vector<1x32xf32> to vector<32xf32>
    %cst_25 = arith.constant dense<0.000000e+00> : vector<8xf32>
    %67 = vector.multi_reduction <add>, %62, %cst_25 [1] : vector<8x32xf32> to vector<8xf32>
    %68 = vector.shape_cast %67 : vector<8xf32> to vector<8x1xf32>
    %cst_26 = arith.constant 3.200000e+01 : f32
    %69 = vector.broadcast %cst_26 : f32 to vector<8x1xf32>
    %70 = arith.divf %68, %69 : vector<8x1xf32>
    %71 = vector.broadcast %70 : vector<8x1xf32> to vector<8x32xf32>
    %72 = arith.subf %62, %71 : vector<8x32xf32>
    %73 = arith.mulf %72, %72 : vector<8x32xf32>
    %cst_27 = arith.constant dense<0.000000e+00> : vector<8xf32>
    %74 = vector.multi_reduction <add>, %73, %cst_27 [1] : vector<8x32xf32> to vector<8xf32>
    %75 = vector.shape_cast %74 : vector<8xf32> to vector<8x1xf32>
    %cst_28 = arith.constant 3.200000e+01 : f32
    %76 = vector.broadcast %cst_28 : f32 to vector<8x1xf32>
    %77 = arith.divf %75, %76 : vector<8x1xf32>
    %cst_29 = arith.constant 9.99999997E-7 : f32
    %78 = vector.broadcast %cst_29 : f32 to vector<8x1xf32>
    %79 = arith.addf %77, %78 : vector<8x1xf32>
    %80 = math.rsqrt %79 : vector<8x1xf32>
    %81 = vector.broadcast %80 : vector<8x1xf32> to vector<8x32xf32>
    %82 = arith.mulf %72, %81 : vector<8x32xf32>
    %83 = vector.shape_cast %64 : vector<32xf32> to vector<1x32xf32>
    %84 = vector.broadcast %83 : vector<1x32xf32> to vector<8x32xf32>
    %85 = arith.mulf %82, %84 : vector<8x32xf32>
    %86 = vector.shape_cast %66 : vector<32xf32> to vector<1x32xf32>
    %87 = vector.broadcast %86 : vector<1x32xf32> to vector<8x32xf32>
    %88 = arith.addf %85, %87 : vector<8x32xf32>
    %89 = arith.truncf %88 : vector<8x32xf32> to vector<8x32xbf16>
    %c0_30 = arith.constant 0 : index
    %c0_31 = arith.constant 0 : index
    %90 = vector.load %arg8[%c0_30, %c0_31] : memref<32x64xbf16, #tpu.memory_space<vmem>>, vector<32x64xbf16>
    %cst_32 = arith.constant dense<0.000000e+00> : vector<8x64xf32>
    %91 = tpu.matmul %89, %90, %cst_32 {dimension_numbers = #tpu.dot_dimension_numbers<[1], [0], [0], [1], [0, 0, 1, 1], [], []>} : vector<8x32xbf16>, vector<32x64xbf16>, vector<8x64xf32> -> vector<8x64xf32>
    %c0_33 = arith.constant 0 : index
    %c0_34 = arith.constant 0 : index
    %92 = vector.load %arg9[%c0_33, %c0_34] : memref<1x64xf32, #tpu.memory_space<vmem>>, vector<1x64xf32>
    %93 = vector.shape_cast %92 : vector<1x64xf32> to vector<64xf32>
    %94 = vector.shape_cast %93 : vector<64xf32> to vector<1x64xf32>
    %95 = vector.broadcast %94 : vector<1x64xf32> to vector<8x64xf32>
    %96 = arith.addf %91, %95 : vector<8x64xf32>
    %cst_35 = arith.constant 0.000000e+00 : f32
    %97 = vector.broadcast %cst_35 : f32 to vector<8x64xf32>
    %98 = arith.maximumf %96, %97 : vector<8x64xf32>
    %99 = arith.truncf %98 : vector<8x64xf32> to vector<8x64xbf16>
    %c0_36 = arith.constant 0 : index
    %c0_37 = arith.constant 0 : index
    %100 = vector.load %arg10[%c0_36, %c0_37] : memref<64x32xbf16, #tpu.memory_space<vmem>>, vector<64x32xbf16>
    %cst_38 = arith.constant dense<0.000000e+00> : vector<8x32xf32>
    %101 = tpu.matmul %99, %100, %cst_38 {dimension_numbers = #tpu.dot_dimension_numbers<[1], [0], [0], [1], [0, 0, 1, 1], [], []>} : vector<8x64xbf16>, vector<64x32xbf16>, vector<8x32xf32> -> vector<8x32xf32>
    %c0_39 = arith.constant 0 : index
    %c0_40 = arith.constant 0 : index
    %102 = vector.load %arg11[%c0_39, %c0_40] : memref<1x32xf32, #tpu.memory_space<vmem>>, vector<1x32xf32>
    %103 = vector.shape_cast %102 : vector<1x32xf32> to vector<32xf32>
    %104 = vector.shape_cast %103 : vector<32xf32> to vector<1x32xf32>
    %105 = vector.broadcast %104 : vector<1x32xf32> to vector<8x32xf32>
    %106 = arith.addf %101, %105 : vector<8x32xf32>
    %107 = arith.addf %62, %106 : vector<8x32xf32>
    %c0_41 = arith.constant 0 : index
    %c0_42 = arith.constant 0 : index
    %108 = vector.load %arg12[%c0_41, %c0_42] : memref<1x32xf32, #tpu.memory_space<vmem>>, vector<1x32xf32>
    %109 = vector.shape_cast %108 : vector<1x32xf32> to vector<32xf32>
    %c0_43 = arith.constant 0 : index
    %c0_44 = arith.constant 0 : index
    %110 = vector.load %arg13[%c0_43, %c0_44] : memref<1x32xf32, #tpu.memory_space<vmem>>, vector<1x32xf32>
    %111 = vector.shape_cast %110 : vector<1x32xf32> to vector<32xf32>
    %cst_45 = arith.constant dense<0.000000e+00> : vector<8xf32>
    %112 = vector.multi_reduction <add>, %107, %cst_45 [1] : vector<8x32xf32> to vector<8xf32>
    %113 = vector.shape_cast %112 : vector<8xf32> to vector<8x1xf32>
    %cst_46 = arith.constant 3.200000e+01 : f32
    %114 = vector.broadcast %cst_46 : f32 to vector<8x1xf32>
    %115 = arith.divf %113, %114 : vector<8x1xf32>
    %116 = vector.broadcast %115 : vector<8x1xf32> to vector<8x32xf32>
    %117 = arith.subf %107, %116 : vector<8x32xf32>
    %118 = arith.mulf %117, %117 : vector<8x32xf32>
    %cst_47 = arith.constant dense<0.000000e+00> : vector<8xf32>
    %119 = vector.multi_reduction <add>, %118, %cst_47 [1] : vector<8x32xf32> to vector<8xf32>
    %120 = vector.shape_cast %119 : vector<8xf32> to vector<8x1xf32>
    %cst_48 = arith.constant 3.200000e+01 : f32
    %121 = vector.broadcast %cst_48 : f32 to vector<8x1xf32>
    %122 = arith.divf %120, %121 : vector<8x1xf32>
    %cst_49 = arith.constant 9.99999997E-7 : f32
    %123 = vector.broadcast %cst_49 : f32 to vector<8x1xf32>
    %124 = arith.addf %122, %123 : vector<8x1xf32>
    %125 = math.rsqrt %124 : vector<8x1xf32>
    %126 = vector.broadcast %125 : vector<8x1xf32> to vector<8x32xf32>
    %127 = arith.mulf %117, %126 : vector<8x32xf32>
    %128 = vector.shape_cast %109 : vector<32xf32> to vector<1x32xf32>
    %129 = vector.broadcast %128 : vector<1x32xf32> to vector<8x32xf32>
    %130 = arith.mulf %127, %129 : vector<8x32xf32>
    %131 = vector.shape_cast %111 : vector<32xf32> to vector<1x32xf32>
    %132 = vector.broadcast %131 : vector<1x32xf32> to vector<8x32xf32>
    %133 = arith.addf %130, %132 : vector<8x32xf32>
    %c0_50 = arith.constant 0 : index
    %c0_51 = arith.constant 0 : index
    %c0_52 = arith.constant 0 : index
    %134 = vector.load %arg14[%c0_50, %c0_51, %c0_52] : memref<1x8x32xf32, #tpu.memory_space<vmem>>, vector<1x8x32xf32>
    %135 = vector.shape_cast %134 : vector<1x8x32xf32> to vector<8x32xf32>
    %136 = vector.shape_cast %133 : vector<8x32xf32> to vector<1x8x32xf32>
    tpu.vector_store %arg14[%c0_50, %c0_51, %c0_52], %136 {strides = array<i32>} : memref<1x8x32xf32, #tpu.memory_space<vmem>>, vector<1x8x32xf32>,
    return
  }
  func.func @transform_0(%arg0: i32) -> (i32, i32, i32) {
    %c0_i32 = arith.constant 0 : i32
    %c0_i32_0 = arith.constant 0 : i32
    %c0_i32_1 = arith.constant 0 : i32
    return %arg0, %c0_i32, %c0_i32_0 : i32, i32, i32
  }
  func.func @transform_1(%arg0: i32) -> (i32, i32) {
    %c0_i32 = arith.constant 0 : i32
    %c0_i32_0 = arith.constant 0 : i32
    %c0_i32_1 = arith.constant 0 : i32
    return %c0_i32, %c0_i32_0 : i32, i32
  }
  func.func @transform_2(%arg0: i32) -> (i32, i32) {
    %c0_i32 = arith.constant 0 : i32
    %c0_i32_0 = arith.constant 0 : i32
    %c0_i32_1 = arith.constant 0 : i32
    return %c0_i32, %c0_i32_0 : i32, i32
  }
  func.func @transform_3(%arg0: i32) -> (i32, i32) {
    %c0_i32 = arith.constant 0 : i32
    %c0_i32_0 = arith.constant 0 : i32
    %c0_i32_1 = arith.constant 0 : i32
    return %c0_i32, %c0_i32_0 : i32, i32
  }
  func.func @transform_4(%arg0: i32) -> (i32, i32) {
    %c0_i32 = arith.constant 0 : i32
    %c0_i32_0 = arith.constant 0 : i32
    %c0_i32_1 = arith.constant 0 : i32
    return %c0_i32, %c0_i32_0 : i32, i32
  }
  func.func @transform_5(%arg0: i32) -> (i32, i32) {
    %c0_i32 = arith.constant 0 : i32
    %c0_i32_0 = arith.constant 0 : i32
    %c0_i32_1 = arith.constant 0 : i32
    return %c0_i32, %c0_i32_0 : i32, i32
  }
  func.func @transform_6(%arg0: i32) -> (i32, i32) {
    %c0_i32 = arith.constant 0 : i32
    %c0_i32_0 = arith.constant 0 : i32
    %c0_i32_1 = arith.constant 0 : i32
    return %c0_i32, %c0_i32_0 : i32, i32
  }
  func.func @transform_7(%arg0: i32) -> (i32, i32) {
    %c0_i32 = arith.constant 0 : i32
    %c0_i32_0 = arith.constant 0 : i32
    %c0_i32_1 = arith.constant 0 : i32
    return %c0_i32, %c0_i32_0 : i32, i32
  }
  func.func @transform_8(%arg0: i32) -> (i32, i32) {
    %c0_i32 = arith.constant 0 : i32
    %c0_i32_0 = arith.constant 0 : i32
    %c0_i32_1 = arith.constant 0 : i32
    return %c0_i32, %c0_i32_0 : i32, i32
  }
  func.func @transform_9(%arg0: i32) -> (i32, i32) {
    %c0_i32 = arith.constant 0 : i32
    %c0_i32_0 = arith.constant 0 : i32
    %c0_i32_1 = arith.constant 0 : i32
    return %c0_i32, %c0_i32_0 : i32, i32
  }
  func.func @transform_10(%arg0: i32) -> (i32, i32) {
    %c0_i32 = arith.constant 0 : i32
    %c0_i32_0 = arith.constant 0 : i32
    %c0_i32_1 = arith.constant 0 : i32
    return %c0_i32, %c0_i32_0 : i32, i32
  }
  func.func @transform_11(%arg0: i32) -> (i32, i32) {
    %c0_i32 = arith.constant 0 : i32
    %c0_i32_0 = arith.constant 0 : i32
    %c0_i32_1 = arith.constant 0 : i32
    return %c0_i32, %c0_i32_0 : i32, i32
  }
  func.func @transform_12(%arg0: i32) -> (i32, i32) {
    %c0_i32 = arith.constant 0 : i32
    %c0_i32_0 = arith.constant 0 : i32
    %c0_i32_1 = arith.constant 0 : i32
    return %c0_i32, %c0_i32_0 : i32, i32
  }
  func.func @transform_13(%arg0: i32) -> (i32, i32, i32) {
    %c0_i32 = arith.constant 0 : i32
    %c0_i32_0 = arith.constant 0 : i32
    %c0_i32_1 = arith.constant 0 : i32
    return %arg0, %c0_i32, %c0_i32_0 : i32, i32, i32
  }
}

module attributes {stable_mosaic.version = 11 : i64} {
  func.func @encoder_layer_kernel(%arg0: i32, %arg1: memref<1x8x32xbf16, #tpu.memory_space<vmem>>, %arg2: memref<32x96xbf16, #tpu.memory_space<vmem>>, %arg3: memref<32x32xbf16, #tpu.memory_space<vmem>>, %arg4: memref<1x32xf32, #tpu.memory_space<vmem>>, %arg5: memref<1x32xf32, #tpu.memory_space<vmem>>, %arg6: memref<1x32xf32, #tpu.memory_space<vmem>>, %arg7: memref<1x32xf32, #tpu.memory_space<vmem>>, %arg8: memref<32x64xbf16, #tpu.memory_space<vmem>>, %arg9: memref<1x64xf32, #tpu.memory_space<vmem>>, %arg10: memref<64x32xbf16, #tpu.memory_space<vmem>>, %arg11: memref<1x32xf32, #tpu.memory_space<vmem>>, %arg12: memref<1x32xf32, #tpu.memory_space<vmem>>, %arg13: memref<1x32xf32, #tpu.memory_space<vmem>>, %arg14: memref<1x8x32xf32, #tpu.memory_space<vmem>>) attributes {dimension_semantics = [#tpu.dimension_semantics<parallel>], iteration_bounds = array<i64: 2>, scalar_prefetch = 0 : i64, scratch_operands = 0 : i64, tpu.core_type = #tpu.core_type<tc>, window_params = [{transform_indices = @transform_0, window_bounds = array<i64: 1, 8, 32>}, {pipeline_mode = #tpu.pipeline_mode<synchronous>, transform_indices = @transform_1, window_bounds = array<i64: 32, 96>}, {pipeline_mode = #tpu.pipeline_mode<synchronous>, transform_indices = @transform_2, window_bounds = array<i64: 32, 32>}, {pipeline_mode = #tpu.pipeline_mode<synchronous>, transform_indices = @transform_3, window_bounds = array<i64: 1, 32>}, {pipeline_mode = #tpu.pipeline_mode<synchronous>, transform_indices = @transform_4, window_bounds = array<i64: 1, 32>}, {pipeline_mode = #tpu.pipeline_mode<synchronous>, transform_indices = @transform_5, window_bounds = array<i64: 1, 32>}, {pipeline_mode = #tpu.pipeline_mode<synchronous>, transform_indices = @transform_6, window_bounds = array<i64: 1, 32>}, {pipeline_mode = #tpu.pipeline_mode<synchronous>, transform_indices = @transform_7, window_bounds = array<i64: 32, 64>}, {pipeline_mode = #tpu.pipeline_mode<synchronous>, transform_indices = @transform_8, window_bounds = array<i64: 1, 64>}, {pipeline_mode = #tpu.pipeline_mode<synchronous>, transform_indices = @transform_9, window_bounds = array<i64: 64, 32>}, {pipeline_mode = #tpu.pipeline_mode<synchronous>, transform_indices = @transform_10, window_bounds = array<i64: 1, 32>}, {pipeline_mode = #tpu.pipeline_mode<synchronous>, transform_indices = @transform_11, window_bounds = array<i64: 1, 32>}, {pipeline_mode = #tpu.pipeline_mode<synchronous>, transform_indices = @transform_12, window_bounds = array<i64: 1, 32>}, {transform_indices = @transform_13, window_bounds = array<i64: 1, 8, 32>}]} {
    %c0 = arith.constant 0 : index
    %c0_0 = arith.constant 0 : index
    %c0_1 = arith.constant 0 : index
    %0 = vector.load %arg1[%c0, %c0_0, %c0_1] : memref<1x8x32xbf16, #tpu.memory_space<vmem>>, vector<1x8x32xbf16>
    %1 = vector.shape_cast %0 : vector<1x8x32xbf16> to vector<8x32xbf16>
    %2 = arith.extf %1 : vector<8x32xbf16> to vector<8x32xf32>
    %c0_2 = arith.constant 0 : index
    %c0_3 = arith.constant 0 : index
    %3 = vector.load %arg4[%c0_2, %c0_3] : memref<1x32xf32, #tpu.memory_space<vmem>>, vector<1x32xf32>
    %4 = vector.shape_cast %3 : vector<1x32xf32> to vector<32xf32>
    %c0_4 = arith.constant 0 : index
    %c0_5 = arith.constant 0 : index
    %5 = vector.load %arg5[%c0_4, %c0_5] : memref<1x32xf32, #tpu.memory_space<vmem>>, vector<1x32xf32>
    %6 = vector.shape_cast %5 : vector<1x32xf32> to vector<32xf32>
    %cst = arith.constant dense<0.000000e+00> : vector<8xf32>
    %7 = vector.multi_reduction <add>, %2, %cst [1] : vector<8x32xf32> to vector<8xf32>
    %8 = vector.shape_cast %7 : vector<8xf32> to vector<8x1xf32>
    %cst_6 = arith.constant 3.200000e+01 : f32
    %9 = vector.broadcast %cst_6 : f32 to vector<8x1xf32>
    %10 = arith.divf %8, %9 : vector<8x1xf32>
    %11 = vector.broadcast %10 : vector<8x1xf32> to vector<8x32xf32>
    %12 = arith.subf %2, %11 : vector<8x32xf32>
    %13 = arith.mulf %12, %12 : vector<8x32xf32>
    %cst_7 = arith.constant dense<0.000000e+00> : vector<8xf32>
    %14 = vector.multi_reduction <add>, %13, %cst_7 [1] : vector<8x32xf32> to vector<8xf32>
    %15 = vector.shape_cast %14 : vector<8xf32> to vector<8x1xf32>
    %cst_8 = arith.constant 3.200000e+01 : f32
    %16 = vector.broadcast %cst_8 : f32 to vector<8x1xf32>
    %17 = arith.divf %15, %16 : vector<8x1xf32>
    %cst_9 = arith.constant 9.99999997E-7 : f32
    %18 = vector.broadcast %cst_9 : f32 to vector<8x1xf32>
    %19 = arith.addf %17, %18 : vector<8x1xf32>
    %20 = math.rsqrt %19 : vector<8x1xf32>
    %21 = vector.broadcast %20 : vector<8x1xf32> to vector<8x32xf32>
    %22 = arith.mulf %12, %21 : vector<8x32xf32>
    %23 = vector.shape_cast %4 : vector<32xf32> to vector<1x32xf32>
    %24 = vector.broadcast %23 : vector<1x32xf32> to vector<8x32xf32>
    %25 = arith.mulf %22, %24 : vector<8x32xf32>
    %26 = vector.shape_cast %6 : vector<32xf32> to vector<1x32xf32>
    %27 = vector.broadcast %26 : vector<1x32xf32> to vector<8x32xf32>
    %28 = arith.addf %25, %27 : vector<8x32xf32>
    %29 = arith.truncf %28 : vector<8x32xf32> to vector<8x32xbf16>
    %c0_10 = arith.constant 0 : index
    %c0_11 = arith.constant 0 : index
    %30 = vector.load %arg2[%c0_10, %c0_11] : memref<32x96xbf16, #tpu.memory_space<vmem>>, vector<32x96xbf16>
    %cst_12 = arith.constant dense<0.000000e+00> : vector<8x96xf32>
    %31 = tpu.matmul %29, %30, %cst_12 {dimension_numbers = #tpu.dot_dimension_numbers<[1], [0], [0], [1], [0, 0, 1, 1], [], []>} : vector<8x32xbf16>, vector<32x96xbf16>, vector<8x96xf32> -> vector<8x96xf32>
    %32 = arith.truncf %31 : vector<8x96xf32> to vector<8x96xbf16>
    %33 = vector.extract_strided_slice %32 {offsets = [0, 0], sizes = [8, 32], strides = [1, 1]} : vector<8x96xbf16> to vector<8x32xbf16>
    %34 = vector.extract_strided_slice %32 {offsets = [0, 32], sizes = [8, 32], strides = [1, 1]} : vector<8x96xbf16> to vector<8x32xbf16>
    %35 = vector.extract_strided_slice %32 {offsets = [0, 64], sizes = [8, 32], strides = [1, 1]} : vector<8x96xbf16> to vector<8x32xbf16>
    %36 = vector.extract_strided_slice %33 {offsets = [0, 0], sizes = [8, 8], strides = [1, 1]} : vector<8x32xbf16> to vector<8x8xbf16>
    %37 = vector.extract_strided_slice %33 {offsets = [0, 8], sizes = [8, 8], strides = [1, 1]} : vector<8x32xbf16> to vector<8x8xbf16>
    %38 = vector.extract_strided_slice %33 {offsets = [0, 16], sizes = [8, 8], strides = [1, 1]} : vector<8x32xbf16> to vector<8x8xbf16>
    %39 = vector.extract_strided_slice %33 {offsets = [0, 24], sizes = [8, 8], strides = [1, 1]} : vector<8x32xbf16> to vector<8x8xbf16>
    %40 = vector.shape_cast %36 : vector<8x8xbf16> to vector<1x8x8xbf16>
    %41 = vector.shape_cast %37 : vector<8x8xbf16> to vector<1x8x8xbf16>
    %42 = vector.shape_cast %38 : vector<8x8xbf16> to vector<1x8x8xbf16>
    %43 = vector.shape_cast %39 : vector<8x8xbf16> to vector<1x8x8xbf16>
    %44 = tpu.concatenate %40, %41, %42, %43 in 0 : vector<1x8x8xbf16>, vector<1x8x8xbf16>, vector<1x8x8xbf16>, vector<1x8x8xbf16> -> vector<4x8x8xbf16>
    %cst_13 = arith.constant 3.535160e-01 : bf16
    %45 = vector.broadcast %cst_13 : bf16 to vector<4x8x8xbf16>
    %46 = arith.mulf %44, %45 : vector<4x8x8xbf16>
    %47 = vector.extract_strided_slice %34 {offsets = [0, 0], sizes = [8, 8], strides = [1, 1]} : vector<8x32xbf16> to vector<8x8xbf16>
    %48 = vector.extract_strided_slice %34 {offsets = [0, 8], sizes = [8, 8], strides = [1, 1]} : vector<8x32xbf16> to vector<8x8xbf16>
    %49 = vector.extract_strided_slice %34 {offsets = [0, 16], sizes = [8, 8], strides = [1, 1]} : vector<8x32xbf16> to vector<8x8xbf16>
    %50 = vector.extract_strided_slice %34 {offsets = [0, 24], sizes = [8, 8], strides = [1, 1]} : vector<8x32xbf16> to vector<8x8xbf16>
    %51 = vector.shape_cast %47 : vector<8x8xbf16> to vector<1x8x8xbf16>
    %52 = vector.shape_cast %48 : vector<8x8xbf16> to vector<1x8x8xbf16>
    %53 = vector.shape_cast %49 : vector<8x8xbf16> to vector<1x8x8xbf16>
    %54 = vector.shape_cast %50 : vector<8x8xbf16> to vector<1x8x8xbf16>
    %55 = tpu.concatenate %51, %52, %53, %54 in 0 : vector<1x8x8xbf16>, vector<1x8x8xbf16>, vector<1x8x8xbf16>, vector<1x8x8xbf16> -> vector<4x8x8xbf16>
    %56 = vector.extract_strided_slice %35 {offsets = [0, 0], sizes = [8, 8], strides = [1, 1]} : vector<8x32xbf16> to vector<8x8xbf16>
    %57 = vector.extract_strided_slice %35 {offsets = [0, 8], sizes = [8, 8], strides = [1, 1]} : vector<8x32xbf16> to vector<8x8xbf16>
    %58 = vector.extract_strided_slice %35 {offsets = [0, 16], sizes = [8, 8], strides = [1, 1]} : vector<8x32xbf16> to vector<8x8xbf16>
    %59 = vector.extract_strided_slice %35 {offsets = [0, 24], sizes = [8, 8], strides = [1, 1]} : vector<8x32xbf16> to vector<8x8xbf16>
    %60 = vector.shape_cast %56 : vector<8x8xbf16> to vector<1x8x8xbf16>
    %61 = vector.shape_cast %57 : vector<8x8xbf16> to vector<1x8x8xbf16>
    %62 = vector.shape_cast %58 : vector<8x8xbf16> to vector<1x8x8xbf16>
    %63 = vector.shape_cast %59 : vector<8x8xbf16> to vector<1x8x8xbf16>
    %64 = tpu.concatenate %60, %61, %62, %63 in 0 : vector<1x8x8xbf16>, vector<1x8x8xbf16>, vector<1x8x8xbf16>, vector<1x8x8xbf16> -> vector<4x8x8xbf16>
    "tpu.trace_start"() <{level = 10 : i32, message = "hqd,hkd->hqk"}> : () -> ()
    %cst_14 = arith.constant dense<0.000000e+00> : vector<4x8x8xf32>
    %65 = tpu.matmul %46, %55, %cst_14 {dimension_numbers = #tpu.dot_dimension_numbers<[2], [2], [1], [1], [0, 0, 0, 1, 1, 1], [0], [0]>} : vector<4x8x8xbf16>, vector<4x8x8xbf16>, vector<4x8x8xf32> -> vector<4x8x8xf32>
    "tpu.trace_stop"() : () -> ()
    %cst_15 = arith.constant dense<0xFF800000> : vector<4x8xf32>
    %66 = vector.multi_reduction <maximumf>, %65, %cst_15 [2] : vector<4x8x8xf32> to vector<4x8xf32>
    %67 = vector.shape_cast %66 : vector<4x8xf32> to vector<4x8x1xf32>
    %68 = vector.broadcast %67 : vector<4x8x1xf32> to vector<4x8x8xf32>
    %69 = arith.subf %65, %68 : vector<4x8x8xf32>
    %70 = math.exp %69 : vector<4x8x8xf32>
    %cst_16 = arith.constant dense<0.000000e+00> : vector<4x8xf32>
    %71 = vector.multi_reduction <add>, %70, %cst_16 [2] : vector<4x8x8xf32> to vector<4x8xf32>
    %72 = vector.shape_cast %71 : vector<4x8xf32> to vector<4x8x1xf32>
    %73 = tpu.reciprocal %72 {approx = true} : vector<4x8x1xf32> -> vector<4x8x1xf32>
    %74 = vector.broadcast %73 : vector<4x8x1xf32> to vector<4x8x8xf32>
    %75 = arith.mulf %70, %74 : vector<4x8x8xf32>
    %76 = arith.truncf %75 : vector<4x8x8xf32> to vector<4x8x8xbf16>
    "tpu.trace_start"() <{level = 10 : i32, message = "hqk,hkd->hqd"}> : () -> ()
    %cst_17 = arith.constant dense<0.000000e+00> : vector<4x8x8xf32>
    %77 = tpu.matmul %76, %64, %cst_17 {dimension_numbers = #tpu.dot_dimension_numbers<[2], [1], [1], [2], [0, 0, 0, 1, 1, 2], [0], [0]>} : vector<4x8x8xbf16>, vector<4x8x8xbf16>, vector<4x8x8xf32> -> vector<4x8x8xf32>
    "tpu.trace_stop"() : () -> ()
    %78 = vector.extract_strided_slice %77 {offsets = [0, 0, 0], sizes = [1, 8, 8], strides = [1, 1, 1]} : vector<4x8x8xf32> to vector<1x8x8xf32>
    %79 = vector.shape_cast %78 : vector<1x8x8xf32> to vector<8x8xf32>
    %80 = vector.extract_strided_slice %77 {offsets = [1, 0, 0], sizes = [1, 8, 8], strides = [1, 1, 1]} : vector<4x8x8xf32> to vector<1x8x8xf32>
    %81 = vector.shape_cast %80 : vector<1x8x8xf32> to vector<8x8xf32>
    %82 = vector.extract_strided_slice %77 {offsets = [2, 0, 0], sizes = [1, 8, 8], strides = [1, 1, 1]} : vector<4x8x8xf32> to vector<1x8x8xf32>
    %83 = vector.shape_cast %82 : vector<1x8x8xf32> to vector<8x8xf32>
    %84 = vector.extract_strided_slice %77 {offsets = [3, 0, 0], sizes = [1, 8, 8], strides = [1, 1, 1]} : vector<4x8x8xf32> to vector<1x8x8xf32>
    %85 = vector.shape_cast %84 : vector<1x8x8xf32> to vector<8x8xf32>
    %86 = tpu.concatenate %79, %81, %83, %85 in 1 : vector<8x8xf32>, vector<8x8xf32>, vector<8x8xf32>, vector<8x8xf32> -> vector<8x32xf32>
    %87 = arith.truncf %86 : vector<8x32xf32> to vector<8x32xbf16>
    %c0_18 = arith.constant 0 : index
    %c0_19 = arith.constant 0 : index
    %88 = vector.load %arg3[%c0_18, %c0_19] : memref<32x32xbf16, #tpu.memory_space<vmem>>, vector<32x32xbf16>
    %cst_20 = arith.constant dense<0.000000e+00> : vector<8x32xf32>
    %89 = tpu.matmul %87, %88, %cst_20 {dimension_numbers = #tpu.dot_dimension_numbers<[1], [0], [0], [1], [0, 0, 1, 1], [], []>} : vector<8x32xbf16>, vector<32x32xbf16>, vector<8x32xf32> -> vector<8x32xf32>
    %90 = arith.addf %2, %89 : vector<8x32xf32>
    %c0_21 = arith.constant 0 : index
    %c0_22 = arith.constant 0 : index
    %91 = vector.load %arg6[%c0_21, %c0_22] : memref<1x32xf32, #tpu.memory_space<vmem>>, vector<1x32xf32>
    %92 = vector.shape_cast %91 : vector<1x32xf32> to vector<32xf32>
    %c0_23 = arith.constant 0 : index
    %c0_24 = arith.constant 0 : index
    %93 = vector.load %arg7[%c0_23, %c0_24] : memref<1x32xf32, #tpu.memory_space<vmem>>, vector<1x32xf32>
    %94 = vector.shape_cast %93 : vector<1x32xf32> to vector<32xf32>
    %cst_25 = arith.constant dense<0.000000e+00> : vector<8xf32>
    %95 = vector.multi_reduction <add>, %90, %cst_25 [1] : vector<8x32xf32> to vector<8xf32>
    %96 = vector.shape_cast %95 : vector<8xf32> to vector<8x1xf32>
    %cst_26 = arith.constant 3.200000e+01 : f32
    %97 = vector.broadcast %cst_26 : f32 to vector<8x1xf32>
    %98 = arith.divf %96, %97 : vector<8x1xf32>
    %99 = vector.broadcast %98 : vector<8x1xf32> to vector<8x32xf32>
    %100 = arith.subf %90, %99 : vector<8x32xf32>
    %101 = arith.mulf %100, %100 : vector<8x32xf32>
    %cst_27 = arith.constant dense<0.000000e+00> : vector<8xf32>
    %102 = vector.multi_reduction <add>, %101, %cst_27 [1] : vector<8x32xf32> to vector<8xf32>
    %103 = vector.shape_cast %102 : vector<8xf32> to vector<8x1xf32>
    %cst_28 = arith.constant 3.200000e+01 : f32
    %104 = vector.broadcast %cst_28 : f32 to vector<8x1xf32>
    %105 = arith.divf %103, %104 : vector<8x1xf32>
    %cst_29 = arith.constant 9.99999997E-7 : f32
    %106 = vector.broadcast %cst_29 : f32 to vector<8x1xf32>
    %107 = arith.addf %105, %106 : vector<8x1xf32>
    %108 = math.rsqrt %107 : vector<8x1xf32>
    %109 = vector.broadcast %108 : vector<8x1xf32> to vector<8x32xf32>
    %110 = arith.mulf %100, %109 : vector<8x32xf32>
    %111 = vector.shape_cast %92 : vector<32xf32> to vector<1x32xf32>
    %112 = vector.broadcast %111 : vector<1x32xf32> to vector<8x32xf32>
    %113 = arith.mulf %110, %112 : vector<8x32xf32>
    %114 = vector.shape_cast %94 : vector<32xf32> to vector<1x32xf32>
    %115 = vector.broadcast %114 : vector<1x32xf32> to vector<8x32xf32>
    %116 = arith.addf %113, %115 : vector<8x32xf32>
    %117 = arith.truncf %116 : vector<8x32xf32> to vector<8x32xbf16>
    %c0_30 = arith.constant 0 : index
    %c0_31 = arith.constant 0 : index
    %118 = vector.load %arg8[%c0_30, %c0_31] : memref<32x64xbf16, #tpu.memory_space<vmem>>, vector<32x64xbf16>
    %cst_32 = arith.constant dense<0.000000e+00> : vector<8x64xf32>
    %119 = tpu.matmul %117, %118, %cst_32 {dimension_numbers = #tpu.dot_dimension_numbers<[1], [0], [0], [1], [0, 0, 1, 1], [], []>} : vector<8x32xbf16>, vector<32x64xbf16>, vector<8x64xf32> -> vector<8x64xf32>
    %c0_33 = arith.constant 0 : index
    %c0_34 = arith.constant 0 : index
    %120 = vector.load %arg9[%c0_33, %c0_34] : memref<1x64xf32, #tpu.memory_space<vmem>>, vector<1x64xf32>
    %121 = vector.shape_cast %120 : vector<1x64xf32> to vector<64xf32>
    %122 = vector.shape_cast %121 : vector<64xf32> to vector<1x64xf32>
    %123 = vector.broadcast %122 : vector<1x64xf32> to vector<8x64xf32>
    %124 = arith.addf %119, %123 : vector<8x64xf32>
    %cst_35 = arith.constant 0.000000e+00 : f32
    %125 = vector.broadcast %cst_35 : f32 to vector<8x64xf32>
    %126 = arith.maximumf %124, %125 : vector<8x64xf32>
    %127 = arith.truncf %126 : vector<8x64xf32> to vector<8x64xbf16>
    %c0_36 = arith.constant 0 : index
    %c0_37 = arith.constant 0 : index
    %128 = vector.load %arg10[%c0_36, %c0_37] : memref<64x32xbf16, #tpu.memory_space<vmem>>, vector<64x32xbf16>
    %cst_38 = arith.constant dense<0.000000e+00> : vector<8x32xf32>
    %129 = tpu.matmul %127, %128, %cst_38 {dimension_numbers = #tpu.dot_dimension_numbers<[1], [0], [0], [1], [0, 0, 1, 1], [], []>} : vector<8x64xbf16>, vector<64x32xbf16>, vector<8x32xf32> -> vector<8x32xf32>
    %c0_39 = arith.constant 0 : index
    %c0_40 = arith.constant 0 : index
    %130 = vector.load %arg11[%c0_39, %c0_40] : memref<1x32xf32, #tpu.memory_space<vmem>>, vector<1x32xf32>
    %131 = vector.shape_cast %130 : vector<1x32xf32> to vector<32xf32>
    %132 = vector.shape_cast %131 : vector<32xf32> to vector<1x32xf32>
    %133 = vector.broadcast %132 : vector<1x32xf32> to vector<8x32xf32>
    %134 = arith.addf %129, %133 : vector<8x32xf32>
    %135 = arith.addf %90, %134 : vector<8x32xf32>
    %c0_41 = arith.constant 0 : index
    %c0_42 = arith.constant 0 : index
    %136 = vector.load %arg12[%c0_41, %c0_42] : memref<1x32xf32, #tpu.memory_space<vmem>>, vector<1x32xf32>
    %137 = vector.shape_cast %136 : vector<1x32xf32> to vector<32xf32>
    %c0_43 = arith.constant 0 : index
    %c0_44 = arith.constant 0 : index
    %138 = vector.load %arg13[%c0_43, %c0_44] : memref<1x32xf32, #tpu.memory_space<vmem>>, vector<1x32xf32>
    %139 = vector.shape_cast %138 : vector<1x32xf32> to vector<32xf32>
    %cst_45 = arith.constant dense<0.000000e+00> : vector<8xf32>
    %140 = vector.multi_reduction <add>, %135, %cst_45 [1] : vector<8x32xf32> to vector<8xf32>
    %141 = vector.shape_cast %140 : vector<8xf32> to vector<8x1xf32>
    %cst_46 = arith.constant 3.200000e+01 : f32
    %142 = vector.broadcast %cst_46 : f32 to vector<8x1xf32>
    %143 = arith.divf %141, %142 : vector<8x1xf32>
    %144 = vector.broadcast %143 : vector<8x1xf32> to vector<8x32xf32>
    %145 = arith.subf %135, %144 : vector<8x32xf32>
    %146 = arith.mulf %145, %145 : vector<8x32xf32>
    %cst_47 = arith.constant dense<0.000000e+00> : vector<8xf32>
    %147 = vector.multi_reduction <add>, %146, %cst_47 [1] : vector<8x32xf32> to vector<8xf32>
    %148 = vector.shape_cast %147 : vector<8xf32> to vector<8x1xf32>
    %cst_48 = arith.constant 3.200000e+01 : f32
    %149 = vector.broadcast %cst_48 : f32 to vector<8x1xf32>
    %150 = arith.divf %148, %149 : vector<8x1xf32>
    %cst_49 = arith.constant 9.99999997E-7 : f32
    %151 = vector.broadcast %cst_49 : f32 to vector<8x1xf32>
    %152 = arith.addf %150, %151 : vector<8x1xf32>
    %153 = math.rsqrt %152 : vector<8x1xf32>
    %154 = vector.broadcast %153 : vector<8x1xf32> to vector<8x32xf32>
    %155 = arith.mulf %145, %154 : vector<8x32xf32>
    %156 = vector.shape_cast %137 : vector<32xf32> to vector<1x32xf32>
    %157 = vector.broadcast %156 : vector<1x32xf32> to vector<8x32xf32>
    %158 = arith.mulf %155, %157 : vector<8x32xf32>
    %159 = vector.shape_cast %139 : vector<32xf32> to vector<1x32xf32>
    %160 = vector.broadcast %159 : vector<1x32xf32> to vector<8x32xf32>
    %161 = arith.addf %158, %160 : vector<8x32xf32>
    %c0_50 = arith.constant 0 : index
    %c0_51 = arith.constant 0 : index
    %c0_52 = arith.constant 0 : index
    %162 = vector.load %arg14[%c0_50, %c0_51, %c0_52] : memref<1x8x32xf32, #tpu.memory_space<vmem>>, vector<1x8x32xf32>
    %163 = vector.shape_cast %162 : vector<1x8x32xf32> to vector<8x32xf32>
    %164 = vector.shape_cast %161 : vector<8x32xf32> to vector<1x8x32xf32>
    tpu.vector_store %arg14[%c0_50, %c0_51, %c0_52], %164 {strides = array<i32>} : memref<1x8x32xf32, #tpu.memory_space<vmem>>, vector<1x8x32xf32>,
    return
  }
  func.func @transform_0(%arg0: i32) -> (i32, i32, i32) {
    %c0_i32 = arith.constant 0 : i32
    %c0_i32_0 = arith.constant 0 : i32
    %c0_i32_1 = arith.constant 0 : i32
    return %arg0, %c0_i32, %c0_i32_0 : i32, i32, i32
  }
  func.func @transform_1(%arg0: i32) -> (i32, i32) {
    %c0_i32 = arith.constant 0 : i32
    %c0_i32_0 = arith.constant 0 : i32
    %c0_i32_1 = arith.constant 0 : i32
    return %c0_i32, %c0_i32_0 : i32, i32
  }
  func.func @transform_2(%arg0: i32) -> (i32, i32) {
    %c0_i32 = arith.constant 0 : i32
    %c0_i32_0 = arith.constant 0 : i32
    %c0_i32_1 = arith.constant 0 : i32
    return %c0_i32, %c0_i32_0 : i32, i32
  }
  func.func @transform_3(%arg0: i32) -> (i32, i32) {
    %c0_i32 = arith.constant 0 : i32
    %c0_i32_0 = arith.constant 0 : i32
    %c0_i32_1 = arith.constant 0 : i32
    return %c0_i32, %c0_i32_0 : i32, i32
  }
  func.func @transform_4(%arg0: i32) -> (i32, i32) {
    %c0_i32 = arith.constant 0 : i32
    %c0_i32_0 = arith.constant 0 : i32
    %c0_i32_1 = arith.constant 0 : i32
    return %c0_i32, %c0_i32_0 : i32, i32
  }
  func.func @transform_5(%arg0: i32) -> (i32, i32) {
    %c0_i32 = arith.constant 0 : i32
    %c0_i32_0 = arith.constant 0 : i32
    %c0_i32_1 = arith.constant 0 : i32
    return %c0_i32, %c0_i32_0 : i32, i32
  }
  func.func @transform_6(%arg0: i32) -> (i32, i32) {
    %c0_i32 = arith.constant 0 : i32
    %c0_i32_0 = arith.constant 0 : i32
    %c0_i32_1 = arith.constant 0 : i32
    return %c0_i32, %c0_i32_0 : i32, i32
  }
  func.func @transform_7(%arg0: i32) -> (i32, i32) {
    %c0_i32 = arith.constant 0 : i32
    %c0_i32_0 = arith.constant 0 : i32
    %c0_i32_1 = arith.constant 0 : i32
    return %c0_i32, %c0_i32_0 : i32, i32
  }
  func.func @transform_8(%arg0: i32) -> (i32, i32) {
    %c0_i32 = arith.constant 0 : i32
    %c0_i32_0 = arith.constant 0 : i32
    %c0_i32_1 = arith.constant 0 : i32
    return %c0_i32, %c0_i32_0 : i32, i32
  }
  func.func @transform_9(%arg0: i32) -> (i32, i32) {
    %c0_i32 = arith.constant 0 : i32
    %c0_i32_0 = arith.constant 0 : i32
    %c0_i32_1 = arith.constant 0 : i32
    return %c0_i32, %c0_i32_0 : i32, i32
  }
  func.func @transform_10(%arg0: i32) -> (i32, i32) {
    %c0_i32 = arith.constant 0 : i32
    %c0_i32_0 = arith.constant 0 : i32
    %c0_i32_1 = arith.constant 0 : i32
    return %c0_i32, %c0_i32_0 : i32, i32
  }
  func.func @transform_11(%arg0: i32) -> (i32, i32) {
    %c0_i32 = arith.constant 0 : i32
    %c0_i32_0 = arith.constant 0 : i32
    %c0_i32_1 = arith.constant 0 : i32
    return %c0_i32, %c0_i32_0 : i32, i32
  }
  func.func @transform_12(%arg0: i32) -> (i32, i32) {
    %c0_i32 = arith.constant 0 : i32
    %c0_i32_0 = arith.constant 0 : i32
    %c0_i32_1 = arith.constant 0 : i32
    return %c0_i32, %c0_i32_0 : i32, i32
  }
  func.func @transform_13(%arg0: i32) -> (i32, i32, i32) {
    %c0_i32 = arith.constant 0 : i32
    %c0_i32_0 = arith.constant 0 : i32
    %c0_i32_1 = arith.constant 0 : i32
    return %arg0, %c0_i32, %c0_i32_0 : i32, i32, i32
  }
}

module attributes {stable_mosaic.version = 11 : i64} {
  func.func @encoder_layer_kernel(%arg0: i32, %arg1: memref<1x8x32xbf16, #tpu.memory_space<vmem>>, %arg2: memref<32x96xbf16, #tpu.memory_space<vmem>>, %arg3: memref<32x32xbf16, #tpu.memory_space<vmem>>, %arg4: memref<1x32xf32, #tpu.memory_space<vmem>>, %arg5: memref<1x32xf32, #tpu.memory_space<vmem>>, %arg6: memref<1x32xf32, #tpu.memory_space<vmem>>, %arg7: memref<1x32xf32, #tpu.memory_space<vmem>>, %arg8: memref<32x64xbf16, #tpu.memory_space<vmem>>, %arg9: memref<1x64xf32, #tpu.memory_space<vmem>>, %arg10: memref<64x32xbf16, #tpu.memory_space<vmem>>, %arg11: memref<1x32xf32, #tpu.memory_space<vmem>>, %arg12: memref<1x32xf32, #tpu.memory_space<vmem>>, %arg13: memref<1x32xf32, #tpu.memory_space<vmem>>, %arg14: memref<1x8x32xbf16, #tpu.memory_space<vmem>>) attributes {dimension_semantics = [#tpu.dimension_semantics<parallel>], iteration_bounds = array<i64: 2>, scalar_prefetch = 0 : i64, scratch_operands = 0 : i64, tpu.core_type = #tpu.core_type<tc>, window_params = [{transform_indices = @transform_0, window_bounds = array<i64: 1, 8, 32>}, {pipeline_mode = #tpu.pipeline_mode<synchronous>, transform_indices = @transform_1, window_bounds = array<i64: 32, 96>}, {pipeline_mode = #tpu.pipeline_mode<synchronous>, transform_indices = @transform_2, window_bounds = array<i64: 32, 32>}, {pipeline_mode = #tpu.pipeline_mode<synchronous>, transform_indices = @transform_3, window_bounds = array<i64: 1, 32>}, {pipeline_mode = #tpu.pipeline_mode<synchronous>, transform_indices = @transform_4, window_bounds = array<i64: 1, 32>}, {pipeline_mode = #tpu.pipeline_mode<synchronous>, transform_indices = @transform_5, window_bounds = array<i64: 1, 32>}, {pipeline_mode = #tpu.pipeline_mode<synchronous>, transform_indices = @transform_6, window_bounds = array<i64: 1, 32>}, {pipeline_mode = #tpu.pipeline_mode<synchronous>, transform_indices = @transform_7, window_bounds = array<i64: 32, 64>}, {pipeline_mode = #tpu.pipeline_mode<synchronous>, transform_indices = @transform_8, window_bounds = array<i64: 1, 64>}, {pipeline_mode = #tpu.pipeline_mode<synchronous>, transform_indices = @transform_9, window_bounds = array<i64: 64, 32>}, {pipeline_mode = #tpu.pipeline_mode<synchronous>, transform_indices = @transform_10, window_bounds = array<i64: 1, 32>}, {pipeline_mode = #tpu.pipeline_mode<synchronous>, transform_indices = @transform_11, window_bounds = array<i64: 1, 32>}, {pipeline_mode = #tpu.pipeline_mode<synchronous>, transform_indices = @transform_12, window_bounds = array<i64: 1, 32>}, {transform_indices = @transform_13, window_bounds = array<i64: 1, 8, 32>}]} {
    %c0 = arith.constant 0 : index
    %c0_0 = arith.constant 0 : index
    %c0_1 = arith.constant 0 : index
    %0 = vector.load %arg1[%c0, %c0_0, %c0_1] : memref<1x8x32xbf16, #tpu.memory_space<vmem>>, vector<1x8x32xbf16>
    %1 = vector.shape_cast %0 : vector<1x8x32xbf16> to vector<8x32xbf16>
    %2 = arith.extf %1 : vector<8x32xbf16> to vector<8x32xf32>
    %c0_2 = arith.constant 0 : index
    %c0_3 = arith.constant 0 : index
    %3 = vector.load %arg4[%c0_2, %c0_3] : memref<1x32xf32, #tpu.memory_space<vmem>>, vector<1x32xf32>
    %4 = vector.shape_cast %3 : vector<1x32xf32> to vector<32xf32>
    %c0_4 = arith.constant 0 : index
    %c0_5 = arith.constant 0 : index
    %5 = vector.load %arg5[%c0_4, %c0_5] : memref<1x32xf32, #tpu.memory_space<vmem>>, vector<1x32xf32>
    %6 = vector.shape_cast %5 : vector<1x32xf32> to vector<32xf32>
    %cst = arith.constant dense<0.000000e+00> : vector<8xf32>
    %7 = vector.multi_reduction <add>, %2, %cst [1] : vector<8x32xf32> to vector<8xf32>
    %8 = vector.shape_cast %7 : vector<8xf32> to vector<8x1xf32>
    %cst_6 = arith.constant 3.200000e+01 : f32
    %9 = vector.broadcast %cst_6 : f32 to vector<8x1xf32>
    %10 = arith.divf %8, %9 : vector<8x1xf32>
    %11 = vector.broadcast %10 : vector<8x1xf32> to vector<8x32xf32>
    %12 = arith.subf %2, %11 : vector<8x32xf32>
    %13 = arith.mulf %12, %12 : vector<8x32xf32>
    %cst_7 = arith.constant dense<0.000000e+00> : vector<8xf32>
    %14 = vector.multi_reduction <add>, %13, %cst_7 [1] : vector<8x32xf32> to vector<8xf32>
    %15 = vector.shape_cast %14 : vector<8xf32> to vector<8x1xf32>
    %cst_8 = arith.constant 3.200000e+01 : f32
    %16 = vector.broadcast %cst_8 : f32 to vector<8x1xf32>
    %17 = arith.divf %15, %16 : vector<8x1xf32>
    %cst_9 = arith.constant 9.99999997E-7 : f32
    %18 = vector.broadcast %cst_9 : f32 to vector<8x1xf32>
    %19 = arith.addf %17, %18 : vector<8x1xf32>
    %20 = math.rsqrt %19 : vector<8x1xf32>
    %21 = vector.broadcast %20 : vector<8x1xf32> to vector<8x32xf32>
    %22 = arith.mulf %12, %21 : vector<8x32xf32>
    %23 = vector.shape_cast %4 : vector<32xf32> to vector<1x32xf32>
    %24 = vector.broadcast %23 : vector<1x32xf32> to vector<8x32xf32>
    %25 = arith.mulf %22, %24 : vector<8x32xf32>
    %26 = vector.shape_cast %6 : vector<32xf32> to vector<1x32xf32>
    %27 = vector.broadcast %26 : vector<1x32xf32> to vector<8x32xf32>
    %28 = arith.addf %25, %27 : vector<8x32xf32>
    %29 = arith.truncf %28 : vector<8x32xf32> to vector<8x32xbf16>
    %c0_10 = arith.constant 0 : index
    %c0_11 = arith.constant 0 : index
    %30 = vector.load %arg2[%c0_10, %c0_11] : memref<32x96xbf16, #tpu.memory_space<vmem>>, vector<32x96xbf16>
    %cst_12 = arith.constant dense<0.000000e+00> : vector<8x96xf32>
    %31 = tpu.matmul %29, %30, %cst_12 {dimension_numbers = #tpu.dot_dimension_numbers<[1], [0], [0], [1], [0, 0, 1, 1], [], []>} : vector<8x32xbf16>, vector<32x96xbf16>, vector<8x96xf32> -> vector<8x96xf32>
    %32 = arith.truncf %31 : vector<8x96xf32> to vector<8x96xbf16>
    %33 = vector.extract_strided_slice %32 {offsets = [0, 0], sizes = [8, 32], strides = [1, 1]} : vector<8x96xbf16> to vector<8x32xbf16>
    %34 = vector.extract_strided_slice %32 {offsets = [0, 32], sizes = [8, 32], strides = [1, 1]} : vector<8x96xbf16> to vector<8x32xbf16>
    %35 = vector.extract_strided_slice %32 {offsets = [0, 64], sizes = [8, 32], strides = [1, 1]} : vector<8x96xbf16> to vector<8x32xbf16>
    %36 = vector.extract_strided_slice %33 {offsets = [0, 0], sizes = [8, 8], strides = [1, 1]} : vector<8x32xbf16> to vector<8x8xbf16>
    %37 = vector.extract_strided_slice %33 {offsets = [0, 8], sizes = [8, 8], strides = [1, 1]} : vector<8x32xbf16> to vector<8x8xbf16>
    %38 = vector.extract_strided_slice %33 {offsets = [0, 16], sizes = [8, 8], strides = [1, 1]} : vector<8x32xbf16> to vector<8x8xbf16>
    %39 = vector.extract_strided_slice %33 {offsets = [0, 24], sizes = [8, 8], strides = [1, 1]} : vector<8x32xbf16> to vector<8x8xbf16>
    %40 = vector.shape_cast %36 : vector<8x8xbf16> to vector<1x8x8xbf16>
    %41 = vector.shape_cast %37 : vector<8x8xbf16> to vector<1x8x8xbf16>
    %42 = vector.shape_cast %38 : vector<8x8xbf16> to vector<1x8x8xbf16>
    %43 = vector.shape_cast %39 : vector<8x8xbf16> to vector<1x8x8xbf16>
    %44 = tpu.concatenate %40, %41, %42, %43 in 0 : vector<1x8x8xbf16>, vector<1x8x8xbf16>, vector<1x8x8xbf16>, vector<1x8x8xbf16> -> vector<4x8x8xbf16>
    %cst_13 = arith.constant 3.535160e-01 : bf16
    %45 = vector.broadcast %cst_13 : bf16 to vector<4x8x8xbf16>
    %46 = arith.mulf %44, %45 : vector<4x8x8xbf16>
    %47 = vector.extract_strided_slice %34 {offsets = [0, 0], sizes = [8, 8], strides = [1, 1]} : vector<8x32xbf16> to vector<8x8xbf16>
    %48 = vector.extract_strided_slice %34 {offsets = [0, 8], sizes = [8, 8], strides = [1, 1]} : vector<8x32xbf16> to vector<8x8xbf16>
    %49 = vector.extract_strided_slice %34 {offsets = [0, 16], sizes = [8, 8], strides = [1, 1]} : vector<8x32xbf16> to vector<8x8xbf16>
    %50 = vector.extract_strided_slice %34 {offsets = [0, 24], sizes = [8, 8], strides = [1, 1]} : vector<8x32xbf16> to vector<8x8xbf16>
    %51 = vector.shape_cast %47 : vector<8x8xbf16> to vector<1x8x8xbf16>
    %52 = vector.shape_cast %48 : vector<8x8xbf16> to vector<1x8x8xbf16>
    %53 = vector.shape_cast %49 : vector<8x8xbf16> to vector<1x8x8xbf16>
    %54 = vector.shape_cast %50 : vector<8x8xbf16> to vector<1x8x8xbf16>
    %55 = tpu.concatenate %51, %52, %53, %54 in 0 : vector<1x8x8xbf16>, vector<1x8x8xbf16>, vector<1x8x8xbf16>, vector<1x8x8xbf16> -> vector<4x8x8xbf16>
    %56 = vector.extract_strided_slice %35 {offsets = [0, 0], sizes = [8, 8], strides = [1, 1]} : vector<8x32xbf16> to vector<8x8xbf16>
    %57 = vector.extract_strided_slice %35 {offsets = [0, 8], sizes = [8, 8], strides = [1, 1]} : vector<8x32xbf16> to vector<8x8xbf16>
    %58 = vector.extract_strided_slice %35 {offsets = [0, 16], sizes = [8, 8], strides = [1, 1]} : vector<8x32xbf16> to vector<8x8xbf16>
    %59 = vector.extract_strided_slice %35 {offsets = [0, 24], sizes = [8, 8], strides = [1, 1]} : vector<8x32xbf16> to vector<8x8xbf16>
    %60 = vector.shape_cast %56 : vector<8x8xbf16> to vector<1x8x8xbf16>
    %61 = vector.shape_cast %57 : vector<8x8xbf16> to vector<1x8x8xbf16>
    %62 = vector.shape_cast %58 : vector<8x8xbf16> to vector<1x8x8xbf16>
    %63 = vector.shape_cast %59 : vector<8x8xbf16> to vector<1x8x8xbf16>
    %64 = tpu.concatenate %60, %61, %62, %63 in 0 : vector<1x8x8xbf16>, vector<1x8x8xbf16>, vector<1x8x8xbf16>, vector<1x8x8xbf16> -> vector<4x8x8xbf16>
    "tpu.trace_start"() <{level = 10 : i32, message = "hqd,hkd->hqk"}> : () -> ()
    %cst_14 = arith.constant dense<0.000000e+00> : vector<4x8x8xf32>
    %65 = tpu.matmul %46, %55, %cst_14 {dimension_numbers = #tpu.dot_dimension_numbers<[2], [2], [1], [1], [0, 0, 0, 1, 1, 1], [0], [0]>} : vector<4x8x8xbf16>, vector<4x8x8xbf16>, vector<4x8x8xf32> -> vector<4x8x8xf32>
    "tpu.trace_stop"() : () -> ()
    %cst_15 = arith.constant dense<0xFF800000> : vector<4x8xf32>
    %66 = vector.multi_reduction <maximumf>, %65, %cst_15 [2] : vector<4x8x8xf32> to vector<4x8xf32>
    %67 = vector.shape_cast %66 : vector<4x8xf32> to vector<4x8x1xf32>
    %68 = vector.broadcast %67 : vector<4x8x1xf32> to vector<4x8x8xf32>
    %69 = arith.subf %65, %68 : vector<4x8x8xf32>
    %70 = math.exp %69 : vector<4x8x8xf32>
    %cst_16 = arith.constant dense<0.000000e+00> : vector<4x8xf32>
    %71 = vector.multi_reduction <add>, %70, %cst_16 [2] : vector<4x8x8xf32> to vector<4x8xf32>
    %72 = vector.shape_cast %71 : vector<4x8xf32> to vector<4x8x1xf32>
    %73 = tpu.reciprocal %72 {approx = true} : vector<4x8x1xf32> -> vector<4x8x1xf32>
    %74 = vector.broadcast %73 : vector<4x8x1xf32> to vector<4x8x8xf32>
    %75 = arith.mulf %70, %74 : vector<4x8x8xf32>
    %76 = arith.truncf %75 : vector<4x8x8xf32> to vector<4x8x8xbf16>
    "tpu.trace_start"() <{level = 10 : i32, message = "hqk,hkd->hqd"}> : () -> ()
    %cst_17 = arith.constant dense<0.000000e+00> : vector<4x8x8xf32>
    %77 = tpu.matmul %76, %64, %cst_17 {dimension_numbers = #tpu.dot_dimension_numbers<[2], [1], [1], [2], [0, 0, 0, 1, 1, 2], [0], [0]>} : vector<4x8x8xbf16>, vector<4x8x8xbf16>, vector<4x8x8xf32> -> vector<4x8x8xf32>
    "tpu.trace_stop"() : () -> ()
    %78 = vector.extract_strided_slice %77 {offsets = [0, 0, 0], sizes = [1, 8, 8], strides = [1, 1, 1]} : vector<4x8x8xf32> to vector<1x8x8xf32>
    %79 = vector.shape_cast %78 : vector<1x8x8xf32> to vector<8x8xf32>
    %80 = vector.extract_strided_slice %77 {offsets = [1, 0, 0], sizes = [1, 8, 8], strides = [1, 1, 1]} : vector<4x8x8xf32> to vector<1x8x8xf32>
    %81 = vector.shape_cast %80 : vector<1x8x8xf32> to vector<8x8xf32>
    %82 = vector.extract_strided_slice %77 {offsets = [2, 0, 0], sizes = [1, 8, 8], strides = [1, 1, 1]} : vector<4x8x8xf32> to vector<1x8x8xf32>
    %83 = vector.shape_cast %82 : vector<1x8x8xf32> to vector<8x8xf32>
    %84 = vector.extract_strided_slice %77 {offsets = [3, 0, 0], sizes = [1, 8, 8], strides = [1, 1, 1]} : vector<4x8x8xf32> to vector<1x8x8xf32>
    %85 = vector.shape_cast %84 : vector<1x8x8xf32> to vector<8x8xf32>
    %86 = tpu.concatenate %79, %81, %83, %85 in 1 : vector<8x8xf32>, vector<8x8xf32>, vector<8x8xf32>, vector<8x8xf32> -> vector<8x32xf32>
    %87 = arith.truncf %86 : vector<8x32xf32> to vector<8x32xbf16>
    %c0_18 = arith.constant 0 : index
    %c0_19 = arith.constant 0 : index
    %88 = vector.load %arg3[%c0_18, %c0_19] : memref<32x32xbf16, #tpu.memory_space<vmem>>, vector<32x32xbf16>
    %cst_20 = arith.constant dense<0.000000e+00> : vector<8x32xf32>
    %89 = tpu.matmul %87, %88, %cst_20 {dimension_numbers = #tpu.dot_dimension_numbers<[1], [0], [0], [1], [0, 0, 1, 1], [], []>} : vector<8x32xbf16>, vector<32x32xbf16>, vector<8x32xf32> -> vector<8x32xf32>
    %90 = arith.addf %2, %89 : vector<8x32xf32>
    %c0_21 = arith.constant 0 : index
    %c0_22 = arith.constant 0 : index
    %91 = vector.load %arg6[%c0_21, %c0_22] : memref<1x32xf32, #tpu.memory_space<vmem>>, vector<1x32xf32>
    %92 = vector.shape_cast %91 : vector<1x32xf32> to vector<32xf32>
    %c0_23 = arith.constant 0 : index
    %c0_24 = arith.constant 0 : index
    %93 = vector.load %arg7[%c0_23, %c0_24] : memref<1x32xf32, #tpu.memory_space<vmem>>, vector<1x32xf32>
    %94 = vector.shape_cast %93 : vector<1x32xf32> to vector<32xf32>
    %cst_25 = arith.constant dense<0.000000e+00> : vector<8xf32>
    %95 = vector.multi_reduction <add>, %90, %cst_25 [1] : vector<8x32xf32> to vector<8xf32>
    %96 = vector.shape_cast %95 : vector<8xf32> to vector<8x1xf32>
    %cst_26 = arith.constant 3.200000e+01 : f32
    %97 = vector.broadcast %cst_26 : f32 to vector<8x1xf32>
    %98 = arith.divf %96, %97 : vector<8x1xf32>
    %99 = vector.broadcast %98 : vector<8x1xf32> to vector<8x32xf32>
    %100 = arith.subf %90, %99 : vector<8x32xf32>
    %101 = arith.mulf %100, %100 : vector<8x32xf32>
    %cst_27 = arith.constant dense<0.000000e+00> : vector<8xf32>
    %102 = vector.multi_reduction <add>, %101, %cst_27 [1] : vector<8x32xf32> to vector<8xf32>
    %103 = vector.shape_cast %102 : vector<8xf32> to vector<8x1xf32>
    %cst_28 = arith.constant 3.200000e+01 : f32
    %104 = vector.broadcast %cst_28 : f32 to vector<8x1xf32>
    %105 = arith.divf %103, %104 : vector<8x1xf32>
    %cst_29 = arith.constant 9.99999997E-7 : f32
    %106 = vector.broadcast %cst_29 : f32 to vector<8x1xf32>
    %107 = arith.addf %105, %106 : vector<8x1xf32>
    %108 = math.rsqrt %107 : vector<8x1xf32>
    %109 = vector.broadcast %108 : vector<8x1xf32> to vector<8x32xf32>
    %110 = arith.mulf %100, %109 : vector<8x32xf32>
    %111 = vector.shape_cast %92 : vector<32xf32> to vector<1x32xf32>
    %112 = vector.broadcast %111 : vector<1x32xf32> to vector<8x32xf32>
    %113 = arith.mulf %110, %112 : vector<8x32xf32>
    %114 = vector.shape_cast %94 : vector<32xf32> to vector<1x32xf32>
    %115 = vector.broadcast %114 : vector<1x32xf32> to vector<8x32xf32>
    %116 = arith.addf %113, %115 : vector<8x32xf32>
    %117 = arith.truncf %116 : vector<8x32xf32> to vector<8x32xbf16>
    %c0_30 = arith.constant 0 : index
    %c0_31 = arith.constant 0 : index
    %118 = vector.load %arg8[%c0_30, %c0_31] : memref<32x64xbf16, #tpu.memory_space<vmem>>, vector<32x64xbf16>
    %cst_32 = arith.constant dense<0.000000e+00> : vector<8x64xf32>
    %119 = tpu.matmul %117, %118, %cst_32 {dimension_numbers = #tpu.dot_dimension_numbers<[1], [0], [0], [1], [0, 0, 1, 1], [], []>} : vector<8x32xbf16>, vector<32x64xbf16>, vector<8x64xf32> -> vector<8x64xf32>
    %c0_33 = arith.constant 0 : index
    %c0_34 = arith.constant 0 : index
    %120 = vector.load %arg9[%c0_33, %c0_34] : memref<1x64xf32, #tpu.memory_space<vmem>>, vector<1x64xf32>
    %121 = vector.shape_cast %120 : vector<1x64xf32> to vector<64xf32>
    %122 = vector.shape_cast %121 : vector<64xf32> to vector<1x64xf32>
    %123 = vector.broadcast %122 : vector<1x64xf32> to vector<8x64xf32>
    %124 = arith.addf %119, %123 : vector<8x64xf32>
    %cst_35 = arith.constant 0.000000e+00 : f32
    %125 = vector.broadcast %cst_35 : f32 to vector<8x64xf32>
    %126 = arith.maximumf %124, %125 : vector<8x64xf32>
    %127 = arith.truncf %126 : vector<8x64xf32> to vector<8x64xbf16>
    %c0_36 = arith.constant 0 : index
    %c0_37 = arith.constant 0 : index
    %128 = vector.load %arg10[%c0_36, %c0_37] : memref<64x32xbf16, #tpu.memory_space<vmem>>, vector<64x32xbf16>
    %cst_38 = arith.constant dense<0.000000e+00> : vector<8x32xf32>
    %129 = tpu.matmul %127, %128, %cst_38 {dimension_numbers = #tpu.dot_dimension_numbers<[1], [0], [0], [1], [0, 0, 1, 1], [], []>} : vector<8x64xbf16>, vector<64x32xbf16>, vector<8x32xf32> -> vector<8x32xf32>
    %c0_39 = arith.constant 0 : index
    %c0_40 = arith.constant 0 : index
    %130 = vector.load %arg11[%c0_39, %c0_40] : memref<1x32xf32, #tpu.memory_space<vmem>>, vector<1x32xf32>
    %131 = vector.shape_cast %130 : vector<1x32xf32> to vector<32xf32>
    %132 = vector.shape_cast %131 : vector<32xf32> to vector<1x32xf32>
    %133 = vector.broadcast %132 : vector<1x32xf32> to vector<8x32xf32>
    %134 = arith.addf %129, %133 : vector<8x32xf32>
    %135 = arith.addf %90, %134 : vector<8x32xf32>
    %136 = arith.truncf %135 : vector<8x32xf32> to vector<8x32xbf16>
    %c0_41 = arith.constant 0 : index
    %c0_42 = arith.constant 0 : index
    %c0_43 = arith.constant 0 : index
    %137 = vector.load %arg14[%c0_41, %c0_42, %c0_43] : memref<1x8x32xbf16, #tpu.memory_space<vmem>>, vector<1x8x32xbf16>
    %138 = vector.shape_cast %137 : vector<1x8x32xbf16> to vector<8x32xbf16>
    %139 = vector.shape_cast %136 : vector<8x32xbf16> to vector<1x8x32xbf16>
    tpu.vector_store %arg14[%c0_41, %c0_42, %c0_43], %139 {strides = array<i32>} : memref<1x8x32xbf16, #tpu.memory_space<vmem>>, vector<1x8x32xbf16>,
    return
  }
  func.func @transform_0(%arg0: i32) -> (i32, i32, i32) {
    %c0_i32 = arith.constant 0 : i32
    %c0_i32_0 = arith.constant 0 : i32
    %c0_i32_1 = arith.constant 0 : i32
    return %arg0, %c0_i32, %c0_i32_0 : i32, i32, i32
  }
  func.func @transform_1(%arg0: i32) -> (i32, i32) {
    %c0_i32 = arith.constant 0 : i32
    %c0_i32_0 = arith.constant 0 : i32
    %c0_i32_1 = arith.constant 0 : i32
    return %c0_i32, %c0_i32_0 : i32, i32
  }
  func.func @transform_2(%arg0: i32) -> (i32, i32) {
    %c0_i32 = arith.constant 0 : i32
    %c0_i32_0 = arith.constant 0 : i32
    %c0_i32_1 = arith.constant 0 : i32
    return %c0_i32, %c0_i32_0 : i32, i32
  }
  func.func @transform_3(%arg0: i32) -> (i32, i32) {
    %c0_i32 = arith.constant 0 : i32
    %c0_i32_0 = arith.constant 0 : i32
    %c0_i32_1 = arith.constant 0 : i32
    return %c0_i32, %c0_i32_0 : i32, i32
  }
  func.func @transform_4(%arg0: i32) -> (i32, i32) {
    %c0_i32 = arith.constant 0 : i32
    %c0_i32_0 = arith.constant 0 : i32
    %c0_i32_1 = arith.constant 0 : i32
    return %c0_i32, %c0_i32_0 : i32, i32
  }
  func.func @transform_5(%arg0: i32) -> (i32, i32) {
    %c0_i32 = arith.constant 0 : i32
    %c0_i32_0 = arith.constant 0 : i32
    %c0_i32_1 = arith.constant 0 : i32
    return %c0_i32, %c0_i32_0 : i32, i32
  }
  func.func @transform_6(%arg0: i32) -> (i32, i32) {
    %c0_i32 = arith.constant 0 : i32
    %c0_i32_0 = arith.constant 0 : i32
    %c0_i32_1 = arith.constant 0 : i32
    return %c0_i32, %c0_i32_0 : i32, i32
  }
  func.func @transform_7(%arg0: i32) -> (i32, i32) {
    %c0_i32 = arith.constant 0 : i32
    %c0_i32_0 = arith.constant 0 : i32
    %c0_i32_1 = arith.constant 0 : i32
    return %c0_i32, %c0_i32_0 : i32, i32
  }
  func.func @transform_8(%arg0: i32) -> (i32, i32) {
    %c0_i32 = arith.constant 0 : i32
    %c0_i32_0 = arith.constant 0 : i32
    %c0_i32_1 = arith.constant 0 : i32
    return %c0_i32, %c0_i32_0 : i32, i32
  }
  func.func @transform_9(%arg0: i32) -> (i32, i32) {
    %c0_i32 = arith.constant 0 : i32
    %c0_i32_0 = arith.constant 0 : i32
    %c0_i32_1 = arith.constant 0 : i32
    return %c0_i32, %c0_i32_0 : i32, i32
  }
  func.func @transform_10(%arg0: i32) -> (i32, i32) {
    %c0_i32 = arith.constant 0 : i32
    %c0_i32_0 = arith.constant 0 : i32
    %c0_i32_1 = arith.constant 0 : i32
    return %c0_i32, %c0_i32_0 : i32, i32
  }
  func.func @transform_11(%arg0: i32) -> (i32, i32) {
    %c0_i32 = arith.constant 0 : i32
    %c0_i32_0 = arith.constant 0 : i32
    %c0_i32_1 = arith.constant 0 : i32
    return %c0_i32, %c0_i32_0 : i32, i32
  }
  func.func @transform_12(%arg0: i32) -> (i32, i32) {
    %c0_i32 = arith.constant 0 : i32
    %c0_i32_0 = arith.constant 0 : i32
    %c0_i32_1 = arith.constant 0 : i32
    return %c0_i32, %c0_i32_0 : i32, i32
  }
  func.func @transform_13(%arg0: i32) -> (i32, i32, i32) {
    %c0_i32 = arith.constant 0 : i32
    %c0_i32_0 = arith.constant 0 : i32
    %c0_i32_1 = arith.constant 0 : i32
    return %arg0, %c0_i32, %c0_i32_0 : i32, i32, i32
  }
}

</mosaic_0001>

<llo_original>
// kernel: transformer_encoder.3
$region0: #{transformer_encoder.3}
  #allocation0 [shape = 'u32[]', space=smem, size = 0x4, offset = 0x4, fixed_abs, tag = 'smem constant byte address 0x4 - core index']
  #allocation1 [shape = 'u32[144,128]{1,0:T(1,128)}', space=vmem, size = 0x12000, scoped, tag = 'internal scratch']
  %s0 = inlined_call_operand.hbm [shape: bf16[2,8,32], index: 0, kind: input, shape index: {}]
  %s1 = inlined_call_operand.hbm [shape: bf16[32,96], index: 1, kind: input, shape index: {}]
  %s2 = inlined_call_operand.hbm [shape: bf16[32,32], index: 2, kind: input, shape index: {}]
  %s3 = inlined_call_operand.hbm [shape: f32[1,32], index: 3, kind: input, shape index: {}]
  %s4 = inlined_call_operand.hbm [shape: f32[1,32], index: 4, kind: input, shape index: {}]
  %s5 = inlined_call_operand.hbm [shape: f32[1,32], index: 5, kind: input, shape index: {}]
  %s6 = inlined_call_operand.hbm [shape: f32[1,32], index: 6, kind: input, shape index: {}]
  %s7 = inlined_call_operand.hbm [shape: bf16[32,64], index: 7, kind: input, shape index: {}]
  %s8 = inlined_call_operand.hbm [shape: f32[1,64], index: 8, kind: input, shape index: {}]
  %s9 = inlined_call_operand.hbm [shape: bf16[64,32], index: 9, kind: input, shape index: {}]
  %s10 = inlined_call_operand.hbm [shape: f32[1,32], index: 10, kind: input, shape index: {}]
  %s11 = inlined_call_operand.hbm [shape: f32[1,32], index: 11, kind: input, shape index: {}]
  %s12 = inlined_call_operand.hbm [shape: f32[1,32], index: 12, kind: input, shape index: {}]
  %s13 = inlined_call_operand.hbm [shape: f32[2,8,32], index: 13, kind: output, shape index: {}]
  %s14 = sld [smem:[#allocation0]]
  $region137: #{transformer_encoder.3} parent=0
    _
  %s16 = ssub.s32 1, %s14
  %s17 = scalar_select 0, %s16, %s14
  $region1: #{transformer_encoder.3} parent=0
    #allocation2 [shape = 'u8[4096]{0}', space=vmem, size = 0x1000, scoped, tag = 'input window, operand 0']
    #allocation3 [shape = 's32[2]{0}', space=sflag, size = 0x8, scoped, tag = 'scoped memory for transformer_encoder.3']
    #allocation4 [shape = 's32[2]{0}', space=sflag, size = 0x8, scoped, tag = 'scoped memory for transformer_encoder.3']
    #allocation5 [shape = 'u8[8192]{0}', space=vmem, size = 0x2000, scoped, tag = 'input window, operand 1, single buffered']
    #allocation6 [shape = 's32[1]{0}', space=sflag, size = 0x4, scoped, tag = 'scoped memory for transformer_encoder.3']
    #allocation7 [shape = 'u8[8192]{0}', space=vmem, size = 0x2000, scoped, tag = 'input window, operand 2, single buffered']
    #allocation8 [shape = 'u8[512]{0}', space=vmem, size = 0x400, scoped, tag = 'input window, operand 3, single buffered']
    #allocation9 [shape = 's32[1]{0}', space=sflag, size = 0x4, scoped, tag = 'scoped memory for transformer_encoder.3']
    #allocation10 [shape = 'u8[512]{0}', space=vmem, size = 0x400, scoped, tag = 'input window, operand 4, single buffered']
    #allocation11 [shape = 'u8[512]{0}', space=vmem, size = 0x400, scoped, tag = 'input window, operand 5, single buffered']
    #allocation12 [shape = 's32[1]{0}', space=sflag, size = 0x4, scoped, tag = 'scoped memory for transformer_encoder.3']
    #allocation13 [shape = 'u8[512]{0}', space=vmem, size = 0x400, scoped, tag = 'input window, operand 6, single buffered']
    #allocation14 [shape = 'u8[8192]{0}', space=vmem, size = 0x2000, scoped, tag = 'input window, operand 7, single buffered']
    #allocation15 [shape = 's32[1]{0}', space=sflag, size = 0x4, scoped, tag = 'scoped memory for transformer_encoder.3']
    #allocation16 [shape = 'u8[512]{0}', space=vmem, size = 0x400, scoped, tag = 'input window, operand 8, single buffered']
    #allocation17 [shape = 'u8[16384]{0}', space=vmem, size = 0x4000, scoped, tag = 'input window, operand 9, single buffered']
    #allocation18 [shape = 's32[1]{0}', space=sflag, size = 0x4, scoped, tag = 'scoped memory for transformer_encoder.3']
    #allocation19 [shape = 'u8[512]{0}', space=vmem, size = 0x400, scoped, tag = 'input window, operand 10, single buffered']
    #allocation20 [shape = 'u8[512]{0}', space=vmem, size = 0x400, scoped, tag = 'input window, operand 11, single buffered']
    #allocation21 [shape = 's32[1]{0}', space=sflag, size = 0x4, scoped, tag = 'scoped memory for transformer_encoder.3']
    #allocation22 [shape = 'u8[512]{0}', space=vmem, size = 0x400, scoped, tag = 'input window, operand 12, single buffered']
    #allocation23 [shape = 'u8[8192]{0}', space=vmem, size = 0x2000, scoped, tag = 'output window, operand 0']
    %18 = vsyncpa [#allocation3], 0
    %s19 = scalar_lea.sflag [#allocation3], 1
    %20 = vsyncpa %s19, 0
    %21 = vsyncpa [#allocation6], 0
    %22 = vsyncpa [#allocation9], 0
    %23 = vsyncpa [#allocation12], 0
    %24 = vsyncpa [#allocation15], 0
    %25 = vsyncpa [#allocation18], 0
    %26 = vsyncpa [#allocation21], 0
    %27 = vsyncpa [#allocation4], 0
    %s28 = scalar_lea.sflag [#allocation4], 1
    %29 = vsyncpa %s28, 0
    loop: start=0, step=1, limit=4
    $region2: #{transformer_encoder.3} parent=1 // loop_pre_header
      _
    $region3: #{transformer_encoder.3} parent=1 // loop_header
      %s31 = sphi 0, %s35
      %p32 = scmp.ge.s32.totalorder %s31, 4
      %s41 = sphi 0, %s43
      %s44 = sphi 0, %s41
      %s45 = sphi 0, %s44
      %s61 = sphi 0, %s45
      %s65 = sphi 0, %s65
      %s67 = sphi 0, %s65
      %s68 = sphi 0, %s67
      %s82 = sphi 0, %s68
      %s86 = sphi 0, %s86
      %s88 = sphi 0, %s86
      %s89 = sphi 0, %s88
      %s103 = sphi 0, %s89
      %s107 = sphi 0, %s107
      %s109 = sphi 0, %s107
      %s110 = sphi 0, %s109
      %s124 = sphi 0, %s110
      %s128 = sphi 0, %s128
      %s130 = sphi 0, %s128
      %s131 = sphi 0, %s130
      %s145 = sphi 0, %s131
      %s149 = sphi 0, %s149
      %s151 = sphi 0, %s149
      %s152 = sphi 0, %s151
      %s166 = sphi 0, %s152
      %s170 = sphi 0, %s170
      %s172 = sphi 0, %s170
      %s173 = sphi 0, %s172
      %s187 = sphi 0, %s173
      %s191 = sphi 0, %s191
      %s193 = sphi 0, %s191
      %s194 = sphi 0, %s193
      %s208 = sphi 0, %s194
      %s212 = sphi 0, %s212
      %s214 = sphi 0, %s212
      %s215 = sphi 0, %s214
      %s229 = sphi 0, %s215
      %s233 = sphi 0, %s233
      %s235 = sphi 0, %s233
      %s236 = sphi 0, %s235
      %s250 = sphi 0, %s236
      %s254 = sphi 0, %s254
      %s256 = sphi 0, %s254
      %s257 = sphi 0, %s256
      %s271 = sphi 0, %s257
      %s275 = sphi 0, %s275
      %s277 = sphi 0, %s275
      %s278 = sphi 0, %s277
      %s292 = sphi 0, %s278
      %s296 = sphi 0, %s296
      %s298 = sphi 0, %s296
      %s299 = sphi 0, %s298
      %s313 = sphi 0, %s299
      %s319 = sphi 0, %s321
      %s322 = sphi 0, %s319
      %s323 = sphi 0, %s322
      %s339 = sphi 0, %s323
    $region4: #{transformer_encoder.3} parent=1 // loop_header_branch
      %34 = sbr.rel (%p32) target = $region8
    $region5: #{transformer_encoder.3} parent=1 // loop_body
      %s36 = ssub.s32 %s31, 1
      %s37 = ssub.s32 %s31, 2
      %s38 = sadd.s32 %s31, 1
      %s39 = ssub.s32 %s31, %s38
      %p40 = scmp.eq.s32.totalorder %s39, 0
      %s42 = sadd.s32 %s41, 1
      %s43 = scalar_select %p40, %s41, %s42
      %p46 = pneg %p40
      %p47 = scmp.eq.s32.totalorder %s31, 1
      %p48 = por %p46, %p47
      %p49 = scmp.ne.s32.totalorder %s41, %s44
      %p50 = scmp.eq.s32.totalorder %s31, 0
      %p51 = por %p49, %p50
      %p52 = scmp.ne.s32.totalorder %s41, %s44
      %p53 = scmp.eq.s32.totalorder %s36, 1
      %p54 = por %p52, %p53
      %p55 = scmp.ne.s32.totalorder %s44, %s45
      %p56 = scmp.eq.s32.totalorder %s36, 0
      %p57 = por %p55, %p56
      %p58 = scmp.ne.s32.totalorder %s44, %s45
      %p59 = scmp.eq.s32.totalorder %s37, 1
      %p60 = por %p58, %p59
      %p62 = scmp.ne.s32.totalorder %s45, %s61
      %p63 = scmp.eq.s32.totalorder %s37, 0
      %p64 = por %p62, %p63
      %s66 = sadd.s32 %s65, 1
      %p69 = scmp.eq.s32.totalorder %s31, 1
      %p70 = scmp.ne.s32.totalorder %s65, %s67
      %p71 = scmp.eq.s32.totalorder %s31, 0
      %p72 = por %p70, %p71
      %p73 = scmp.ne.s32.totalorder %s65, %s67
      %p74 = scmp.eq.s32.totalorder %s36, 1
      %p75 = por %p73, %p74
      %p76 = scmp.ne.s32.totalorder %s67, %s68
      %p77 = scmp.eq.s32.totalorder %s36, 0
      %p78 = por %p76, %p77
      %p79 = scmp.ne.s32.totalorder %s67, %s68
      %p80 = scmp.eq.s32.totalorder %s37, 1
      %p81 = por %p79, %p80
      %p83 = scmp.ne.s32.totalorder %s68, %s82
      %p84 = scmp.eq.s32.totalorder %s37, 0
      %p85 = por %p83, %p84
      %s87 = sadd.s32 %s86, 1
      %p90 = scmp.eq.s32.totalorder %s31, 1
      %p91 = scmp.ne.s32.totalorder %s86, %s88
      %p92 = scmp.eq.s32.totalorder %s31, 0
      %p93 = por %p91, %p92
      %p94 = scmp.ne.s32.totalorder %s86, %s88
      %p95 = scmp.eq.s32.totalorder %s36, 1
      %p96 = por %p94, %p95
      %p97 = scmp.ne.s32.totalorder %s88, %s89
      %p98 = scmp.eq.s32.totalorder %s36, 0
      %p99 = por %p97, %p98
      %p100 = scmp.ne.s32.totalorder %s88, %s89
      %p101 = scmp.eq.s32.totalorder %s37, 1
      %p102 = por %p100, %p101
      %p104 = scmp.ne.s32.totalorder %s89, %s103
      %p105 = scmp.eq.s32.totalorder %s37, 0
      %p106 = por %p104, %p105
      %s108 = sadd.s32 %s107, 1
      %p111 = scmp.eq.s32.totalorder %s31, 1
      %p112 = scmp.ne.s32.totalorder %s107, %s109
      %p113 = scmp.eq.s32.totalorder %s31, 0
      %p114 = por %p112, %p113
      %p115 = scmp.ne.s32.totalorder %s107, %s109
      %p116 = scmp.eq.s32.totalorder %s36, 1
      %p117 = por %p115, %p116
      %p118 = scmp.ne.s32.totalorder %s109, %s110
      %p119 = scmp.eq.s32.totalorder %s36, 0
      %p120 = por %p118, %p119
      %p121 = scmp.ne.s32.totalorder %s109, %s110
      %p122 = scmp.eq.s32.totalorder %s37, 1
      %p123 = por %p121, %p122
      %p125 = scmp.ne.s32.totalorder %s110, %s124
      %p126 = scmp.eq.s32.totalorder %s37, 0
      %p127 = por %p125, %p126
      %s129 = sadd.s32 %s128, 1
      %p132 = scmp.eq.s32.totalorder %s31, 1
      %p133 = scmp.ne.s32.totalorder %s128, %s130
      %p134 = scmp.eq.s32.totalorder %s31, 0
      %p135 = por %p133, %p134
      %p136 = scmp.ne.s32.totalorder %s128, %s130
      %p137 = scmp.eq.s32.totalorder %s36, 1
      %p138 = por %p136, %p137
      %p139 = scmp.ne.s32.totalorder %s130, %s131
      %p140 = scmp.eq.s32.totalorder %s36, 0
      %p141 = por %p139, %p140
      %p142 = scmp.ne.s32.totalorder %s130, %s131
      %p143 = scmp.eq.s32.totalorder %s37, 1
      %p144 = por %p142, %p143
      %p146 = scmp.ne.s32.totalorder %s131, %s145
      %p147 = scmp.eq.s32.totalorder %s37, 0
      %p148 = por %p146, %p147
      %s150 = sadd.s32 %s149, 1
      %p153 = scmp.eq.s32.totalorder %s31, 1
      %p154 = scmp.ne.s32.totalorder %s149, %s151
      %p155 = scmp.eq.s32.totalorder %s31, 0
      %p156 = por %p154, %p155
      %p157 = scmp.ne.s32.totalorder %s149, %s151
      %p158 = scmp.eq.s32.totalorder %s36, 1
      %p159 = por %p157, %p158
      %p160 = scmp.ne.s32.totalorder %s151, %s152
      %p161 = scmp.eq.s32.totalorder %s36, 0
      %p162 = por %p160, %p161
      %p163 = scmp.ne.s32.totalorder %s151, %s152
      %p164 = scmp.eq.s32.totalorder %s37, 1
      %p165 = por %p163, %p164
      %p167 = scmp.ne.s32.totalorder %s152, %s166
      %p168 = scmp.eq.s32.totalorder %s37, 0
      %p169 = por %p167, %p168
      %s171 = sadd.s32 %s170, 1
      %p174 = scmp.eq.s32.totalorder %s31, 1
      %p175 = scmp.ne.s32.totalorder %s170, %s172
      %p176 = scmp.eq.s32.totalorder %s31, 0
      %p177 = por %p175, %p176
      %p178 = scmp.ne.s32.totalorder %s170, %s172
      %p179 = scmp.eq.s32.totalorder %s36, 1
      %p180 = por %p178, %p179
      %p181 = scmp.ne.s32.totalorder %s172, %s173
      %p182 = scmp.eq.s32.totalorder %s36, 0
      %p183 = por %p181, %p182
      %p184 = scmp.ne.s32.totalorder %s172, %s173
      %p185 = scmp.eq.s32.totalorder %s37, 1
      %p186 = por %p184, %p185
      %p188 = scmp.ne.s32.totalorder %s173, %s187
      %p189 = scmp.eq.s32.totalorder %s37, 0
      %p190 = por %p188, %p189
      %s192 = sadd.s32 %s191, 1
      %p195 = scmp.eq.s32.totalorder %s31, 1
      %p196 = scmp.ne.s32.totalorder %s191, %s193
      %p197 = scmp.eq.s32.totalorder %s31, 0
      %p198 = por %p196, %p197
      %p199 = scmp.ne.s32.totalorder %s191, %s193
      %p200 = scmp.eq.s32.totalorder %s36, 1
      %p201 = por %p199, %p200
      %p202 = scmp.ne.s32.totalorder %s193, %s194
      %p203 = scmp.eq.s32.totalorder %s36, 0
      %p204 = por %p202, %p203
      %p205 = scmp.ne.s32.totalorder %s193, %s194
      %p206 = scmp.eq.s32.totalorder %s37, 1
      %p207 = por %p205, %p206
      %p209 = scmp.ne.s32.totalorder %s194, %s208
      %p210 = scmp.eq.s32.totalorder %s37, 0
      %p211 = por %p209, %p210
      %s213 = sadd.s32 %s212, 1
      %p216 = scmp.eq.s32.totalorder %s31, 1
      %p217 = scmp.ne.s32.totalorder %s212, %s214
      %p218 = scmp.eq.s32.totalorder %s31, 0
      %p219 = por %p217, %p218
      %p220 = scmp.ne.s32.totalorder %s212, %s214
      %p221 = scmp.eq.s32.totalorder %s36, 1
      %p222 = por %p220, %p221
      %p223 = scmp.ne.s32.totalorder %s214, %s215
      %p224 = scmp.eq.s32.totalorder %s36, 0
      %p225 = por %p223, %p224
      %p226 = scmp.ne.s32.totalorder %s214, %s215
      %p227 = scmp.eq.s32.totalorder %s37, 1
      %p228 = por %p226, %p227
      %p230 = scmp.ne.s32.totalorder %s215, %s229
      %p231 = scmp.eq.s32.totalorder %s37, 0
      %p232 = por %p230, %p231
      %s234 = sadd.s32 %s233, 1
      %p237 = scmp.eq.s32.totalorder %s31, 1
      %p238 = scmp.ne.s32.totalorder %s233, %s235
      %p239 = scmp.eq.s32.totalorder %s31, 0
      %p240 = por %p238, %p239
      %p241 = scmp.ne.s32.totalorder %s233, %s235
      %p242 = scmp.eq.s32.totalorder %s36, 1
      %p243 = por %p241, %p242
      %p244 = scmp.ne.s32.totalorder %s235, %s236
      %p245 = scmp.eq.s32.totalorder %s36, 0
      %p246 = por %p244, %p245
      %p247 = scmp.ne.s32.totalorder %s235, %s236
      %p248 = scmp.eq.s32.totalorder %s37, 1
      %p249 = por %p247, %p248
      %p251 = scmp.ne.s32.totalorder %s236, %s250
      %p252 = scmp.eq.s32.totalorder %s37, 0
      %p253 = por %p251, %p252
      %s255 = sadd.s32 %s254, 1
      %p258 = scmp.eq.s32.totalorder %s31, 1
      %p259 = scmp.ne.s32.totalorder %s254, %s256
      %p260 = scmp.eq.s32.totalorder %s31, 0
      %p261 = por %p259, %p260
      %p262 = scmp.ne.s32.totalorder %s254, %s256
      %p263 = scmp.eq.s32.totalorder %s36, 1
      %p264 = por %p262, %p263
      %p265 = scmp.ne.s32.totalorder %s256, %s257
      %p266 = scmp.eq.s32.totalorder %s36, 0
      %p267 = por %p265, %p266
      %p268 = scmp.ne.s32.totalorder %s256, %s257
      %p269 = scmp.eq.s32.totalorder %s37, 1
      %p270 = por %p268, %p269
      %p272 = scmp.ne.s32.totalorder %s257, %s271
      %p273 = scmp.eq.s32.totalorder %s37, 0
      %p274 = por %p272, %p273
      %s276 = sadd.s32 %s275, 1
      %p279 = scmp.eq.s32.totalorder %s31, 1
      %p280 = scmp.ne.s32.totalorder %s275, %s277
      %p281 = scmp.eq.s32.totalorder %s31, 0
      %p282 = por %p280, %p281
      %p283 = scmp.ne.s32.totalorder %s275, %s277
      %p284 = scmp.eq.s32.totalorder %s36, 1
      %p285 = por %p283, %p284
      %p286 = scmp.ne.s32.totalorder %s277, %s278
      %p287 = scmp.eq.s32.totalorder %s36, 0
      %p288 = por %p286, %p287
      %p289 = scmp.ne.s32.totalorder %s277, %s278
      %p290 = scmp.eq.s32.totalorder %s37, 1
      %p291 = por %p289, %p290
      %p293 = scmp.ne.s32.totalorder %s278, %s292
      %p294 = scmp.eq.s32.totalorder %s37, 0
      %p295 = por %p293, %p294
      %s297 = sadd.s32 %s296, 1
      %p300 = scmp.eq.s32.totalorder %s31, 1
      %p301 = scmp.ne.s32.totalorder %s296, %s298
      %p302 = scmp.eq.s32.totalorder %s31, 0
      %p303 = por %p301, %p302
      %p304 = scmp.ne.s32.totalorder %s296, %s298
      %p305 = scmp.eq.s32.totalorder %s36, 1
      %p306 = por %p304, %p305
      %p307 = scmp.ne.s32.totalorder %s298, %s299
      %p308 = scmp.eq.s32.totalorder %s36, 0
      %p309 = por %p307, %p308
      %p310 = scmp.ne.s32.totalorder %s298, %s299
      %p311 = scmp.eq.s32.totalorder %s37, 1
      %p312 = por %p310, %p311
      %p314 = scmp.ne.s32.totalorder %s299, %s313
      %p315 = scmp.eq.s32.totalorder %s37, 0
      %p316 = por %p314, %p315
      %s317 = ssub.s32 %s31, %s38
      %p318 = scmp.eq.s32.totalorder %s317, 0
      %s320 = sadd.s32 %s319, 1
      %s321 = scalar_select %p318, %s319, %s320
      %p324 = pneg %p318
      %p325 = scmp.eq.s32.totalorder %s31, 1
      %p326 = por %p324, %p325
      %p327 = scmp.ne.s32.totalorder %s319, %s322
      %p328 = scmp.eq.s32.totalorder %s31, 0
      %p329 = por %p327, %p328
      %p330 = scmp.ne.s32.totalorder %s319, %s322
      %p331 = scmp.eq.s32.totalorder %s36, 1
      %p332 = por %p330, %p331
      %p333 = scmp.ne.s32.totalorder %s322, %s323
      %p334 = scmp.eq.s32.totalorder %s36, 0
      %p335 = por %p333, %p334
      %p336 = scmp.ne.s32.totalorder %s322, %s323
      %p337 = scmp.eq.s32.totalorder %s37, 1
      %p338 = por %p336, %p337
      %p340 = scmp.ne.s32.totalorder %s323, %s339
      %p341 = scmp.eq.s32.totalorder %s37, 0
      %p342 = por %p340, %p341
      %p343 = scmp.le.s32.totalorder 1, %s31
      %p344 = scmp.lt.s32.totalorder %s31, 3
      %p345 = pnand %p343, %p344
      %p346 = pneg %p345
      // Predicated region
      $region9: #{transformer_encoder.3} parent=5 // pred_check
        _
      $region10: #{transformer_encoder.3} parent=5 // pred_check_branch
        %348 = sbr.rel (%p345) target = $region12
      $region11: #{transformer_encoder.3} parent=5 // pred_region
        %s349 = ssub.s32 %s31, 1
        // Predicated region
        $region13: #{transformer_encoder.3} parent=11 // pred_check
          %p350 = pneg %p78
        $region14: #{transformer_encoder.3} parent=11 // pred_check_branch
          %352 = sbr.rel (%p350) target = $region16
        $region15: #{transformer_encoder.3} parent=11 // pred_region
          %s354 = ssub.s32 256, 256
          %355 = vsyncadd [#allocation6], %s354
          %s356 = sshll.u32 [#allocation5], 4
          %s357 = int_to_ptr.vmem [resolvable:$true] %s356
          %362 = dma.hbm_to_vmem [thread:$0]  %s1, 256, %s357, [#allocation6], 64, 64, 4
        $region16: #{transformer_encoder.3} parent=11 // pred_fallthru
          _
        // Predicated region
        $region17: #{transformer_encoder.3} parent=11 // pred_check
          %p363 = pneg %p99
        $region18: #{transformer_encoder.3} parent=11 // pred_check_branch
          %365 = sbr.rel (%p363) target = $region20
        $region19: #{transformer_encoder.3} parent=11 // pred_region
          %s367 = ssub.s32 256, 256
          %368 = vsyncadd [#allocation6], %s367
          %s369 = sshll.u32 [#allocation7], 4
          %s370 = int_to_ptr.vmem [resolvable:$true] %s369
          %375 = dma.hbm_to_vmem [thread:$0]  %s2, 256, %s370, [#allocation6], 64, 64, 4
        $region20: #{transformer_encoder.3} parent=11 // pred_fallthru
          _
        // Predicated region
        $region21: #{transformer_encoder.3} parent=11 // pred_check
          %p376 = pneg %p120
        $region22: #{transformer_encoder.3} parent=11 // pred_check_branch
          %378 = sbr.rel (%p376) target = $region24
        $region23: #{transformer_encoder.3} parent=11 // pred_region
          %s380 = ssub.s32 16, 16
          %381 = vsyncadd [#allocation9], %s380
          %s383 = sshll.u32 [#allocation8], 4
          %s384 = int_to_ptr.vmem [resolvable:$true] %s383
          %386 = dma.hbm_to_vmem [thread:$0]  %s3, 16, %s384, [#allocation9]
        $region24: #{transformer_encoder.3} parent=11 // pred_fallthru
          _
        // Predicated region
        $region25: #{transformer_encoder.3} parent=11 // pred_check
          %p387 = pneg %p141
        $region26: #{transformer_encoder.3} parent=11 // pred_check_branch
          %389 = sbr.rel (%p387) target = $region28
        $region27: #{transformer_encoder.3} parent=11 // pred_region
          %s391 = ssub.s32 16, 16
          %392 = vsyncadd [#allocation9], %s391
          %s394 = sshll.u32 [#allocation10], 4
          %s395 = int_to_ptr.vmem [resolvable:$true] %s394
          %397 = dma.hbm_to_vmem [thread:$0]  %s4, 16, %s395, [#allocation9]
        $region28: #{transformer_encoder.3} parent=11 // pred_fallthru
          _
        // Predicated region
        $region29: #{transformer_encoder.3} parent=11 // pred_check
          %p398 = pneg %p162
        $region30: #{transformer_encoder.3} parent=11 // pred_check_branch
          %400 = sbr.rel (%p398) target = $region32
        $region31: #{transformer_encoder.3} parent=11 // pred_region
          %s402 = ssub.s32 16, 16
          %403 = vsyncadd [#allocation12], %s402
          %s405 = sshll.u32 [#allocation11], 4
          %s406 = int_to_ptr.vmem [resolvable:$true] %s405
          %408 = dma.hbm_to_vmem [thread:$0]  %s5, 16, %s406, [#allocation12]
        $region32: #{transformer_encoder.3} parent=11 // pred_fallthru
          _
        // Predicated region
        $region33: #{transformer_encoder.3} parent=11 // pred_check
          %p409 = pneg %p183
        $region34: #{transformer_encoder.3} parent=11 // pred_check_branch
          %411 = sbr.rel (%p409) target = $region36
        $region35: #{transformer_encoder.3} parent=11 // pred_region
          %s413 = ssub.s32 16, 16
          %414 = vsyncadd [#allocation12], %s413
          %s416 = sshll.u32 [#allocation13], 4
          %s417 = int_to_ptr.vmem [resolvable:$true] %s416
          %419 = dma.hbm_to_vmem [thread:$0]  %s6, 16, %s417, [#allocation12]
        $region36: #{transformer_encoder.3} parent=11 // pred_fallthru
          _
        // Predicated region
        $region37: #{transformer_encoder.3} parent=11 // pred_check
          %p420 = pneg %p204
        $region38: #{transformer_encoder.3} parent=11 // pred_check_branch
          %422 = sbr.rel (%p420) target = $region40
        $region39: #{transformer_encoder.3} parent=11 // pred_region
          %s424 = ssub.s32 256, 256
          %425 = vsyncadd [#allocation15], %s424
          %s426 = sshll.u32 [#allocation14], 4
          %s427 = int_to_ptr.vmem [resolvable:$true] %s426
          %432 = dma.hbm_to_vmem [thread:$0]  %s7, 256, %s427, [#allocation15], 64, 64, 4
        $region40: #{transformer_encoder.3} parent=11 // pred_fallthru
          _
        // Predicated region
        $region41: #{transformer_encoder.3} parent=11 // pred_check
          %p433 = pneg %p225
        $region42: #{transformer_encoder.3} parent=11 // pred_check_branch
          %435 = sbr.rel (%p433) target = $region44
        $region43: #{transformer_encoder.3} parent=11 // pred_region
          %s437 = ssub.s32 16, 16
          %438 = vsyncadd [#allocation15], %s437
          %s440 = sshll.u32 [#allocation16], 4
          %s441 = int_to_ptr.vmem [resolvable:$true] %s440
          %443 = dma.hbm_to_vmem [thread:$0]  %s8, 16, %s441, [#allocation15]
        $region44: #{transformer_encoder.3} parent=11 // pred_fallthru
          _
        // Predicated region
        $region45: #{transformer_encoder.3} parent=11 // pred_check
          %p444 = pneg %p246
        $region46: #{transformer_encoder.3} parent=11 // pred_check_branch
          %446 = sbr.rel (%p444) target = $region48
        $region47: #{transformer_encoder.3} parent=11 // pred_region
          %s448 = ssub.s32 512, 512
          %449 = vsyncadd [#allocation18], %s448
          %s450 = sshll.u32 [#allocation17], 4
          %s451 = int_to_ptr.vmem [resolvable:$true] %s450
          %456 = dma.hbm_to_vmem [thread:$0]  %s9, 512, %s451, [#allocation18], 64, 64, 4
        $region48: #{transformer_encoder.3} parent=11 // pred_fallthru
          _
        // Predicated region
        $region49: #{transformer_encoder.3} parent=11 // pred_check
          %p457 = pneg %p267
        $region50: #{transformer_encoder.3} parent=11 // pred_check_branch
          %459 = sbr.rel (%p457) target = $region52
        $region51: #{transformer_encoder.3} parent=11 // pred_region
          %s461 = ssub.s32 16, 16
          %462 = vsyncadd [#allocation18], %s461
          %s464 = sshll.u32 [#allocation19], 4
          %s465 = int_to_ptr.vmem [resolvable:$true] %s464
          %467 = dma.hbm_to_vmem [thread:$0]  %s10, 16, %s465, [#allocation18]
        $region52: #{transformer_encoder.3} parent=11 // pred_fallthru
          _
        // Predicated region
        $region53: #{transformer_encoder.3} parent=11 // pred_check
          %p468 = pneg %p288
        $region54: #{transformer_encoder.3} parent=11 // pred_check_branch
          %470 = sbr.rel (%p468) target = $region56
        $region55: #{transformer_encoder.3} parent=11 // pred_region
          %s472 = ssub.s32 16, 16
          %473 = vsyncadd [#allocation21], %s472
          %s475 = sshll.u32 [#allocation20], 4
          %s476 = int_to_ptr.vmem [resolvable:$true] %s475
          %478 = dma.hbm_to_vmem [thread:$0]  %s11, 16, %s476, [#allocation21]
        $region56: #{transformer_encoder.3} parent=11 // pred_fallthru
          _
        // Predicated region
        $region57: #{transformer_encoder.3} parent=11 // pred_check
          %p479 = pneg %p309
        $region58: #{transformer_encoder.3} parent=11 // pred_check_branch
          %481 = sbr.rel (%p479) target = $region60
        $region59: #{transformer_encoder.3} parent=11 // pred_region
          %s483 = ssub.s32 16, 16
          %484 = vsyncadd [#allocation21], %s483
          %s486 = sshll.u32 [#allocation22], 4
          %s487 = int_to_ptr.vmem [resolvable:$true] %s486
          %489 = dma.hbm_to_vmem [thread:$0]  %s12, 16, %s487, [#allocation21]
        $region60: #{transformer_encoder.3} parent=11 // pred_fallthru
          _
      $region12: #{transformer_encoder.3} parent=5 // pred_fallthru
        _
      %p490 = scmp.lt.s32.totalorder %s31, 2
      // Predicated region
      $region61: #{transformer_encoder.3} parent=5 // pred_check
        %p491 = pneg %p490
      $region62: #{transformer_encoder.3} parent=5 // pred_check_branch
        %493 = sbr.rel (%p491) target = $region64
      $region63: #{transformer_encoder.3} parent=5 // pred_region
        // Predicated region
        $region65: #{transformer_encoder.3} parent=63 // pred_check
          %p494 = pneg %p51
        $region66: #{transformer_encoder.3} parent=63 // pred_check_branch
          %496 = sbr.rel (%p494) target = $region68
        $region67: #{transformer_encoder.3} parent=63 // pred_region
          %s497 = sand.u32 %s41, 1
          %s498 = scalar_lea.sflag [#allocation3], %s497
          %s499 = sand.u32 %s41, 1
          %s500 = smul.addr %s499, 4
          %s501 = scalar_lea.vmem [#allocation2], %s500
          %s503 = ssub.s32 64, 64
          %504 = vsyncadd %s498, %s503
          %s505 = smul.addr %s31, 64
          %s506 = scalar_lea.hbm %s0, %s505
          %s508 = sshll.u32 %s501, 4
          %s509 = int_to_ptr.vmem [resolvable:$true] %s508
          %511 = dma.hbm_to_vmem [thread:$0]  %s506, 64, %s509, %s498
        $region68: #{transformer_encoder.3} parent=63 // pred_fallthru
          _
      $region64: #{transformer_encoder.3} parent=5 // pred_fallthru
        _
      %p512 = scmp.le.s32.totalorder 1, %s31
      %p513 = scmp.lt.s32.totalorder %s31, 3
      %p514 = pnand %p512, %p513
      %p515 = pneg %p514
      // Predicated region
      $region69: #{transformer_encoder.3} parent=5 // pred_check
        _
      $region70: #{transformer_encoder.3} parent=5 // pred_check_branch
        %517 = sbr.rel (%p514) target = $region72
      $region71: #{transformer_encoder.3} parent=5 // pred_region
        %s518 = ssub.s32 %s31, 1
        %s519 = sand.u32 %s44, 1
        %s520 = scalar_lea.sflag [#allocation3], %s519
        %s521 = sand.u32 %s44, 1
        %s522 = smul.addr %s521, 4
        %s523 = scalar_lea.vmem [#allocation2], %s522
        // Predicated region
        $region73: #{transformer_encoder.3} parent=71 // pred_check
          %p524 = pneg %p57
        $region74: #{transformer_encoder.3} parent=71 // pred_check_branch
          %526 = sbr.rel (%p524) target = $region76
        $region75: #{transformer_encoder.3} parent=71 // pred_region
          %527 = dma.done %s520, 64
        $region76: #{transformer_encoder.3} parent=71 // pred_fallthru
          _
        // Predicated region
        $region77: #{transformer_encoder.3} parent=71 // pred_check
          %p528 = pneg %p78
        $region78: #{transformer_encoder.3} parent=71 // pred_check_branch
          %530 = sbr.rel (%p528) target = $region80
        $region79: #{transformer_encoder.3} parent=71 // pred_region
          %531 = dma.done [#allocation6], 256
        $region80: #{transformer_encoder.3} parent=71 // pred_fallthru
          _
        // Predicated region
        $region81: #{transformer_encoder.3} parent=71 // pred_check
          %p532 = pneg %p99
        $region82: #{transformer_encoder.3} parent=71 // pred_check_branch
          %534 = sbr.rel (%p532) target = $region84
        $region83: #{transformer_encoder.3} parent=71 // pred_region
          %535 = dma.done [#allocation6], 256
        $region84: #{transformer_encoder.3} parent=71 // pred_fallthru
          _
        // Predicated region
        $region85: #{transformer_encoder.3} parent=71 // pred_check
          %p536 = pneg %p120
        $region86: #{transformer_encoder.3} parent=71 // pred_check_branch
          %538 = sbr.rel (%p536) target = $region88
        $region87: #{transformer_encoder.3} parent=71 // pred_region
          %539 = dma.done [#allocation9], 16
        $region88: #{transformer_encoder.3} parent=71 // pred_fallthru
          _
        // Predicated region
        $region89: #{transformer_encoder.3} parent=71 // pred_check
          %p540 = pneg %p141
        $region90: #{transformer_encoder.3} parent=71 // pred_check_branch
          %542 = sbr.rel (%p540) target = $region92
        $region91: #{transformer_encoder.3} parent=71 // pred_region
          %543 = dma.done [#allocation9], 16
        $region92: #{transformer_encoder.3} parent=71 // pred_fallthru
          _
        // Predicated region
        $region93: #{transformer_encoder.3} parent=71 // pred_check
          %p544 = pneg %p162
        $region94: #{transformer_encoder.3} parent=71 // pred_check_branch
          %546 = sbr.rel (%p544) target = $region96
        $region95: #{transformer_encoder.3} parent=71 // pred_region
          %547 = dma.done [#allocation12], 16
        $region96: #{transformer_encoder.3} parent=71 // pred_fallthru
          _
        // Predicated region
        $region97: #{transformer_encoder.3} parent=71 // pred_check
          %p548 = pneg %p183
        $region98: #{transformer_encoder.3} parent=71 // pred_check_branch
          %550 = sbr.rel (%p548) target = $region100
        $region99: #{transformer_encoder.3} parent=71 // pred_region
          %551 = dma.done [#allocation12], 16
        $region100: #{transformer_encoder.3} parent=71 // pred_fallthru
          _
        // Predicated region
        $region101: #{transformer_encoder.3} parent=71 // pred_check
          %p552 = pneg %p204
        $region102: #{transformer_encoder.3} parent=71 // pred_check_branch
          %554 = sbr.rel (%p552) target = $region104
        $region103: #{transformer_encoder.3} parent=71 // pred_region
          %555 = dma.done [#allocation15], 256
        $region104: #{transformer_encoder.3} parent=71 // pred_fallthru
          _
        // Predicated region
        $region105: #{transformer_encoder.3} parent=71 // pred_check
          %p556 = pneg %p225
        $region106: #{transformer_encoder.3} parent=71 // pred_check_branch
          %558 = sbr.rel (%p556) target = $region108
        $region107: #{transformer_encoder.3} parent=71 // pred_region
          %559 = dma.done [#allocation15], 16
        $region108: #{transformer_encoder.3} parent=71 // pred_fallthru
          _
        // Predicated region
        $region109: #{transformer_encoder.3} parent=71 // pred_check
          %p560 = pneg %p246
        $region110: #{transformer_encoder.3} parent=71 // pred_check_branch
          %562 = sbr.rel (%p560) target = $region112
        $region111: #{transformer_encoder.3} parent=71 // pred_region
          %563 = dma.done [#allocation18], 512
        $region112: #{transformer_encoder.3} parent=71 // pred_fallthru
          _
        // Predicated region
        $region113: #{transformer_encoder.3} parent=71 // pred_check
          %p564 = pneg %p267
        $region114: #{transformer_encoder.3} parent=71 // pred_check_branch
          %566 = sbr.rel (%p564) target = $region116
        $region115: #{transformer_encoder.3} parent=71 // pred_region
          %567 = dma.done [#allocation18], 16
        $region116: #{transformer_encoder.3} parent=71 // pred_fallthru
          _
        // Predicated region
        $region117: #{transformer_encoder.3} parent=71 // pred_check
          %p568 = pneg %p288
        $region118: #{transformer_encoder.3} parent=71 // pred_check_branch
          %570 = sbr.rel (%p568) target = $region120
        $region119: #{transformer_encoder.3} parent=71 // pred_region
          %571 = dma.done [#allocation21], 16
        $region120: #{transformer_encoder.3} parent=71 // pred_fallthru
          _
        // Predicated region
        $region121: #{transformer_encoder.3} parent=71 // pred_check
          %p572 = pneg %p309
        $region122: #{transformer_encoder.3} parent=71 // pred_check_branch
          %574 = sbr.rel (%p572) target = $region124
        $region123: #{transformer_encoder.3} parent=71 // pred_region
          %575 = dma.done [#allocation21], 16
        $region124: #{transformer_encoder.3} parent=71 // pred_fallthru
          _
        %s576 = sand.u32 %s44, 1
        %s577 = scalar_lea.sflag [#allocation3], %s576
        %s578 = sand.u32 %s44, 1
        %s579 = smul.addr %s578, 4
        %s580 = scalar_lea.vmem [#allocation2], %s579
        %p581 = pneg %p57
        %p582 = pneg %p54
        %p583 = pneg %p78
        %p584 = pneg %p75
        %p585 = pneg %p99
        %p586 = pneg %p96
        %p587 = pneg %p120
        %p588 = pneg %p117
        %p589 = pneg %p141
        %p590 = pneg %p138
        %p591 = pneg %p162
        %p592 = pneg %p159
        %p593 = pneg %p183
        %p594 = pneg %p180
        %p595 = pneg %p204
        %p596 = pneg %p201
        %p597 = pneg %p225
        %p598 = pneg %p222
        %p599 = pneg %p246
        %p600 = pneg %p243
        %p601 = pneg %p267
        %p602 = pneg %p264
        %p603 = pneg %p288
        %p604 = pneg %p285
        %p605 = pneg %p309
        %p606 = pneg %p306
        %p607 = pneg %p335
        %p608 = pneg %p332
        %s609 = sand.u32 %s322, 1
        %s610 = scalar_lea.sflag [#allocation4], %s609
        %s611 = sand.u32 %s322, 1
        %s612 = smul.addr %s611, 8
        %s613 = scalar_lea.vmem [#allocation23], %s612
        %v616 = vld [vmem:[%s523] sm:$0xf]
        %v617 = vunpack.c.l.bf16 %v616
        %v618 = vld [vmem:[#allocation8] sm:$0x1]
        %v619 = vld [vmem:[#allocation10] sm:$0x1]
        %vm620 = vcmask 261120
        %v621 = vsel %vm620, %v617, 0.0
        %622 = vadd.xlane.f32.xlu0 %v621
        %v623 = vpop.xlane.xlu0 %622
        %v624 = vrcp.pop 32.0
        %v625 = vmul.f32 %v623, %v624
        %v626 = vsub.f32 %v617, %v625
        %v627 = vmul.f32 %v626, %v626
        %v628 = vsel %vm620, %v627, 0.0
        %629 = vadd.xlane.f32.xlu0 %v628
        %v630 = vpop.xlane.xlu0 %629
        %v631 = vmul.f32 %v630, %v624
        %v632 = vadd.f32 %v631, 1e-06
        %v633 = vrsqrt.pop %v632
        %v634 = vmul.f32 %v626, %v633
        %v636 = vlaneseq
        %v637 = vshrl.u32 %v636, 7
        %v638 = vsub.s32 0, %v637
        %v639 = vrot.slane %v618, %v638
        %v641 = vmul.f32 %v634, %v639
        %v643 = vlaneseq
        %v644 = vshrl.u32 %v643, 7
        %v645 = vsub.s32 0, %v644
        %v646 = vrot.slane %v619, %v645
        %v648 = vadd.f32 %v641, %v646
        %v649 = vpack.c.bf16 %v648, %v648
        %v650 = vld [vmem:[#allocation5] sm:$0xf]
        %v651 = vld [vmem:[#allocation5 + $0x4] sm:$0xf]
        %v652 = vld [vmem:[#allocation5 + $0x8] sm:$0xf]
        %v653 = vld [vmem:[#allocation5 + $0xc] sm:$0xf]
        %v658 = vunpack.c.l.b16 %v650
        %v659 = vunpack.c.l.b16 %v651
        %v660 = vunpack.c.l.b16 %v652
        %v661 = vunpack.c.l.b16 %v653
        %v662 = vpack.c.b16 %v659, %v658
        %v663 = vpack.c.b16 %v661, %v660
        %v667 = vsel %vm620, %v649, 0
        %669 = vmatprep.subr.bf16.mxu0 0
        %670 = vmatpush1.bf16.msra.mxu0 %v662
        %671 = vmatprep.subr.bf16.mxu0 0
        %672 = vmatpush1.bf16.msra.mxu0 %v663
        %673 = vmatprep.subr.bf16.mxu0 0
        %674 = vmatpush1.bf16.msra.mxu0 0
        %675 = vmatprep.subr.bf16.mxu0 0
        %676 = vmatpush1.bf16.msra.mxu0 0
        %677 = vmatprep.subr.bf16.mxu0 0
        %678 = vmatpush1.bf16.msra.mxu0 0
        %679 = vmatprep.subr.bf16.mxu0 0
        %680 = vmatpush1.bf16.msra.mxu0 0
        %681 = vmatprep.subr.bf16.mxu0 0
        %682 = vmatpush1.bf16.msra.mxu0 0
        %683 = vmatprep.subr.bf16.mxu0 0
        %684 = vmatpush1.bf16.msra.mxu0 0
        %685 = vmatprep.subr.bf16.mxu0 0
        %686 = vmatpush1.bf16.msra.mxu0 0
        %687 = vmatprep.subr.bf16.mxu0 0
        %688 = vmatpush1.bf16.msra.mxu0 0
        %689 = vmatprep.subr.bf16.mxu0 0
        %690 = vmatpush1.bf16.msra.mxu0 0
        %691 = vmatprep.subr.bf16.mxu0 0
        %692 = vmatpush1.bf16.msra.mxu0 0
        %693 = vmatprep.subr.bf16.mxu0 0
        %694 = vmatpush1.bf16.msra.mxu0 0
        %695 = vmatprep.subr.bf16.mxu0 0
        %696 = vmatpush1.bf16.msra.mxu0 0
        %697 = vmatprep.subr.bf16.mxu0 0
        %698 = vmatpush1.bf16.msra.mxu0 0
        %699 = vmatprep.subr.bf16.mxu0 0
        %700 = vmatpush1.bf16.msra.mxu0 0
        %701 = vmatprep.mubr.bf16.mxu0 0
        %702 = vmatmul.mubr.bf16.gmra.mrb[0].mxu0 %v667
        %v703 = vpop.f32.mrb[0].mxu0
        %v704 = vadd.f32 0.0, %v703
        %v705 = vpop.f32.mrb[0].mxu0
        %v706 = vpop.f32.mrb[0].mxu0
        %v707 = vpop.f32.mrb[0].mxu0
        %708 = vdwg.mxu0
        %v709 = vpack.c.bf16 %v704, %v704
        %711 = vrot.lane.b32.xlu0 %v709, 120
        %v712 = vpop.permute.xlu0 %711
        %713 = vrot.lane.b32.xlu0 %v709, 112
        %v714 = vpop.permute.xlu0 %713
        %715 = vrot.lane.b32.xlu0 %v709, 104
        %v716 = vpop.permute.xlu0 %715
        %v718 = vunpack.c.l.s4 1983009808
        %v719 = vunpack.c.0.s8 %v718
        %v720 = vlaneseq
        %v721 = vshrl.u32 %v720, 7
        %v722 = vsub.s32 %v719, %v721
        %v723 = vrot.slane %v709, %v722
        %v726 = vunpack.c.l.s4 1983009808
        %v727 = vunpack.c.0.s8 %v726
        %v728 = vlaneseq
        %v729 = vshrl.u32 %v728, 7
        %v730 = vsub.s32 %v727, %v729
        %v731 = vrot.slane %v714, %v730
        %v732 = vcombine.low %v723, %v731
        %v733 = vcombine.high %v723, %v731
        %v735 = vunpack.c.l.s4 1934713408
        %v736 = vunpack.c.0.s8 %v735
        %v737 = vlaneseq
        %v738 = vshrl.u32 %v737, 7
        %v739 = vsub.s32 %v736, %v738
        %v740 = vrot.slane %v732, %v739
        %v742 = vunpack.c.l.s4 1934713408
        %v743 = vunpack.c.0.s8 %v742
        %v744 = vlaneseq
        %v745 = vshrl.u32 %v744, 7
        %v746 = vsub.s32 %v743, %v745
        %v747 = vrot.slane %v733, %v746
        %v748 = vcombine.high %v740, 0
        %v749 = vcombine.high %v747, 0
        %v752 = vunpack.c.l.s4 1983009808
        %v753 = vunpack.c.0.s8 %v752
        %v754 = vlaneseq
        %v755 = vshrl.u32 %v754, 7
        %v756 = vsub.s32 %v753, %v755
        %v757 = vrot.slane %v712, %v756
        %v760 = vunpack.c.l.s4 1983009808
        %v761 = vunpack.c.0.s8 %v760
        %v762 = vlaneseq
        %v763 = vshrl.u32 %v762, 7
        %v764 = vsub.s32 %v761, %v763
        %v765 = vrot.slane %v716, %v764
        %v766 = vcombine.low %v757, %v765
        %v767 = vcombine.high %v757, %v765
        %v769 = vunpack.c.l.s4 1934713408
        %v770 = vunpack.c.0.s8 %v769
        %v771 = vlaneseq
        %v772 = vshrl.u32 %v771, 7
        %v773 = vsub.s32 %v770, %v772
        %v774 = vrot.slane %v766, %v773
        %v776 = vunpack.c.l.s4 1934713408
        %v777 = vunpack.c.0.s8 %v776
        %v778 = vlaneseq
        %v779 = vshrl.u32 %v778, 7
        %v780 = vsub.s32 %v777, %v779
        %v781 = vrot.slane %v767, %v780
        %v782 = vcombine.high %v774, 0
        %v783 = vcombine.high %v781, 0
        %v786 = vpack.i.b16 %v774, %v740
        %v788 = vshrl.u32 %v740, 16
        %v789 = vshrl.u32 %v774, 16
        %v790 = vpack.i.b16 %v789, %v788
        %v794 = vpack.i.b16 %v782, %v748
        %v796 = vshrl.u32 %v748, 16
        %v797 = vshrl.u32 %v782, 16
        %v798 = vpack.i.b16 %v797, %v796
        %v802 = vpack.i.b16 %v781, %v747
        %v804 = vshrl.u32 %v747, 16
        %v805 = vshrl.u32 %v781, 16
        %v806 = vpack.i.b16 %v805, %v804
        %v810 = vpack.i.b16 %v783, %v749
        %v812 = vshrl.u32 %v749, 16
        %v813 = vshrl.u32 %v783, 16
        %v814 = vpack.i.b16 %v813, %v812
        %v816 = vcombine.low %v786, %v802
        %v818 = vunpack.c.l.s4 1983009808
        %v819 = vunpack.c.0.s8 %v818
        %v820 = vlaneseq
        %v821 = vshrl.u32 %v820, 7
        %v822 = vsub.s32 %v819, %v821
        %v823 = vrot.slane %v816, %v822
        %v824 = vcombine.low %v794, %v810
        %v826 = vunpack.c.l.s4 1983009808
        %v827 = vunpack.c.0.s8 %v826
        %v828 = vlaneseq
        %v829 = vshrl.u32 %v828, 7
        %v830 = vsub.s32 %v827, %v829
        %v831 = vrot.slane %v824, %v830
        %v832 = vcombine.low %v823, %v831
        %v834 = vunpack.c.l.s4 1934713408
        %v835 = vunpack.c.0.s8 %v834
        %v836 = vlaneseq
        %v837 = vshrl.u32 %v836, 7
        %v838 = vsub.s32 %v835, %v837
        %v839 = vrot.slane %v832, %v838
        %v840 = vcombine.high %v839, 0
        %v841 = vcombine.low %v790, %v806
        %v843 = vunpack.c.l.s4 1983009808
        %v844 = vunpack.c.0.s8 %v843
        %v845 = vlaneseq
        %v846 = vshrl.u32 %v845, 7
        %v847 = vsub.s32 %v844, %v846
        %v848 = vrot.slane %v841, %v847
        %v849 = vcombine.low %v798, %v814
        %v851 = vunpack.c.l.s4 1983009808
        %v852 = vunpack.c.0.s8 %v851
        %v853 = vlaneseq
        %v854 = vshrl.u32 %v853, 7
        %v855 = vsub.s32 %v852, %v854
        %v856 = vrot.slane %v849, %v855
        %v857 = vcombine.low %v848, %v856
        %v859 = vunpack.c.l.s4 1934713408
        %v860 = vunpack.c.0.s8 %v859
        %v861 = vlaneseq
        %v862 = vshrl.u32 %v861, 7
        %v863 = vsub.s32 %v860, %v862
        %v864 = vrot.slane %v857, %v863
        %v865 = vcombine.high %v864, 0
        %v868 = vpack.i.b16 %v864, %v839
        %v870 = vshrl.u32 %v839, 16
        %v871 = vshrl.u32 %v864, 16
        %v872 = vpack.i.b16 %v871, %v870
        %v876 = vpack.i.b16 %v865, %v840
        %v878 = vshrl.u32 %v840, 16
        %v879 = vshrl.u32 %v865, 16
        %v880 = vpack.i.b16 %v879, %v878
        %v882 = vmul.bf16 %v868, 1052065461
        %v883 = vmul.bf16 %v872, 1052065461
        %v884 = vmul.bf16 %v876, 1052065461
        %v885 = vmul.bf16 %v880, 1052065461
        %886 = vrot.lane.b32.xlu0 %v709, 96
        %v887 = vpop.permute.xlu0 %886
        %888 = vrot.lane.b32.xlu0 %v712, 96
        %v889 = vpop.permute.xlu0 %888
        %890 = vrot.lane.b32.xlu0 %v714, 96
        %v891 = vpop.permute.xlu0 %890
        %892 = vrot.lane.b32.xlu0 %v716, 96
        %v893 = vpop.permute.xlu0 %892
        %v896 = vunpack.c.l.s4 1983009808
        %v897 = vunpack.c.0.s8 %v896
        %v898 = vlaneseq
        %v899 = vshrl.u32 %v898, 7
        %v900 = vsub.s32 %v897, %v899
        %v901 = vrot.slane %v887, %v900
        %v904 = vunpack.c.l.s4 1983009808
        %v905 = vunpack.c.0.s8 %v904
        %v906 = vlaneseq
        %v907 = vshrl.u32 %v906, 7
        %v908 = vsub.s32 %v905, %v907
        %v909 = vrot.slane %v891, %v908
        %v910 = vcombine.low %v901, %v909
        %v911 = vcombine.high %v901, %v909
        %v913 = vunpack.c.l.s4 1934713408
        %v914 = vunpack.c.0.s8 %v913
        %v915 = vlaneseq
        %v916 = vshrl.u32 %v915, 7
        %v917 = vsub.s32 %v914, %v916
        %v918 = vrot.slane %v910, %v917
        %v920 = vunpack.c.l.s4 1934713408
        %v921 = vunpack.c.0.s8 %v920
        %v922 = vlaneseq
        %v923 = vshrl.u32 %v922, 7
        %v924 = vsub.s32 %v921, %v923
        %v925 = vrot.slane %v911, %v924
        %v926 = vcombine.high %v918, 0
        %v927 = vcombine.high %v925, 0
        %v930 = vunpack.c.l.s4 1983009808
        %v931 = vunpack.c.0.s8 %v930
        %v932 = vlaneseq
        %v933 = vshrl.u32 %v932, 7
        %v934 = vsub.s32 %v931, %v933
        %v935 = vrot.slane %v889, %v934
        %v938 = vunpack.c.l.s4 1983009808
        %v939 = vunpack.c.0.s8 %v938
        %v940 = vlaneseq
        %v941 = vshrl.u32 %v940, 7
        %v942 = vsub.s32 %v939, %v941
        %v943 = vrot.slane %v893, %v942
        %v944 = vcombine.low %v935, %v943
        %v945 = vcombine.high %v935, %v943
        %v947 = vunpack.c.l.s4 1934713408
        %v948 = vunpack.c.0.s8 %v947
        %v949 = vlaneseq
        %v950 = vshrl.u32 %v949, 7
        %v951 = vsub.s32 %v948, %v950
        %v952 = vrot.slane %v944, %v951
        %v954 = vunpack.c.l.s4 1934713408
        %v955 = vunpack.c.0.s8 %v954
        %v956 = vlaneseq
        %v957 = vshrl.u32 %v956, 7
        %v958 = vsub.s32 %v955, %v957
        %v959 = vrot.slane %v945, %v958
        %v960 = vcombine.high %v952, 0
        %v961 = vcombine.high %v959, 0
        %v964 = vpack.i.b16 %v952, %v918
        %v966 = vshrl.u32 %v918, 16
        %v967 = vshrl.u32 %v952, 16
        %v968 = vpack.i.b16 %v967, %v966
        %v972 = vpack.i.b16 %v960, %v926
        %v974 = vshrl.u32 %v926, 16
        %v975 = vshrl.u32 %v960, 16
        %v976 = vpack.i.b16 %v975, %v974
        %v980 = vpack.i.b16 %v959, %v925
        %v982 = vshrl.u32 %v925, 16
        %v983 = vshrl.u32 %v959, 16
        %v984 = vpack.i.b16 %v983, %v982
        %v988 = vpack.i.b16 %v961, %v927
        %v990 = vshrl.u32 %v927, 16
        %v991 = vshrl.u32 %v961, 16
        %v992 = vpack.i.b16 %v991, %v990
        %v994 = vcombine.low %v964, %v980
        %v996 = vunpack.c.l.s4 1983009808
        %v997 = vunpack.c.0.s8 %v996
        %v998 = vlaneseq
        %v999 = vshrl.u32 %v998, 7
        %v1000 = vsub.s32 %v997, %v999
        %v1001 = vrot.slane %v994, %v1000
        %v1002 = vcombine.low %v972, %v988
        %v1004 = vunpack.c.l.s4 1983009808
        %v1005 = vunpack.c.0.s8 %v1004
        %v1006 = vlaneseq
        %v1007 = vshrl.u32 %v1006, 7
        %v1008 = vsub.s32 %v1005, %v1007
        %v1009 = vrot.slane %v1002, %v1008
        %v1010 = vcombine.low %v1001, %v1009
        %v1012 = vunpack.c.l.s4 1934713408
        %v1013 = vunpack.c.0.s8 %v1012
        %v1014 = vlaneseq
        %v1015 = vshrl.u32 %v1014, 7
        %v1016 = vsub.s32 %v1013, %v1015
        %v1017 = vrot.slane %v1010, %v1016
        %v1018 = vcombine.high %v1017, 0
        %v1019 = vcombine.low %v968, %v984
        %v1021 = vunpack.c.l.s4 1983009808
        %v1022 = vunpack.c.0.s8 %v1021
        %v1023 = vlaneseq
        %v1024 = vshrl.u32 %v1023, 7
        %v1025 = vsub.s32 %v1022, %v1024
        %v1026 = vrot.slane %v1019, %v1025
        %v1027 = vcombine.low %v976, %v992
        %v1029 = vunpack.c.l.s4 1983009808
        %v1030 = vunpack.c.0.s8 %v1029
        %v1031 = vlaneseq
        %v1032 = vshrl.u32 %v1031, 7
        %v1033 = vsub.s32 %v1030, %v1032
        %v1034 = vrot.slane %v1027, %v1033
        %v1035 = vcombine.low %v1026, %v1034
        %v1037 = vunpack.c.l.s4 1934713408
        %v1038 = vunpack.c.0.s8 %v1037
        %v1039 = vlaneseq
        %v1040 = vshrl.u32 %v1039, 7
        %v1041 = vsub.s32 %v1038, %v1040
        %v1042 = vrot.slane %v1035, %v1041
        %v1043 = vcombine.high %v1042, 0
        %v1046 = vpack.i.b16 %v1042, %v1017
        %v1047 = vshrl.u32 %v1017, 16
        %v1048 = vshrl.u32 %v1042, 16
        %v1049 = vpack.i.b16 %v1048, %v1047
        %v1052 = vpack.i.b16 %v1043, %v1018
        %v1053 = vshrl.u32 %v1018, 16
        %v1054 = vshrl.u32 %v1043, 16
        %v1055 = vpack.i.b16 %v1054, %v1053
        %1056 = vrot.lane.b32.xlu0 %v709, 64
        %v1057 = vpop.permute.xlu0 %1056
        %1058 = vrot.lane.b32.xlu0 %v712, 64
        %v1059 = vpop.permute.xlu0 %1058
        %1060 = vrot.lane.b32.xlu0 %v714, 64
        %v1061 = vpop.permute.xlu0 %1060
        %1062 = vrot.lane.b32.xlu0 %v716, 64
        %v1063 = vpop.permute.xlu0 %1062
        %v1066 = vunpack.c.l.s4 1983009808
        %v1067 = vunpack.c.0.s8 %v1066
        %v1068 = vlaneseq
        %v1069 = vshrl.u32 %v1068, 7
        %v1070 = vsub.s32 %v1067, %v1069
        %v1071 = vrot.slane %v1057, %v1070
        %v1074 = vunpack.c.l.s4 1983009808
        %v1075 = vunpack.c.0.s8 %v1074
        %v1076 = vlaneseq
        %v1077 = vshrl.u32 %v1076, 7
        %v1078 = vsub.s32 %v1075, %v1077
        %v1079 = vrot.slane %v1061, %v1078
        %v1080 = vcombine.low %v1071, %v1079
        %v1081 = vcombine.high %v1071, %v1079
        %v1083 = vunpack.c.l.s4 1934713408
        %v1084 = vunpack.c.0.s8 %v1083
        %v1085 = vlaneseq
        %v1086 = vshrl.u32 %v1085, 7
        %v1087 = vsub.s32 %v1084, %v1086
        %v1088 = vrot.slane %v1080, %v1087
        %v1090 = vunpack.c.l.s4 1934713408
        %v1091 = vunpack.c.0.s8 %v1090
        %v1092 = vlaneseq
        %v1093 = vshrl.u32 %v1092, 7
        %v1094 = vsub.s32 %v1091, %v1093
        %v1095 = vrot.slane %v1081, %v1094
        %v1096 = vcombine.high %v1088, 0
        %v1097 = vcombine.high %v1095, 0
        %v1100 = vunpack.c.l.s4 1983009808
        %v1101 = vunpack.c.0.s8 %v1100
        %v1102 = vlaneseq
        %v1103 = vshrl.u32 %v1102, 7
        %v1104 = vsub.s32 %v1101, %v1103
        %v1105 = vrot.slane %v1059, %v1104
        %v1108 = vunpack.c.l.s4 1983009808
        %v1109 = vunpack.c.0.s8 %v1108
        %v1110 = vlaneseq
        %v1111 = vshrl.u32 %v1110, 7
        %v1112 = vsub.s32 %v1109, %v1111
        %v1113 = vrot.slane %v1063, %v1112
        %v1114 = vcombine.low %v1105, %v1113
        %v1115 = vcombine.high %v1105, %v1113
        %v1117 = vunpack.c.l.s4 1934713408
        %v1118 = vunpack.c.0.s8 %v1117
        %v1119 = vlaneseq
        %v1120 = vshrl.u32 %v1119, 7
        %v1121 = vsub.s32 %v1118, %v1120
        %v1122 = vrot.slane %v1114, %v1121
        %v1124 = vunpack.c.l.s4 1934713408
        %v1125 = vunpack.c.0.s8 %v1124
        %v1126 = vlaneseq
        %v1127 = vshrl.u32 %v1126, 7
        %v1128 = vsub.s32 %v1125, %v1127
        %v1129 = vrot.slane %v1115, %v1128
        %v1130 = vcombine.high %v1122, 0
        %v1131 = vcombine.high %v1129, 0
        %v1134 = vpack.i.b16 %v1122, %v1088
        %v1136 = vshrl.u32 %v1088, 16
        %v1137 = vshrl.u32 %v1122, 16
        %v1138 = vpack.i.b16 %v1137, %v1136
        %v1142 = vpack.i.b16 %v1130, %v1096
        %v1144 = vshrl.u32 %v1096, 16
        %v1145 = vshrl.u32 %v1130, 16
        %v1146 = vpack.i.b16 %v1145, %v1144
        %v1150 = vpack.i.b16 %v1129, %v1095
        %v1152 = vshrl.u32 %v1095, 16
        %v1153 = vshrl.u32 %v1129, 16
        %v1154 = vpack.i.b16 %v1153, %v1152
        %v1158 = vpack.i.b16 %v1131, %v1097
        %v1160 = vshrl.u32 %v1097, 16
        %v1161 = vshrl.u32 %v1131, 16
        %v1162 = vpack.i.b16 %v1161, %v1160
        %v1164 = vcombine.low %v1134, %v1150
        %v1166 = vunpack.c.l.s4 1983009808
        %v1167 = vunpack.c.0.s8 %v1166
        %v1168 = vlaneseq
        %v1169 = vshrl.u32 %v1168, 7
        %v1170 = vsub.s32 %v1167, %v1169
        %v1171 = vrot.slane %v1164, %v1170
        %v1172 = vcombine.low %v1142, %v1158
        %v1174 = vunpack.c.l.s4 1983009808
        %v1175 = vunpack.c.0.s8 %v1174
        %v1176 = vlaneseq
        %v1177 = vshrl.u32 %v1176, 7
        %v1178 = vsub.s32 %v1175, %v1177
        %v1179 = vrot.slane %v1172, %v1178
        %v1180 = vcombine.low %v1171, %v1179
        %v1182 = vunpack.c.l.s4 1934713408
        %v1183 = vunpack.c.0.s8 %v1182
        %v1184 = vlaneseq
        %v1185 = vshrl.u32 %v1184, 7
        %v1186 = vsub.s32 %v1183, %v1185
        %v1187 = vrot.slane %v1180, %v1186
        %v1188 = vcombine.high %v1187, 0
        %v1189 = vcombine.low %v1138, %v1154
        %v1191 = vunpack.c.l.s4 1983009808
        %v1192 = vunpack.c.0.s8 %v1191
        %v1193 = vlaneseq
        %v1194 = vshrl.u32 %v1193, 7
        %v1195 = vsub.s32 %v1192, %v1194
        %v1196 = vrot.slane %v1189, %v1195
        %v1197 = vcombine.low %v1146, %v1162
        %v1199 = vunpack.c.l.s4 1983009808
        %v1200 = vunpack.c.0.s8 %v1199
        %v1201 = vlaneseq
        %v1202 = vshrl.u32 %v1201, 7
        %v1203 = vsub.s32 %v1200, %v1202
        %v1204 = vrot.slane %v1197, %v1203
        %v1205 = vcombine.low %v1196, %v1204
        %v1207 = vunpack.c.l.s4 1934713408
        %v1208 = vunpack.c.0.s8 %v1207
        %v1209 = vlaneseq
        %v1210 = vshrl.u32 %v1209, 7
        %v1211 = vsub.s32 %v1208, %v1210
        %v1212 = vrot.slane %v1205, %v1211
        %v1213 = vcombine.high %v1212, 0
        %v1216 = vpack.i.b16 %v1212, %v1187
        %v1217 = vshrl.u32 %v1187, 16
        %v1218 = vshrl.u32 %v1212, 16
        %v1219 = vpack.i.b16 %v1218, %v1217
        %v1222 = vpack.i.b16 %v1213, %v1188
        %v1223 = vshrl.u32 %v1188, 16
        %v1224 = vshrl.u32 %v1213, 16
        %v1225 = vpack.i.b16 %v1224, %v1223
        %vm1226 = vcmask 64512
        %v1228 = vsel %vm1226, %v882, 0
        %v1231 = vsel %vm1226, %v1046, 0
        %1233 = vmatprep.subr.bf16.mxu0 0
        %1234 = vmatpush1.bf16.xpose.msra.mxu0 %v1231
        %1235 = vmatprep.subr.bf16.mxu0 0
        %1236 = vmatpush1.bf16.xpose.msra.mxu0 0
        %1237 = vmatprep.subr.bf16.mxu0 0
        %1238 = vmatpush1.bf16.xpose.msra.mxu0 0
        %1239 = vmatprep.subr.bf16.mxu0 0
        %1240 = vmatpush1.bf16.xpose.msra.mxu0 0
        %1241 = vmatprep.subr.bf16.mxu0 0
        %1242 = vmatpush1.bf16.xpose.msra.mxu0 0
        %1243 = vmatprep.subr.bf16.mxu0 0
        %1244 = vmatpush1.bf16.xpose.msra.mxu0 0
        %1245 = vmatprep.subr.bf16.mxu0 0
        %1246 = vmatpush1.bf16.xpose.msra.mxu0 0
        %1247 = vmatprep.subr.bf16.mxu0 0
        %1248 = vmatpush1.bf16.xpose.msra.mxu0 0
        %1249 = vmatprep.subr.bf16.mxu0 0
        %1250 = vmatpush1.bf16.xpose.msra.mxu0 0
        %1251 = vmatprep.subr.bf16.mxu0 0
        %1252 = vmatpush1.bf16.xpose.msra.mxu0 0
        %1253 = vmatprep.subr.bf16.mxu0 0
        %1254 = vmatpush1.bf16.xpose.msra.mxu0 0
        %1255 = vmatprep.subr.bf16.mxu0 0
        %1256 = vmatpush1.bf16.xpose.msra.mxu0 0
        %1257 = vmatprep.subr.bf16.mxu0 0
        %1258 = vmatpush1.bf16.xpose.msra.mxu0 0
        %1259 = vmatprep.subr.bf16.mxu0 0
        %1260 = vmatpush1.bf16.xpose.msra.mxu0 0
        %1261 = vmatprep.subr.bf16.mxu0 0
        %1262 = vmatpush1.bf16.xpose.msra.mxu0 0
        %1263 = vmatprep.subr.bf16.mxu0 0
        %1264 = vmatpush1.bf16.xpose.msra.mxu0 0
        %1265 = vmatprep.mubr.bf16.mxu0 0
        %1266 = vmatmul.mubr.bf16.gmra.mrb[0].mxu0 %v1228
        %v1267 = vpop.f32.mrb[0].mxu0
        %v1268 = vadd.f32 0.0, %v1267
        %v1269 = vpop.f32.mrb[0].mxu0
        %v1270 = vpop.f32.mrb[0].mxu0
        %v1271 = vpop.f32.mrb[0].mxu0
        %1272 = vdwg.mxu0
        %v1274 = vsel %vm1226, %v883, 0
        %v1277 = vsel %vm1226, %v1049, 0
        %1279 = vmatprep.subr.bf16.mxu0 0
        %1280 = vmatpush1.bf16.xpose.msra.mxu0 %v1277
        %1281 = vmatprep.subr.bf16.mxu0 0
        %1282 = vmatpush1.bf16.xpose.msra.mxu0 0
        %1283 = vmatprep.subr.bf16.mxu0 0
        %1284 = vmatpush1.bf16.xpose.msra.mxu0 0
        %1285 = vmatprep.subr.bf16.mxu0 0
        %1286 = vmatpush1.bf16.xpose.msra.mxu0 0
        %1287 = vmatprep.subr.bf16.mxu0 0
        %1288 = vmatpush1.bf16.xpose.msra.mxu0 0
        %1289 = vmatprep.subr.bf16.mxu0 0
        %1290 = vmatpush1.bf16.xpose.msra.mxu0 0
        %1291 = vmatprep.subr.bf16.mxu0 0
        %1292 = vmatpush1.bf16.xpose.msra.mxu0 0
        %1293 = vmatprep.subr.bf16.mxu0 0
        %1294 = vmatpush1.bf16.xpose.msra.mxu0 0
        %1295 = vmatprep.subr.bf16.mxu0 0
        %1296 = vmatpush1.bf16.xpose.msra.mxu0 0
        %1297 = vmatprep.subr.bf16.mxu0 0
        %1298 = vmatpush1.bf16.xpose.msra.mxu0 0
        %1299 = vmatprep.subr.bf16.mxu0 0
        %1300 = vmatpush1.bf16.xpose.msra.mxu0 0
        %1301 = vmatprep.subr.bf16.mxu0 0
        %1302 = vmatpush1.bf16.xpose.msra.mxu0 0
        %1303 = vmatprep.subr.bf16.mxu0 0
        %1304 = vmatpush1.bf16.xpose.msra.mxu0 0
        %1305 = vmatprep.subr.bf16.mxu0 0
        %1306 = vmatpush1.bf16.xpose.msra.mxu0 0
        %1307 = vmatprep.subr.bf16.mxu0 0
        %1308 = vmatpush1.bf16.xpose.msra.mxu0 0
        %1309 = vmatprep.subr.bf16.mxu0 0
        %1310 = vmatpush1.bf16.xpose.msra.mxu0 0
        %1311 = vmatprep.mubr.bf16.mxu0 0
        %1312 = vmatmul.mubr.bf16.gmra.mrb[0].mxu0 %v1274
        %v1313 = vpop.f32.mrb[0].mxu0
        %v1314 = vadd.f32 0.0, %v1313
        %v1315 = vpop.f32.mrb[0].mxu0
        %v1316 = vpop.f32.mrb[0].mxu0
        %v1317 = vpop.f32.mrb[0].mxu0
        %1318 = vdwg.mxu0
        %v1320 = vsel %vm1226, %v884, 0
        %v1323 = vsel %vm1226, %v1052, 0
        %1325 = vmatprep.subr.bf16.mxu0 0
        %1326 = vmatpush1.bf16.xpose.msra.mxu0 %v1323
        %1327 = vmatprep.subr.bf16.mxu0 0
        %1328 = vmatpush1.bf16.xpose.msra.mxu0 0
        %1329 = vmatprep.subr.bf16.mxu0 0
        %1330 = vmatpush1.bf16.xpose.msra.mxu0 0
        %1331 = vmatprep.subr.bf16.mxu0 0
        %1332 = vmatpush1.bf16.xpose.msra.mxu0 0
        %1333 = vmatprep.subr.bf16.mxu0 0
        %1334 = vmatpush1.bf16.xpose.msra.mxu0 0
        %1335 = vmatprep.subr.bf16.mxu0 0
        %1336 = vmatpush1.bf16.xpose.msra.mxu0 0
        %1337 = vmatprep.subr.bf16.mxu0 0
        %1338 = vmatpush1.bf16.xpose.msra.mxu0 0
        %1339 = vmatprep.subr.bf16.mxu0 0
        %1340 = vmatpush1.bf16.xpose.msra.mxu0 0
        %1341 = vmatprep.subr.bf16.mxu0 0
        %1342 = vmatpush1.bf16.xpose.msra.mxu0 0
        %1343 = vmatprep.subr.bf16.mxu0 0
        %1344 = vmatpush1.bf16.xpose.msra.mxu0 0
        %1345 = vmatprep.subr.bf16.mxu0 0
        %1346 = vmatpush1.bf16.xpose.msra.mxu0 0
        %1347 = vmatprep.subr.bf16.mxu0 0
        %1348 = vmatpush1.bf16.xpose.msra.mxu0 0
        %1349 = vmatprep.subr.bf16.mxu0 0
        %1350 = vmatpush1.bf16.xpose.msra.mxu0 0
        %1351 = vmatprep.subr.bf16.mxu0 0
        %1352 = vmatpush1.bf16.xpose.msra.mxu0 0
        %1353 = vmatprep.subr.bf16.mxu0 0
        %1354 = vmatpush1.bf16.xpose.msra.mxu0 0
        %1355 = vmatprep.subr.bf16.mxu0 0
        %1356 = vmatpush1.bf16.xpose.msra.mxu0 0
        %1357 = vmatprep.mubr.bf16.mxu0 0
        %1358 = vmatmul.mubr.bf16.gmra.mrb[0].mxu0 %v1320
        %v1359 = vpop.f32.mrb[0].mxu0
        %v1360 = vadd.f32 0.0, %v1359
        %v1361 = vpop.f32.mrb[0].mxu0
        %v1362 = vpop.f32.mrb[0].mxu0
        %v1363 = vpop.f32.mrb[0].mxu0
        %1364 = vdwg.mxu0
        %v1366 = vsel %vm1226, %v885, 0
        %v1369 = vsel %vm1226, %v1055, 0
        %1371 = vmatprep.subr.bf16.mxu0 0
        %1372 = vmatpush1.bf16.xpose.msra.mxu0 %v1369
        %1373 = vmatprep.subr.bf16.mxu0 0
        %1374 = vmatpush1.bf16.xpose.msra.mxu0 0
        %1375 = vmatprep.subr.bf16.mxu0 0
        %1376 = vmatpush1.bf16.xpose.msra.mxu0 0
        %1377 = vmatprep.subr.bf16.mxu0 0
        %1378 = vmatpush1.bf16.xpose.msra.mxu0 0
        %1379 = vmatprep.subr.bf16.mxu0 0
        %1380 = vmatpush1.bf16.xpose.msra.mxu0 0
        %1381 = vmatprep.subr.bf16.mxu0 0
        %1382 = vmatpush1.bf16.xpose.msra.mxu0 0
        %1383 = vmatprep.subr.bf16.mxu0 0
        %1384 = vmatpush1.bf16.xpose.msra.mxu0 0
        %1385 = vmatprep.subr.bf16.mxu0 0
        %1386 = vmatpush1.bf16.xpose.msra.mxu0 0
        %1387 = vmatprep.subr.bf16.mxu0 0
        %1388 = vmatpush1.bf16.xpose.msra.mxu0 0
        %1389 = vmatprep.subr.bf16.mxu0 0
        %1390 = vmatpush1.bf16.xpose.msra.mxu0 0
        %1391 = vmatprep.subr.bf16.mxu0 0
        %1392 = vmatpush1.bf16.xpose.msra.mxu0 0
        %1393 = vmatprep.subr.bf16.mxu0 0
        %1394 = vmatpush1.bf16.xpose.msra.mxu0 0
        %1395 = vmatprep.subr.bf16.mxu0 0
        %1396 = vmatpush1.bf16.xpose.msra.mxu0 0
        %1397 = vmatprep.subr.bf16.mxu0 0
        %1398 = vmatpush1.bf16.xpose.msra.mxu0 0
        %1399 = vmatprep.subr.bf16.mxu0 0
        %1400 = vmatpush1.bf16.xpose.msra.mxu0 0
        %1401 = vmatprep.subr.bf16.mxu0 0
        %1402 = vmatpush1.bf16.xpose.msra.mxu0 0
        %1403 = vmatprep.mubr.bf16.mxu0 0
        %1404 = vmatmul.mubr.bf16.gmra.mrb[0].mxu0 %v1366
        %v1405 = vpop.f32.mrb[0].mxu0
        %v1406 = vadd.f32 0.0, %v1405
        %v1407 = vpop.f32.mrb[0].mxu0
        %v1408 = vpop.f32.mrb[0].mxu0
        %v1409 = vpop.f32.mrb[0].mxu0
        %1410 = vdwg.mxu0
        %v1411 = vsel %vm1226, %v1268, -inf
        %1412 = vmax.xlane.f32.xlu0 %v1411
        %v1413 = vpop.xlane.xlu0 %1412
        %v1414 = vsel %vm1226, %v1314, -inf
        %1415 = vmax.xlane.f32.xlu0 %v1414
        %v1416 = vpop.xlane.xlu0 %1415
        %v1417 = vsel %vm1226, %v1360, -inf
        %1418 = vmax.xlane.f32.xlu0 %v1417
        %v1419 = vpop.xlane.xlu0 %1418
        %v1420 = vsel %vm1226, %v1406, -inf
        %1421 = vmax.xlane.f32.xlu0 %v1420
        %v1422 = vpop.xlane.xlu0 %1421
        %v1423 = vsub.f32 %v1268, %v1413
        %v1424 = vsub.f32 %v1314, %v1416
        %v1425 = vsub.f32 %v1360, %v1419
        %v1426 = vsub.f32 %v1406, %v1422
        %v1427 = vmul.f32 %v1423, 1.442695
        %v1428 = vpow.pop %v1427
        %v1429 = vmul.f32 %v1424, 1.442695
        %v1430 = vpow.pop %v1429
        %v1431 = vmul.f32 %v1425, 1.442695
        %v1432 = vpow.pop %v1431
        %v1433 = vmul.f32 %v1426, 1.442695
        %v1434 = vpow.pop %v1433
        %v1435 = vsel %vm1226, %v1428, 0.0
        %1436 = vadd.xlane.f32.xlu0 %v1435
        %v1437 = vpop.xlane.xlu0 %1436
        %v1438 = vsel %vm1226, %v1430, 0.0
        %1439 = vadd.xlane.f32.xlu0 %v1438
        %v1440 = vpop.xlane.xlu0 %1439
        %v1441 = vsel %vm1226, %v1432, 0.0
        %1442 = vadd.xlane.f32.xlu0 %v1441
        %v1443 = vpop.xlane.xlu0 %1442
        %v1444 = vsel %vm1226, %v1434, 0.0
        %1445 = vadd.xlane.f32.xlu0 %v1444
        %v1446 = vpop.xlane.xlu0 %1445
        %v1447 = vrcp.pop %v1437
        %v1448 = vrcp.pop %v1440
        %v1449 = vrcp.pop %v1443
        %v1450 = vrcp.pop %v1446
        %v1451 = vmul.f32 %v1428, %v1447
        %v1452 = vmul.f32 %v1430, %v1448
        %v1453 = vmul.f32 %v1432, %v1449
        %v1454 = vmul.f32 %v1434, %v1450
        %v1455 = vpack.c.bf16 %v1451, %v1451
        %v1456 = vpack.c.bf16 %v1452, %v1452
        %v1457 = vpack.c.bf16 %v1453, %v1453
        %v1458 = vpack.c.bf16 %v1454, %v1454
        %v1460 = vsel %vm1226, %v1455, 0
        %vm1462 = vcmask 1043456
        %v1464 = vsel %vm1462, %v1216, 0
        %1466 = vmatprep.subr.bf16.mxu0 0
        %1467 = vmatpush1.bf16.msra.mxu0 %v1464
        %1468 = vmatprep.subr.bf16.mxu0 0
        %1469 = vmatpush1.bf16.msra.mxu0 0
        %1470 = vmatprep.subr.bf16.mxu0 0
        %1471 = vmatpush1.bf16.msra.mxu0 0
        %1472 = vmatprep.subr.bf16.mxu0 0
        %1473 = vmatpush1.bf16.msra.mxu0 0
        %1474 = vmatprep.subr.bf16.mxu0 0
        %1475 = vmatpush1.bf16.msra.mxu0 0
        %1476 = vmatprep.subr.bf16.mxu0 0
        %1477 = vmatpush1.bf16.msra.mxu0 0
        %1478 = vmatprep.subr.bf16.mxu0 0
        %1479 = vmatpush1.bf16.msra.mxu0 0
        %1480 = vmatprep.subr.bf16.mxu0 0
        %1481 = vmatpush1.bf16.msra.mxu0 0
        %1482 = vmatprep.subr.bf16.mxu0 0
        %1483 = vmatpush1.bf16.msra.mxu0 0
        %1484 = vmatprep.subr.bf16.mxu0 0
        %1485 = vmatpush1.bf16.msra.mxu0 0
        %1486 = vmatprep.subr.bf16.mxu0 0
        %1487 = vmatpush1.bf16.msra.mxu0 0
        %1488 = vmatprep.subr.bf16.mxu0 0
        %1489 = vmatpush1.bf16.msra.mxu0 0
        %1490 = vmatprep.subr.bf16.mxu0 0
        %1491 = vmatpush1.bf16.msra.mxu0 0
        %1492 = vmatprep.subr.bf16.mxu0 0
        %1493 = vmatpush1.bf16.msra.mxu0 0
        %1494 = vmatprep.subr.bf16.mxu0 0
        %1495 = vmatpush1.bf16.msra.mxu0 0
        %1496 = vmatprep.subr.bf16.mxu0 0
        %1497 = vmatpush1.bf16.msra.mxu0 0
        %1498 = vmatprep.mubr.bf16.mxu0 0
        %1499 = vmatmul.mubr.bf16.gmra.mrb[0].mxu0 %v1460
        %v1500 = vpop.f32.mrb[0].mxu0
        %v1501 = vadd.f32 0.0, %v1500
        %v1502 = vpop.f32.mrb[0].mxu0
        %v1503 = vpop.f32.mrb[0].mxu0
        %v1504 = vpop.f32.mrb[0].mxu0
        %1505 = vdwg.mxu0
        %v1507 = vsel %vm1226, %v1456, 0
        %v1510 = vsel %vm1462, %v1219, 0
        %1512 = vmatprep.subr.bf16.mxu0 0
        %1513 = vmatpush1.bf16.msra.mxu0 %v1510
        %1514 = vmatprep.subr.bf16.mxu0 0
        %1515 = vmatpush1.bf16.msra.mxu0 0
        %1516 = vmatprep.subr.bf16.mxu0 0
        %1517 = vmatpush1.bf16.msra.mxu0 0
        %1518 = vmatprep.subr.bf16.mxu0 0
        %1519 = vmatpush1.bf16.msra.mxu0 0
        %1520 = vmatprep.subr.bf16.mxu0 0
        %1521 = vmatpush1.bf16.msra.mxu0 0
        %1522 = vmatprep.subr.bf16.mxu0 0
        %1523 = vmatpush1.bf16.msra.mxu0 0
        %1524 = vmatprep.subr.bf16.mxu0 0
        %1525 = vmatpush1.bf16.msra.mxu0 0
        %1526 = vmatprep.subr.bf16.mxu0 0
        %1527 = vmatpush1.bf16.msra.mxu0 0
        %1528 = vmatprep.subr.bf16.mxu0 0
        %1529 = vmatpush1.bf16.msra.mxu0 0
        %1530 = vmatprep.subr.bf16.mxu0 0
        %1531 = vmatpush1.bf16.msra.mxu0 0
        %1532 = vmatprep.subr.bf16.mxu0 0
        %1533 = vmatpush1.bf16.msra.mxu0 0
        %1534 = vmatprep.subr.bf16.mxu0 0
        %1535 = vmatpush1.bf16.msra.mxu0 0
        %1536 = vmatprep.subr.bf16.mxu0 0
        %1537 = vmatpush1.bf16.msra.mxu0 0
        %1538 = vmatprep.subr.bf16.mxu0 0
        %1539 = vmatpush1.bf16.msra.mxu0 0
        %1540 = vmatprep.subr.bf16.mxu0 0
        %1541 = vmatpush1.bf16.msra.mxu0 0
        %1542 = vmatprep.subr.bf16.mxu0 0
        %1543 = vmatpush1.bf16.msra.mxu0 0
        %1544 = vmatprep.mubr.bf16.mxu0 0
        %1545 = vmatmul.mubr.bf16.gmra.mrb[0].mxu0 %v1507
        %v1546 = vpop.f32.mrb[0].mxu0
        %v1547 = vadd.f32 0.0, %v1546
        %v1548 = vpop.f32.mrb[0].mxu0
        %v1549 = vpop.f32.mrb[0].mxu0
        %v1550 = vpop.f32.mrb[0].mxu0
        %1551 = vdwg.mxu0
        %v1553 = vsel %vm1226, %v1457, 0
        %v1556 = vsel %vm1462, %v1222, 0
        %1558 = vmatprep.subr.bf16.mxu0 0
        %1559 = vmatpush1.bf16.msra.mxu0 %v1556
        %1560 = vmatprep.subr.bf16.mxu0 0
        %1561 = vmatpush1.bf16.msra.mxu0 0
        %1562 = vmatprep.subr.bf16.mxu0 0
        %1563 = vmatpush1.bf16.msra.mxu0 0
        %1564 = vmatprep.subr.bf16.mxu0 0
        %1565 = vmatpush1.bf16.msra.mxu0 0
        %1566 = vmatprep.subr.bf16.mxu0 0
        %1567 = vmatpush1.bf16.msra.mxu0 0
        %1568 = vmatprep.subr.bf16.mxu0 0
        %1569 = vmatpush1.bf16.msra.mxu0 0
        %1570 = vmatprep.subr.bf16.mxu0 0
        %1571 = vmatpush1.bf16.msra.mxu0 0
        %1572 = vmatprep.subr.bf16.mxu0 0
        %1573 = vmatpush1.bf16.msra.mxu0 0
        %1574 = vmatprep.subr.bf16.mxu0 0
        %1575 = vmatpush1.bf16.msra.mxu0 0
        %1576 = vmatprep.subr.bf16.mxu0 0
        %1577 = vmatpush1.bf16.msra.mxu0 0
        %1578 = vmatprep.subr.bf16.mxu0 0
        %1579 = vmatpush1.bf16.msra.mxu0 0
        %1580 = vmatprep.subr.bf16.mxu0 0
        %1581 = vmatpush1.bf16.msra.mxu0 0
        %1582 = vmatprep.subr.bf16.mxu0 0
        %1583 = vmatpush1.bf16.msra.mxu0 0
        %1584 = vmatprep.subr.bf16.mxu0 0
        %1585 = vmatpush1.bf16.msra.mxu0 0
        %1586 = vmatprep.subr.bf16.mxu0 0
        %1587 = vmatpush1.bf16.msra.mxu0 0
        %1588 = vmatprep.subr.bf16.mxu0 0
        %1589 = vmatpush1.bf16.msra.mxu0 0
        %1590 = vmatprep.mubr.bf16.mxu0 0
        %1591 = vmatmul.mubr.bf16.gmra.mrb[0].mxu0 %v1553
        %v1592 = vpop.f32.mrb[0].mxu0
        %v1593 = vadd.f32 0.0, %v1592
        %v1594 = vpop.f32.mrb[0].mxu0
        %v1595 = vpop.f32.mrb[0].mxu0
        %v1596 = vpop.f32.mrb[0].mxu0
        %1597 = vdwg.mxu0
        %v1599 = vsel %vm1226, %v1458, 0
        %v1602 = vsel %vm1462, %v1225, 0
        %1604 = vmatprep.subr.bf16.mxu0 0
        %1605 = vmatpush1.bf16.msra.mxu0 %v1602
        %1606 = vmatprep.subr.bf16.mxu0 0
        %1607 = vmatpush1.bf16.msra.mxu0 0
        %1608 = vmatprep.subr.bf16.mxu0 0
        %1609 = vmatpush1.bf16.msra.mxu0 0
        %1610 = vmatprep.subr.bf16.mxu0 0
        %1611 = vmatpush1.bf16.msra.mxu0 0
        %1612 = vmatprep.subr.bf16.mxu0 0
        %1613 = vmatpush1.bf16.msra.mxu0 0
        %1614 = vmatprep.subr.bf16.mxu0 0
        %1615 = vmatpush1.bf16.msra.mxu0 0
        %1616 = vmatprep.subr.bf16.mxu0 0
        %1617 = vmatpush1.bf16.msra.mxu0 0
        %1618 = vmatprep.subr.bf16.mxu0 0
        %1619 = vmatpush1.bf16.msra.mxu0 0
        %1620 = vmatprep.subr.bf16.mxu0 0
        %1621 = vmatpush1.bf16.msra.mxu0 0
        %1622 = vmatprep.subr.bf16.mxu0 0
        %1623 = vmatpush1.bf16.msra.mxu0 0
        %1624 = vmatprep.subr.bf16.mxu0 0
        %1625 = vmatpush1.bf16.msra.mxu0 0
        %1626 = vmatprep.subr.bf16.mxu0 0
        %1627 = vmatpush1.bf16.msra.mxu0 0
        %1628 = vmatprep.subr.bf16.mxu0 0
        %1629 = vmatpush1.bf16.msra.mxu0 0
        %1630 = vmatprep.subr.bf16.mxu0 0
        %1631 = vmatpush1.bf16.msra.mxu0 0
        %1632 = vmatprep.subr.bf16.mxu0 0
        %1633 = vmatpush1.bf16.msra.mxu0 0
        %1634 = vmatprep.subr.bf16.mxu0 0
        %1635 = vmatpush1.bf16.msra.mxu0 0
        %1636 = vmatprep.mubr.bf16.mxu0 0
        %1637 = vmatmul.mubr.bf16.gmra.mrb[0].mxu0 %v1599
        %v1638 = vpop.f32.mrb[0].mxu0
        %v1639 = vadd.f32 0.0, %v1638
        %v1640 = vpop.f32.mrb[0].mxu0
        %v1641 = vpop.f32.mrb[0].mxu0
        %v1642 = vpop.f32.mrb[0].mxu0
        %1643 = vdwg.mxu0
        %v1644 = vcombine.low %v1501, %v1593
        %v1645 = vcombine.high %v1501, %v1593
        %v1647 = vunpack.c.l.s4 1983009808
        %v1648 = vunpack.c.0.s8 %v1647
        %v1649 = vlaneseq
        %v1650 = vshrl.u32 %v1649, 7
        %v1651 = vsub.s32 %v1648, %v1650
        %v1652 = vrot.slane %v1644, %v1651
        %v1654 = vunpack.c.l.s4 1983009808
        %v1655 = vunpack.c.0.s8 %v1654
        %v1656 = vlaneseq
        %v1657 = vshrl.u32 %v1656, 7
        %v1658 = vsub.s32 %v1655, %v1657
        %v1659 = vrot.slane %v1645, %v1658
        %v1660 = vcombine.low %v1547, %v1639
        %v1661 = vcombine.high %v1547, %v1639
        %v1663 = vunpack.c.l.s4 1983009808
        %v1664 = vunpack.c.0.s8 %v1663
        %v1665 = vlaneseq
        %v1666 = vshrl.u32 %v1665, 7
        %v1667 = vsub.s32 %v1664, %v1666
        %v1668 = vrot.slane %v1660, %v1667
        %v1670 = vunpack.c.l.s4 1983009808
        %v1671 = vunpack.c.0.s8 %v1670
        %v1672 = vlaneseq
        %v1673 = vshrl.u32 %v1672, 7
        %v1674 = vsub.s32 %v1671, %v1673
        %v1675 = vrot.slane %v1661, %v1674
        %v1676 = vcombine.low %v1652, %v1668
        %v1677 = vcombine.high %v1652, %v1668
        %v1679 = vunpack.c.l.s4 1934713408
        %v1680 = vunpack.c.0.s8 %v1679
        %v1681 = vlaneseq
        %v1682 = vshrl.u32 %v1681, 7
        %v1683 = vsub.s32 %v1680, %v1682
        %v1684 = vrot.slane %v1676, %v1683
        %v1686 = vunpack.c.l.s4 1934713408
        %v1687 = vunpack.c.0.s8 %v1686
        %v1688 = vlaneseq
        %v1689 = vshrl.u32 %v1688, 7
        %v1690 = vsub.s32 %v1687, %v1689
        %v1691 = vrot.slane %v1677, %v1690
        %v1692 = vcombine.low %v1659, %v1675
        %v1693 = vcombine.high %v1659, %v1675
        %v1695 = vunpack.c.l.s4 1934713408
        %v1696 = vunpack.c.0.s8 %v1695
        %v1697 = vlaneseq
        %v1698 = vshrl.u32 %v1697, 7
        %v1699 = vsub.s32 %v1696, %v1698
        %v1700 = vrot.slane %v1692, %v1699
        %v1702 = vunpack.c.l.s4 1934713408
        %v1703 = vunpack.c.0.s8 %v1702
        %v1704 = vlaneseq
        %v1705 = vshrl.u32 %v1704, 7
        %v1706 = vsub.s32 %v1703, %v1705
        %v1707 = vrot.slane %v1693, %v1706
        %v1708 = vcombine.high %v1684, 0.0
        %v1709 = vcombine.high %v1691, 0.0
        %v1710 = vcombine.high %v1700, 0.0
        %v1711 = vcombine.high %v1707, 0.0
        %v1712 = vcombine.low %v1684, %v1691
        %v1714 = vunpack.c.l.s4 1983009808
        %v1715 = vunpack.c.0.s8 %v1714
        %v1716 = vlaneseq
        %v1717 = vshrl.u32 %v1716, 7
        %v1718 = vsub.s32 %v1715, %v1717
        %v1719 = vrot.slane %v1712, %v1718
        %v1720 = vcombine.low %v1708, %v1709
        %v1722 = vunpack.c.l.s4 1983009808
        %v1723 = vunpack.c.0.s8 %v1722
        %v1724 = vlaneseq
        %v1725 = vshrl.u32 %v1724, 7
        %v1726 = vsub.s32 %v1723, %v1725
        %v1727 = vrot.slane %v1720, %v1726
        %v1728 = vcombine.low %v1700, %v1707
        %v1730 = vunpack.c.l.s4 1983009808
        %v1731 = vunpack.c.0.s8 %v1730
        %v1732 = vlaneseq
        %v1733 = vshrl.u32 %v1732, 7
        %v1734 = vsub.s32 %v1731, %v1733
        %v1735 = vrot.slane %v1728, %v1734
        %v1736 = vcombine.low %v1710, %v1711
        %v1738 = vunpack.c.l.s4 1983009808
        %v1739 = vunpack.c.0.s8 %v1738
        %v1740 = vlaneseq
        %v1741 = vshrl.u32 %v1740, 7
        %v1742 = vsub.s32 %v1739, %v1741
        %v1743 = vrot.slane %v1736, %v1742
        %v1744 = vcombine.low %v1719, %v1727
        %v1745 = vcombine.high %v1719, %v1727
        %v1747 = vunpack.c.l.s4 1934713408
        %v1748 = vunpack.c.0.s8 %v1747
        %v1749 = vlaneseq
        %v1750 = vshrl.u32 %v1749, 7
        %v1751 = vsub.s32 %v1748, %v1750
        %v1752 = vrot.slane %v1744, %v1751
        %v1754 = vunpack.c.l.s4 1934713408
        %v1755 = vunpack.c.0.s8 %v1754
        %v1756 = vlaneseq
        %v1757 = vshrl.u32 %v1756, 7
        %v1758 = vsub.s32 %v1755, %v1757
        %v1759 = vrot.slane %v1745, %v1758
        %v1760 = vcombine.low %v1735, %v1743
        %v1761 = vcombine.high %v1735, %v1743
        %v1763 = vunpack.c.l.s4 1934713408
        %v1764 = vunpack.c.0.s8 %v1763
        %v1765 = vlaneseq
        %v1766 = vshrl.u32 %v1765, 7
        %v1767 = vsub.s32 %v1764, %v1766
        %v1768 = vrot.slane %v1760, %v1767
        %v1770 = vunpack.c.l.s4 1934713408
        %v1771 = vunpack.c.0.s8 %v1770
        %v1772 = vlaneseq
        %v1773 = vshrl.u32 %v1772, 7
        %v1774 = vsub.s32 %v1771, %v1773
        %v1775 = vrot.slane %v1761, %v1774
        %v1776 = vcombine.low %v1752, %v1768
        %v1777 = vcombine.high %v1752, %v1768
        %v1778 = vcombine.low %v1759, %v1775
        %v1779 = vcombine.high %v1759, %v1775
        %1781 = vrot.lane.b32.xlu0 %v1777, 8
        %v1782 = vpop.permute.xlu0 %1781
        %1785 = vrot.lane.b32.xlu0 %v1778, 16
        %v1786 = vpop.permute.xlu0 %1785
        %1789 = vrot.lane.b32.xlu0 %v1779, 24
        %v1790 = vpop.permute.xlu0 %1789
        %v1792 = vsel %vm1226, %v1776, %v1782
        %vm1793 = vcmask 130048
        %v1794 = vsel %vm1793, %v1792, %v1786
        %vm1795 = vcmask 195584
        %v1796 = vsel %vm1795, %v1794, %v1790
        %v1797 = vpack.c.bf16 %v1796, %v1796
        %v1798 = vld [vmem:[#allocation7] sm:$0xf]
        %v1799 = vld [vmem:[#allocation7 + $0x4] sm:$0xf]
        %v1800 = vld [vmem:[#allocation7 + $0x8] sm:$0xf]
        %v1801 = vld [vmem:[#allocation7 + $0xc] sm:$0xf]
        %v1806 = vunpack.c.l.b16 %v1798
        %v1807 = vunpack.c.l.b16 %v1799
        %v1808 = vunpack.c.l.b16 %v1800
        %v1809 = vunpack.c.l.b16 %v1801
        %v1810 = vpack.c.b16 %v1807, %v1806
        %v1811 = vpack.c.b16 %v1809, %v1808
        %v1815 = vsel %vm620, %v1797, 0
        %1817 = vmatprep.subr.bf16.mxu0 0
        %1818 = vmatpush1.bf16.msra.mxu0 %v1810
        %1819 = vmatprep.subr.bf16.mxu0 0
        %1820 = vmatpush1.bf16.msra.mxu0 %v1811
        %1821 = vmatprep.subr.bf16.mxu0 0
        %1822 = vmatpush1.bf16.msra.mxu0 0
        %1823 = vmatprep.subr.bf16.mxu0 0
        %1824 = vmatpush1.bf16.msra.mxu0 0
        %1825 = vmatprep.subr.bf16.mxu0 0
        %1826 = vmatpush1.bf16.msra.mxu0 0
        %1827 = vmatprep.subr.bf16.mxu0 0
        %1828 = vmatpush1.bf16.msra.mxu0 0
        %1829 = vmatprep.subr.bf16.mxu0 0
        %1830 = vmatpush1.bf16.msra.mxu0 0
        %1831 = vmatprep.subr.bf16.mxu0 0
        %1832 = vmatpush1.bf16.msra.mxu0 0
        %1833 = vmatprep.subr.bf16.mxu0 0
        %1834 = vmatpush1.bf16.msra.mxu0 0
        %1835 = vmatprep.subr.bf16.mxu0 0
        %1836 = vmatpush1.bf16.msra.mxu0 0
        %1837 = vmatprep.subr.bf16.mxu0 0
        %1838 = vmatpush1.bf16.msra.mxu0 0
        %1839 = vmatprep.subr.bf16.mxu0 0
        %1840 = vmatpush1.bf16.msra.mxu0 0
        %1841 = vmatprep.subr.bf16.mxu0 0
        %1842 = vmatpush1.bf16.msra.mxu0 0
        %1843 = vmatprep.subr.bf16.mxu0 0
        %1844 = vmatpush1.bf16.msra.mxu0 0
        %1845 = vmatprep.subr.bf16.mxu0 0
        %1846 = vmatpush1.bf16.msra.mxu0 0
        %1847 = vmatprep.subr.bf16.mxu0 0
        %1848 = vmatpush1.bf16.msra.mxu0 0
        %1849 = vmatprep.mubr.bf16.mxu0 0
        %1850 = vmatmul.mubr.bf16.gmra.mrb[0].mxu0 %v1815
        %v1851 = vpop.f32.mrb[0].mxu0
        %v1852 = vadd.f32 0.0, %v1851
        %v1853 = vpop.f32.mrb[0].mxu0
        %v1854 = vpop.f32.mrb[0].mxu0
        %v1855 = vpop.f32.mrb[0].mxu0
        %1856 = vdwg.mxu0
        %v1857 = vadd.f32 %v617, %v1852
        %v1858 = vld [vmem:[#allocation11] sm:$0x1]
        %v1859 = vld [vmem:[#allocation13] sm:$0x1]
        %v1860 = vsel %vm620, %v1857, 0.0
        %1861 = vadd.xlane.f32.xlu0 %v1860
        %v1862 = vpop.xlane.xlu0 %1861
        %v1863 = vmul.f32 %v1862, %v624
        %v1864 = vsub.f32 %v1857, %v1863
        %v1865 = vmul.f32 %v1864, %v1864
        %v1866 = vsel %vm620, %v1865, 0.0
        %1867 = vadd.xlane.f32.xlu0 %v1866
        %v1868 = vpop.xlane.xlu0 %1867
        %v1869 = vmul.f32 %v1868, %v624
        %v1870 = vadd.f32 %v1869, 1e-06
        %v1871 = vrsqrt.pop %v1870
        %v1872 = vmul.f32 %v1864, %v1871
        %v1874 = vlaneseq
        %v1875 = vshrl.u32 %v1874, 7
        %v1876 = vsub.s32 0, %v1875
        %v1877 = vrot.slane %v1858, %v1876
        %v1879 = vmul.f32 %v1872, %v1877
        %v1881 = vlaneseq
        %v1882 = vshrl.u32 %v1881, 7
        %v1883 = vsub.s32 0, %v1882
        %v1884 = vrot.slane %v1859, %v1883
        %v1886 = vadd.f32 %v1879, %v1884
        %v1887 = vpack.c.bf16 %v1886, %v1886
        %v1888 = vld [vmem:[#allocation14] sm:$0xf]
        %v1889 = vld [vmem:[#allocation14 + $0x4] sm:$0xf]
        %v1890 = vld [vmem:[#allocation14 + $0x8] sm:$0xf]
        %v1891 = vld [vmem:[#allocation14 + $0xc] sm:$0xf]
        %v1892 = vld [vmem:[#allocation16] sm:$0x1]
        %v1894 = vlaneseq
        %v1895 = vshrl.u32 %v1894, 7
        %v1896 = vsub.s32 0, %v1895
        %v1897 = vrot.slane %v1892, %v1896
        %v1903 = vunpack.c.l.b16 %v1888
        %v1904 = vunpack.c.l.b16 %v1889
        %v1905 = vunpack.c.l.b16 %v1890
        %v1906 = vunpack.c.l.b16 %v1891
        %v1907 = vpack.c.b16 %v1904, %v1903
        %v1908 = vpack.c.b16 %v1906, %v1905
        %v1912 = vsel %vm620, %v1887, 0
        %1914 = vmatprep.subr.bf16.mxu0 0
        %1915 = vmatpush1.bf16.msra.mxu0 %v1907
        %1916 = vmatprep.subr.bf16.mxu0 0
        %1917 = vmatpush1.bf16.msra.mxu0 %v1908
        %1918 = vmatprep.subr.bf16.mxu0 0
        %1919 = vmatpush1.bf16.msra.mxu0 0
        %1920 = vmatprep.subr.bf16.mxu0 0
        %1921 = vmatpush1.bf16.msra.mxu0 0
        %1922 = vmatprep.subr.bf16.mxu0 0
        %1923 = vmatpush1.bf16.msra.mxu0 0
        %1924 = vmatprep.subr.bf16.mxu0 0
        %1925 = vmatpush1.bf16.msra.mxu0 0
        %1926 = vmatprep.subr.bf16.mxu0 0
        %1927 = vmatpush1.bf16.msra.mxu0 0
        %1928 = vmatprep.subr.bf16.mxu0 0
        %1929 = vmatpush1.bf16.msra.mxu0 0
        %1930 = vmatprep.subr.bf16.mxu0 0
        %1931 = vmatpush1.bf16.msra.mxu0 0
        %1932 = vmatprep.subr.bf16.mxu0 0
        %1933 = vmatpush1.bf16.msra.mxu0 0
        %1934 = vmatprep.subr.bf16.mxu0 0
        %1935 = vmatpush1.bf16.msra.mxu0 0
        %1936 = vmatprep.subr.bf16.mxu0 0
        %1937 = vmatpush1.bf16.msra.mxu0 0
        %1938 = vmatprep.subr.bf16.mxu0 0
        %1939 = vmatpush1.bf16.msra.mxu0 0
        %1940 = vmatprep.subr.bf16.mxu0 0
        %1941 = vmatpush1.bf16.msra.mxu0 0
        %1942 = vmatprep.subr.bf16.mxu0 0
        %1943 = vmatpush1.bf16.msra.mxu0 0
        %1944 = vmatprep.subr.bf16.mxu0 0
        %1945 = vmatpush1.bf16.msra.mxu0 0
        %1946 = vmatprep.mubr.bf16.mxu0 0
        %1947 = vmatmul.mubr.bf16.gmra.mrb[0].mxu0 %v1912
        %v1948 = vpop.f32.mrb[0].mxu0
        %v1949 = vadd.f32 %v1897, %v1948
        %v1950 = vpop.f32.mrb[0].mxu0
        %v1951 = vpop.f32.mrb[0].mxu0
        %v1952 = vpop.f32.mrb[0].mxu0
        %1953 = vdwg.mxu0
        %v1954 = vmax.f32 %v1949, 0.0
        %v1955 = vpack.c.bf16 %v1954, %v1954
        %v1956 = vld [vmem:[#allocation17] sm:$0xf]
        %v1957 = vld [vmem:[#allocation17 + $0x4] sm:$0xf]
        %v1958 = vld [vmem:[#allocation17 + $0x8] sm:$0xf]
        %v1959 = vld [vmem:[#allocation17 + $0xc] sm:$0xf]
        %v1960 = vld [vmem:[#allocation17 + $0x10] sm:$0xf]
        %v1961 = vld [vmem:[#allocation17 + $0x14] sm:$0xf]
        %v1962 = vld [vmem:[#allocation17 + $0x18] sm:$0xf]
        %v1963 = vld [vmem:[#allocation17 + $0x1c] sm:$0xf]
        %v1964 = vld [vmem:[#allocation19] sm:$0x1]
        %v1966 = vlaneseq
        %v1967 = vshrl.u32 %v1966, 7
        %v1968 = vsub.s32 0, %v1967
        %v1969 = vrot.slane %v1964, %v1968
        %v1979 = vunpack.c.l.b16 %v1956
        %v1980 = vunpack.c.l.b16 %v1957
        %v1981 = vunpack.c.l.b16 %v1958
        %v1982 = vunpack.c.l.b16 %v1959
        %v1983 = vunpack.c.l.b16 %v1960
        %v1984 = vunpack.c.l.b16 %v1961
        %v1985 = vunpack.c.l.b16 %v1962
        %v1986 = vunpack.c.l.b16 %v1963
        %v1987 = vpack.c.b16 %v1980, %v1979
        %v1988 = vpack.c.b16 %v1982, %v1981
        %v1989 = vpack.c.b16 %v1984, %v1983
        %v1990 = vpack.c.b16 %v1986, %v1985
        %vm1995 = vcmask 523264
        %v1997 = vsel %vm1995, %v1955, 0
        %1999 = vmatprep.subr.bf16.mxu0 0
        %2000 = vmatpush1.bf16.msra.mxu0 %v1987
        %2001 = vmatprep.subr.bf16.mxu0 0
        %2002 = vmatpush1.bf16.msra.mxu0 %v1988
        %2003 = vmatprep.subr.bf16.mxu0 0
        %2004 = vmatpush1.bf16.msra.mxu0 %v1989
        %2005 = vmatprep.subr.bf16.mxu0 0
        %2006 = vmatpush1.bf16.msra.mxu0 %v1990
        %2007 = vmatprep.subr.bf16.mxu0 0
        %2008 = vmatpush1.bf16.msra.mxu0 0
        %2009 = vmatprep.subr.bf16.mxu0 0
        %2010 = vmatpush1.bf16.msra.mxu0 0
        %2011 = vmatprep.subr.bf16.mxu0 0
        %2012 = vmatpush1.bf16.msra.mxu0 0
        %2013 = vmatprep.subr.bf16.mxu0 0
        %2014 = vmatpush1.bf16.msra.mxu0 0
        %2015 = vmatprep.subr.bf16.mxu0 0
        %2016 = vmatpush1.bf16.msra.mxu0 0
        %2017 = vmatprep.subr.bf16.mxu0 0
        %2018 = vmatpush1.bf16.msra.mxu0 0
        %2019 = vmatprep.subr.bf16.mxu0 0
        %2020 = vmatpush1.bf16.msra.mxu0 0
        %2021 = vmatprep.subr.bf16.mxu0 0
        %2022 = vmatpush1.bf16.msra.mxu0 0
        %2023 = vmatprep.subr.bf16.mxu0 0
        %2024 = vmatpush1.bf16.msra.mxu0 0
        %2025 = vmatprep.subr.bf16.mxu0 0
        %2026 = vmatpush1.bf16.msra.mxu0 0
        %2027 = vmatprep.subr.bf16.mxu0 0
        %2028 = vmatpush1.bf16.msra.mxu0 0
        %2029 = vmatprep.subr.bf16.mxu0 0
        %2030 = vmatpush1.bf16.msra.mxu0 0
        %2031 = vmatprep.mubr.bf16.mxu0 0
        %2032 = vmatmul.mubr.bf16.gmra.mrb[0].mxu0 %v1997
        %v2033 = vpop.f32.mrb[0].mxu0
        %v2034 = vadd.f32 %v1969, %v2033
        %v2035 = vpop.f32.mrb[0].mxu0
        %v2036 = vpop.f32.mrb[0].mxu0
        %v2037 = vpop.f32.mrb[0].mxu0
        %2038 = vdwg.mxu0
        %v2039 = vadd.f32 %v1857, %v2034
        %v2040 = vld [vmem:[#allocation20] sm:$0x1]
        %v2041 = vld [vmem:[#allocation22] sm:$0x1]
        %v2042 = vsel %vm620, %v2039, 0.0
        %2043 = vadd.xlane.f32.xlu0 %v2042
        %v2044 = vpop.xlane.xlu0 %2043
        %v2045 = vmul.f32 %v2044, %v624
        %v2046 = vsub.f32 %v2039, %v2045
        %v2047 = vmul.f32 %v2046, %v2046
        %v2048 = vsel %vm620, %v2047, 0.0
        %2049 = vadd.xlane.f32.xlu0 %v2048
        %v2050 = vpop.xlane.xlu0 %2049
        %v2051 = vmul.f32 %v2050, %v624
        %v2052 = vadd.f32 %v2051, 1e-06
        %v2053 = vrsqrt.pop %v2052
        %v2054 = vmul.f32 %v2046, %v2053
        %v2056 = vlaneseq
        %v2057 = vshrl.u32 %v2056, 7
        %v2058 = vsub.s32 0, %v2057
        %v2059 = vrot.slane %v2040, %v2058
        %v2061 = vmul.f32 %v2054, %v2059
        %v2063 = vlaneseq
        %v2064 = vshrl.u32 %v2063, 7
        %v2065 = vsub.s32 0, %v2064
        %v2066 = vrot.slane %v2041, %v2065
        %v2068 = vadd.f32 %v2061, %v2066
        %2069 = vst.msk [vmem:[%s613] sm:$0xff] %vm620, %v2068
        %s2070 = sand.u32 %s322, 1
        %s2071 = scalar_lea.sflag [#allocation4], %s2070
        %s2072 = sand.u32 %s322, 1
        %s2073 = smul.addr %s2072, 8
        %s2074 = scalar_lea.vmem [#allocation23], %s2073
        // Predicated region
        $region125: #{transformer_encoder.3} parent=71 // pred_check
          %p2075 = pneg %p332
        $region126: #{transformer_encoder.3} parent=71 // pred_check_branch
          %2077 = sbr.rel (%p2075) target = $region128
        $region127: #{transformer_encoder.3} parent=71 // pred_region
          %s2079 = ssub.s32 128, 128
          %2080 = vsyncadd %s2071, %s2079
          %s2081 = smul.addr %s36, 128
          %s2082 = scalar_lea.hbm %s13, %s2081
          %s2084 = sshll.u32 %s2074, 4
          %s2085 = int_to_ptr.vmem [resolvable:$true] %s2084
          %2087 = dma.vmem_to_hbm [thread:$0]  %s2085, 128, %s2082, %s2071
        $region128: #{transformer_encoder.3} parent=71 // pred_fallthru
          _
      $region72: #{transformer_encoder.3} parent=5 // pred_fallthru
        _
      %p2088 = scmp.le.s32.totalorder 2, %s31
      // Predicated region
      $region129: #{transformer_encoder.3} parent=5 // pred_check
        %p2089 = pneg %p2088
      $region130: #{transformer_encoder.3} parent=5 // pred_check_branch
        %2091 = sbr.rel (%p2089) target = $region132
      $region131: #{transformer_encoder.3} parent=5 // pred_region
        %s2092 = ssub.s32 %s31, 2
        // Predicated region
        $region133: #{transformer_encoder.3} parent=131 // pred_check
          %p2093 = pneg %p338
        $region134: #{transformer_encoder.3} parent=131 // pred_check_branch
          %2095 = sbr.rel (%p2093) target = $region136
        $region135: #{transformer_encoder.3} parent=131 // pred_region
          %s2096 = sand.u32 %s323, 1
          %s2097 = scalar_lea.sflag [#allocation4], %s2096
          %s2098 = sand.u32 %s323, 1
          %s2099 = smul.addr %s2098, 8
          %s2100 = scalar_lea.vmem [#allocation23], %s2099
          %2101 = dma.done %s2097, 128
        $region136: #{transformer_encoder.3} parent=131 // pred_fallthru
          _
      $region132: #{transformer_encoder.3} parent=5 // pred_fallthru
        _
    $region6: #{transformer_encoder.3} parent=1 // loop_footer
      %s35 = sadd.s32 1, %s31
    $region7: #{transformer_encoder.3} parent=1 // loop_footer_branch
      %30 = sbr.rel target = $region3
    $region8: #{transformer_encoder.3} parent=1 // loop_exit
      _
    %2102 = vsyncpa [#allocation3], 1
    %s2103 = scalar_lea.sflag [#allocation3], 1
    %2104 = vsyncpa %s2103, 1
    %2105 = vsyncpa [#allocation6], 1
    %2106 = vsyncpa [#allocation9], 1
    %2107 = vsyncpa [#allocation12], 1
    %2108 = vsyncpa [#allocation15], 1
    %2109 = vsyncpa [#allocation18], 1
    %2110 = vsyncpa [#allocation21], 1
    %2111 = vsyncpa [#allocation4], 1
    %s2112 = scalar_lea.sflag [#allocation4], 1
    %2113 = vsyncpa %s2112, 1

// kernel: transformer_encoder.2
$region0: #{transformer_encoder.2}
  #allocation0 [shape = 'u32[]', space=smem, size = 0x4, offset = 0x4, fixed_abs, tag = 'smem constant byte address 0x4 - core index']
  #allocation1 [shape = 'u32[144,128]{1,0:T(1,128)}', space=vmem, size = 0x12000, scoped, tag = 'internal scratch']
  %s0 = inlined_call_operand.hbm [shape: bf16[2,8,32], index: 0, kind: input, shape index: {}, may-alias: {0,13}]
  %s1 = inlined_call_operand.hbm [shape: bf16[32,96], index: 1, kind: input, shape index: {}]
  %s2 = inlined_call_operand.hbm [shape: bf16[32,32], index: 2, kind: input, shape index: {}]
  %s3 = inlined_call_operand.hbm [shape: f32[1,32], index: 3, kind: input, shape index: {}]
  %s4 = inlined_call_operand.hbm [shape: f32[1,32], index: 4, kind: input, shape index: {}]
  %s5 = inlined_call_operand.hbm [shape: f32[1,32], index: 5, kind: input, shape index: {}]
  %s6 = inlined_call_operand.hbm [shape: f32[1,32], index: 6, kind: input, shape index: {}]
  %s7 = inlined_call_operand.hbm [shape: bf16[32,64], index: 7, kind: input, shape index: {}]
  %s8 = inlined_call_operand.hbm [shape: f32[1,64], index: 8, kind: input, shape index: {}]
  %s9 = inlined_call_operand.hbm [shape: bf16[64,32], index: 9, kind: input, shape index: {}]
  %s10 = inlined_call_operand.hbm [shape: f32[1,32], index: 10, kind: input, shape index: {}]
  %s11 = inlined_call_operand.hbm [shape: f32[1,32], index: 11, kind: input, shape index: {}]
  %s12 = inlined_call_operand.hbm [shape: f32[1,32], index: 12, kind: input, shape index: {}]
  %s13 = inlined_call_operand.hbm [shape: bf16[2,8,32], index: 13, kind: output, shape index: {}, may-alias: {0,13}]
  %s14 = sld [smem:[#allocation0]]
  $region137: #{transformer_encoder.2} parent=0
    _
  %s16 = ssub.s32 1, %s14
  %s17 = scalar_select 0, %s16, %s14
  $region1: #{transformer_encoder.2} parent=0
    #allocation2 [shape = 'u8[4096]{0}', space=vmem, size = 0x1000, scoped, tag = 'input window, operand 0']
    #allocation3 [shape = 's32[2]{0}', space=sflag, size = 0x8, scoped, tag = 'scoped memory for transformer_encoder.2']
    #allocation4 [shape = 's32[2]{0}', space=sflag, size = 0x8, scoped, tag = 'scoped memory for transformer_encoder.2']
    #allocation5 [shape = 'u8[8192]{0}', space=vmem, size = 0x2000, scoped, tag = 'input window, operand 1, single buffered']
    #allocation6 [shape = 's32[1]{0}', space=sflag, size = 0x4, scoped, tag = 'scoped memory for transformer_encoder.2']
    #allocation7 [shape = 'u8[8192]{0}', space=vmem, size = 0x2000, scoped, tag = 'input window, operand 2, single buffered']
    #allocation8 [shape = 'u8[512]{0}', space=vmem, size = 0x400, scoped, tag = 'input window, operand 3, single buffered']
    #allocation9 [shape = 's32[1]{0}', space=sflag, size = 0x4, scoped, tag = 'scoped memory for transformer_encoder.2']
    #allocation10 [shape = 'u8[512]{0}', space=vmem, size = 0x400, scoped, tag = 'input window, operand 4, single buffered']
    #allocation11 [shape = 'u8[512]{0}', space=vmem, size = 0x400, scoped, tag = 'input window, operand 5, single buffered']
    #allocation12 [shape = 's32[1]{0}', space=sflag, size = 0x4, scoped, tag = 'scoped memory for transformer_encoder.2']
    #allocation13 [shape = 'u8[512]{0}', space=vmem, size = 0x400, scoped, tag = 'input window, operand 6, single buffered']
    #allocation14 [shape = 'u8[8192]{0}', space=vmem, size = 0x2000, scoped, tag = 'input window, operand 7, single buffered']
    #allocation15 [shape = 's32[1]{0}', space=sflag, size = 0x4, scoped, tag = 'scoped memory for transformer_encoder.2']
    #allocation16 [shape = 'u8[512]{0}', space=vmem, size = 0x400, scoped, tag = 'input window, operand 8, single buffered']
    #allocation17 [shape = 'u8[16384]{0}', space=vmem, size = 0x4000, scoped, tag = 'input window, operand 9, single buffered']
    #allocation18 [shape = 's32[1]{0}', space=sflag, size = 0x4, scoped, tag = 'scoped memory for transformer_encoder.2']
    #allocation19 [shape = 'u8[512]{0}', space=vmem, size = 0x400, scoped, tag = 'input window, operand 10, single buffered']
    #allocation20 [shape = 'u8[512]{0}', space=vmem, size = 0x400, scoped, tag = 'input window, operand 11, single buffered']
    #allocation21 [shape = 's32[1]{0}', space=sflag, size = 0x4, scoped, tag = 'scoped memory for transformer_encoder.2']
    #allocation22 [shape = 'u8[512]{0}', space=vmem, size = 0x400, scoped, tag = 'input window, operand 12, single buffered']
    #allocation23 [shape = 'u8[4096]{0}', space=vmem, size = 0x1000, scoped, tag = 'output window, operand 0']
    %18 = vsyncpa [#allocation3], 0
    %s19 = scalar_lea.sflag [#allocation3], 1
    %20 = vsyncpa %s19, 0
    %21 = vsyncpa [#allocation6], 0
    %22 = vsyncpa [#allocation9], 0
    %23 = vsyncpa [#allocation12], 0
    %24 = vsyncpa [#allocation15], 0
    %25 = vsyncpa [#allocation18], 0
    %26 = vsyncpa [#allocation21], 0
    %27 = vsyncpa [#allocation4], 0
    %s28 = scalar_lea.sflag [#allocation4], 1
    %29 = vsyncpa %s28, 0
    loop: start=0, step=1, limit=4
    $region2: #{transformer_encoder.2} parent=1 // loop_pre_header
      _
    $region3: #{transformer_encoder.2} parent=1 // loop_header
      %s31 = sphi 0, %s35
      %p32 = scmp.ge.s32.totalorder %s31, 4
      %s41 = sphi 0, %s43
      %s44 = sphi 0, %s41
      %s45 = sphi 0, %s44
      %s61 = sphi 0, %s45
      %s65 = sphi 0, %s65
      %s67 = sphi 0, %s65
      %s68 = sphi 0, %s67
      %s82 = sphi 0, %s68
      %s86 = sphi 0, %s86
      %s88 = sphi 0, %s86
      %s89 = sphi 0, %s88
      %s103 = sphi 0, %s89
      %s107 = sphi 0, %s107
      %s109 = sphi 0, %s107
      %s110 = sphi 0, %s109
      %s124 = sphi 0, %s110
      %s128 = sphi 0, %s128
      %s130 = sphi 0, %s128
      %s131 = sphi 0, %s130
      %s145 = sphi 0, %s131
      %s149 = sphi 0, %s149
      %s151 = sphi 0, %s149
      %s152 = sphi 0, %s151
      %s166 = sphi 0, %s152
      %s170 = sphi 0, %s170
      %s172 = sphi 0, %s170
      %s173 = sphi 0, %s172
      %s187 = sphi 0, %s173
      %s191 = sphi 0, %s191
      %s193 = sphi 0, %s191
      %s194 = sphi 0, %s193
      %s208 = sphi 0, %s194
      %s212 = sphi 0, %s212
      %s214 = sphi 0, %s212
      %s215 = sphi 0, %s214
      %s229 = sphi 0, %s215
      %s233 = sphi 0, %s233
      %s235 = sphi 0, %s233
      %s236 = sphi 0, %s235
      %s250 = sphi 0, %s236
      %s254 = sphi 0, %s254
      %s256 = sphi 0, %s254
      %s257 = sphi 0, %s256
      %s271 = sphi 0, %s257
      %s275 = sphi 0, %s275
      %s277 = sphi 0, %s275
      %s278 = sphi 0, %s277
      %s292 = sphi 0, %s278
      %s296 = sphi 0, %s296
      %s298 = sphi 0, %s296
      %s299 = sphi 0, %s298
      %s313 = sphi 0, %s299
      %s319 = sphi 0, %s321
      %s322 = sphi 0, %s319
      %s323 = sphi 0, %s322
      %s339 = sphi 0, %s323
    $region4: #{transformer_encoder.2} parent=1 // loop_header_branch
      %34 = sbr.rel (%p32) target = $region8
    $region5: #{transformer_encoder.2} parent=1 // loop_body
      %s36 = ssub.s32 %s31, 1
      %s37 = ssub.s32 %s31, 2
      %s38 = sadd.s32 %s31, 1
      %s39 = ssub.s32 %s31, %s38
      %p40 = scmp.eq.s32.totalorder %s39, 0
      %s42 = sadd.s32 %s41, 1
      %s43 = scalar_select %p40, %s41, %s42
      %p46 = pneg %p40
      %p47 = scmp.eq.s32.totalorder %s31, 1
      %p48 = por %p46, %p47
      %p49 = scmp.ne.s32.totalorder %s41, %s44
      %p50 = scmp.eq.s32.totalorder %s31, 0
      %p51 = por %p49, %p50
      %p52 = scmp.ne.s32.totalorder %s41, %s44
      %p53 = scmp.eq.s32.totalorder %s36, 1
      %p54 = por %p52, %p53
      %p55 = scmp.ne.s32.totalorder %s44, %s45
      %p56 = scmp.eq.s32.totalorder %s36, 0
      %p57 = por %p55, %p56
      %p58 = scmp.ne.s32.totalorder %s44, %s45
      %p59 = scmp.eq.s32.totalorder %s37, 1
      %p60 = por %p58, %p59
      %p62 = scmp.ne.s32.totalorder %s45, %s61
      %p63 = scmp.eq.s32.totalorder %s37, 0
      %p64 = por %p62, %p63
      %s66 = sadd.s32 %s65, 1
      %p69 = scmp.eq.s32.totalorder %s31, 1
      %p70 = scmp.ne.s32.totalorder %s65, %s67
      %p71 = scmp.eq.s32.totalorder %s31, 0
      %p72 = por %p70, %p71
      %p73 = scmp.ne.s32.totalorder %s65, %s67
      %p74 = scmp.eq.s32.totalorder %s36, 1
      %p75 = por %p73, %p74
      %p76 = scmp.ne.s32.totalorder %s67, %s68
      %p77 = scmp.eq.s32.totalorder %s36, 0
      %p78 = por %p76, %p77
      %p79 = scmp.ne.s32.totalorder %s67, %s68
      %p80 = scmp.eq.s32.totalorder %s37, 1
      %p81 = por %p79, %p80
      %p83 = scmp.ne.s32.totalorder %s68, %s82
      %p84 = scmp.eq.s32.totalorder %s37, 0
      %p85 = por %p83, %p84
      %s87 = sadd.s32 %s86, 1
      %p90 = scmp.eq.s32.totalorder %s31, 1
      %p91 = scmp.ne.s32.totalorder %s86, %s88
      %p92 = scmp.eq.s32.totalorder %s31, 0
      %p93 = por %p91, %p92
      %p94 = scmp.ne.s32.totalorder %s86, %s88
      %p95 = scmp.eq.s32.totalorder %s36, 1
      %p96 = por %p94, %p95
      %p97 = scmp.ne.s32.totalorder %s88, %s89
      %p98 = scmp.eq.s32.totalorder %s36, 0
      %p99 = por %p97, %p98
      %p100 = scmp.ne.s32.totalorder %s88, %s89
      %p101 = scmp.eq.s32.totalorder %s37, 1
      %p102 = por %p100, %p101
      %p104 = scmp.ne.s32.totalorder %s89, %s103
      %p105 = scmp.eq.s32.totalorder %s37, 0
      %p106 = por %p104, %p105
      %s108 = sadd.s32 %s107, 1
      %p111 = scmp.eq.s32.totalorder %s31, 1
      %p112 = scmp.ne.s32.totalorder %s107, %s109
      %p113 = scmp.eq.s32.totalorder %s31, 0
      %p114 = por %p112, %p113
      %p115 = scmp.ne.s32.totalorder %s107, %s109
      %p116 = scmp.eq.s32.totalorder %s36, 1
      %p117 = por %p115, %p116
      %p118 = scmp.ne.s32.totalorder %s109, %s110
      %p119 = scmp.eq.s32.totalorder %s36, 0
      %p120 = por %p118, %p119
      %p121 = scmp.ne.s32.totalorder %s109, %s110
      %p122 = scmp.eq.s32.totalorder %s37, 1
      %p123 = por %p121, %p122
      %p125 = scmp.ne.s32.totalorder %s110, %s124
      %p126 = scmp.eq.s32.totalorder %s37, 0
      %p127 = por %p125, %p126
      %s129 = sadd.s32 %s128, 1
      %p132 = scmp.eq.s32.totalorder %s31, 1
      %p133 = scmp.ne.s32.totalorder %s128, %s130
      %p134 = scmp.eq.s32.totalorder %s31, 0
      %p135 = por %p133, %p134
      %p136 = scmp.ne.s32.totalorder %s128, %s130
      %p137 = scmp.eq.s32.totalorder %s36, 1
      %p138 = por %p136, %p137
      %p139 = scmp.ne.s32.totalorder %s130, %s131
      %p140 = scmp.eq.s32.totalorder %s36, 0
      %p141 = por %p139, %p140
      %p142 = scmp.ne.s32.totalorder %s130, %s131
      %p143 = scmp.eq.s32.totalorder %s37, 1
      %p144 = por %p142, %p143
      %p146 = scmp.ne.s32.totalorder %s131, %s145
      %p147 = scmp.eq.s32.totalorder %s37, 0
      %p148 = por %p146, %p147
      %s150 = sadd.s32 %s149, 1
      %p153 = scmp.eq.s32.totalorder %s31, 1
      %p154 = scmp.ne.s32.totalorder %s149, %s151
      %p155 = scmp.eq.s32.totalorder %s31, 0
      %p156 = por %p154, %p155
      %p157 = scmp.ne.s32.totalorder %s149, %s151
      %p158 = scmp.eq.s32.totalorder %s36, 1
      %p159 = por %p157, %p158
      %p160 = scmp.ne.s32.totalorder %s151, %s152
      %p161 = scmp.eq.s32.totalorder %s36, 0
      %p162 = por %p160, %p161
      %p163 = scmp.ne.s32.totalorder %s151, %s152
      %p164 = scmp.eq.s32.totalorder %s37, 1
      %p165 = por %p163, %p164
      %p167 = scmp.ne.s32.totalorder %s152, %s166
      %p168 = scmp.eq.s32.totalorder %s37, 0
      %p169 = por %p167, %p168
      %s171 = sadd.s32 %s170, 1
      %p174 = scmp.eq.s32.totalorder %s31, 1
      %p175 = scmp.ne.s32.totalorder %s170, %s172
      %p176 = scmp.eq.s32.totalorder %s31, 0
      %p177 = por %p175, %p176
      %p178 = scmp.ne.s32.totalorder %s170, %s172
      %p179 = scmp.eq.s32.totalorder %s36, 1
      %p180 = por %p178, %p179
      %p181 = scmp.ne.s32.totalorder %s172, %s173
      %p182 = scmp.eq.s32.totalorder %s36, 0
      %p183 = por %p181, %p182
      %p184 = scmp.ne.s32.totalorder %s172, %s173
      %p185 = scmp.eq.s32.totalorder %s37, 1
      %p186 = por %p184, %p185
      %p188 = scmp.ne.s32.totalorder %s173, %s187
      %p189 = scmp.eq.s32.totalorder %s37, 0
      %p190 = por %p188, %p189
      %s192 = sadd.s32 %s191, 1
      %p195 = scmp.eq.s32.totalorder %s31, 1
      %p196 = scmp.ne.s32.totalorder %s191, %s193
      %p197 = scmp.eq.s32.totalorder %s31, 0
      %p198 = por %p196, %p197
      %p199 = scmp.ne.s32.totalorder %s191, %s193
      %p200 = scmp.eq.s32.totalorder %s36, 1
      %p201 = por %p199, %p200
      %p202 = scmp.ne.s32.totalorder %s193, %s194
      %p203 = scmp.eq.s32.totalorder %s36, 0
      %p204 = por %p202, %p203
      %p205 = scmp.ne.s32.totalorder %s193, %s194
      %p206 = scmp.eq.s32.totalorder %s37, 1
      %p207 = por %p205, %p206
      %p209 = scmp.ne.s32.totalorder %s194, %s208
      %p210 = scmp.eq.s32.totalorder %s37, 0
      %p211 = por %p209, %p210
      %s213 = sadd.s32 %s212, 1
      %p216 = scmp.eq.s32.totalorder %s31, 1
      %p217 = scmp.ne.s32.totalorder %s212, %s214
      %p218 = scmp.eq.s32.totalorder %s31, 0
      %p219 = por %p217, %p218
      %p220 = scmp.ne.s32.totalorder %s212, %s214
      %p221 = scmp.eq.s32.totalorder %s36, 1
      %p222 = por %p220, %p221
      %p223 = scmp.ne.s32.totalorder %s214, %s215
      %p224 = scmp.eq.s32.totalorder %s36, 0
      %p225 = por %p223, %p224
      %p226 = scmp.ne.s32.totalorder %s214, %s215
      %p227 = scmp.eq.s32.totalorder %s37, 1
      %p228 = por %p226, %p227
      %p230 = scmp.ne.s32.totalorder %s215, %s229
      %p231 = scmp.eq.s32.totalorder %s37, 0
      %p232 = por %p230, %p231
      %s234 = sadd.s32 %s233, 1
      %p237 = scmp.eq.s32.totalorder %s31, 1
      %p238 = scmp.ne.s32.totalorder %s233, %s235
      %p239 = scmp.eq.s32.totalorder %s31, 0
      %p240 = por %p238, %p239
      %p241 = scmp.ne.s32.totalorder %s233, %s235
      %p242 = scmp.eq.s32.totalorder %s36, 1
      %p243 = por %p241, %p242
      %p244 = scmp.ne.s32.totalorder %s235, %s236
      %p245 = scmp.eq.s32.totalorder %s36, 0
      %p246 = por %p244, %p245
      %p247 = scmp.ne.s32.totalorder %s235, %s236
      %p248 = scmp.eq.s32.totalorder %s37, 1
      %p249 = por %p247, %p248
      %p251 = scmp.ne.s32.totalorder %s236, %s250
      %p252 = scmp.eq.s32.totalorder %s37, 0
      %p253 = por %p251, %p252
      %s255 = sadd.s32 %s254, 1
      %p258 = scmp.eq.s32.totalorder %s31, 1
      %p259 = scmp.ne.s32.totalorder %s254, %s256
      %p260 = scmp.eq.s32.totalorder %s31, 0
      %p261 = por %p259, %p260
      %p262 = scmp.ne.s32.totalorder %s254, %s256
      %p263 = scmp.eq.s32.totalorder %s36, 1
      %p264 = por %p262, %p263
      %p265 = scmp.ne.s32.totalorder %s256, %s257
      %p266 = scmp.eq.s32.totalorder %s36, 0
      %p267 = por %p265, %p266
      %p268 = scmp.ne.s32.totalorder %s256, %s257
      %p269 = scmp.eq.s32.totalorder %s37, 1
      %p270 = por %p268, %p269
      %p272 = scmp.ne.s32.totalorder %s257, %s271
      %p273 = scmp.eq.s32.totalorder %s37, 0
      %p274 = por %p272, %p273
      %s276 = sadd.s32 %s275, 1
      %p279 = scmp.eq.s32.totalorder %s31, 1
      %p280 = scmp.ne.s32.totalorder %s275, %s277
      %p281 = scmp.eq.s32.totalorder %s31, 0
      %p282 = por %p280, %p281
      %p283 = scmp.ne.s32.totalorder %s275, %s277
      %p284 = scmp.eq.s32.totalorder %s36, 1
      %p285 = por %p283, %p284
      %p286 = scmp.ne.s32.totalorder %s277, %s278
      %p287 = scmp.eq.s32.totalorder %s36, 0
      %p288 = por %p286, %p287
      %p289 = scmp.ne.s32.totalorder %s277, %s278
      %p290 = scmp.eq.s32.totalorder %s37, 1
      %p291 = por %p289, %p290
      %p293 = scmp.ne.s32.totalorder %s278, %s292
      %p294 = scmp.eq.s32.totalorder %s37, 0
      %p295 = por %p293, %p294
      %s297 = sadd.s32 %s296, 1
      %p300 = scmp.eq.s32.totalorder %s31, 1
      %p301 = scmp.ne.s32.totalorder %s296, %s298
      %p302 = scmp.eq.s32.totalorder %s31, 0
      %p303 = por %p301, %p302
      %p304 = scmp.ne.s32.totalorder %s296, %s298
      %p305 = scmp.eq.s32.totalorder %s36, 1
      %p306 = por %p304, %p305
      %p307 = scmp.ne.s32.totalorder %s298, %s299
      %p308 = scmp.eq.s32.totalorder %s36, 0
      %p309 = por %p307, %p308
      %p310 = scmp.ne.s32.totalorder %s298, %s299
      %p311 = scmp.eq.s32.totalorder %s37, 1
      %p312 = por %p310, %p311
      %p314 = scmp.ne.s32.totalorder %s299, %s313
      %p315 = scmp.eq.s32.totalorder %s37, 0
      %p316 = por %p314, %p315
      %s317 = ssub.s32 %s31, %s38
      %p318 = scmp.eq.s32.totalorder %s317, 0
      %s320 = sadd.s32 %s319, 1
      %s321 = scalar_select %p318, %s319, %s320
      %p324 = pneg %p318
      %p325 = scmp.eq.s32.totalorder %s31, 1
      %p326 = por %p324, %p325
      %p327 = scmp.ne.s32.totalorder %s319, %s322
      %p328 = scmp.eq.s32.totalorder %s31, 0
      %p329 = por %p327, %p328
      %p330 = scmp.ne.s32.totalorder %s319, %s322
      %p331 = scmp.eq.s32.totalorder %s36, 1
      %p332 = por %p330, %p331
      %p333 = scmp.ne.s32.totalorder %s322, %s323
      %p334 = scmp.eq.s32.totalorder %s36, 0
      %p335 = por %p333, %p334
      %p336 = scmp.ne.s32.totalorder %s322, %s323
      %p337 = scmp.eq.s32.totalorder %s37, 1
      %p338 = por %p336, %p337
      %p340 = scmp.ne.s32.totalorder %s323, %s339
      %p341 = scmp.eq.s32.totalorder %s37, 0
      %p342 = por %p340, %p341
      %p343 = scmp.le.s32.totalorder 1, %s31
      %p344 = scmp.lt.s32.totalorder %s31, 3
      %p345 = pnand %p343, %p344
      %p346 = pneg %p345
      // Predicated region
      $region9: #{transformer_encoder.2} parent=5 // pred_check
        _
      $region10: #{transformer_encoder.2} parent=5 // pred_check_branch
        %348 = sbr.rel (%p345) target = $region12
      $region11: #{transformer_encoder.2} parent=5 // pred_region
        %s349 = ssub.s32 %s31, 1
        // Predicated region
        $region13: #{transformer_encoder.2} parent=11 // pred_check
          %p350 = pneg %p78
        $region14: #{transformer_encoder.2} parent=11 // pred_check_branch
          %352 = sbr.rel (%p350) target = $region16
        $region15: #{transformer_encoder.2} parent=11 // pred_region
          %s354 = ssub.s32 256, 256
          %355 = vsyncadd [#allocation6], %s354
          %s356 = sshll.u32 [#allocation5], 4
          %s357 = int_to_ptr.vmem [resolvable:$true] %s356
          %362 = dma.hbm_to_vmem [thread:$0]  %s1, 256, %s357, [#allocation6], 64, 64, 4
        $region16: #{transformer_encoder.2} parent=11 // pred_fallthru
          _
        // Predicated region
        $region17: #{transformer_encoder.2} parent=11 // pred_check
          %p363 = pneg %p99
        $region18: #{transformer_encoder.2} parent=11 // pred_check_branch
          %365 = sbr.rel (%p363) target = $region20
        $region19: #{transformer_encoder.2} parent=11 // pred_region
          %s367 = ssub.s32 256, 256
          %368 = vsyncadd [#allocation6], %s367
          %s369 = sshll.u32 [#allocation7], 4
          %s370 = int_to_ptr.vmem [resolvable:$true] %s369
          %375 = dma.hbm_to_vmem [thread:$0]  %s2, 256, %s370, [#allocation6], 64, 64, 4
        $region20: #{transformer_encoder.2} parent=11 // pred_fallthru
          _
        // Predicated region
        $region21: #{transformer_encoder.2} parent=11 // pred_check
          %p376 = pneg %p120
        $region22: #{transformer_encoder.2} parent=11 // pred_check_branch
          %378 = sbr.rel (%p376) target = $region24
        $region23: #{transformer_encoder.2} parent=11 // pred_region
          %s380 = ssub.s32 16, 16
          %381 = vsyncadd [#allocation9], %s380
          %s383 = sshll.u32 [#allocation8], 4
          %s384 = int_to_ptr.vmem [resolvable:$true] %s383
          %386 = dma.hbm_to_vmem [thread:$0]  %s3, 16, %s384, [#allocation9]
        $region24: #{transformer_encoder.2} parent=11 // pred_fallthru
          _
        // Predicated region
        $region25: #{transformer_encoder.2} parent=11 // pred_check
          %p387 = pneg %p141
        $region26: #{transformer_encoder.2} parent=11 // pred_check_branch
          %389 = sbr.rel (%p387) target = $region28
        $region27: #{transformer_encoder.2} parent=11 // pred_region
          %s391 = ssub.s32 16, 16
          %392 = vsyncadd [#allocation9], %s391
          %s394 = sshll.u32 [#allocation10], 4
          %s395 = int_to_ptr.vmem [resolvable:$true] %s394
          %397 = dma.hbm_to_vmem [thread:$0]  %s4, 16, %s395, [#allocation9]
        $region28: #{transformer_encoder.2} parent=11 // pred_fallthru
          _
        // Predicated region
        $region29: #{transformer_encoder.2} parent=11 // pred_check
          %p398 = pneg %p162
        $region30: #{transformer_encoder.2} parent=11 // pred_check_branch
          %400 = sbr.rel (%p398) target = $region32
        $region31: #{transformer_encoder.2} parent=11 // pred_region
          %s402 = ssub.s32 16, 16
          %403 = vsyncadd [#allocation12], %s402
          %s405 = sshll.u32 [#allocation11], 4
          %s406 = int_to_ptr.vmem [resolvable:$true] %s405
          %408 = dma.hbm_to_vmem [thread:$0]  %s5, 16, %s406, [#allocation12]
        $region32: #{transformer_encoder.2} parent=11 // pred_fallthru
          _
        // Predicated region
        $region33: #{transformer_encoder.2} parent=11 // pred_check
          %p409 = pneg %p183
        $region34: #{transformer_encoder.2} parent=11 // pred_check_branch
          %411 = sbr.rel (%p409) target = $region36
        $region35: #{transformer_encoder.2} parent=11 // pred_region
          %s413 = ssub.s32 16, 16
          %414 = vsyncadd [#allocation12], %s413
          %s416 = sshll.u32 [#allocation13], 4
          %s417 = int_to_ptr.vmem [resolvable:$true] %s416
          %419 = dma.hbm_to_vmem [thread:$0]  %s6, 16, %s417, [#allocation12]
        $region36: #{transformer_encoder.2} parent=11 // pred_fallthru
          _
        // Predicated region
        $region37: #{transformer_encoder.2} parent=11 // pred_check
          %p420 = pneg %p204
        $region38: #{transformer_encoder.2} parent=11 // pred_check_branch
          %422 = sbr.rel (%p420) target = $region40
        $region39: #{transformer_encoder.2} parent=11 // pred_region
          %s424 = ssub.s32 256, 256
          %425 = vsyncadd [#allocation15], %s424
          %s426 = sshll.u32 [#allocation14], 4
          %s427 = int_to_ptr.vmem [resolvable:$true] %s426
          %432 = dma.hbm_to_vmem [thread:$0]  %s7, 256, %s427, [#allocation15], 64, 64, 4
        $region40: #{transformer_encoder.2} parent=11 // pred_fallthru
          _
        // Predicated region
        $region41: #{transformer_encoder.2} parent=11 // pred_check
          %p433 = pneg %p225
        $region42: #{transformer_encoder.2} parent=11 // pred_check_branch
          %435 = sbr.rel (%p433) target = $region44
        $region43: #{transformer_encoder.2} parent=11 // pred_region
          %s437 = ssub.s32 16, 16
          %438 = vsyncadd [#allocation15], %s437
          %s440 = sshll.u32 [#allocation16], 4
          %s441 = int_to_ptr.vmem [resolvable:$true] %s440
          %443 = dma.hbm_to_vmem [thread:$0]  %s8, 16, %s441, [#allocation15]
        $region44: #{transformer_encoder.2} parent=11 // pred_fallthru
          _
        // Predicated region
        $region45: #{transformer_encoder.2} parent=11 // pred_check
          %p444 = pneg %p246
        $region46: #{transformer_encoder.2} parent=11 // pred_check_branch
          %446 = sbr.rel (%p444) target = $region48
        $region47: #{transformer_encoder.2} parent=11 // pred_region
          %s448 = ssub.s32 512, 512
          %449 = vsyncadd [#allocation18], %s448
          %s450 = sshll.u32 [#allocation17], 4
          %s451 = int_to_ptr.vmem [resolvable:$true] %s450
          %456 = dma.hbm_to_vmem [thread:$0]  %s9, 512, %s451, [#allocation18], 64, 64, 4
        $region48: #{transformer_encoder.2} parent=11 // pred_fallthru
          _
        // Predicated region
        $region49: #{transformer_encoder.2} parent=11 // pred_check
          %p457 = pneg %p267
        $region50: #{transformer_encoder.2} parent=11 // pred_check_branch
          %459 = sbr.rel (%p457) target = $region52
        $region51: #{transformer_encoder.2} parent=11 // pred_region
          %s461 = ssub.s32 16, 16
          %462 = vsyncadd [#allocation18], %s461
          %s464 = sshll.u32 [#allocation19], 4
          %s465 = int_to_ptr.vmem [resolvable:$true] %s464
          %467 = dma.hbm_to_vmem [thread:$0]  %s10, 16, %s465, [#allocation18]
        $region52: #{transformer_encoder.2} parent=11 // pred_fallthru
          _
        // Predicated region
        $region53: #{transformer_encoder.2} parent=11 // pred_check
          %p468 = pneg %p288
        $region54: #{transformer_encoder.2} parent=11 // pred_check_branch
          %470 = sbr.rel (%p468) target = $region56
        $region55: #{transformer_encoder.2} parent=11 // pred_region
          %s472 = ssub.s32 16, 16
          %473 = vsyncadd [#allocation21], %s472
          %s475 = sshll.u32 [#allocation20], 4
          %s476 = int_to_ptr.vmem [resolvable:$true] %s475
          %478 = dma.hbm_to_vmem [thread:$0]  %s11, 16, %s476, [#allocation21]
        $region56: #{transformer_encoder.2} parent=11 // pred_fallthru
          _
        // Predicated region
        $region57: #{transformer_encoder.2} parent=11 // pred_check
          %p479 = pneg %p309
        $region58: #{transformer_encoder.2} parent=11 // pred_check_branch
          %481 = sbr.rel (%p479) target = $region60
        $region59: #{transformer_encoder.2} parent=11 // pred_region
          %s483 = ssub.s32 16, 16
          %484 = vsyncadd [#allocation21], %s483
          %s486 = sshll.u32 [#allocation22], 4
          %s487 = int_to_ptr.vmem [resolvable:$true] %s486
          %489 = dma.hbm_to_vmem [thread:$0]  %s12, 16, %s487, [#allocation21]
        $region60: #{transformer_encoder.2} parent=11 // pred_fallthru
          _
      $region12: #{transformer_encoder.2} parent=5 // pred_fallthru
        _
      %p490 = scmp.lt.s32.totalorder %s31, 2
      // Predicated region
      $region61: #{transformer_encoder.2} parent=5 // pred_check
        %p491 = pneg %p490
      $region62: #{transformer_encoder.2} parent=5 // pred_check_branch
        %493 = sbr.rel (%p491) target = $region64
      $region63: #{transformer_encoder.2} parent=5 // pred_region
        // Predicated region
        $region65: #{transformer_encoder.2} parent=63 // pred_check
          %p494 = pneg %p51
        $region66: #{transformer_encoder.2} parent=63 // pred_check_branch
          %496 = sbr.rel (%p494) target = $region68
        $region67: #{transformer_encoder.2} parent=63 // pred_region
          %s497 = sand.u32 %s41, 1
          %s498 = scalar_lea.sflag [#allocation3], %s497
          %s499 = sand.u32 %s41, 1
          %s500 = smul.addr %s499, 4
          %s501 = scalar_lea.vmem [#allocation2], %s500
          %s503 = ssub.s32 64, 64
          %504 = vsyncadd %s498, %s503
          %s505 = smul.addr %s31, 64
          %s506 = scalar_lea.hbm %s0, %s505
          %s508 = sshll.u32 %s501, 4
          %s509 = int_to_ptr.vmem [resolvable:$true] %s508
          %511 = dma.hbm_to_vmem [thread:$0]  %s506, 64, %s509, %s498
        $region68: #{transformer_encoder.2} parent=63 // pred_fallthru
          _
      $region64: #{transformer_encoder.2} parent=5 // pred_fallthru
        _
      %p512 = scmp.le.s32.totalorder 1, %s31
      %p513 = scmp.lt.s32.totalorder %s31, 3
      %p514 = pnand %p512, %p513
      %p515 = pneg %p514
      // Predicated region
      $region69: #{transformer_encoder.2} parent=5 // pred_check
        _
      $region70: #{transformer_encoder.2} parent=5 // pred_check_branch
        %517 = sbr.rel (%p514) target = $region72
      $region71: #{transformer_encoder.2} parent=5 // pred_region
        %s518 = ssub.s32 %s31, 1
        %s519 = sand.u32 %s44, 1
        %s520 = scalar_lea.sflag [#allocation3], %s519
        %s521 = sand.u32 %s44, 1
        %s522 = smul.addr %s521, 4
        %s523 = scalar_lea.vmem [#allocation2], %s522
        // Predicated region
        $region73: #{transformer_encoder.2} parent=71 // pred_check
          %p524 = pneg %p57
        $region74: #{transformer_encoder.2} parent=71 // pred_check_branch
          %526 = sbr.rel (%p524) target = $region76
        $region75: #{transformer_encoder.2} parent=71 // pred_region
          %527 = dma.done %s520, 64
        $region76: #{transformer_encoder.2} parent=71 // pred_fallthru
          _
        // Predicated region
        $region77: #{transformer_encoder.2} parent=71 // pred_check
          %p528 = pneg %p78
        $region78: #{transformer_encoder.2} parent=71 // pred_check_branch
          %530 = sbr.rel (%p528) target = $region80
        $region79: #{transformer_encoder.2} parent=71 // pred_region
          %531 = dma.done [#allocation6], 256
        $region80: #{transformer_encoder.2} parent=71 // pred_fallthru
          _
        // Predicated region
        $region81: #{transformer_encoder.2} parent=71 // pred_check
          %p532 = pneg %p99
        $region82: #{transformer_encoder.2} parent=71 // pred_check_branch
          %534 = sbr.rel (%p532) target = $region84
        $region83: #{transformer_encoder.2} parent=71 // pred_region
          %535 = dma.done [#allocation6], 256
        $region84: #{transformer_encoder.2} parent=71 // pred_fallthru
          _
        // Predicated region
        $region85: #{transformer_encoder.2} parent=71 // pred_check
          %p536 = pneg %p120
        $region86: #{transformer_encoder.2} parent=71 // pred_check_branch
          %538 = sbr.rel (%p536) target = $region88
        $region87: #{transformer_encoder.2} parent=71 // pred_region
          %539 = dma.done [#allocation9], 16
        $region88: #{transformer_encoder.2} parent=71 // pred_fallthru
          _
        // Predicated region
        $region89: #{transformer_encoder.2} parent=71 // pred_check
          %p540 = pneg %p141
        $region90: #{transformer_encoder.2} parent=71 // pred_check_branch
          %542 = sbr.rel (%p540) target = $region92
        $region91: #{transformer_encoder.2} parent=71 // pred_region
          %543 = dma.done [#allocation9], 16
        $region92: #{transformer_encoder.2} parent=71 // pred_fallthru
          _
        // Predicated region
        $region93: #{transformer_encoder.2} parent=71 // pred_check
          %p544 = pneg %p162
        $region94: #{transformer_encoder.2} parent=71 // pred_check_branch
          %546 = sbr.rel (%p544) target = $region96
        $region95: #{transformer_encoder.2} parent=71 // pred_region
          %547 = dma.done [#allocation12], 16
        $region96: #{transformer_encoder.2} parent=71 // pred_fallthru
          _
        // Predicated region
        $region97: #{transformer_encoder.2} parent=71 // pred_check
          %p548 = pneg %p183
        $region98: #{transformer_encoder.2} parent=71 // pred_check_branch
          %550 = sbr.rel (%p548) target = $region100
        $region99: #{transformer_encoder.2} parent=71 // pred_region
          %551 = dma.done [#allocation12], 16
        $region100: #{transformer_encoder.2} parent=71 // pred_fallthru
          _
        // Predicated region
        $region101: #{transformer_encoder.2} parent=71 // pred_check
          %p552 = pneg %p204
        $region102: #{transformer_encoder.2} parent=71 // pred_check_branch
          %554 = sbr.rel (%p552) target = $region104
        $region103: #{transformer_encoder.2} parent=71 // pred_region
          %555 = dma.done [#allocation15], 256
        $region104: #{transformer_encoder.2} parent=71 // pred_fallthru
          _
        // Predicated region
        $region105: #{transformer_encoder.2} parent=71 // pred_check
          %p556 = pneg %p225
        $region106: #{transformer_encoder.2} parent=71 // pred_check_branch
          %558 = sbr.rel (%p556) target = $region108
        $region107: #{transformer_encoder.2} parent=71 // pred_region
          %559 = dma.done [#allocation15], 16
        $region108: #{transformer_encoder.2} parent=71 // pred_fallthru
          _
        // Predicated region
        $region109: #{transformer_encoder.2} parent=71 // pred_check
          %p560 = pneg %p246
        $region110: #{transformer_encoder.2} parent=71 // pred_check_branch
          %562 = sbr.rel (%p560) target = $region112
        $region111: #{transformer_encoder.2} parent=71 // pred_region
          %563 = dma.done [#allocation18], 512
        $region112: #{transformer_encoder.2} parent=71 // pred_fallthru
          _
        // Predicated region
        $region113: #{transformer_encoder.2} parent=71 // pred_check
          %p564 = pneg %p267
        $region114: #{transformer_encoder.2} parent=71 // pred_check_branch
          %566 = sbr.rel (%p564) target = $region116
        $region115: #{transformer_encoder.2} parent=71 // pred_region
          %567 = dma.done [#allocation18], 16
        $region116: #{transformer_encoder.2} parent=71 // pred_fallthru
          _
        // Predicated region
        $region117: #{transformer_encoder.2} parent=71 // pred_check
          %p568 = pneg %p288
        $region118: #{transformer_encoder.2} parent=71 // pred_check_branch
          %570 = sbr.rel (%p568) target = $region120
        $region119: #{transformer_encoder.2} parent=71 // pred_region
          %571 = dma.done [#allocation21], 16
        $region120: #{transformer_encoder.2} parent=71 // pred_fallthru
          _
        // Predicated region
        $region121: #{transformer_encoder.2} parent=71 // pred_check
          %p572 = pneg %p309
        $region122: #{transformer_encoder.2} parent=71 // pred_check_branch
          %574 = sbr.rel (%p572) target = $region124
        $region123: #{transformer_encoder.2} parent=71 // pred_region
          %575 = dma.done [#allocation21], 16
        $region124: #{transformer_encoder.2} parent=71 // pred_fallthru
          _
        %s576 = sand.u32 %s44, 1
        %s577 = scalar_lea.sflag [#allocation3], %s576
        %s578 = sand.u32 %s44, 1
        %s579 = smul.addr %s578, 4
        %s580 = scalar_lea.vmem [#allocation2], %s579
        %p581 = pneg %p57
        %p582 = pneg %p54
        %p583 = pneg %p78
        %p584 = pneg %p75
        %p585 = pneg %p99
        %p586 = pneg %p96
        %p587 = pneg %p120
        %p588 = pneg %p117
        %p589 = pneg %p141
        %p590 = pneg %p138
        %p591 = pneg %p162
        %p592 = pneg %p159
        %p593 = pneg %p183
        %p594 = pneg %p180
        %p595 = pneg %p204
        %p596 = pneg %p201
        %p597 = pneg %p225
        %p598 = pneg %p222
        %p599 = pneg %p246
        %p600 = pneg %p243
        %p601 = pneg %p267
        %p602 = pneg %p264
        %p603 = pneg %p288
        %p604 = pneg %p285
        %p605 = pneg %p309
        %p606 = pneg %p306
        %p607 = pneg %p335
        %p608 = pneg %p332
        %s609 = sand.u32 %s322, 1
        %s610 = scalar_lea.sflag [#allocation4], %s609
        %s611 = sand.u32 %s322, 1
        %s612 = smul.addr %s611, 4
        %s613 = scalar_lea.vmem [#allocation23], %s612
        %v616 = vld [vmem:[%s523] sm:$0xf]
        %v617 = vunpack.c.l.bf16 %v616
        %v618 = vld [vmem:[#allocation8] sm:$0x1]
        %v619 = vld [vmem:[#allocation10] sm:$0x1]
        %vm620 = vcmask 261120
        %v621 = vsel %vm620, %v617, 0.0
        %622 = vadd.xlane.f32.xlu0 %v621
        %v623 = vpop.xlane.xlu0 %622
        %v624 = vrcp.pop 32.0
        %v625 = vmul.f32 %v623, %v624
        %v626 = vsub.f32 %v617, %v625
        %v627 = vmul.f32 %v626, %v626
        %v628 = vsel %vm620, %v627, 0.0
        %629 = vadd.xlane.f32.xlu0 %v628
        %v630 = vpop.xlane.xlu0 %629
        %v631 = vmul.f32 %v630, %v624
        %v632 = vadd.f32 %v631, 1e-06
        %v633 = vrsqrt.pop %v632
        %v634 = vmul.f32 %v626, %v633
        %v636 = vlaneseq
        %v637 = vshrl.u32 %v636, 7
        %v638 = vsub.s32 0, %v637
        %v639 = vrot.slane %v618, %v638
        %v641 = vmul.f32 %v634, %v639
        %v643 = vlaneseq
        %v644 = vshrl.u32 %v643, 7
        %v645 = vsub.s32 0, %v644
        %v646 = vrot.slane %v619, %v645
        %v648 = vadd.f32 %v641, %v646
        %v649 = vpack.c.bf16 %v648, %v648
        %v650 = vld [vmem:[#allocation5] sm:$0xf]
        %v651 = vld [vmem:[#allocation5 + $0x4] sm:$0xf]
        %v652 = vld [vmem:[#allocation5 + $0x8] sm:$0xf]
        %v653 = vld [vmem:[#allocation5 + $0xc] sm:$0xf]
        %v658 = vunpack.c.l.b16 %v650
        %v659 = vunpack.c.l.b16 %v651
        %v660 = vunpack.c.l.b16 %v652
        %v661 = vunpack.c.l.b16 %v653
        %v662 = vpack.c.b16 %v659, %v658
        %v663 = vpack.c.b16 %v661, %v660
        %v667 = vsel %vm620, %v649, 0
        %669 = vmatprep.subr.bf16.mxu0 0
        %670 = vmatpush1.bf16.msra.mxu0 %v662
        %671 = vmatprep.subr.bf16.mxu0 0
        %672 = vmatpush1.bf16.msra.mxu0 %v663
        %673 = vmatprep.subr.bf16.mxu0 0
        %674 = vmatpush1.bf16.msra.mxu0 0
        %675 = vmatprep.subr.bf16.mxu0 0
        %676 = vmatpush1.bf16.msra.mxu0 0
        %677 = vmatprep.subr.bf16.mxu0 0
        %678 = vmatpush1.bf16.msra.mxu0 0
        %679 = vmatprep.subr.bf16.mxu0 0
        %680 = vmatpush1.bf16.msra.mxu0 0
        %681 = vmatprep.subr.bf16.mxu0 0
        %682 = vmatpush1.bf16.msra.mxu0 0
        %683 = vmatprep.subr.bf16.mxu0 0
        %684 = vmatpush1.bf16.msra.mxu0 0
        %685 = vmatprep.subr.bf16.mxu0 0
        %686 = vmatpush1.bf16.msra.mxu0 0
        %687 = vmatprep.subr.bf16.mxu0 0
        %688 = vmatpush1.bf16.msra.mxu0 0
        %689 = vmatprep.subr.bf16.mxu0 0
        %690 = vmatpush1.bf16.msra.mxu0 0
        %691 = vmatprep.subr.bf16.mxu0 0
        %692 = vmatpush1.bf16.msra.mxu0 0
        %693 = vmatprep.subr.bf16.mxu0 0
        %694 = vmatpush1.bf16.msra.mxu0 0
        %695 = vmatprep.subr.bf16.mxu0 0
        %696 = vmatpush1.bf16.msra.mxu0 0
        %697 = vmatprep.subr.bf16.mxu0 0
        %698 = vmatpush1.bf16.msra.mxu0 0
        %699 = vmatprep.subr.bf16.mxu0 0
        %700 = vmatpush1.bf16.msra.mxu0 0
        %701 = vmatprep.mubr.bf16.mxu0 0
        %702 = vmatmul.mubr.bf16.gmra.mrb[0].mxu0 %v667
        %v703 = vpop.f32.mrb[0].mxu0
        %v704 = vadd.f32 0.0, %v703
        %v705 = vpop.f32.mrb[0].mxu0
        %v706 = vpop.f32.mrb[0].mxu0
        %v707 = vpop.f32.mrb[0].mxu0
        %708 = vdwg.mxu0
        %v709 = vpack.c.bf16 %v704, %v704
        %711 = vrot.lane.b32.xlu0 %v709, 120
        %v712 = vpop.permute.xlu0 %711
        %713 = vrot.lane.b32.xlu0 %v709, 112
        %v714 = vpop.permute.xlu0 %713
        %715 = vrot.lane.b32.xlu0 %v709, 104
        %v716 = vpop.permute.xlu0 %715
        %v718 = vunpack.c.l.s4 1983009808
        %v719 = vunpack.c.0.s8 %v718
        %v720 = vlaneseq
        %v721 = vshrl.u32 %v720, 7
        %v722 = vsub.s32 %v719, %v721
        %v723 = vrot.slane %v709, %v722
        %v726 = vunpack.c.l.s4 1983009808
        %v727 = vunpack.c.0.s8 %v726
        %v728 = vlaneseq
        %v729 = vshrl.u32 %v728, 7
        %v730 = vsub.s32 %v727, %v729
        %v731 = vrot.slane %v714, %v730
        %v732 = vcombine.low %v723, %v731
        %v733 = vcombine.high %v723, %v731
        %v735 = vunpack.c.l.s4 1934713408
        %v736 = vunpack.c.0.s8 %v735
        %v737 = vlaneseq
        %v738 = vshrl.u32 %v737, 7
        %v739 = vsub.s32 %v736, %v738
        %v740 = vrot.slane %v732, %v739
        %v742 = vunpack.c.l.s4 1934713408
        %v743 = vunpack.c.0.s8 %v742
        %v744 = vlaneseq
        %v745 = vshrl.u32 %v744, 7
        %v746 = vsub.s32 %v743, %v745
        %v747 = vrot.slane %v733, %v746
        %v748 = vcombine.high %v740, 0
        %v749 = vcombine.high %v747, 0
        %v752 = vunpack.c.l.s4 1983009808
        %v753 = vunpack.c.0.s8 %v752
        %v754 = vlaneseq
        %v755 = vshrl.u32 %v754, 7
        %v756 = vsub.s32 %v753, %v755
        %v757 = vrot.slane %v712, %v756
        %v760 = vunpack.c.l.s4 1983009808
        %v761 = vunpack.c.0.s8 %v760
        %v762 = vlaneseq
        %v763 = vshrl.u32 %v762, 7
        %v764 = vsub.s32 %v761, %v763
        %v765 = vrot.slane %v716, %v764
        %v766 = vcombine.low %v757, %v765
        %v767 = vcombine.high %v757, %v765
        %v769 = vunpack.c.l.s4 1934713408
        %v770 = vunpack.c.0.s8 %v769
        %v771 = vlaneseq
        %v772 = vshrl.u32 %v771, 7
        %v773 = vsub.s32 %v770, %v772
        %v774 = vrot.slane %v766, %v773
        %v776 = vunpack.c.l.s4 1934713408
        %v777 = vunpack.c.0.s8 %v776
        %v778 = vlaneseq
        %v779 = vshrl.u32 %v778, 7
        %v780 = vsub.s32 %v777, %v779
        %v781 = vrot.slane %v767, %v780
        %v782 = vcombine.high %v774, 0
        %v783 = vcombine.high %v781, 0
        %v786 = vpack.i.b16 %v774, %v740
        %v788 = vshrl.u32 %v740, 16
        %v789 = vshrl.u32 %v774, 16
        %v790 = vpack.i.b16 %v789, %v788
        %v794 = vpack.i.b16 %v782, %v748
        %v796 = vshrl.u32 %v748, 16
        %v797 = vshrl.u32 %v782, 16
        %v798 = vpack.i.b16 %v797, %v796
        %v802 = vpack.i.b16 %v781, %v747
        %v804 = vshrl.u32 %v747, 16
        %v805 = vshrl.u32 %v781, 16
        %v806 = vpack.i.b16 %v805, %v804
        %v810 = vpack.i.b16 %v783, %v749
        %v812 = vshrl.u32 %v749, 16
        %v813 = vshrl.u32 %v783, 16
        %v814 = vpack.i.b16 %v813, %v812
        %v816 = vcombine.low %v786, %v802
        %v818 = vunpack.c.l.s4 1983009808
        %v819 = vunpack.c.0.s8 %v818
        %v820 = vlaneseq
        %v821 = vshrl.u32 %v820, 7
        %v822 = vsub.s32 %v819, %v821
        %v823 = vrot.slane %v816, %v822
        %v824 = vcombine.low %v794, %v810
        %v826 = vunpack.c.l.s4 1983009808
        %v827 = vunpack.c.0.s8 %v826
        %v828 = vlaneseq
        %v829 = vshrl.u32 %v828, 7
        %v830 = vsub.s32 %v827, %v829
        %v831 = vrot.slane %v824, %v830
        %v832 = vcombine.low %v823, %v831
        %v834 = vunpack.c.l.s4 1934713408
        %v835 = vunpack.c.0.s8 %v834
        %v836 = vlaneseq
        %v837 = vshrl.u32 %v836, 7
        %v838 = vsub.s32 %v835, %v837
        %v839 = vrot.slane %v832, %v838
        %v840 = vcombine.high %v839, 0
        %v841 = vcombine.low %v790, %v806
        %v843 = vunpack.c.l.s4 1983009808
        %v844 = vunpack.c.0.s8 %v843
        %v845 = vlaneseq
        %v846 = vshrl.u32 %v845, 7
        %v847 = vsub.s32 %v844, %v846
        %v848 = vrot.slane %v841, %v847
        %v849 = vcombine.low %v798, %v814
        %v851 = vunpack.c.l.s4 1983009808
        %v852 = vunpack.c.0.s8 %v851
        %v853 = vlaneseq
        %v854 = vshrl.u32 %v853, 7
        %v855 = vsub.s32 %v852, %v854
        %v856 = vrot.slane %v849, %v855
        %v857 = vcombine.low %v848, %v856
        %v859 = vunpack.c.l.s4 1934713408
        %v860 = vunpack.c.0.s8 %v859
        %v861 = vlaneseq
        %v862 = vshrl.u32 %v861, 7
        %v863 = vsub.s32 %v860, %v862
        %v864 = vrot.slane %v857, %v863
        %v865 = vcombine.high %v864, 0
        %v868 = vpack.i.b16 %v864, %v839
        %v870 = vshrl.u32 %v839, 16
        %v871 = vshrl.u32 %v864, 16
        %v872 = vpack.i.b16 %v871, %v870
        %v876 = vpack.i.b16 %v865, %v840
        %v878 = vshrl.u32 %v840, 16
        %v879 = vshrl.u32 %v865, 16
        %v880 = vpack.i.b16 %v879, %v878
        %v882 = vmul.bf16 %v868, 1052065461
        %v883 = vmul.bf16 %v872, 1052065461
        %v884 = vmul.bf16 %v876, 1052065461
        %v885 = vmul.bf16 %v880, 1052065461
        %886 = vrot.lane.b32.xlu0 %v709, 96
        %v887 = vpop.permute.xlu0 %886
        %888 = vrot.lane.b32.xlu0 %v712, 96
        %v889 = vpop.permute.xlu0 %888
        %890 = vrot.lane.b32.xlu0 %v714, 96
        %v891 = vpop.permute.xlu0 %890
        %892 = vrot.lane.b32.xlu0 %v716, 96
        %v893 = vpop.permute.xlu0 %892
        %v896 = vunpack.c.l.s4 1983009808
        %v897 = vunpack.c.0.s8 %v896
        %v898 = vlaneseq
        %v899 = vshrl.u32 %v898, 7
        %v900 = vsub.s32 %v897, %v899
        %v901 = vrot.slane %v887, %v900
        %v904 = vunpack.c.l.s4 1983009808
        %v905 = vunpack.c.0.s8 %v904
        %v906 = vlaneseq
        %v907 = vshrl.u32 %v906, 7
        %v908 = vsub.s32 %v905, %v907
        %v909 = vrot.slane %v891, %v908
        %v910 = vcombine.low %v901, %v909
        %v911 = vcombine.high %v901, %v909
        %v913 = vunpack.c.l.s4 1934713408
        %v914 = vunpack.c.0.s8 %v913
        %v915 = vlaneseq
        %v916 = vshrl.u32 %v915, 7
        %v917 = vsub.s32 %v914, %v916
        %v918 = vrot.slane %v910, %v917
        %v920 = vunpack.c.l.s4 1934713408
        %v921 = vunpack.c.0.s8 %v920
        %v922 = vlaneseq
        %v923 = vshrl.u32 %v922, 7
        %v924 = vsub.s32 %v921, %v923
        %v925 = vrot.slane %v911, %v924
        %v926 = vcombine.high %v918, 0
        %v927 = vcombine.high %v925, 0
        %v930 = vunpack.c.l.s4 1983009808
        %v931 = vunpack.c.0.s8 %v930
        %v932 = vlaneseq
        %v933 = vshrl.u32 %v932, 7
        %v934 = vsub.s32 %v931, %v933
        %v935 = vrot.slane %v889, %v934
        %v938 = vunpack.c.l.s4 1983009808
        %v939 = vunpack.c.0.s8 %v938
        %v940 = vlaneseq
        %v941 = vshrl.u32 %v940, 7
        %v942 = vsub.s32 %v939, %v941
        %v943 = vrot.slane %v893, %v942
        %v944 = vcombine.low %v935, %v943
        %v945 = vcombine.high %v935, %v943
        %v947 = vunpack.c.l.s4 1934713408
        %v948 = vunpack.c.0.s8 %v947
        %v949 = vlaneseq
        %v950 = vshrl.u32 %v949, 7
        %v951 = vsub.s32 %v948, %v950
        %v952 = vrot.slane %v944, %v951
        %v954 = vunpack.c.l.s4 1934713408
        %v955 = vunpack.c.0.s8 %v954
        %v956 = vlaneseq
        %v957 = vshrl.u32 %v956, 7
        %v958 = vsub.s32 %v955, %v957
        %v959 = vrot.slane %v945, %v958
        %v960 = vcombine.high %v952, 0
        %v961 = vcombine.high %v959, 0
        %v964 = vpack.i.b16 %v952, %v918
        %v966 = vshrl.u32 %v918, 16
        %v967 = vshrl.u32 %v952, 16
        %v968 = vpack.i.b16 %v967, %v966
        %v972 = vpack.i.b16 %v960, %v926
        %v974 = vshrl.u32 %v926, 16
        %v975 = vshrl.u32 %v960, 16
        %v976 = vpack.i.b16 %v975, %v974
        %v980 = vpack.i.b16 %v959, %v925
        %v982 = vshrl.u32 %v925, 16
        %v983 = vshrl.u32 %v959, 16
        %v984 = vpack.i.b16 %v983, %v982
        %v988 = vpack.i.b16 %v961, %v927
        %v990 = vshrl.u32 %v927, 16
        %v991 = vshrl.u32 %v961, 16
        %v992 = vpack.i.b16 %v991, %v990
        %v994 = vcombine.low %v964, %v980
        %v996 = vunpack.c.l.s4 1983009808
        %v997 = vunpack.c.0.s8 %v996
        %v998 = vlaneseq
        %v999 = vshrl.u32 %v998, 7
        %v1000 = vsub.s32 %v997, %v999
        %v1001 = vrot.slane %v994, %v1000
        %v1002 = vcombine.low %v972, %v988
        %v1004 = vunpack.c.l.s4 1983009808
        %v1005 = vunpack.c.0.s8 %v1004
        %v1006 = vlaneseq
        %v1007 = vshrl.u32 %v1006, 7
        %v1008 = vsub.s32 %v1005, %v1007
        %v1009 = vrot.slane %v1002, %v1008
        %v1010 = vcombine.low %v1001, %v1009
        %v1012 = vunpack.c.l.s4 1934713408
        %v1013 = vunpack.c.0.s8 %v1012
        %v1014 = vlaneseq
        %v1015 = vshrl.u32 %v1014, 7
        %v1016 = vsub.s32 %v1013, %v1015
        %v1017 = vrot.slane %v1010, %v1016
        %v1018 = vcombine.high %v1017, 0
        %v1019 = vcombine.low %v968, %v984
        %v1021 = vunpack.c.l.s4 1983009808
        %v1022 = vunpack.c.0.s8 %v1021
        %v1023 = vlaneseq
        %v1024 = vshrl.u32 %v1023, 7
        %v1025 = vsub.s32 %v1022, %v1024
        %v1026 = vrot.slane %v1019, %v1025
        %v1027 = vcombine.low %v976, %v992
        %v1029 = vunpack.c.l.s4 1983009808
        %v1030 = vunpack.c.0.s8 %v1029
        %v1031 = vlaneseq
        %v1032 = vshrl.u32 %v1031, 7
        %v1033 = vsub.s32 %v1030, %v1032
        %v1034 = vrot.slane %v1027, %v1033
        %v1035 = vcombine.low %v1026, %v1034
        %v1037 = vunpack.c.l.s4 1934713408
        %v1038 = vunpack.c.0.s8 %v1037
        %v1039 = vlaneseq
        %v1040 = vshrl.u32 %v1039, 7
        %v1041 = vsub.s32 %v1038, %v1040
        %v1042 = vrot.slane %v1035, %v1041
        %v1043 = vcombine.high %v1042, 0
        %v1046 = vpack.i.b16 %v1042, %v1017
        %v1047 = vshrl.u32 %v1017, 16
        %v1048 = vshrl.u32 %v1042, 16
        %v1049 = vpack.i.b16 %v1048, %v1047
        %v1052 = vpack.i.b16 %v1043, %v1018
        %v1053 = vshrl.u32 %v1018, 16
        %v1054 = vshrl.u32 %v1043, 16
        %v1055 = vpack.i.b16 %v1054, %v1053
        %1056 = vrot.lane.b32.xlu0 %v709, 64
        %v1057 = vpop.permute.xlu0 %1056
        %1058 = vrot.lane.b32.xlu0 %v712, 64
        %v1059 = vpop.permute.xlu0 %1058
        %1060 = vrot.lane.b32.xlu0 %v714, 64
        %v1061 = vpop.permute.xlu0 %1060
        %1062 = vrot.lane.b32.xlu0 %v716, 64
        %v1063 = vpop.permute.xlu0 %1062
        %v1066 = vunpack.c.l.s4 1983009808
        %v1067 = vunpack.c.0.s8 %v1066
        %v1068 = vlaneseq
        %v1069 = vshrl.u32 %v1068, 7
        %v1070 = vsub.s32 %v1067, %v1069
        %v1071 = vrot.slane %v1057, %v1070
        %v1074 = vunpack.c.l.s4 1983009808
        %v1075 = vunpack.c.0.s8 %v1074
        %v1076 = vlaneseq
        %v1077 = vshrl.u32 %v1076, 7
        %v1078 = vsub.s32 %v1075, %v1077
        %v1079 = vrot.slane %v1061, %v1078
        %v1080 = vcombine.low %v1071, %v1079
        %v1081 = vcombine.high %v1071, %v1079
        %v1083 = vunpack.c.l.s4 1934713408
        %v1084 = vunpack.c.0.s8 %v1083
        %v1085 = vlaneseq
        %v1086 = vshrl.u32 %v1085, 7
        %v1087 = vsub.s32 %v1084, %v1086
        %v1088 = vrot.slane %v1080, %v1087
        %v1090 = vunpack.c.l.s4 1934713408
        %v1091 = vunpack.c.0.s8 %v1090
        %v1092 = vlaneseq
        %v1093 = vshrl.u32 %v1092, 7
        %v1094 = vsub.s32 %v1091, %v1093
        %v1095 = vrot.slane %v1081, %v1094
        %v1096 = vcombine.high %v1088, 0
        %v1097 = vcombine.high %v1095, 0
        %v1100 = vunpack.c.l.s4 1983009808
        %v1101 = vunpack.c.0.s8 %v1100
        %v1102 = vlaneseq
        %v1103 = vshrl.u32 %v1102, 7
        %v1104 = vsub.s32 %v1101, %v1103
        %v1105 = vrot.slane %v1059, %v1104
        %v1108 = vunpack.c.l.s4 1983009808
        %v1109 = vunpack.c.0.s8 %v1108
        %v1110 = vlaneseq
        %v1111 = vshrl.u32 %v1110, 7
        %v1112 = vsub.s32 %v1109, %v1111
        %v1113 = vrot.slane %v1063, %v1112
        %v1114 = vcombine.low %v1105, %v1113
        %v1115 = vcombine.high %v1105, %v1113
        %v1117 = vunpack.c.l.s4 1934713408
        %v1118 = vunpack.c.0.s8 %v1117
        %v1119 = vlaneseq
        %v1120 = vshrl.u32 %v1119, 7
        %v1121 = vsub.s32 %v1118, %v1120
        %v1122 = vrot.slane %v1114, %v1121
        %v1124 = vunpack.c.l.s4 1934713408
        %v1125 = vunpack.c.0.s8 %v1124
        %v1126 = vlaneseq
        %v1127 = vshrl.u32 %v1126, 7
        %v1128 = vsub.s32 %v1125, %v1127
        %v1129 = vrot.slane %v1115, %v1128
        %v1130 = vcombine.high %v1122, 0
        %v1131 = vcombine.high %v1129, 0
        %v1134 = vpack.i.b16 %v1122, %v1088
        %v1136 = vshrl.u32 %v1088, 16
        %v1137 = vshrl.u32 %v1122, 16
        %v1138 = vpack.i.b16 %v1137, %v1136
        %v1142 = vpack.i.b16 %v1130, %v1096
        %v1144 = vshrl.u32 %v1096, 16
        %v1145 = vshrl.u32 %v1130, 16
        %v1146 = vpack.i.b16 %v1145, %v1144
        %v1150 = vpack.i.b16 %v1129, %v1095
        %v1152 = vshrl.u32 %v1095, 16
        %v1153 = vshrl.u32 %v1129, 16
        %v1154 = vpack.i.b16 %v1153, %v1152
        %v1158 = vpack.i.b16 %v1131, %v1097
        %v1160 = vshrl.u32 %v1097, 16
        %v1161 = vshrl.u32 %v1131, 16
        %v1162 = vpack.i.b16 %v1161, %v1160
        %v1164 = vcombine.low %v1134, %v1150
        %v1166 = vunpack.c.l.s4 1983009808
        %v1167 = vunpack.c.0.s8 %v1166
        %v1168 = vlaneseq
        %v1169 = vshrl.u32 %v1168, 7
        %v1170 = vsub.s32 %v1167, %v1169
        %v1171 = vrot.slane %v1164, %v1170
        %v1172 = vcombine.low %v1142, %v1158
        %v1174 = vunpack.c.l.s4 1983009808
        %v1175 = vunpack.c.0.s8 %v1174
        %v1176 = vlaneseq
        %v1177 = vshrl.u32 %v1176, 7
        %v1178 = vsub.s32 %v1175, %v1177
        %v1179 = vrot.slane %v1172, %v1178
        %v1180 = vcombine.low %v1171, %v1179
        %v1182 = vunpack.c.l.s4 1934713408
        %v1183 = vunpack.c.0.s8 %v1182
        %v1184 = vlaneseq
        %v1185 = vshrl.u32 %v1184, 7
        %v1186 = vsub.s32 %v1183, %v1185
        %v1187 = vrot.slane %v1180, %v1186
        %v1188 = vcombine.high %v1187, 0
        %v1189 = vcombine.low %v1138, %v1154
        %v1191 = vunpack.c.l.s4 1983009808
        %v1192 = vunpack.c.0.s8 %v1191
        %v1193 = vlaneseq
        %v1194 = vshrl.u32 %v1193, 7
        %v1195 = vsub.s32 %v1192, %v1194
        %v1196 = vrot.slane %v1189, %v1195
        %v1197 = vcombine.low %v1146, %v1162
        %v1199 = vunpack.c.l.s4 1983009808
        %v1200 = vunpack.c.0.s8 %v1199
        %v1201 = vlaneseq
        %v1202 = vshrl.u32 %v1201, 7
        %v1203 = vsub.s32 %v1200, %v1202
        %v1204 = vrot.slane %v1197, %v1203
        %v1205 = vcombine.low %v1196, %v1204
        %v1207 = vunpack.c.l.s4 1934713408
        %v1208 = vunpack.c.0.s8 %v1207
        %v1209 = vlaneseq
        %v1210 = vshrl.u32 %v1209, 7
        %v1211 = vsub.s32 %v1208, %v1210
        %v1212 = vrot.slane %v1205, %v1211
        %v1213 = vcombine.high %v1212, 0
        %v1216 = vpack.i.b16 %v1212, %v1187
        %v1217 = vshrl.u32 %v1187, 16
        %v1218 = vshrl.u32 %v1212, 16
        %v1219 = vpack.i.b16 %v1218, %v1217
        %v1222 = vpack.i.b16 %v1213, %v1188
        %v1223 = vshrl.u32 %v1188, 16
        %v1224 = vshrl.u32 %v1213, 16
        %v1225 = vpack.i.b16 %v1224, %v1223
        %vm1226 = vcmask 64512
        %v1228 = vsel %vm1226, %v882, 0
        %v1231 = vsel %vm1226, %v1046, 0
        %1233 = vmatprep.subr.bf16.mxu0 0
        %1234 = vmatpush1.bf16.xpose.msra.mxu0 %v1231
        %1235 = vmatprep.subr.bf16.mxu0 0
        %1236 = vmatpush1.bf16.xpose.msra.mxu0 0
        %1237 = vmatprep.subr.bf16.mxu0 0
        %1238 = vmatpush1.bf16.xpose.msra.mxu0 0
        %1239 = vmatprep.subr.bf16.mxu0 0
        %1240 = vmatpush1.bf16.xpose.msra.mxu0 0
        %1241 = vmatprep.subr.bf16.mxu0 0
        %1242 = vmatpush1.bf16.xpose.msra.mxu0 0
        %1243 = vmatprep.subr.bf16.mxu0 0
        %1244 = vmatpush1.bf16.xpose.msra.mxu0 0
        %1245 = vmatprep.subr.bf16.mxu0 0
        %1246 = vmatpush1.bf16.xpose.msra.mxu0 0
        %1247 = vmatprep.subr.bf16.mxu0 0
        %1248 = vmatpush1.bf16.xpose.msra.mxu0 0
        %1249 = vmatprep.subr.bf16.mxu0 0
        %1250 = vmatpush1.bf16.xpose.msra.mxu0 0
        %1251 = vmatprep.subr.bf16.mxu0 0
        %1252 = vmatpush1.bf16.xpose.msra.mxu0 0
        %1253 = vmatprep.subr.bf16.mxu0 0
        %1254 = vmatpush1.bf16.xpose.msra.mxu0 0
        %1255 = vmatprep.subr.bf16.mxu0 0
        %1256 = vmatpush1.bf16.xpose.msra.mxu0 0
        %1257 = vmatprep.subr.bf16.mxu0 0
        %1258 = vmatpush1.bf16.xpose.msra.mxu0 0
        %1259 = vmatprep.subr.bf16.mxu0 0
        %1260 = vmatpush1.bf16.xpose.msra.mxu0 0
        %1261 = vmatprep.subr.bf16.mxu0 0
        %1262 = vmatpush1.bf16.xpose.msra.mxu0 0
        %1263 = vmatprep.subr.bf16.mxu0 0
        %1264 = vmatpush1.bf16.xpose.msra.mxu0 0
        %1265 = vmatprep.mubr.bf16.mxu0 0
        %1266 = vmatmul.mubr.bf16.gmra.mrb[0].mxu0 %v1228
        %v1267 = vpop.f32.mrb[0].mxu0
        %v1268 = vadd.f32 0.0, %v1267
        %v1269 = vpop.f32.mrb[0].mxu0
        %v1270 = vpop.f32.mrb[0].mxu0
        %v1271 = vpop.f32.mrb[0].mxu0
        %1272 = vdwg.mxu0
        %v1274 = vsel %vm1226, %v883, 0
        %v1277 = vsel %vm1226, %v1049, 0
        %1279 = vmatprep.subr.bf16.mxu0 0
        %1280 = vmatpush1.bf16.xpose.msra.mxu0 %v1277
        %1281 = vmatprep.subr.bf16.mxu0 0
        %1282 = vmatpush1.bf16.xpose.msra.mxu0 0
        %1283 = vmatprep.subr.bf16.mxu0 0
        %1284 = vmatpush1.bf16.xpose.msra.mxu0 0
        %1285 = vmatprep.subr.bf16.mxu0 0
        %1286 = vmatpush1.bf16.xpose.msra.mxu0 0
        %1287 = vmatprep.subr.bf16.mxu0 0
        %1288 = vmatpush1.bf16.xpose.msra.mxu0 0
        %1289 = vmatprep.subr.bf16.mxu0 0
        %1290 = vmatpush1.bf16.xpose.msra.mxu0 0
        %1291 = vmatprep.subr.bf16.mxu0 0
        %1292 = vmatpush1.bf16.xpose.msra.mxu0 0
        %1293 = vmatprep.subr.bf16.mxu0 0
        %1294 = vmatpush1.bf16.xpose.msra.mxu0 0
        %1295 = vmatprep.subr.bf16.mxu0 0
        %1296 = vmatpush1.bf16.xpose.msra.mxu0 0
        %1297 = vmatprep.subr.bf16.mxu0 0
        %1298 = vmatpush1.bf16.xpose.msra.mxu0 0
        %1299 = vmatprep.subr.bf16.mxu0 0
        %1300 = vmatpush1.bf16.xpose.msra.mxu0 0
        %1301 = vmatprep.subr.bf16.mxu0 0
        %1302 = vmatpush1.bf16.xpose.msra.mxu0 0
        %1303 = vmatprep.subr.bf16.mxu0 0
        %1304 = vmatpush1.bf16.xpose.msra.mxu0 0
        %1305 = vmatprep.subr.bf16.mxu0 0
        %1306 = vmatpush1.bf16.xpose.msra.mxu0 0
        %1307 = vmatprep.subr.bf16.mxu0 0
        %1308 = vmatpush1.bf16.xpose.msra.mxu0 0
        %1309 = vmatprep.subr.bf16.mxu0 0
        %1310 = vmatpush1.bf16.xpose.msra.mxu0 0
        %1311 = vmatprep.mubr.bf16.mxu0 0
        %1312 = vmatmul.mubr.bf16.gmra.mrb[0].mxu0 %v1274
        %v1313 = vpop.f32.mrb[0].mxu0
        %v1314 = vadd.f32 0.0, %v1313
        %v1315 = vpop.f32.mrb[0].mxu0
        %v1316 = vpop.f32.mrb[0].mxu0
        %v1317 = vpop.f32.mrb[0].mxu0
        %1318 = vdwg.mxu0
        %v1320 = vsel %vm1226, %v884, 0
        %v1323 = vsel %vm1226, %v1052, 0
        %1325 = vmatprep.subr.bf16.mxu0 0
        %1326 = vmatpush1.bf16.xpose.msra.mxu0 %v1323
        %1327 = vmatprep.subr.bf16.mxu0 0
        %1328 = vmatpush1.bf16.xpose.msra.mxu0 0
        %1329 = vmatprep.subr.bf16.mxu0 0
        %1330 = vmatpush1.bf16.xpose.msra.mxu0 0
        %1331 = vmatprep.subr.bf16.mxu0 0
        %1332 = vmatpush1.bf16.xpose.msra.mxu0 0
        %1333 = vmatprep.subr.bf16.mxu0 0
        %1334 = vmatpush1.bf16.xpose.msra.mxu0 0
        %1335 = vmatprep.subr.bf16.mxu0 0
        %1336 = vmatpush1.bf16.xpose.msra.mxu0 0
        %1337 = vmatprep.subr.bf16.mxu0 0
        %1338 = vmatpush1.bf16.xpose.msra.mxu0 0
        %1339 = vmatprep.subr.bf16.mxu0 0
        %1340 = vmatpush1.bf16.xpose.msra.mxu0 0
        %1341 = vmatprep.subr.bf16.mxu0 0
        %1342 = vmatpush1.bf16.xpose.msra.mxu0 0
        %1343 = vmatprep.subr.bf16.mxu0 0
        %1344 = vmatpush1.bf16.xpose.msra.mxu0 0
        %1345 = vmatprep.subr.bf16.mxu0 0
        %1346 = vmatpush1.bf16.xpose.msra.mxu0 0
        %1347 = vmatprep.subr.bf16.mxu0 0
        %1348 = vmatpush1.bf16.xpose.msra.mxu0 0
        %1349 = vmatprep.subr.bf16.mxu0 0
        %1350 = vmatpush1.bf16.xpose.msra.mxu0 0
        %1351 = vmatprep.subr.bf16.mxu0 0
        %1352 = vmatpush1.bf16.xpose.msra.mxu0 0
        %1353 = vmatprep.subr.bf16.mxu0 0
        %1354 = vmatpush1.bf16.xpose.msra.mxu0 0
        %1355 = vmatprep.subr.bf16.mxu0 0
        %1356 = vmatpush1.bf16.xpose.msra.mxu0 0
        %1357 = vmatprep.mubr.bf16.mxu0 0
        %1358 = vmatmul.mubr.bf16.gmra.mrb[0].mxu0 %v1320
        %v1359 = vpop.f32.mrb[0].mxu0
        %v1360 = vadd.f32 0.0, %v1359
        %v1361 = vpop.f32.mrb[0].mxu0
        %v1362 = vpop.f32.mrb[0].mxu0
        %v1363 = vpop.f32.mrb[0].mxu0
        %1364 = vdwg.mxu0
        %v1366 = vsel %vm1226, %v885, 0
        %v1369 = vsel %vm1226, %v1055, 0
        %1371 = vmatprep.subr.bf16.mxu0 0
        %1372 = vmatpush1.bf16.xpose.msra.mxu0 %v1369
        %1373 = vmatprep.subr.bf16.mxu0 0
        %1374 = vmatpush1.bf16.xpose.msra.mxu0 0
        %1375 = vmatprep.subr.bf16.mxu0 0
        %1376 = vmatpush1.bf16.xpose.msra.mxu0 0
        %1377 = vmatprep.subr.bf16.mxu0 0
        %1378 = vmatpush1.bf16.xpose.msra.mxu0 0
        %1379 = vmatprep.subr.bf16.mxu0 0
        %1380 = vmatpush1.bf16.xpose.msra.mxu0 0
        %1381 = vmatprep.subr.bf16.mxu0 0
        %1382 = vmatpush1.bf16.xpose.msra.mxu0 0
        %1383 = vmatprep.subr.bf16.mxu0 0
        %1384 = vmatpush1.bf16.xpose.msra.mxu0 0
        %1385 = vmatprep.subr.bf16.mxu0 0
        %1386 = vmatpush1.bf16.xpose.msra.mxu0 0
        %1387 = vmatprep.subr.bf16.mxu0 0
        %1388 = vmatpush1.bf16.xpose.msra.mxu0 0
        %1389 = vmatprep.subr.bf16.mxu0 0
        %1390 = vmatpush1.bf16.xpose.msra.mxu0 0
        %1391 = vmatprep.subr.bf16.mxu0 0
        %1392 = vmatpush1.bf16.xpose.msra.mxu0 0
        %1393 = vmatprep.subr.bf16.mxu0 0
        %1394 = vmatpush1.bf16.xpose.msra.mxu0 0
        %1395 = vmatprep.subr.bf16.mxu0 0
        %1396 = vmatpush1.bf16.xpose.msra.mxu0 0
        %1397 = vmatprep.subr.bf16.mxu0 0
        %1398 = vmatpush1.bf16.xpose.msra.mxu0 0
        %1399 = vmatprep.subr.bf16.mxu0 0
        %1400 = vmatpush1.bf16.xpose.msra.mxu0 0
        %1401 = vmatprep.subr.bf16.mxu0 0
        %1402 = vmatpush1.bf16.xpose.msra.mxu0 0
        %1403 = vmatprep.mubr.bf16.mxu0 0
        %1404 = vmatmul.mubr.bf16.gmra.mrb[0].mxu0 %v1366
        %v1405 = vpop.f32.mrb[0].mxu0
        %v1406 = vadd.f32 0.0, %v1405
        %v1407 = vpop.f32.mrb[0].mxu0
        %v1408 = vpop.f32.mrb[0].mxu0
        %v1409 = vpop.f32.mrb[0].mxu0
        %1410 = vdwg.mxu0
        %v1411 = vsel %vm1226, %v1268, -inf
        %1412 = vmax.xlane.f32.xlu0 %v1411
        %v1413 = vpop.xlane.xlu0 %1412
        %v1414 = vsel %vm1226, %v1314, -inf
        %1415 = vmax.xlane.f32.xlu0 %v1414
        %v1416 = vpop.xlane.xlu0 %1415
        %v1417 = vsel %vm1226, %v1360, -inf
        %1418 = vmax.xlane.f32.xlu0 %v1417
        %v1419 = vpop.xlane.xlu0 %1418
        %v1420 = vsel %vm1226, %v1406, -inf
        %1421 = vmax.xlane.f32.xlu0 %v1420
        %v1422 = vpop.xlane.xlu0 %1421
        %v1423 = vsub.f32 %v1268, %v1413
        %v1424 = vsub.f32 %v1314, %v1416
        %v1425 = vsub.f32 %v1360, %v1419
        %v1426 = vsub.f32 %v1406, %v1422
        %v1427 = vmul.f32 %v1423, 1.442695
        %v1428 = vpow.pop %v1427
        %v1429 = vmul.f32 %v1424, 1.442695
        %v1430 = vpow.pop %v1429
        %v1431 = vmul.f32 %v1425, 1.442695
        %v1432 = vpow.pop %v1431
        %v1433 = vmul.f32 %v1426, 1.442695
        %v1434 = vpow.pop %v1433
        %v1435 = vsel %vm1226, %v1428, 0.0
        %1436 = vadd.xlane.f32.xlu0 %v1435
        %v1437 = vpop.xlane.xlu0 %1436
        %v1438 = vsel %vm1226, %v1430, 0.0
        %1439 = vadd.xlane.f32.xlu0 %v1438
        %v1440 = vpop.xlane.xlu0 %1439
        %v1441 = vsel %vm1226, %v1432, 0.0
        %1442 = vadd.xlane.f32.xlu0 %v1441
        %v1443 = vpop.xlane.xlu0 %1442
        %v1444 = vsel %vm1226, %v1434, 0.0
        %1445 = vadd.xlane.f32.xlu0 %v1444
        %v1446 = vpop.xlane.xlu0 %1445
        %v1447 = vrcp.pop %v1437
        %v1448 = vrcp.pop %v1440
        %v1449 = vrcp.pop %v1443
        %v1450 = vrcp.pop %v1446
        %v1451 = vmul.f32 %v1428, %v1447
        %v1452 = vmul.f32 %v1430, %v1448
        %v1453 = vmul.f32 %v1432, %v1449
        %v1454 = vmul.f32 %v1434, %v1450
        %v1455 = vpack.c.bf16 %v1451, %v1451
        %v1456 = vpack.c.bf16 %v1452, %v1452
        %v1457 = vpack.c.bf16 %v1453, %v1453
        %v1458 = vpack.c.bf16 %v1454, %v1454
        %v1460 = vsel %vm1226, %v1455, 0
        %vm1462 = vcmask 1043456
        %v1464 = vsel %vm1462, %v1216, 0
        %1466 = vmatprep.subr.bf16.mxu0 0
        %1467 = vmatpush1.bf16.msra.mxu0 %v1464
        %1468 = vmatprep.subr.bf16.mxu0 0
        %1469 = vmatpush1.bf16.msra.mxu0 0
        %1470 = vmatprep.subr.bf16.mxu0 0
        %1471 = vmatpush1.bf16.msra.mxu0 0
        %1472 = vmatprep.subr.bf16.mxu0 0
        %1473 = vmatpush1.bf16.msra.mxu0 0
        %1474 = vmatprep.subr.bf16.mxu0 0
        %1475 = vmatpush1.bf16.msra.mxu0 0
        %1476 = vmatprep.subr.bf16.mxu0 0
        %1477 = vmatpush1.bf16.msra.mxu0 0
        %1478 = vmatprep.subr.bf16.mxu0 0
        %1479 = vmatpush1.bf16.msra.mxu0 0
        %1480 = vmatprep.subr.bf16.mxu0 0
        %1481 = vmatpush1.bf16.msra.mxu0 0
        %1482 = vmatprep.subr.bf16.mxu0 0
        %1483 = vmatpush1.bf16.msra.mxu0 0
        %1484 = vmatprep.subr.bf16.mxu0 0
        %1485 = vmatpush1.bf16.msra.mxu0 0
        %1486 = vmatprep.subr.bf16.mxu0 0
        %1487 = vmatpush1.bf16.msra.mxu0 0
        %1488 = vmatprep.subr.bf16.mxu0 0
        %1489 = vmatpush1.bf16.msra.mxu0 0
        %1490 = vmatprep.subr.bf16.mxu0 0
        %1491 = vmatpush1.bf16.msra.mxu0 0
        %1492 = vmatprep.subr.bf16.mxu0 0
        %1493 = vmatpush1.bf16.msra.mxu0 0
        %1494 = vmatprep.subr.bf16.mxu0 0
        %1495 = vmatpush1.bf16.msra.mxu0 0
        %1496 = vmatprep.subr.bf16.mxu0 0
        %1497 = vmatpush1.bf16.msra.mxu0 0
        %1498 = vmatprep.mubr.bf16.mxu0 0
        %1499 = vmatmul.mubr.bf16.gmra.mrb[0].mxu0 %v1460
        %v1500 = vpop.f32.mrb[0].mxu0
        %v1501 = vadd.f32 0.0, %v1500
        %v1502 = vpop.f32.mrb[0].mxu0
        %v1503 = vpop.f32.mrb[0].mxu0
        %v1504 = vpop.f32.mrb[0].mxu0
        %1505 = vdwg.mxu0
        %v1507 = vsel %vm1226, %v1456, 0
        %v1510 = vsel %vm1462, %v1219, 0
        %1512 = vmatprep.subr.bf16.mxu0 0
        %1513 = vmatpush1.bf16.msra.mxu0 %v1510
        %1514 = vmatprep.subr.bf16.mxu0 0
        %1515 = vmatpush1.bf16.msra.mxu0 0
        %1516 = vmatprep.subr.bf16.mxu0 0
        %1517 = vmatpush1.bf16.msra.mxu0 0
        %1518 = vmatprep.subr.bf16.mxu0 0
        %1519 = vmatpush1.bf16.msra.mxu0 0
        %1520 = vmatprep.subr.bf16.mxu0 0
        %1521 = vmatpush1.bf16.msra.mxu0 0
        %1522 = vmatprep.subr.bf16.mxu0 0
        %1523 = vmatpush1.bf16.msra.mxu0 0
        %1524 = vmatprep.subr.bf16.mxu0 0
        %1525 = vmatpush1.bf16.msra.mxu0 0
        %1526 = vmatprep.subr.bf16.mxu0 0
        %1527 = vmatpush1.bf16.msra.mxu0 0
        %1528 = vmatprep.subr.bf16.mxu0 0
        %1529 = vmatpush1.bf16.msra.mxu0 0
        %1530 = vmatprep.subr.bf16.mxu0 0
        %1531 = vmatpush1.bf16.msra.mxu0 0
        %1532 = vmatprep.subr.bf16.mxu0 0
        %1533 = vmatpush1.bf16.msra.mxu0 0
        %1534 = vmatprep.subr.bf16.mxu0 0
        %1535 = vmatpush1.bf16.msra.mxu0 0
        %1536 = vmatprep.subr.bf16.mxu0 0
        %1537 = vmatpush1.bf16.msra.mxu0 0
        %1538 = vmatprep.subr.bf16.mxu0 0
        %1539 = vmatpush1.bf16.msra.mxu0 0
        %1540 = vmatprep.subr.bf16.mxu0 0
        %1541 = vmatpush1.bf16.msra.mxu0 0
        %1542 = vmatprep.subr.bf16.mxu0 0
        %1543 = vmatpush1.bf16.msra.mxu0 0
        %1544 = vmatprep.mubr.bf16.mxu0 0
        %1545 = vmatmul.mubr.bf16.gmra.mrb[0].mxu0 %v1507
        %v1546 = vpop.f32.mrb[0].mxu0
        %v1547 = vadd.f32 0.0, %v1546
        %v1548 = vpop.f32.mrb[0].mxu0
        %v1549 = vpop.f32.mrb[0].mxu0
        %v1550 = vpop.f32.mrb[0].mxu0
        %1551 = vdwg.mxu0
        %v1553 = vsel %vm1226, %v1457, 0
        %v1556 = vsel %vm1462, %v1222, 0
        %1558 = vmatprep.subr.bf16.mxu0 0
        %1559 = vmatpush1.bf16.msra.mxu0 %v1556
        %1560 = vmatprep.subr.bf16.mxu0 0
        %1561 = vmatpush1.bf16.msra.mxu0 0
        %1562 = vmatprep.subr.bf16.mxu0 0
        %1563 = vmatpush1.bf16.msra.mxu0 0
        %1564 = vmatprep.subr.bf16.mxu0 0
        %1565 = vmatpush1.bf16.msra.mxu0 0
        %1566 = vmatprep.subr.bf16.mxu0 0
        %1567 = vmatpush1.bf16.msra.mxu0 0
        %1568 = vmatprep.subr.bf16.mxu0 0
        %1569 = vmatpush1.bf16.msra.mxu0 0
        %1570 = vmatprep.subr.bf16.mxu0 0
        %1571 = vmatpush1.bf16.msra.mxu0 0
        %1572 = vmatprep.subr.bf16.mxu0 0
        %1573 = vmatpush1.bf16.msra.mxu0 0
        %1574 = vmatprep.subr.bf16.mxu0 0
        %1575 = vmatpush1.bf16.msra.mxu0 0
        %1576 = vmatprep.subr.bf16.mxu0 0
        %1577 = vmatpush1.bf16.msra.mxu0 0
        %1578 = vmatprep.subr.bf16.mxu0 0
        %1579 = vmatpush1.bf16.msra.mxu0 0
        %1580 = vmatprep.subr.bf16.mxu0 0
        %1581 = vmatpush1.bf16.msra.mxu0 0
        %1582 = vmatprep.subr.bf16.mxu0 0
        %1583 = vmatpush1.bf16.msra.mxu0 0
        %1584 = vmatprep.subr.bf16.mxu0 0
        %1585 = vmatpush1.bf16.msra.mxu0 0
        %1586 = vmatprep.subr.bf16.mxu0 0
        %1587 = vmatpush1.bf16.msra.mxu0 0
        %1588 = vmatprep.subr.bf16.mxu0 0
        %1589 = vmatpush1.bf16.msra.mxu0 0
        %1590 = vmatprep.mubr.bf16.mxu0 0
        %1591 = vmatmul.mubr.bf16.gmra.mrb[0].mxu0 %v1553
        %v1592 = vpop.f32.mrb[0].mxu0
        %v1593 = vadd.f32 0.0, %v1592
        %v1594 = vpop.f32.mrb[0].mxu0
        %v1595 = vpop.f32.mrb[0].mxu0
        %v1596 = vpop.f32.mrb[0].mxu0
        %1597 = vdwg.mxu0
        %v1599 = vsel %vm1226, %v1458, 0
        %v1602 = vsel %vm1462, %v1225, 0
        %1604 = vmatprep.subr.bf16.mxu0 0
        %1605 = vmatpush1.bf16.msra.mxu0 %v1602
        %1606 = vmatprep.subr.bf16.mxu0 0
        %1607 = vmatpush1.bf16.msra.mxu0 0
        %1608 = vmatprep.subr.bf16.mxu0 0
        %1609 = vmatpush1.bf16.msra.mxu0 0
        %1610 = vmatprep.subr.bf16.mxu0 0
        %1611 = vmatpush1.bf16.msra.mxu0 0
        %1612 = vmatprep.subr.bf16.mxu0 0
        %1613 = vmatpush1.bf16.msra.mxu0 0
        %1614 = vmatprep.subr.bf16.mxu0 0
        %1615 = vmatpush1.bf16.msra.mxu0 0
        %1616 = vmatprep.subr.bf16.mxu0 0
        %1617 = vmatpush1.bf16.msra.mxu0 0
        %1618 = vmatprep.subr.bf16.mxu0 0
        %1619 = vmatpush1.bf16.msra.mxu0 0
        %1620 = vmatprep.subr.bf16.mxu0 0
        %1621 = vmatpush1.bf16.msra.mxu0 0
        %1622 = vmatprep.subr.bf16.mxu0 0
        %1623 = vmatpush1.bf16.msra.mxu0 0
        %1624 = vmatprep.subr.bf16.mxu0 0
        %1625 = vmatpush1.bf16.msra.mxu0 0
        %1626 = vmatprep.subr.bf16.mxu0 0
        %1627 = vmatpush1.bf16.msra.mxu0 0
        %1628 = vmatprep.subr.bf16.mxu0 0
        %1629 = vmatpush1.bf16.msra.mxu0 0
        %1630 = vmatprep.subr.bf16.mxu0 0
        %1631 = vmatpush1.bf16.msra.mxu0 0
        %1632 = vmatprep.subr.bf16.mxu0 0
        %1633 = vmatpush1.bf16.msra.mxu0 0
        %1634 = vmatprep.subr.bf16.mxu0 0
        %1635 = vmatpush1.bf16.msra.mxu0 0
        %1636 = vmatprep.mubr.bf16.mxu0 0
        %1637 = vmatmul.mubr.bf16.gmra.mrb[0].mxu0 %v1599
        %v1638 = vpop.f32.mrb[0].mxu0
        %v1639 = vadd.f32 0.0, %v1638
        %v1640 = vpop.f32.mrb[0].mxu0
        %v1641 = vpop.f32.mrb[0].mxu0
        %v1642 = vpop.f32.mrb[0].mxu0
        %1643 = vdwg.mxu0
        %v1644 = vcombine.low %v1501, %v1593
        %v1645 = vcombine.high %v1501, %v1593
        %v1647 = vunpack.c.l.s4 1983009808
        %v1648 = vunpack.c.0.s8 %v1647
        %v1649 = vlaneseq
        %v1650 = vshrl.u32 %v1649, 7
        %v1651 = vsub.s32 %v1648, %v1650
        %v1652 = vrot.slane %v1644, %v1651
        %v1654 = vunpack.c.l.s4 1983009808
        %v1655 = vunpack.c.0.s8 %v1654
        %v1656 = vlaneseq
        %v1657 = vshrl.u32 %v1656, 7
        %v1658 = vsub.s32 %v1655, %v1657
        %v1659 = vrot.slane %v1645, %v1658
        %v1660 = vcombine.low %v1547, %v1639
        %v1661 = vcombine.high %v1547, %v1639
        %v1663 = vunpack.c.l.s4 1983009808
        %v1664 = vunpack.c.0.s8 %v1663
        %v1665 = vlaneseq
        %v1666 = vshrl.u32 %v1665, 7
        %v1667 = vsub.s32 %v1664, %v1666
        %v1668 = vrot.slane %v1660, %v1667
        %v1670 = vunpack.c.l.s4 1983009808
        %v1671 = vunpack.c.0.s8 %v1670
        %v1672 = vlaneseq
        %v1673 = vshrl.u32 %v1672, 7
        %v1674 = vsub.s32 %v1671, %v1673
        %v1675 = vrot.slane %v1661, %v1674
        %v1676 = vcombine.low %v1652, %v1668
        %v1677 = vcombine.high %v1652, %v1668
        %v1679 = vunpack.c.l.s4 1934713408
        %v1680 = vunpack.c.0.s8 %v1679
        %v1681 = vlaneseq
        %v1682 = vshrl.u32 %v1681, 7
        %v1683 = vsub.s32 %v1680, %v1682
        %v1684 = vrot.slane %v1676, %v1683
        %v1686 = vunpack.c.l.s4 1934713408
        %v1687 = vunpack.c.0.s8 %v1686
        %v1688 = vlaneseq
        %v1689 = vshrl.u32 %v1688, 7
        %v1690 = vsub.s32 %v1687, %v1689
        %v1691 = vrot.slane %v1677, %v1690
        %v1692 = vcombine.low %v1659, %v1675
        %v1693 = vcombine.high %v1659, %v1675
        %v1695 = vunpack.c.l.s4 1934713408
        %v1696 = vunpack.c.0.s8 %v1695
        %v1697 = vlaneseq
        %v1698 = vshrl.u32 %v1697, 7
        %v1699 = vsub.s32 %v1696, %v1698
        %v1700 = vrot.slane %v1692, %v1699
        %v1702 = vunpack.c.l.s4 1934713408
        %v1703 = vunpack.c.0.s8 %v1702
        %v1704 = vlaneseq
        %v1705 = vshrl.u32 %v1704, 7
        %v1706 = vsub.s32 %v1703, %v1705
        %v1707 = vrot.slane %v1693, %v1706
        %v1708 = vcombine.high %v1684, 0.0
        %v1709 = vcombine.high %v1691, 0.0
        %v1710 = vcombine.high %v1700, 0.0
        %v1711 = vcombine.high %v1707, 0.0
        %v1712 = vcombine.low %v1684, %v1691
        %v1714 = vunpack.c.l.s4 1983009808
        %v1715 = vunpack.c.0.s8 %v1714
        %v1716 = vlaneseq
        %v1717 = vshrl.u32 %v1716, 7
        %v1718 = vsub.s32 %v1715, %v1717
        %v1719 = vrot.slane %v1712, %v1718
        %v1720 = vcombine.low %v1708, %v1709
        %v1722 = vunpack.c.l.s4 1983009808
        %v1723 = vunpack.c.0.s8 %v1722
        %v1724 = vlaneseq
        %v1725 = vshrl.u32 %v1724, 7
        %v1726 = vsub.s32 %v1723, %v1725
        %v1727 = vrot.slane %v1720, %v1726
        %v1728 = vcombine.low %v1700, %v1707
        %v1730 = vunpack.c.l.s4 1983009808
        %v1731 = vunpack.c.0.s8 %v1730
        %v1732 = vlaneseq
        %v1733 = vshrl.u32 %v1732, 7
        %v1734 = vsub.s32 %v1731, %v1733
        %v1735 = vrot.slane %v1728, %v1734
        %v1736 = vcombine.low %v1710, %v1711
        %v1738 = vunpack.c.l.s4 1983009808
        %v1739 = vunpack.c.0.s8 %v1738
        %v1740 = vlaneseq
        %v1741 = vshrl.u32 %v1740, 7
        %v1742 = vsub.s32 %v1739, %v1741
        %v1743 = vrot.slane %v1736, %v1742
        %v1744 = vcombine.low %v1719, %v1727
        %v1745 = vcombine.high %v1719, %v1727
        %v1747 = vunpack.c.l.s4 1934713408
        %v1748 = vunpack.c.0.s8 %v1747
        %v1749 = vlaneseq
        %v1750 = vshrl.u32 %v1749, 7
        %v1751 = vsub.s32 %v1748, %v1750
        %v1752 = vrot.slane %v1744, %v1751
        %v1754 = vunpack.c.l.s4 1934713408
        %v1755 = vunpack.c.0.s8 %v1754
        %v1756 = vlaneseq
        %v1757 = vshrl.u32 %v1756, 7
        %v1758 = vsub.s32 %v1755, %v1757
        %v1759 = vrot.slane %v1745, %v1758
        %v1760 = vcombine.low %v1735, %v1743
        %v1761 = vcombine.high %v1735, %v1743
        %v1763 = vunpack.c.l.s4 1934713408
        %v1764 = vunpack.c.0.s8 %v1763
        %v1765 = vlaneseq
        %v1766 = vshrl.u32 %v1765, 7
        %v1767 = vsub.s32 %v1764, %v1766
        %v1768 = vrot.slane %v1760, %v1767
        %v1770 = vunpack.c.l.s4 1934713408
        %v1771 = vunpack.c.0.s8 %v1770
        %v1772 = vlaneseq
        %v1773 = vshrl.u32 %v1772, 7
        %v1774 = vsub.s32 %v1771, %v1773
        %v1775 = vrot.slane %v1761, %v1774
        %v1776 = vcombine.low %v1752, %v1768
        %v1777 = vcombine.high %v1752, %v1768
        %v1778 = vcombine.low %v1759, %v1775
        %v1779 = vcombine.high %v1759, %v1775
        %1781 = vrot.lane.b32.xlu0 %v1777, 8
        %v1782 = vpop.permute.xlu0 %1781
        %1785 = vrot.lane.b32.xlu0 %v1778, 16
        %v1786 = vpop.permute.xlu0 %1785
        %1789 = vrot.lane.b32.xlu0 %v1779, 24
        %v1790 = vpop.permute.xlu0 %1789
        %v1792 = vsel %vm1226, %v1776, %v1782
        %vm1793 = vcmask 130048
        %v1794 = vsel %vm1793, %v1792, %v1786
        %vm1795 = vcmask 195584
        %v1796 = vsel %vm1795, %v1794, %v1790
        %v1797 = vpack.c.bf16 %v1796, %v1796
        %v1798 = vld [vmem:[#allocation7] sm:$0xf]
        %v1799 = vld [vmem:[#allocation7 + $0x4] sm:$0xf]
        %v1800 = vld [vmem:[#allocation7 + $0x8] sm:$0xf]
        %v1801 = vld [vmem:[#allocation7 + $0xc] sm:$0xf]
        %v1806 = vunpack.c.l.b16 %v1798
        %v1807 = vunpack.c.l.b16 %v1799
        %v1808 = vunpack.c.l.b16 %v1800
        %v1809 = vunpack.c.l.b16 %v1801
        %v1810 = vpack.c.b16 %v1807, %v1806
        %v1811 = vpack.c.b16 %v1809, %v1808
        %v1815 = vsel %vm620, %v1797, 0
        %1817 = vmatprep.subr.bf16.mxu0 0
        %1818 = vmatpush1.bf16.msra.mxu0 %v1810
        %1819 = vmatprep.subr.bf16.mxu0 0
        %1820 = vmatpush1.bf16.msra.mxu0 %v1811
        %1821 = vmatprep.subr.bf16.mxu0 0
        %1822 = vmatpush1.bf16.msra.mxu0 0
        %1823 = vmatprep.subr.bf16.mxu0 0
        %1824 = vmatpush1.bf16.msra.mxu0 0
        %1825 = vmatprep.subr.bf16.mxu0 0
        %1826 = vmatpush1.bf16.msra.mxu0 0
        %1827 = vmatprep.subr.bf16.mxu0 0
        %1828 = vmatpush1.bf16.msra.mxu0 0
        %1829 = vmatprep.subr.bf16.mxu0 0
        %1830 = vmatpush1.bf16.msra.mxu0 0
        %1831 = vmatprep.subr.bf16.mxu0 0
        %1832 = vmatpush1.bf16.msra.mxu0 0
        %1833 = vmatprep.subr.bf16.mxu0 0
        %1834 = vmatpush1.bf16.msra.mxu0 0
        %1835 = vmatprep.subr.bf16.mxu0 0
        %1836 = vmatpush1.bf16.msra.mxu0 0
        %1837 = vmatprep.subr.bf16.mxu0 0
        %1838 = vmatpush1.bf16.msra.mxu0 0
        %1839 = vmatprep.subr.bf16.mxu0 0
        %1840 = vmatpush1.bf16.msra.mxu0 0
        %1841 = vmatprep.subr.bf16.mxu0 0
        %1842 = vmatpush1.bf16.msra.mxu0 0
        %1843 = vmatprep.subr.bf16.mxu0 0
        %1844 = vmatpush1.bf16.msra.mxu0 0
        %1845 = vmatprep.subr.bf16.mxu0 0
        %1846 = vmatpush1.bf16.msra.mxu0 0
        %1847 = vmatprep.subr.bf16.mxu0 0
        %1848 = vmatpush1.bf16.msra.mxu0 0
        %1849 = vmatprep.mubr.bf16.mxu0 0
        %1850 = vmatmul.mubr.bf16.gmra.mrb[0].mxu0 %v1815
        %v1851 = vpop.f32.mrb[0].mxu0
        %v1852 = vadd.f32 0.0, %v1851
        %v1853 = vpop.f32.mrb[0].mxu0
        %v1854 = vpop.f32.mrb[0].mxu0
        %v1855 = vpop.f32.mrb[0].mxu0
        %1856 = vdwg.mxu0
        %v1857 = vadd.f32 %v617, %v1852
        %v1858 = vld [vmem:[#allocation11] sm:$0x1]
        %v1859 = vld [vmem:[#allocation13] sm:$0x1]
        %v1860 = vsel %vm620, %v1857, 0.0
        %1861 = vadd.xlane.f32.xlu0 %v1860
        %v1862 = vpop.xlane.xlu0 %1861
        %v1863 = vmul.f32 %v1862, %v624
        %v1864 = vsub.f32 %v1857, %v1863
        %v1865 = vmul.f32 %v1864, %v1864
        %v1866 = vsel %vm620, %v1865, 0.0
        %1867 = vadd.xlane.f32.xlu0 %v1866
        %v1868 = vpop.xlane.xlu0 %1867
        %v1869 = vmul.f32 %v1868, %v624
        %v1870 = vadd.f32 %v1869, 1e-06
        %v1871 = vrsqrt.pop %v1870
        %v1872 = vmul.f32 %v1864, %v1871
        %v1874 = vlaneseq
        %v1875 = vshrl.u32 %v1874, 7
        %v1876 = vsub.s32 0, %v1875
        %v1877 = vrot.slane %v1858, %v1876
        %v1879 = vmul.f32 %v1872, %v1877
        %v1881 = vlaneseq
        %v1882 = vshrl.u32 %v1881, 7
        %v1883 = vsub.s32 0, %v1882
        %v1884 = vrot.slane %v1859, %v1883
        %v1886 = vadd.f32 %v1879, %v1884
        %v1887 = vpack.c.bf16 %v1886, %v1886
        %v1888 = vld [vmem:[#allocation14] sm:$0xf]
        %v1889 = vld [vmem:[#allocation14 + $0x4] sm:$0xf]
        %v1890 = vld [vmem:[#allocation14 + $0x8] sm:$0xf]
        %v1891 = vld [vmem:[#allocation14 + $0xc] sm:$0xf]
        %v1892 = vld [vmem:[#allocation16] sm:$0x1]
        %v1894 = vlaneseq
        %v1895 = vshrl.u32 %v1894, 7
        %v1896 = vsub.s32 0, %v1895
        %v1897 = vrot.slane %v1892, %v1896
        %v1903 = vunpack.c.l.b16 %v1888
        %v1904 = vunpack.c.l.b16 %v1889
        %v1905 = vunpack.c.l.b16 %v1890
        %v1906 = vunpack.c.l.b16 %v1891
        %v1907 = vpack.c.b16 %v1904, %v1903
        %v1908 = vpack.c.b16 %v1906, %v1905
        %v1912 = vsel %vm620, %v1887, 0
        %1914 = vmatprep.subr.bf16.mxu0 0
        %1915 = vmatpush1.bf16.msra.mxu0 %v1907
        %1916 = vmatprep.subr.bf16.mxu0 0
        %1917 = vmatpush1.bf16.msra.mxu0 %v1908
        %1918 = vmatprep.subr.bf16.mxu0 0
        %1919 = vmatpush1.bf16.msra.mxu0 0
        %1920 = vmatprep.subr.bf16.mxu0 0
        %1921 = vmatpush1.bf16.msra.mxu0 0
        %1922 = vmatprep.subr.bf16.mxu0 0
        %1923 = vmatpush1.bf16.msra.mxu0 0
        %1924 = vmatprep.subr.bf16.mxu0 0
        %1925 = vmatpush1.bf16.msra.mxu0 0
        %1926 = vmatprep.subr.bf16.mxu0 0
        %1927 = vmatpush1.bf16.msra.mxu0 0
        %1928 = vmatprep.subr.bf16.mxu0 0
        %1929 = vmatpush1.bf16.msra.mxu0 0
        %1930 = vmatprep.subr.bf16.mxu0 0
        %1931 = vmatpush1.bf16.msra.mxu0 0
        %1932 = vmatprep.subr.bf16.mxu0 0
        %1933 = vmatpush1.bf16.msra.mxu0 0
        %1934 = vmatprep.subr.bf16.mxu0 0
        %1935 = vmatpush1.bf16.msra.mxu0 0
        %1936 = vmatprep.subr.bf16.mxu0 0
        %1937 = vmatpush1.bf16.msra.mxu0 0
        %1938 = vmatprep.subr.bf16.mxu0 0
        %1939 = vmatpush1.bf16.msra.mxu0 0
        %1940 = vmatprep.subr.bf16.mxu0 0
        %1941 = vmatpush1.bf16.msra.mxu0 0
        %1942 = vmatprep.subr.bf16.mxu0 0
        %1943 = vmatpush1.bf16.msra.mxu0 0
        %1944 = vmatprep.subr.bf16.mxu0 0
        %1945 = vmatpush1.bf16.msra.mxu0 0
        %1946 = vmatprep.mubr.bf16.mxu0 0
        %1947 = vmatmul.mubr.bf16.gmra.mrb[0].mxu0 %v1912
        %v1948 = vpop.f32.mrb[0].mxu0
        %v1949 = vadd.f32 %v1897, %v1948
        %v1950 = vpop.f32.mrb[0].mxu0
        %v1951 = vpop.f32.mrb[0].mxu0
        %v1952 = vpop.f32.mrb[0].mxu0
        %1953 = vdwg.mxu0
        %v1954 = vmax.f32 %v1949, 0.0
        %v1955 = vpack.c.bf16 %v1954, %v1954
        %v1956 = vld [vmem:[#allocation17] sm:$0xf]
        %v1957 = vld [vmem:[#allocation17 + $0x4] sm:$0xf]
        %v1958 = vld [vmem:[#allocation17 + $0x8] sm:$0xf]
        %v1959 = vld [vmem:[#allocation17 + $0xc] sm:$0xf]
        %v1960 = vld [vmem:[#allocation17 + $0x10] sm:$0xf]
        %v1961 = vld [vmem:[#allocation17 + $0x14] sm:$0xf]
        %v1962 = vld [vmem:[#allocation17 + $0x18] sm:$0xf]
        %v1963 = vld [vmem:[#allocation17 + $0x1c] sm:$0xf]
        %v1964 = vld [vmem:[#allocation19] sm:$0x1]
        %v1966 = vlaneseq
        %v1967 = vshrl.u32 %v1966, 7
        %v1968 = vsub.s32 0, %v1967
        %v1969 = vrot.slane %v1964, %v1968
        %v1979 = vunpack.c.l.b16 %v1956
        %v1980 = vunpack.c.l.b16 %v1957
        %v1981 = vunpack.c.l.b16 %v1958
        %v1982 = vunpack.c.l.b16 %v1959
        %v1983 = vunpack.c.l.b16 %v1960
        %v1984 = vunpack.c.l.b16 %v1961
        %v1985 = vunpack.c.l.b16 %v1962
        %v1986 = vunpack.c.l.b16 %v1963
        %v1987 = vpack.c.b16 %v1980, %v1979
        %v1988 = vpack.c.b16 %v1982, %v1981
        %v1989 = vpack.c.b16 %v1984, %v1983
        %v1990 = vpack.c.b16 %v1986, %v1985
        %vm1995 = vcmask 523264
        %v1997 = vsel %vm1995, %v1955, 0
        %1999 = vmatprep.subr.bf16.mxu0 0
        %2000 = vmatpush1.bf16.msra.mxu0 %v1987
        %2001 = vmatprep.subr.bf16.mxu0 0
        %2002 = vmatpush1.bf16.msra.mxu0 %v1988
        %2003 = vmatprep.subr.bf16.mxu0 0
        %2004 = vmatpush1.bf16.msra.mxu0 %v1989
        %2005 = vmatprep.subr.bf16.mxu0 0
        %2006 = vmatpush1.bf16.msra.mxu0 %v1990
        %2007 = vmatprep.subr.bf16.mxu0 0
        %2008 = vmatpush1.bf16.msra.mxu0 0
        %2009 = vmatprep.subr.bf16.mxu0 0
        %2010 = vmatpush1.bf16.msra.mxu0 0
        %2011 = vmatprep.subr.bf16.mxu0 0
        %2012 = vmatpush1.bf16.msra.mxu0 0
        %2013 = vmatprep.subr.bf16.mxu0 0
        %2014 = vmatpush1.bf16.msra.mxu0 0
        %2015 = vmatprep.subr.bf16.mxu0 0
        %2016 = vmatpush1.bf16.msra.mxu0 0
        %2017 = vmatprep.subr.bf16.mxu0 0
        %2018 = vmatpush1.bf16.msra.mxu0 0
        %2019 = vmatprep.subr.bf16.mxu0 0
        %2020 = vmatpush1.bf16.msra.mxu0 0
        %2021 = vmatprep.subr.bf16.mxu0 0
        %2022 = vmatpush1.bf16.msra.mxu0 0
        %2023 = vmatprep.subr.bf16.mxu0 0
        %2024 = vmatpush1.bf16.msra.mxu0 0
        %2025 = vmatprep.subr.bf16.mxu0 0
        %2026 = vmatpush1.bf16.msra.mxu0 0
        %2027 = vmatprep.subr.bf16.mxu0 0
        %2028 = vmatpush1.bf16.msra.mxu0 0
        %2029 = vmatprep.subr.bf16.mxu0 0
        %2030 = vmatpush1.bf16.msra.mxu0 0
        %2031 = vmatprep.mubr.bf16.mxu0 0
        %2032 = vmatmul.mubr.bf16.gmra.mrb[0].mxu0 %v1997
        %v2033 = vpop.f32.mrb[0].mxu0
        %v2034 = vadd.f32 %v1969, %v2033
        %v2035 = vpop.f32.mrb[0].mxu0
        %v2036 = vpop.f32.mrb[0].mxu0
        %v2037 = vpop.f32.mrb[0].mxu0
        %2038 = vdwg.mxu0
        %v2039 = vadd.f32 %v1857, %v2034
        %v2040 = vpack.c.bf16 %v2039, %v2039
        %vm2041 = vcmask 257024
        %2042 = vst.msk [vmem:[%s613] sm:$0xf] %vm2041, %v2040
        %s2043 = sand.u32 %s322, 1
        %s2044 = scalar_lea.sflag [#allocation4], %s2043
        %s2045 = sand.u32 %s322, 1
        %s2046 = smul.addr %s2045, 4
        %s2047 = scalar_lea.vmem [#allocation23], %s2046
        // Predicated region
        $region125: #{transformer_encoder.2} parent=71 // pred_check
          %p2048 = pneg %p332
        $region126: #{transformer_encoder.2} parent=71 // pred_check_branch
          %2050 = sbr.rel (%p2048) target = $region128
        $region127: #{transformer_encoder.2} parent=71 // pred_region
          %s2052 = ssub.s32 64, 64
          %2053 = vsyncadd %s2044, %s2052
          %s2054 = smul.addr %s36, 64
          %s2055 = scalar_lea.hbm %s13, %s2054
          %s2057 = sshll.u32 %s2047, 4
          %s2058 = int_to_ptr.vmem [resolvable:$true] %s2057
          %2060 = dma.vmem_to_hbm [thread:$0]  %s2058, 64, %s2055, %s2044
        $region128: #{transformer_encoder.2} parent=71 // pred_fallthru
          _
      $region72: #{transformer_encoder.2} parent=5 // pred_fallthru
        _
      %p2061 = scmp.le.s32.totalorder 2, %s31
      // Predicated region
      $region129: #{transformer_encoder.2} parent=5 // pred_check
        %p2062 = pneg %p2061
      $region130: #{transformer_encoder.2} parent=5 // pred_check_branch
        %2064 = sbr.rel (%p2062) target = $region132
      $region131: #{transformer_encoder.2} parent=5 // pred_region
        %s2065 = ssub.s32 %s31, 2
        // Predicated region
        $region133: #{transformer_encoder.2} parent=131 // pred_check
          %p2066 = pneg %p338
        $region134: #{transformer_encoder.2} parent=131 // pred_check_branch
          %2068 = sbr.rel (%p2066) target = $region136
        $region135: #{transformer_encoder.2} parent=131 // pred_region
          %s2069 = sand.u32 %s323, 1
          %s2070 = scalar_lea.sflag [#allocation4], %s2069
          %s2071 = sand.u32 %s323, 1
          %s2072 = smul.addr %s2071, 4
          %s2073 = scalar_lea.vmem [#allocation23], %s2072
          %2074 = dma.done %s2070, 64
        $region136: #{transformer_encoder.2} parent=131 // pred_fallthru
          _
      $region132: #{transformer_encoder.2} parent=5 // pred_fallthru
        _
    $region6: #{transformer_encoder.2} parent=1 // loop_footer
      %s35 = sadd.s32 1, %s31
    $region7: #{transformer_encoder.2} parent=1 // loop_footer_branch
      %30 = sbr.rel target = $region3
    $region8: #{transformer_encoder.2} parent=1 // loop_exit
      _
    %2075 = vsyncpa [#allocation3], 1
    %s2076 = scalar_lea.sflag [#allocation3], 1
    %2077 = vsyncpa %s2076, 1
    %2078 = vsyncpa [#allocation6], 1
    %2079 = vsyncpa [#allocation9], 1
    %2080 = vsyncpa [#allocation12], 1
    %2081 = vsyncpa [#allocation15], 1
    %2082 = vsyncpa [#allocation18], 1
    %2083 = vsyncpa [#allocation21], 1
    %2084 = vsyncpa [#allocation4], 1
    %s2085 = scalar_lea.sflag [#allocation4], 1
    %2086 = vsyncpa %s2085, 1

// kernel: transformer_encoder.3
$region0: #{transformer_encoder.3}
  #allocation0 [shape = 'u32[]', space=smem, size = 0x4, offset = 0x4, fixed_abs, tag = 'smem constant byte address 0x4 - core index']
  #allocation1 [shape = 'u32[144,128]{1,0:T(1,128)}', space=vmem, size = 0x12000, scoped, tag = 'internal scratch']
  %s0 = inlined_call_operand.hbm [shape: bf16[2,8,32], index: 0, kind: input, shape index: {}]
  %s1 = inlined_call_operand.hbm [shape: bf16[32,96], index: 1, kind: input, shape index: {}]
  %s2 = inlined_call_operand.hbm [shape: bf16[32,32], index: 2, kind: input, shape index: {}]
  %s3 = inlined_call_operand.hbm [shape: f32[1,32], index: 3, kind: input, shape index: {}]
  %s4 = inlined_call_operand.hbm [shape: f32[1,32], index: 4, kind: input, shape index: {}]
  %s5 = inlined_call_operand.hbm [shape: f32[1,32], index: 5, kind: input, shape index: {}]
  %s6 = inlined_call_operand.hbm [shape: f32[1,32], index: 6, kind: input, shape index: {}]
  %s7 = inlined_call_operand.hbm [shape: bf16[32,64], index: 7, kind: input, shape index: {}]
  %s8 = inlined_call_operand.hbm [shape: f32[1,64], index: 8, kind: input, shape index: {}]
  %s9 = inlined_call_operand.hbm [shape: bf16[64,32], index: 9, kind: input, shape index: {}]
  %s10 = inlined_call_operand.hbm [shape: f32[1,32], index: 10, kind: input, shape index: {}]
  %s11 = inlined_call_operand.hbm [shape: f32[1,32], index: 11, kind: input, shape index: {}]
  %s12 = inlined_call_operand.hbm [shape: f32[1,32], index: 12, kind: input, shape index: {}]
  %s13 = inlined_call_operand.hbm [shape: f32[2,8,32], index: 13, kind: output, shape index: {}]
  %s14 = sld [smem:[#allocation0]]
  $region137: #{transformer_encoder.3} parent=0
    _
  %s16 = ssub.s32 1, %s14
  %s17 = scalar_select 0, %s16, %s14
  $region1: #{transformer_encoder.3} parent=0
    #allocation2 [shape = 'u8[4096]{0}', space=vmem, size = 0x1000, scoped, tag = 'input window, operand 0']
    #allocation3 [shape = 's32[2]{0}', space=sflag, size = 0x8, scoped, tag = 'scoped memory for transformer_encoder.3']
    #allocation4 [shape = 's32[2]{0}', space=sflag, size = 0x8, scoped, tag = 'scoped memory for transformer_encoder.3']
    #allocation5 [shape = 'u8[8192]{0}', space=vmem, size = 0x2000, scoped, tag = 'input window, operand 1, single buffered']
    #allocation6 [shape = 's32[1]{0}', space=sflag, size = 0x4, scoped, tag = 'scoped memory for transformer_encoder.3']
    #allocation7 [shape = 'u8[8192]{0}', space=vmem, size = 0x2000, scoped, tag = 'input window, operand 2, single buffered']
    #allocation8 [shape = 'u8[512]{0}', space=vmem, size = 0x400, scoped, tag = 'input window, operand 3, single buffered']
    #allocation9 [shape = 's32[1]{0}', space=sflag, size = 0x4, scoped, tag = 'scoped memory for transformer_encoder.3']
    #allocation10 [shape = 'u8[512]{0}', space=vmem, size = 0x400, scoped, tag = 'input window, operand 4, single buffered']
    #allocation11 [shape = 'u8[512]{0}', space=vmem, size = 0x400, scoped, tag = 'input window, operand 5, single buffered']
    #allocation12 [shape = 's32[1]{0}', space=sflag, size = 0x4, scoped, tag = 'scoped memory for transformer_encoder.3']
    #allocation13 [shape = 'u8[512]{0}', space=vmem, size = 0x400, scoped, tag = 'input window, operand 6, single buffered']
    #allocation14 [shape = 'u8[8192]{0}', space=vmem, size = 0x2000, scoped, tag = 'input window, operand 7, single buffered']
    #allocation15 [shape = 's32[1]{0}', space=sflag, size = 0x4, scoped, tag = 'scoped memory for transformer_encoder.3']
    #allocation16 [shape = 'u8[512]{0}', space=vmem, size = 0x400, scoped, tag = 'input window, operand 8, single buffered']
    #allocation17 [shape = 'u8[16384]{0}', space=vmem, size = 0x4000, scoped, tag = 'input window, operand 9, single buffered']
    #allocation18 [shape = 's32[1]{0}', space=sflag, size = 0x4, scoped, tag = 'scoped memory for transformer_encoder.3']
    #allocation19 [shape = 'u8[512]{0}', space=vmem, size = 0x400, scoped, tag = 'input window, operand 10, single buffered']
    #allocation20 [shape = 'u8[512]{0}', space=vmem, size = 0x400, scoped, tag = 'input window, operand 11, single buffered']
    #allocation21 [shape = 's32[1]{0}', space=sflag, size = 0x4, scoped, tag = 'scoped memory for transformer_encoder.3']
    #allocation22 [shape = 'u8[512]{0}', space=vmem, size = 0x400, scoped, tag = 'input window, operand 12, single buffered']
    #allocation23 [shape = 'u8[8192]{0}', space=vmem, size = 0x2000, scoped, tag = 'output window, operand 0']
    %18 = vsyncpa [#allocation3], 0
    %s19 = scalar_lea.sflag [#allocation3], 1
    %20 = vsyncpa %s19, 0
    %21 = vsyncpa [#allocation6], 0
    %22 = vsyncpa [#allocation9], 0
    %23 = vsyncpa [#allocation12], 0
    %24 = vsyncpa [#allocation15], 0
    %25 = vsyncpa [#allocation18], 0
    %26 = vsyncpa [#allocation21], 0
    %27 = vsyncpa [#allocation4], 0
    %s28 = scalar_lea.sflag [#allocation4], 1
    %29 = vsyncpa %s28, 0
    loop: start=0, step=1, limit=4
    $region2: #{transformer_encoder.3} parent=1 // loop_pre_header
      _
    $region3: #{transformer_encoder.3} parent=1 // loop_header
      %s31 = sphi 0, %s35
      %p32 = scmp.ge.s32.totalorder %s31, 4
      %s41 = sphi 0, %s43
      %s44 = sphi 0, %s41
      %s45 = sphi 0, %s44
      %s61 = sphi 0, %s45
      %s65 = sphi 0, %s65
      %s67 = sphi 0, %s65
      %s68 = sphi 0, %s67
      %s82 = sphi 0, %s68
      %s86 = sphi 0, %s86
      %s88 = sphi 0, %s86
      %s89 = sphi 0, %s88
      %s103 = sphi 0, %s89
      %s107 = sphi 0, %s107
      %s109 = sphi 0, %s107
      %s110 = sphi 0, %s109
      %s124 = sphi 0, %s110
      %s128 = sphi 0, %s128
      %s130 = sphi 0, %s128
      %s131 = sphi 0, %s130
      %s145 = sphi 0, %s131
      %s149 = sphi 0, %s149
      %s151 = sphi 0, %s149
      %s152 = sphi 0, %s151
      %s166 = sphi 0, %s152
      %s170 = sphi 0, %s170
      %s172 = sphi 0, %s170
      %s173 = sphi 0, %s172
      %s187 = sphi 0, %s173
      %s191 = sphi 0, %s191
      %s193 = sphi 0, %s191
      %s194 = sphi 0, %s193
      %s208 = sphi 0, %s194
      %s212 = sphi 0, %s212
      %s214 = sphi 0, %s212
      %s215 = sphi 0, %s214
      %s229 = sphi 0, %s215
      %s233 = sphi 0, %s233
      %s235 = sphi 0, %s233
      %s236 = sphi 0, %s235
      %s250 = sphi 0, %s236
      %s254 = sphi 0, %s254
      %s256 = sphi 0, %s254
      %s257 = sphi 0, %s256
      %s271 = sphi 0, %s257
      %s275 = sphi 0, %s275
      %s277 = sphi 0, %s275
      %s278 = sphi 0, %s277
      %s292 = sphi 0, %s278
      %s296 = sphi 0, %s296
      %s298 = sphi 0, %s296
      %s299 = sphi 0, %s298
      %s313 = sphi 0, %s299
      %s319 = sphi 0, %s321
      %s322 = sphi 0, %s319
      %s323 = sphi 0, %s322
      %s339 = sphi 0, %s323
    $region4: #{transformer_encoder.3} parent=1 // loop_header_branch
      %34 = sbr.rel (%p32) target = $region8
    $region5: #{transformer_encoder.3} parent=1 // loop_body
      %s36 = ssub.s32 %s31, 1
      %s37 = ssub.s32 %s31, 2
      %s38 = sadd.s32 %s31, 1
      %s39 = ssub.s32 %s31, %s38
      %p40 = scmp.eq.s32.totalorder %s39, 0
      %s42 = sadd.s32 %s41, 1
      %s43 = scalar_select %p40, %s41, %s42
      %p46 = pneg %p40
      %p47 = scmp.eq.s32.totalorder %s31, 1
      %p48 = por %p46, %p47
      %p49 = scmp.ne.s32.totalorder %s41, %s44
      %p50 = scmp.eq.s32.totalorder %s31, 0
      %p51 = por %p49, %p50
      %p52 = scmp.ne.s32.totalorder %s41, %s44
      %p53 = scmp.eq.s32.totalorder %s36, 1
      %p54 = por %p52, %p53
      %p55 = scmp.ne.s32.totalorder %s44, %s45
      %p56 = scmp.eq.s32.totalorder %s36, 0
      %p57 = por %p55, %p56
      %p58 = scmp.ne.s32.totalorder %s44, %s45
      %p59 = scmp.eq.s32.totalorder %s37, 1
      %p60 = por %p58, %p59
      %p62 = scmp.ne.s32.totalorder %s45, %s61
      %p63 = scmp.eq.s32.totalorder %s37, 0
      %p64 = por %p62, %p63
      %s66 = sadd.s32 %s65, 1
      %p69 = scmp.eq.s32.totalorder %s31, 1
      %p70 = scmp.ne.s32.totalorder %s65, %s67
      %p71 = scmp.eq.s32.totalorder %s31, 0
      %p72 = por %p70, %p71
      %p73 = scmp.ne.s32.totalorder %s65, %s67
      %p74 = scmp.eq.s32.totalorder %s36, 1
      %p75 = por %p73, %p74
      %p76 = scmp.ne.s32.totalorder %s67, %s68
      %p77 = scmp.eq.s32.totalorder %s36, 0
      %p78 = por %p76, %p77
      %p79 = scmp.ne.s32.totalorder %s67, %s68
      %p80 = scmp.eq.s32.totalorder %s37, 1
      %p81 = por %p79, %p80
      %p83 = scmp.ne.s32.totalorder %s68, %s82
      %p84 = scmp.eq.s32.totalorder %s37, 0
      %p85 = por %p83, %p84
      %s87 = sadd.s32 %s86, 1
      %p90 = scmp.eq.s32.totalorder %s31, 1
      %p91 = scmp.ne.s32.totalorder %s86, %s88
      %p92 = scmp.eq.s32.totalorder %s31, 0
      %p93 = por %p91, %p92
      %p94 = scmp.ne.s32.totalorder %s86, %s88
      %p95 = scmp.eq.s32.totalorder %s36, 1
      %p96 = por %p94, %p95
      %p97 = scmp.ne.s32.totalorder %s88, %s89
      %p98 = scmp.eq.s32.totalorder %s36, 0
      %p99 = por %p97, %p98
      %p100 = scmp.ne.s32.totalorder %s88, %s89
      %p101 = scmp.eq.s32.totalorder %s37, 1
      %p102 = por %p100, %p101
      %p104 = scmp.ne.s32.totalorder %s89, %s103
      %p105 = scmp.eq.s32.totalorder %s37, 0
      %p106 = por %p104, %p105
      %s108 = sadd.s32 %s107, 1
      %p111 = scmp.eq.s32.totalorder %s31, 1
      %p112 = scmp.ne.s32.totalorder %s107, %s109
      %p113 = scmp.eq.s32.totalorder %s31, 0
      %p114 = por %p112, %p113
      %p115 = scmp.ne.s32.totalorder %s107, %s109
      %p116 = scmp.eq.s32.totalorder %s36, 1
      %p117 = por %p115, %p116
      %p118 = scmp.ne.s32.totalorder %s109, %s110
      %p119 = scmp.eq.s32.totalorder %s36, 0
      %p120 = por %p118, %p119
      %p121 = scmp.ne.s32.totalorder %s109, %s110
      %p122 = scmp.eq.s32.totalorder %s37, 1
      %p123 = por %p121, %p122
      %p125 = scmp.ne.s32.totalorder %s110, %s124
      %p126 = scmp.eq.s32.totalorder %s37, 0
      %p127 = por %p125, %p126
      %s129 = sadd.s32 %s128, 1
      %p132 = scmp.eq.s32.totalorder %s31, 1
      %p133 = scmp.ne.s32.totalorder %s128, %s130
      %p134 = scmp.eq.s32.totalorder %s31, 0
      %p135 = por %p133, %p134
      %p136 = scmp.ne.s32.totalorder %s128, %s130
      %p137 = scmp.eq.s32.totalorder %s36, 1
      %p138 = por %p136, %p137
      %p139 = scmp.ne.s32.totalorder %s130, %s131
      %p140 = scmp.eq.s32.totalorder %s36, 0
      %p141 = por %p139, %p140
      %p142 = scmp.ne.s32.totalorder %s130, %s131
      %p143 = scmp.eq.s32.totalorder %s37, 1
      %p144 = por %p142, %p143
      %p146 = scmp.ne.s32.totalorder %s131, %s145
      %p147 = scmp.eq.s32.totalorder %s37, 0
      %p148 = por %p146, %p147
      %s150 = sadd.s32 %s149, 1
      %p153 = scmp.eq.s32.totalorder %s31, 1
      %p154 = scmp.ne.s32.totalorder %s149, %s151
      %p155 = scmp.eq.s32.totalorder %s31, 0
      %p156 = por %p154, %p155
      %p157 = scmp.ne.s32.totalorder %s149, %s151
      %p158 = scmp.eq.s32.totalorder %s36, 1
      %p159 = por %p157, %p158
      %p160 = scmp.ne.s32.totalorder %s151, %s152
      %p161 = scmp.eq.s32.totalorder %s36, 0
      %p162 = por %p160, %p161
      %p163 = scmp.ne.s32.totalorder %s151, %s152
      %p164 = scmp.eq.s32.totalorder %s37, 1
      %p165 = por %p163, %p164
      %p167 = scmp.ne.s32.totalorder %s152, %s166
      %p168 = scmp.eq.s32.totalorder %s37, 0
      %p169 = por %p167, %p168
      %s171 = sadd.s32 %s170, 1
      %p174 = scmp.eq.s32.totalorder %s31, 1
      %p175 = scmp.ne.s32.totalorder %s170, %s172
      %p176 = scmp.eq.s32.totalorder %s31, 0
      %p177 = por %p175, %p176
      %p178 = scmp.ne.s32.totalorder %s170, %s172
      %p179 = scmp.eq.s32.totalorder %s36, 1
      %p180 = por %p178, %p179
      %p181 = scmp.ne.s32.totalorder %s172, %s173
      %p182 = scmp.eq.s32.totalorder %s36, 0
      %p183 = por %p181, %p182
      %p184 = scmp.ne.s32.totalorder %s172, %s173
      %p185 = scmp.eq.s32.totalorder %s37, 1
      %p186 = por %p184, %p185
      %p188 = scmp.ne.s32.totalorder %s173, %s187
      %p189 = scmp.eq.s32.totalorder %s37, 0
      %p190 = por %p188, %p189
      %s192 = sadd.s32 %s191, 1
      %p195 = scmp.eq.s32.totalorder %s31, 1
      %p196 = scmp.ne.s32.totalorder %s191, %s193
      %p197 = scmp.eq.s32.totalorder %s31, 0
      %p198 = por %p196, %p197
      %p199 = scmp.ne.s32.totalorder %s191, %s193
      %p200 = scmp.eq.s32.totalorder %s36, 1
      %p201 = por %p199, %p200
      %p202 = scmp.ne.s32.totalorder %s193, %s194
      %p203 = scmp.eq.s32.totalorder %s36, 0
      %p204 = por %p202, %p203
      %p205 = scmp.ne.s32.totalorder %s193, %s194
      %p206 = scmp.eq.s32.totalorder %s37, 1
      %p207 = por %p205, %p206
      %p209 = scmp.ne.s32.totalorder %s194, %s208
      %p210 = scmp.eq.s32.totalorder %s37, 0
      %p211 = por %p209, %p210
      %s213 = sadd.s32 %s212, 1
      %p216 = scmp.eq.s32.totalorder %s31, 1
      %p217 = scmp.ne.s32.totalorder %s212, %s214
      %p218 = scmp.eq.s32.totalorder %s31, 0
      %p219 = por %p217, %p218
      %p220 = scmp.ne.s32.totalorder %s212, %s214
      %p221 = scmp.eq.s32.totalorder %s36, 1
      %p222 = por %p220, %p221
      %p223 = scmp.ne.s32.totalorder %s214, %s215
      %p224 = scmp.eq.s32.totalorder %s36, 0
      %p225 = por %p223, %p224
      %p226 = scmp.ne.s32.totalorder %s214, %s215
      %p227 = scmp.eq.s32.totalorder %s37, 1
      %p228 = por %p226, %p227
      %p230 = scmp.ne.s32.totalorder %s215, %s229
      %p231 = scmp.eq.s32.totalorder %s37, 0
      %p232 = por %p230, %p231
      %s234 = sadd.s32 %s233, 1
      %p237 = scmp.eq.s32.totalorder %s31, 1
      %p238 = scmp.ne.s32.totalorder %s233, %s235
      %p239 = scmp.eq.s32.totalorder %s31, 0
      %p240 = por %p238, %p239
      %p241 = scmp.ne.s32.totalorder %s233, %s235
      %p242 = scmp.eq.s32.totalorder %s36, 1
      %p243 = por %p241, %p242
      %p244 = scmp.ne.s32.totalorder %s235, %s236
      %p245 = scmp.eq.s32.totalorder %s36, 0
      %p246 = por %p244, %p245
      %p247 = scmp.ne.s32.totalorder %s235, %s236
      %p248 = scmp.eq.s32.totalorder %s37, 1
      %p249 = por %p247, %p248
      %p251 = scmp.ne.s32.totalorder %s236, %s250
      %p252 = scmp.eq.s32.totalorder %s37, 0
      %p253 = por %p251, %p252
      %s255 = sadd.s32 %s254, 1
      %p258 = scmp.eq.s32.totalorder %s31, 1
      %p259 = scmp.ne.s32.totalorder %s254, %s256
      %p260 = scmp.eq.s32.totalorder %s31, 0
      %p261 = por %p259, %p260
      %p262 = scmp.ne.s32.totalorder %s254, %s256
      %p263 = scmp.eq.s32.totalorder %s36, 1
      %p264 = por %p262, %p263
      %p265 = scmp.ne.s32.totalorder %s256, %s257
      %p266 = scmp.eq.s32.totalorder %s36, 0
      %p267 = por %p265, %p266
      %p268 = scmp.ne.s32.totalorder %s256, %s257
      %p269 = scmp.eq.s32.totalorder %s37, 1
      %p270 = por %p268, %p269
      %p272 = scmp.ne.s32.totalorder %s257, %s271
      %p273 = scmp.eq.s32.totalorder %s37, 0
      %p274 = por %p272, %p273
      %s276 = sadd.s32 %s275, 1
      %p279 = scmp.eq.s32.totalorder %s31, 1
      %p280 = scmp.ne.s32.totalorder %s275, %s277
      %p281 = scmp.eq.s32.totalorder %s31, 0
      %p282 = por %p280, %p281
      %p283 = scmp.ne.s32.totalorder %s275, %s277
      %p284 = scmp.eq.s32.totalorder %s36, 1
      %p285 = por %p283, %p284
      %p286 = scmp.ne.s32.totalorder %s277, %s278
      %p287 = scmp.eq.s32.totalorder %s36, 0
      %p288 = por %p286, %p287
      %p289 = scmp.ne.s32.totalorder %s277, %s278
      %p290 = scmp.eq.s32.totalorder %s37, 1
      %p291 = por %p289, %p290
      %p293 = scmp.ne.s32.totalorder %s278, %s292
      %p294 = scmp.eq.s32.totalorder %s37, 0
      %p295 = por %p293, %p294
      %s297 = sadd.s32 %s296, 1
      %p300 = scmp.eq.s32.totalorder %s31, 1
      %p301 = scmp.ne.s32.totalorder %s296, %s298
      %p302 = scmp.eq.s32.totalorder %s31, 0
      %p303 = por %p301, %p302
      %p304 = scmp.ne.s32.totalorder %s296, %s298
      %p305 = scmp.eq.s32.totalorder %s36, 1
      %p306 = por %p304, %p305
      %p307 = scmp.ne.s32.totalorder %s298, %s299
      %p308 = scmp.eq.s32.totalorder %s36, 0
      %p309 = por %p307, %p308
      %p310 = scmp.ne.s32.totalorder %s298, %s299
      %p311 = scmp.eq.s32.totalorder %s37, 1
      %p312 = por %p310, %p311
      %p314 = scmp.ne.s32.totalorder %s299, %s313
      %p315 = scmp.eq.s32.totalorder %s37, 0
      %p316 = por %p314, %p315
      %s317 = ssub.s32 %s31, %s38
      %p318 = scmp.eq.s32.totalorder %s317, 0
      %s320 = sadd.s32 %s319, 1
      %s321 = scalar_select %p318, %s319, %s320
      %p324 = pneg %p318
      %p325 = scmp.eq.s32.totalorder %s31, 1
      %p326 = por %p324, %p325
      %p327 = scmp.ne.s32.totalorder %s319, %s322
      %p328 = scmp.eq.s32.totalorder %s31, 0
      %p329 = por %p327, %p328
      %p330 = scmp.ne.s32.totalorder %s319, %s322
      %p331 = scmp.eq.s32.totalorder %s36, 1
      %p332 = por %p330, %p331
      %p333 = scmp.ne.s32.totalorder %s322, %s323
      %p334 = scmp.eq.s32.totalorder %s36, 0
      %p335 = por %p333, %p334
      %p336 = scmp.ne.s32.totalorder %s322, %s323
      %p337 = scmp.eq.s32.totalorder %s37, 1
      %p338 = por %p336, %p337
      %p340 = scmp.ne.s32.totalorder %s323, %s339
      %p341 = scmp.eq.s32.totalorder %s37, 0
      %p342 = por %p340, %p341
      %p343 = scmp.le.s32.totalorder 1, %s31
      %p344 = scmp.lt.s32.totalorder %s31, 3
      %p345 = pnand %p343, %p344
      %p346 = pneg %p345
      // Predicated region
      $region9: #{transformer_encoder.3} parent=5 // pred_check
        _
      $region10: #{transformer_encoder.3} parent=5 // pred_check_branch
        %348 = sbr.rel (%p345) target = $region12
      $region11: #{transformer_encoder.3} parent=5 // pred_region
        %s349 = ssub.s32 %s31, 1
        // Predicated region
        $region13: #{transformer_encoder.3} parent=11 // pred_check
          %p350 = pneg %p78
        $region14: #{transformer_encoder.3} parent=11 // pred_check_branch
          %352 = sbr.rel (%p350) target = $region16
        $region15: #{transformer_encoder.3} parent=11 // pred_region
          %s354 = ssub.s32 256, 256
          %355 = vsyncadd [#allocation6], %s354
          %s356 = sshll.u32 [#allocation5], 4
          %s357 = int_to_ptr.vmem [resolvable:$true] %s356
          %362 = dma.hbm_to_vmem [thread:$0]  %s1, 256, %s357, [#allocation6], 64, 64, 4
        $region16: #{transformer_encoder.3} parent=11 // pred_fallthru
          _
        // Predicated region
        $region17: #{transformer_encoder.3} parent=11 // pred_check
          %p363 = pneg %p99
        $region18: #{transformer_encoder.3} parent=11 // pred_check_branch
          %365 = sbr.rel (%p363) target = $region20
        $region19: #{transformer_encoder.3} parent=11 // pred_region
          %s367 = ssub.s32 256, 256
          %368 = vsyncadd [#allocation6], %s367
          %s369 = sshll.u32 [#allocation7], 4
          %s370 = int_to_ptr.vmem [resolvable:$true] %s369
          %375 = dma.hbm_to_vmem [thread:$0]  %s2, 256, %s370, [#allocation6], 64, 64, 4
        $region20: #{transformer_encoder.3} parent=11 // pred_fallthru
          _
        // Predicated region
        $region21: #{transformer_encoder.3} parent=11 // pred_check
          %p376 = pneg %p120
        $region22: #{transformer_encoder.3} parent=11 // pred_check_branch
          %378 = sbr.rel (%p376) target = $region24
        $region23: #{transformer_encoder.3} parent=11 // pred_region
          %s380 = ssub.s32 16, 16
          %381 = vsyncadd [#allocation9], %s380
          %s383 = sshll.u32 [#allocation8], 4
          %s384 = int_to_ptr.vmem [resolvable:$true] %s383
          %386 = dma.hbm_to_vmem [thread:$0]  %s3, 16, %s384, [#allocation9]
        $region24: #{transformer_encoder.3} parent=11 // pred_fallthru
          _
        // Predicated region
        $region25: #{transformer_encoder.3} parent=11 // pred_check
          %p387 = pneg %p141
        $region26: #{transformer_encoder.3} parent=11 // pred_check_branch
          %389 = sbr.rel (%p387) target = $region28
        $region27: #{transformer_encoder.3} parent=11 // pred_region
          %s391 = ssub.s32 16, 16
          %392 = vsyncadd [#allocation9], %s391
          %s394 = sshll.u32 [#allocation10], 4
          %s395 = int_to_ptr.vmem [resolvable:$true] %s394
          %397 = dma.hbm_to_vmem [thread:$0]  %s4, 16, %s395, [#allocation9]
        $region28: #{transformer_encoder.3} parent=11 // pred_fallthru
          _
        // Predicated region
        $region29: #{transformer_encoder.3} parent=11 // pred_check
          %p398 = pneg %p162
        $region30: #{transformer_encoder.3} parent=11 // pred_check_branch
          %400 = sbr.rel (%p398) target = $region32
        $region31: #{transformer_encoder.3} parent=11 // pred_region
          %s402 = ssub.s32 16, 16
          %403 = vsyncadd [#allocation12], %s402
          %s405 = sshll.u32 [#allocation11], 4
          %s406 = int_to_ptr.vmem [resolvable:$true] %s405
          %408 = dma.hbm_to_vmem [thread:$0]  %s5, 16, %s406, [#allocation12]
        $region32: #{transformer_encoder.3} parent=11 // pred_fallthru
          _
        // Predicated region
        $region33: #{transformer_encoder.3} parent=11 // pred_check
          %p409 = pneg %p183
        $region34: #{transformer_encoder.3} parent=11 // pred_check_branch
          %411 = sbr.rel (%p409) target = $region36
        $region35: #{transformer_encoder.3} parent=11 // pred_region
          %s413 = ssub.s32 16, 16
          %414 = vsyncadd [#allocation12], %s413
          %s416 = sshll.u32 [#allocation13], 4
          %s417 = int_to_ptr.vmem [resolvable:$true] %s416
          %419 = dma.hbm_to_vmem [thread:$0]  %s6, 16, %s417, [#allocation12]
        $region36: #{transformer_encoder.3} parent=11 // pred_fallthru
          _
        // Predicated region
        $region37: #{transformer_encoder.3} parent=11 // pred_check
          %p420 = pneg %p204
        $region38: #{transformer_encoder.3} parent=11 // pred_check_branch
          %422 = sbr.rel (%p420) target = $region40
        $region39: #{transformer_encoder.3} parent=11 // pred_region
          %s424 = ssub.s32 256, 256
          %425 = vsyncadd [#allocation15], %s424
          %s426 = sshll.u32 [#allocation14], 4
          %s427 = int_to_ptr.vmem [resolvable:$true] %s426
          %432 = dma.hbm_to_vmem [thread:$0]  %s7, 256, %s427, [#allocation15], 64, 64, 4
        $region40: #{transformer_encoder.3} parent=11 // pred_fallthru
          _
        // Predicated region
        $region41: #{transformer_encoder.3} parent=11 // pred_check
          %p433 = pneg %p225
        $region42: #{transformer_encoder.3} parent=11 // pred_check_branch
          %435 = sbr.rel (%p433) target = $region44
        $region43: #{transformer_encoder.3} parent=11 // pred_region
          %s437 = ssub.s32 16, 16
          %438 = vsyncadd [#allocation15], %s437
          %s440 = sshll.u32 [#allocation16], 4
          %s441 = int_to_ptr.vmem [resolvable:$true] %s440
          %443 = dma.hbm_to_vmem [thread:$0]  %s8, 16, %s441, [#allocation15]
        $region44: #{transformer_encoder.3} parent=11 // pred_fallthru
          _
        // Predicated region
        $region45: #{transformer_encoder.3} parent=11 // pred_check
          %p444 = pneg %p246
        $region46: #{transformer_encoder.3} parent=11 // pred_check_branch
          %446 = sbr.rel (%p444) target = $region48
        $region47: #{transformer_encoder.3} parent=11 // pred_region
          %s448 = ssub.s32 512, 512
          %449 = vsyncadd [#allocation18], %s448
          %s450 = sshll.u32 [#allocation17], 4
          %s451 = int_to_ptr.vmem [resolvable:$true] %s450
          %456 = dma.hbm_to_vmem [thread:$0]  %s9, 512, %s451, [#allocation18], 64, 64, 4
        $region48: #{transformer_encoder.3} parent=11 // pred_fallthru
          _
        // Predicated region
        $region49: #{transformer_encoder.3} parent=11 // pred_check
          %p457 = pneg %p267
        $region50: #{transformer_encoder.3} parent=11 // pred_check_branch
          %459 = sbr.rel (%p457) target = $region52
        $region51: #{transformer_encoder.3} parent=11 // pred_region
          %s461 = ssub.s32 16, 16
          %462 = vsyncadd [#allocation18], %s461
          %s464 = sshll.u32 [#allocation19], 4
          %s465 = int_to_ptr.vmem [resolvable:$true] %s464
          %467 = dma.hbm_to_vmem [thread:$0]  %s10, 16, %s465, [#allocation18]
        $region52: #{transformer_encoder.3} parent=11 // pred_fallthru
          _
        // Predicated region
        $region53: #{transformer_encoder.3} parent=11 // pred_check
          %p468 = pneg %p288
        $region54: #{transformer_encoder.3} parent=11 // pred_check_branch
          %470 = sbr.rel (%p468) target = $region56
        $region55: #{transformer_encoder.3} parent=11 // pred_region
          %s472 = ssub.s32 16, 16
          %473 = vsyncadd [#allocation21], %s472
          %s475 = sshll.u32 [#allocation20], 4
          %s476 = int_to_ptr.vmem [resolvable:$true] %s475
          %478 = dma.hbm_to_vmem [thread:$0]  %s11, 16, %s476, [#allocation21]
        $region56: #{transformer_encoder.3} parent=11 // pred_fallthru
          _
        // Predicated region
        $region57: #{transformer_encoder.3} parent=11 // pred_check
          %p479 = pneg %p309
        $region58: #{transformer_encoder.3} parent=11 // pred_check_branch
          %481 = sbr.rel (%p479) target = $region60
        $region59: #{transformer_encoder.3} parent=11 // pred_region
          %s483 = ssub.s32 16, 16
          %484 = vsyncadd [#allocation21], %s483
          %s486 = sshll.u32 [#allocation22], 4
          %s487 = int_to_ptr.vmem [resolvable:$true] %s486
          %489 = dma.hbm_to_vmem [thread:$0]  %s12, 16, %s487, [#allocation21]
        $region60: #{transformer_encoder.3} parent=11 // pred_fallthru
          _
      $region12: #{transformer_encoder.3} parent=5 // pred_fallthru
        _
      %p490 = scmp.lt.s32.totalorder %s31, 2
      // Predicated region
      $region61: #{transformer_encoder.3} parent=5 // pred_check
        %p491 = pneg %p490
      $region62: #{transformer_encoder.3} parent=5 // pred_check_branch
        %493 = sbr.rel (%p491) target = $region64
      $region63: #{transformer_encoder.3} parent=5 // pred_region
        // Predicated region
        $region65: #{transformer_encoder.3} parent=63 // pred_check
          %p494 = pneg %p51
        $region66: #{transformer_encoder.3} parent=63 // pred_check_branch
          %496 = sbr.rel (%p494) target = $region68
        $region67: #{transformer_encoder.3} parent=63 // pred_region
          %s497 = sand.u32 %s41, 1
          %s498 = scalar_lea.sflag [#allocation3], %s497
          %s499 = sand.u32 %s41, 1
          %s500 = smul.addr %s499, 4
          %s501 = scalar_lea.vmem [#allocation2], %s500
          %s503 = ssub.s32 64, 64
          %504 = vsyncadd %s498, %s503
          %s505 = smul.addr %s31, 64
          %s506 = scalar_lea.hbm %s0, %s505
          %s508 = sshll.u32 %s501, 4
          %s509 = int_to_ptr.vmem [resolvable:$true] %s508
          %511 = dma.hbm_to_vmem [thread:$0]  %s506, 64, %s509, %s498
        $region68: #{transformer_encoder.3} parent=63 // pred_fallthru
          _
      $region64: #{transformer_encoder.3} parent=5 // pred_fallthru
        _
      %p512 = scmp.le.s32.totalorder 1, %s31
      %p513 = scmp.lt.s32.totalorder %s31, 3
      %p514 = pnand %p512, %p513
      %p515 = pneg %p514
      // Predicated region
      $region69: #{transformer_encoder.3} parent=5 // pred_check
        _
      $region70: #{transformer_encoder.3} parent=5 // pred_check_branch
        %517 = sbr.rel (%p514) target = $region72
      $region71: #{transformer_encoder.3} parent=5 // pred_region
        %s518 = ssub.s32 %s31, 1
        %s519 = sand.u32 %s44, 1
        %s520 = scalar_lea.sflag [#allocation3], %s519
        %s521 = sand.u32 %s44, 1
        %s522 = smul.addr %s521, 4
        %s523 = scalar_lea.vmem [#allocation2], %s522
        // Predicated region
        $region73: #{transformer_encoder.3} parent=71 // pred_check
          %p524 = pneg %p57
        $region74: #{transformer_encoder.3} parent=71 // pred_check_branch
          %526 = sbr.rel (%p524) target = $region76
        $region75: #{transformer_encoder.3} parent=71 // pred_region
          %527 = dma.done %s520, 64
        $region76: #{transformer_encoder.3} parent=71 // pred_fallthru
          _
        // Predicated region
        $region77: #{transformer_encoder.3} parent=71 // pred_check
          %p528 = pneg %p78
        $region78: #{transformer_encoder.3} parent=71 // pred_check_branch
          %530 = sbr.rel (%p528) target = $region80
        $region79: #{transformer_encoder.3} parent=71 // pred_region
          %531 = dma.done [#allocation6], 256
        $region80: #{transformer_encoder.3} parent=71 // pred_fallthru
          _
        // Predicated region
        $region81: #{transformer_encoder.3} parent=71 // pred_check
          %p532 = pneg %p99
        $region82: #{transformer_encoder.3} parent=71 // pred_check_branch
          %534 = sbr.rel (%p532) target = $region84
        $region83: #{transformer_encoder.3} parent=71 // pred_region
          %535 = dma.done [#allocation6], 256
        $region84: #{transformer_encoder.3} parent=71 // pred_fallthru
          _
        // Predicated region
        $region85: #{transformer_encoder.3} parent=71 // pred_check
          %p536 = pneg %p120
        $region86: #{transformer_encoder.3} parent=71 // pred_check_branch
          %538 = sbr.rel (%p536) target = $region88
        $region87: #{transformer_encoder.3} parent=71 // pred_region
          %539 = dma.done [#allocation9], 16
        $region88: #{transformer_encoder.3} parent=71 // pred_fallthru
          _
        // Predicated region
        $region89: #{transformer_encoder.3} parent=71 // pred_check
          %p540 = pneg %p141
        $region90: #{transformer_encoder.3} parent=71 // pred_check_branch
          %542 = sbr.rel (%p540) target = $region92
        $region91: #{transformer_encoder.3} parent=71 // pred_region
          %543 = dma.done [#allocation9], 16
        $region92: #{transformer_encoder.3} parent=71 // pred_fallthru
          _
        // Predicated region
        $region93: #{transformer_encoder.3} parent=71 // pred_check
          %p544 = pneg %p162
        $region94: #{transformer_encoder.3} parent=71 // pred_check_branch
          %546 = sbr.rel (%p544) target = $region96
        $region95: #{transformer_encoder.3} parent=71 // pred_region
          %547 = dma.done [#allocation12], 16
        $region96: #{transformer_encoder.3} parent=71 // pred_fallthru
          _
        // Predicated region
        $region97: #{transformer_encoder.3} parent=71 // pred_check
          %p548 = pneg %p183
        $region98: #{transformer_encoder.3} parent=71 // pred_check_branch
          %550 = sbr.rel (%p548) target = $region100
        $region99: #{transformer_encoder.3} parent=71 // pred_region
          %551 = dma.done [#allocation12], 16
        $region100: #{transformer_encoder.3} parent=71 // pred_fallthru
          _
        // Predicated region
        $region101: #{transformer_encoder.3} parent=71 // pred_check
          %p552 = pneg %p204
        $region102: #{transformer_encoder.3} parent=71 // pred_check_branch
          %554 = sbr.rel (%p552) target = $region104
        $region103: #{transformer_encoder.3} parent=71 // pred_region
          %555 = dma.done [#allocation15], 256
        $region104: #{transformer_encoder.3} parent=71 // pred_fallthru
          _
        // Predicated region
        $region105: #{transformer_encoder.3} parent=71 // pred_check
          %p556 = pneg %p225
        $region106: #{transformer_encoder.3} parent=71 // pred_check_branch
          %558 = sbr.rel (%p556) target = $region108
        $region107: #{transformer_encoder.3} parent=71 // pred_region
          %559 = dma.done [#allocation15], 16
        $region108: #{transformer_encoder.3} parent=71 // pred_fallthru
          _
        // Predicated region
        $region109: #{transformer_encoder.3} parent=71 // pred_check
          %p560 = pneg %p246
        $region110: #{transformer_encoder.3} parent=71 // pred_check_branch
          %562 = sbr.rel (%p560) target = $region112
        $region111: #{transformer_encoder.3} parent=71 // pred_region
          %563 = dma.done [#allocation18], 512
        $region112: #{transformer_encoder.3} parent=71 // pred_fallthru
          _
        // Predicated region
        $region113: #{transformer_encoder.3} parent=71 // pred_check
          %p564 = pneg %p267
        $region114: #{transformer_encoder.3} parent=71 // pred_check_branch
          %566 = sbr.rel (%p564) target = $region116
        $region115: #{transformer_encoder.3} parent=71 // pred_region
          %567 = dma.done [#allocation18], 16
        $region116: #{transformer_encoder.3} parent=71 // pred_fallthru
          _
        // Predicated region
        $region117: #{transformer_encoder.3} parent=71 // pred_check
          %p568 = pneg %p288
        $region118: #{transformer_encoder.3} parent=71 // pred_check_branch
          %570 = sbr.rel (%p568) target = $region120
        $region119: #{transformer_encoder.3} parent=71 // pred_region
          %571 = dma.done [#allocation21], 16
        $region120: #{transformer_encoder.3} parent=71 // pred_fallthru
          _
        // Predicated region
        $region121: #{transformer_encoder.3} parent=71 // pred_check
          %p572 = pneg %p309
        $region122: #{transformer_encoder.3} parent=71 // pred_check_branch
          %574 = sbr.rel (%p572) target = $region124
        $region123: #{transformer_encoder.3} parent=71 // pred_region
          %575 = dma.done [#allocation21], 16
        $region124: #{transformer_encoder.3} parent=71 // pred_fallthru
          _
        %s576 = sand.u32 %s44, 1
        %s577 = scalar_lea.sflag [#allocation3], %s576
        %s578 = sand.u32 %s44, 1
        %s579 = smul.addr %s578, 4
        %s580 = scalar_lea.vmem [#allocation2], %s579
        %p581 = pneg %p57
        %p582 = pneg %p54
        %p583 = pneg %p78
        %p584 = pneg %p75
        %p585 = pneg %p99
        %p586 = pneg %p96
        %p587 = pneg %p120
        %p588 = pneg %p117
        %p589 = pneg %p141
        %p590 = pneg %p138
        %p591 = pneg %p162
        %p592 = pneg %p159
        %p593 = pneg %p183
        %p594 = pneg %p180
        %p595 = pneg %p204
        %p596 = pneg %p201
        %p597 = pneg %p225
        %p598 = pneg %p222
        %p599 = pneg %p246
        %p600 = pneg %p243
        %p601 = pneg %p267
        %p602 = pneg %p264
        %p603 = pneg %p288
        %p604 = pneg %p285
        %p605 = pneg %p309
        %p606 = pneg %p306
        %p607 = pneg %p335
        %p608 = pneg %p332
        %s609 = sand.u32 %s322, 1
        %s610 = scalar_lea.sflag [#allocation4], %s609
        %s611 = sand.u32 %s322, 1
        %s612 = smul.addr %s611, 8
        %s613 = scalar_lea.vmem [#allocation23], %s612
        %v616 = vld [vmem:[%s523] sm:$0xf]
        %v617 = vunpack.c.l.bf16 %v616
        %v618 = vld [vmem:[#allocation8] sm:$0x1]
        %v619 = vld [vmem:[#allocation10] sm:$0x1]
        %vm620 = vcmask 261120
        %v621 = vsel %vm620, %v617, 0.0
        %622 = vadd.xlane.f32.xlu0 %v621
        %v623 = vpop.xlane.xlu0 %622
        %v624 = vrcp.pop 32.0
        %v625 = vmul.f32 %v623, %v624
        %v626 = vsub.f32 %v617, %v625
        %v627 = vmul.f32 %v626, %v626
        %v628 = vsel %vm620, %v627, 0.0
        %629 = vadd.xlane.f32.xlu0 %v628
        %v630 = vpop.xlane.xlu0 %629
        %v631 = vmul.f32 %v630, %v624
        %v632 = vadd.f32 %v631, 1e-06
        %v633 = vrsqrt.pop %v632
        %v634 = vmul.f32 %v626, %v633
        %v636 = vlaneseq
        %v637 = vshrl.u32 %v636, 7
        %v638 = vsub.s32 0, %v637
        %v639 = vrot.slane %v618, %v638
        %v641 = vmul.f32 %v634, %v639
        %v643 = vlaneseq
        %v644 = vshrl.u32 %v643, 7
        %v645 = vsub.s32 0, %v644
        %v646 = vrot.slane %v619, %v645
        %v648 = vadd.f32 %v641, %v646
        %v649 = vpack.c.bf16 %v648, %v648
        %v650 = vld [vmem:[#allocation5] sm:$0xf]
        %v651 = vld [vmem:[#allocation5 + $0x4] sm:$0xf]
        %v652 = vld [vmem:[#allocation5 + $0x8] sm:$0xf]
        %v653 = vld [vmem:[#allocation5 + $0xc] sm:$0xf]
        %v658 = vunpack.c.l.b16 %v650
        %v659 = vunpack.c.l.b16 %v651
        %v660 = vunpack.c.l.b16 %v652
        %v661 = vunpack.c.l.b16 %v653
        %v662 = vpack.c.b16 %v659, %v658
        %v663 = vpack.c.b16 %v661, %v660
        %v667 = vsel %vm620, %v649, 0
        %669 = vmatprep.subr.bf16.mxu0 0
        %670 = vmatpush1.bf16.msra.mxu0 %v662
        %671 = vmatprep.subr.bf16.mxu0 0
        %672 = vmatpush1.bf16.msra.mxu0 %v663
        %673 = vmatprep.subr.bf16.mxu0 0
        %674 = vmatpush1.bf16.msra.mxu0 0
        %675 = vmatprep.subr.bf16.mxu0 0
        %676 = vmatpush1.bf16.msra.mxu0 0
        %677 = vmatprep.subr.bf16.mxu0 0
        %678 = vmatpush1.bf16.msra.mxu0 0
        %679 = vmatprep.subr.bf16.mxu0 0
        %680 = vmatpush1.bf16.msra.mxu0 0
        %681 = vmatprep.subr.bf16.mxu0 0
        %682 = vmatpush1.bf16.msra.mxu0 0
        %683 = vmatprep.subr.bf16.mxu0 0
        %684 = vmatpush1.bf16.msra.mxu0 0
        %685 = vmatprep.subr.bf16.mxu0 0
        %686 = vmatpush1.bf16.msra.mxu0 0
        %687 = vmatprep.subr.bf16.mxu0 0
        %688 = vmatpush1.bf16.msra.mxu0 0
        %689 = vmatprep.subr.bf16.mxu0 0
        %690 = vmatpush1.bf16.msra.mxu0 0
        %691 = vmatprep.subr.bf16.mxu0 0
        %692 = vmatpush1.bf16.msra.mxu0 0
        %693 = vmatprep.subr.bf16.mxu0 0
        %694 = vmatpush1.bf16.msra.mxu0 0
        %695 = vmatprep.subr.bf16.mxu0 0
        %696 = vmatpush1.bf16.msra.mxu0 0
        %697 = vmatprep.subr.bf16.mxu0 0
        %698 = vmatpush1.bf16.msra.mxu0 0
        %699 = vmatprep.subr.bf16.mxu0 0
        %700 = vmatpush1.bf16.msra.mxu0 0
        %701 = vmatprep.mubr.bf16.mxu0 0
        %702 = vmatmul.mubr.bf16.gmra.mrb[0].mxu0 %v667
        %v703 = vpop.f32.mrb[0].mxu0
        %v704 = vadd.f32 0.0, %v703
        %v705 = vpop.f32.mrb[0].mxu0
        %v706 = vpop.f32.mrb[0].mxu0
        %v707 = vpop.f32.mrb[0].mxu0
        %708 = vdwg.mxu0
        %v709 = vpack.c.bf16 %v704, %v704
        %711 = vrot.lane.b32.xlu0 %v709, 120
        %v712 = vpop.permute.xlu0 %711
        %714 = vrot.lane.b32.xlu0 %v709, 112
        %v715 = vpop.permute.xlu0 %714
        %717 = vrot.lane.b32.xlu0 %v709, 104
        %v718 = vpop.permute.xlu0 %717
        %v720 = vmul.bf16 %v709, 1052065461
        %v721 = vmul.bf16 %v712, 1052065461
        %v722 = vmul.bf16 %v715, 1052065461
        %v723 = vmul.bf16 %v718, 1052065461
        %724 = vrot.lane.b32.xlu0 %v709, 96
        %v725 = vpop.permute.xlu0 %724
        %vm726 = vcmask 64512
        %v728 = vsel %vm726, %v720, 0
        %v731 = vsel %vm726, %v725, 0
        %733 = vmatprep.subr.bf16.mxu0 0
        %734 = vmatpush1.bf16.xpose.msra.mxu0 %v731
        %735 = vmatprep.subr.bf16.mxu0 0
        %736 = vmatpush1.bf16.xpose.msra.mxu0 0
        %737 = vmatprep.subr.bf16.mxu0 0
        %738 = vmatpush1.bf16.xpose.msra.mxu0 0
        %739 = vmatprep.subr.bf16.mxu0 0
        %740 = vmatpush1.bf16.xpose.msra.mxu0 0
        %741 = vmatprep.subr.bf16.mxu0 0
        %742 = vmatpush1.bf16.xpose.msra.mxu0 0
        %743 = vmatprep.subr.bf16.mxu0 0
        %744 = vmatpush1.bf16.xpose.msra.mxu0 0
        %745 = vmatprep.subr.bf16.mxu0 0
        %746 = vmatpush1.bf16.xpose.msra.mxu0 0
        %747 = vmatprep.subr.bf16.mxu0 0
        %748 = vmatpush1.bf16.xpose.msra.mxu0 0
        %749 = vmatprep.subr.bf16.mxu0 0
        %750 = vmatpush1.bf16.xpose.msra.mxu0 0
        %751 = vmatprep.subr.bf16.mxu0 0
        %752 = vmatpush1.bf16.xpose.msra.mxu0 0
        %753 = vmatprep.subr.bf16.mxu0 0
        %754 = vmatpush1.bf16.xpose.msra.mxu0 0
        %755 = vmatprep.subr.bf16.mxu0 0
        %756 = vmatpush1.bf16.xpose.msra.mxu0 0
        %757 = vmatprep.subr.bf16.mxu0 0
        %758 = vmatpush1.bf16.xpose.msra.mxu0 0
        %759 = vmatprep.subr.bf16.mxu0 0
        %760 = vmatpush1.bf16.xpose.msra.mxu0 0
        %761 = vmatprep.subr.bf16.mxu0 0
        %762 = vmatpush1.bf16.xpose.msra.mxu0 0
        %763 = vmatprep.subr.bf16.mxu0 0
        %764 = vmatpush1.bf16.xpose.msra.mxu0 0
        %765 = vmatprep.mubr.bf16.mxu0 0
        %766 = vmatmul.mubr.bf16.gmra.mrb[0].mxu0 %v728
        %v767 = vpop.f32.mrb[0].mxu0
        %v768 = vadd.f32 0.0, %v767
        %v769 = vpop.f32.mrb[0].mxu0
        %v770 = vpop.f32.mrb[0].mxu0
        %v771 = vpop.f32.mrb[0].mxu0
        %772 = vdwg.mxu0
        %773 = vrot.lane.b32.xlu0 %v712, 96
        %v774 = vpop.permute.xlu0 %773
        %v776 = vsel %vm726, %v721, 0
        %v779 = vsel %vm726, %v774, 0
        %781 = vmatprep.subr.bf16.mxu0 0
        %782 = vmatpush1.bf16.xpose.msra.mxu0 %v779
        %783 = vmatprep.subr.bf16.mxu0 0
        %784 = vmatpush1.bf16.xpose.msra.mxu0 0
        %785 = vmatprep.subr.bf16.mxu0 0
        %786 = vmatpush1.bf16.xpose.msra.mxu0 0
        %787 = vmatprep.subr.bf16.mxu0 0
        %788 = vmatpush1.bf16.xpose.msra.mxu0 0
        %789 = vmatprep.subr.bf16.mxu0 0
        %790 = vmatpush1.bf16.xpose.msra.mxu0 0
        %791 = vmatprep.subr.bf16.mxu0 0
        %792 = vmatpush1.bf16.xpose.msra.mxu0 0
        %793 = vmatprep.subr.bf16.mxu0 0
        %794 = vmatpush1.bf16.xpose.msra.mxu0 0
        %795 = vmatprep.subr.bf16.mxu0 0
        %796 = vmatpush1.bf16.xpose.msra.mxu0 0
        %797 = vmatprep.subr.bf16.mxu0 0
        %798 = vmatpush1.bf16.xpose.msra.mxu0 0
        %799 = vmatprep.subr.bf16.mxu0 0
        %800 = vmatpush1.bf16.xpose.msra.mxu0 0
        %801 = vmatprep.subr.bf16.mxu0 0
        %802 = vmatpush1.bf16.xpose.msra.mxu0 0
        %803 = vmatprep.subr.bf16.mxu0 0
        %804 = vmatpush1.bf16.xpose.msra.mxu0 0
        %805 = vmatprep.subr.bf16.mxu0 0
        %806 = vmatpush1.bf16.xpose.msra.mxu0 0
        %807 = vmatprep.subr.bf16.mxu0 0
        %808 = vmatpush1.bf16.xpose.msra.mxu0 0
        %809 = vmatprep.subr.bf16.mxu0 0
        %810 = vmatpush1.bf16.xpose.msra.mxu0 0
        %811 = vmatprep.subr.bf16.mxu0 0
        %812 = vmatpush1.bf16.xpose.msra.mxu0 0
        %813 = vmatprep.mubr.bf16.mxu0 0
        %814 = vmatmul.mubr.bf16.gmra.mrb[0].mxu0 %v776
        %v815 = vpop.f32.mrb[0].mxu0
        %v816 = vadd.f32 0.0, %v815
        %v817 = vpop.f32.mrb[0].mxu0
        %v818 = vpop.f32.mrb[0].mxu0
        %v819 = vpop.f32.mrb[0].mxu0
        %820 = vdwg.mxu0
        %821 = vrot.lane.b32.xlu0 %v715, 96
        %v822 = vpop.permute.xlu0 %821
        %v824 = vsel %vm726, %v722, 0
        %v827 = vsel %vm726, %v822, 0
        %829 = vmatprep.subr.bf16.mxu0 0
        %830 = vmatpush1.bf16.xpose.msra.mxu0 %v827
        %831 = vmatprep.subr.bf16.mxu0 0
        %832 = vmatpush1.bf16.xpose.msra.mxu0 0
        %833 = vmatprep.subr.bf16.mxu0 0
        %834 = vmatpush1.bf16.xpose.msra.mxu0 0
        %835 = vmatprep.subr.bf16.mxu0 0
        %836 = vmatpush1.bf16.xpose.msra.mxu0 0
        %837 = vmatprep.subr.bf16.mxu0 0
        %838 = vmatpush1.bf16.xpose.msra.mxu0 0
        %839 = vmatprep.subr.bf16.mxu0 0
        %840 = vmatpush1.bf16.xpose.msra.mxu0 0
        %841 = vmatprep.subr.bf16.mxu0 0
        %842 = vmatpush1.bf16.xpose.msra.mxu0 0
        %843 = vmatprep.subr.bf16.mxu0 0
        %844 = vmatpush1.bf16.xpose.msra.mxu0 0
        %845 = vmatprep.subr.bf16.mxu0 0
        %846 = vmatpush1.bf16.xpose.msra.mxu0 0
        %847 = vmatprep.subr.bf16.mxu0 0
        %848 = vmatpush1.bf16.xpose.msra.mxu0 0
        %849 = vmatprep.subr.bf16.mxu0 0
        %850 = vmatpush1.bf16.xpose.msra.mxu0 0
        %851 = vmatprep.subr.bf16.mxu0 0
        %852 = vmatpush1.bf16.xpose.msra.mxu0 0
        %853 = vmatprep.subr.bf16.mxu0 0
        %854 = vmatpush1.bf16.xpose.msra.mxu0 0
        %855 = vmatprep.subr.bf16.mxu0 0
        %856 = vmatpush1.bf16.xpose.msra.mxu0 0
        %857 = vmatprep.subr.bf16.mxu0 0
        %858 = vmatpush1.bf16.xpose.msra.mxu0 0
        %859 = vmatprep.subr.bf16.mxu0 0
        %860 = vmatpush1.bf16.xpose.msra.mxu0 0
        %861 = vmatprep.mubr.bf16.mxu0 0
        %862 = vmatmul.mubr.bf16.gmra.mrb[0].mxu0 %v824
        %v863 = vpop.f32.mrb[0].mxu0
        %v864 = vadd.f32 0.0, %v863
        %v865 = vpop.f32.mrb[0].mxu0
        %v866 = vpop.f32.mrb[0].mxu0
        %v867 = vpop.f32.mrb[0].mxu0
        %868 = vdwg.mxu0
        %869 = vrot.lane.b32.xlu0 %v718, 96
        %v870 = vpop.permute.xlu0 %869
        %v872 = vsel %vm726, %v723, 0
        %v875 = vsel %vm726, %v870, 0
        %877 = vmatprep.subr.bf16.mxu0 0
        %878 = vmatpush1.bf16.xpose.msra.mxu0 %v875
        %879 = vmatprep.subr.bf16.mxu0 0
        %880 = vmatpush1.bf16.xpose.msra.mxu0 0
        %881 = vmatprep.subr.bf16.mxu0 0
        %882 = vmatpush1.bf16.xpose.msra.mxu0 0
        %883 = vmatprep.subr.bf16.mxu0 0
        %884 = vmatpush1.bf16.xpose.msra.mxu0 0
        %885 = vmatprep.subr.bf16.mxu0 0
        %886 = vmatpush1.bf16.xpose.msra.mxu0 0
        %887 = vmatprep.subr.bf16.mxu0 0
        %888 = vmatpush1.bf16.xpose.msra.mxu0 0
        %889 = vmatprep.subr.bf16.mxu0 0
        %890 = vmatpush1.bf16.xpose.msra.mxu0 0
        %891 = vmatprep.subr.bf16.mxu0 0
        %892 = vmatpush1.bf16.xpose.msra.mxu0 0
        %893 = vmatprep.subr.bf16.mxu0 0
        %894 = vmatpush1.bf16.xpose.msra.mxu0 0
        %895 = vmatprep.subr.bf16.mxu0 0
        %896 = vmatpush1.bf16.xpose.msra.mxu0 0
        %897 = vmatprep.subr.bf16.mxu0 0
        %898 = vmatpush1.bf16.xpose.msra.mxu0 0
        %899 = vmatprep.subr.bf16.mxu0 0
        %900 = vmatpush1.bf16.xpose.msra.mxu0 0
        %901 = vmatprep.subr.bf16.mxu0 0
        %902 = vmatpush1.bf16.xpose.msra.mxu0 0
        %903 = vmatprep.subr.bf16.mxu0 0
        %904 = vmatpush1.bf16.xpose.msra.mxu0 0
        %905 = vmatprep.subr.bf16.mxu0 0
        %906 = vmatpush1.bf16.xpose.msra.mxu0 0
        %907 = vmatprep.subr.bf16.mxu0 0
        %908 = vmatpush1.bf16.xpose.msra.mxu0 0
        %909 = vmatprep.mubr.bf16.mxu0 0
        %910 = vmatmul.mubr.bf16.gmra.mrb[0].mxu0 %v872
        %v911 = vpop.f32.mrb[0].mxu0
        %v912 = vadd.f32 0.0, %v911
        %v913 = vpop.f32.mrb[0].mxu0
        %v914 = vpop.f32.mrb[0].mxu0
        %v915 = vpop.f32.mrb[0].mxu0
        %916 = vdwg.mxu0
        %v917 = vsel %vm726, %v768, -inf
        %918 = vmax.xlane.f32.xlu0 %v917
        %v919 = vpop.xlane.xlu0 %918
        %v920 = vsel %vm726, %v816, -inf
        %921 = vmax.xlane.f32.xlu0 %v920
        %v922 = vpop.xlane.xlu0 %921
        %v923 = vsel %vm726, %v864, -inf
        %924 = vmax.xlane.f32.xlu0 %v923
        %v925 = vpop.xlane.xlu0 %924
        %v926 = vsel %vm726, %v912, -inf
        %927 = vmax.xlane.f32.xlu0 %v926
        %v928 = vpop.xlane.xlu0 %927
        %v929 = vsub.f32 %v768, %v919
        %v930 = vsub.f32 %v816, %v922
        %v931 = vsub.f32 %v864, %v925
        %v932 = vsub.f32 %v912, %v928
        %v933 = vmul.f32 %v929, 1.442695
        %v934 = vpow.pop %v933
        %v935 = vmul.f32 %v930, 1.442695
        %v936 = vpow.pop %v935
        %v937 = vmul.f32 %v931, 1.442695
        %v938 = vpow.pop %v937
        %v939 = vmul.f32 %v932, 1.442695
        %v940 = vpow.pop %v939
        %v941 = vsel %vm726, %v934, 0.0
        %942 = vadd.xlane.f32.xlu0 %v941
        %v943 = vpop.xlane.xlu0 %942
        %v944 = vsel %vm726, %v936, 0.0
        %945 = vadd.xlane.f32.xlu0 %v944
        %v946 = vpop.xlane.xlu0 %945
        %v947 = vsel %vm726, %v938, 0.0
        %948 = vadd.xlane.f32.xlu0 %v947
        %v949 = vpop.xlane.xlu0 %948
        %v950 = vsel %vm726, %v940, 0.0
        %951 = vadd.xlane.f32.xlu0 %v950
        %v952 = vpop.xlane.xlu0 %951
        %v953 = vrcp.pop %v943
        %v954 = vrcp.pop %v946
        %v955 = vrcp.pop %v949
        %v956 = vrcp.pop %v952
        %v957 = vmul.f32 %v934, %v953
        %v958 = vmul.f32 %v936, %v954
        %v959 = vmul.f32 %v938, %v955
        %v960 = vmul.f32 %v940, %v956
        %v961 = vpack.c.bf16 %v957, %v957
        %v962 = vpack.c.bf16 %v958, %v958
        %v963 = vpack.c.bf16 %v959, %v959
        %v964 = vpack.c.bf16 %v960, %v960
        %965 = vrot.lane.b32.xlu0 %v709, 64
        %v966 = vpop.permute.xlu0 %965
        %v968 = vsel %vm726, %v961, 0
        %vm970 = vcmask 1043456
        %v972 = vsel %vm970, %v966, 0
        %974 = vmatprep.subr.bf16.mxu0 0
        %975 = vmatpush1.bf16.msra.mxu0 %v972
        %976 = vmatprep.subr.bf16.mxu0 0
        %977 = vmatpush1.bf16.msra.mxu0 0
        %978 = vmatprep.subr.bf16.mxu0 0
        %979 = vmatpush1.bf16.msra.mxu0 0
        %980 = vmatprep.subr.bf16.mxu0 0
        %981 = vmatpush1.bf16.msra.mxu0 0
        %982 = vmatprep.subr.bf16.mxu0 0
        %983 = vmatpush1.bf16.msra.mxu0 0
        %984 = vmatprep.subr.bf16.mxu0 0
        %985 = vmatpush1.bf16.msra.mxu0 0
        %986 = vmatprep.subr.bf16.mxu0 0
        %987 = vmatpush1.bf16.msra.mxu0 0
        %988 = vmatprep.subr.bf16.mxu0 0
        %989 = vmatpush1.bf16.msra.mxu0 0
        %990 = vmatprep.subr.bf16.mxu0 0
        %991 = vmatpush1.bf16.msra.mxu0 0
        %992 = vmatprep.subr.bf16.mxu0 0
        %993 = vmatpush1.bf16.msra.mxu0 0
        %994 = vmatprep.subr.bf16.mxu0 0
        %995 = vmatpush1.bf16.msra.mxu0 0
        %996 = vmatprep.subr.bf16.mxu0 0
        %997 = vmatpush1.bf16.msra.mxu0 0
        %998 = vmatprep.subr.bf16.mxu0 0
        %999 = vmatpush1.bf16.msra.mxu0 0
        %1000 = vmatprep.subr.bf16.mxu0 0
        %1001 = vmatpush1.bf16.msra.mxu0 0
        %1002 = vmatprep.subr.bf16.mxu0 0
        %1003 = vmatpush1.bf16.msra.mxu0 0
        %1004 = vmatprep.subr.bf16.mxu0 0
        %1005 = vmatpush1.bf16.msra.mxu0 0
        %1006 = vmatprep.mubr.bf16.mxu0 0
        %1007 = vmatmul.mubr.bf16.gmra.mrb[0].mxu0 %v968
        %v1008 = vpop.f32.mrb[0].mxu0
        %v1009 = vadd.f32 0.0, %v1008
        %v1010 = vpop.f32.mrb[0].mxu0
        %v1011 = vpop.f32.mrb[0].mxu0
        %v1012 = vpop.f32.mrb[0].mxu0
        %1013 = vdwg.mxu0
        %1014 = vrot.lane.b32.xlu0 %v712, 64
        %v1015 = vpop.permute.xlu0 %1014
        %v1017 = vsel %vm726, %v962, 0
        %v1020 = vsel %vm970, %v1015, 0
        %1022 = vmatprep.subr.bf16.mxu0 0
        %1023 = vmatpush1.bf16.msra.mxu0 %v1020
        %1024 = vmatprep.subr.bf16.mxu0 0
        %1025 = vmatpush1.bf16.msra.mxu0 0
        %1026 = vmatprep.subr.bf16.mxu0 0
        %1027 = vmatpush1.bf16.msra.mxu0 0
        %1028 = vmatprep.subr.bf16.mxu0 0
        %1029 = vmatpush1.bf16.msra.mxu0 0
        %1030 = vmatprep.subr.bf16.mxu0 0
        %1031 = vmatpush1.bf16.msra.mxu0 0
        %1032 = vmatprep.subr.bf16.mxu0 0
        %1033 = vmatpush1.bf16.msra.mxu0 0
        %1034 = vmatprep.subr.bf16.mxu0 0
        %1035 = vmatpush1.bf16.msra.mxu0 0
        %1036 = vmatprep.subr.bf16.mxu0 0
        %1037 = vmatpush1.bf16.msra.mxu0 0
        %1038 = vmatprep.subr.bf16.mxu0 0
        %1039 = vmatpush1.bf16.msra.mxu0 0
        %1040 = vmatprep.subr.bf16.mxu0 0
        %1041 = vmatpush1.bf16.msra.mxu0 0
        %1042 = vmatprep.subr.bf16.mxu0 0
        %1043 = vmatpush1.bf16.msra.mxu0 0
        %1044 = vmatprep.subr.bf16.mxu0 0
        %1045 = vmatpush1.bf16.msra.mxu0 0
        %1046 = vmatprep.subr.bf16.mxu0 0
        %1047 = vmatpush1.bf16.msra.mxu0 0
        %1048 = vmatprep.subr.bf16.mxu0 0
        %1049 = vmatpush1.bf16.msra.mxu0 0
        %1050 = vmatprep.subr.bf16.mxu0 0
        %1051 = vmatpush1.bf16.msra.mxu0 0
        %1052 = vmatprep.subr.bf16.mxu0 0
        %1053 = vmatpush1.bf16.msra.mxu0 0
        %1054 = vmatprep.mubr.bf16.mxu0 0
        %1055 = vmatmul.mubr.bf16.gmra.mrb[0].mxu0 %v1017
        %v1056 = vpop.f32.mrb[0].mxu0
        %v1057 = vadd.f32 0.0, %v1056
        %v1058 = vpop.f32.mrb[0].mxu0
        %v1059 = vpop.f32.mrb[0].mxu0
        %v1060 = vpop.f32.mrb[0].mxu0
        %1061 = vdwg.mxu0
        %1062 = vrot.lane.b32.xlu0 %v715, 64
        %v1063 = vpop.permute.xlu0 %1062
        %v1065 = vsel %vm726, %v963, 0
        %v1068 = vsel %vm970, %v1063, 0
        %1070 = vmatprep.subr.bf16.mxu0 0
        %1071 = vmatpush1.bf16.msra.mxu0 %v1068
        %1072 = vmatprep.subr.bf16.mxu0 0
        %1073 = vmatpush1.bf16.msra.mxu0 0
        %1074 = vmatprep.subr.bf16.mxu0 0
        %1075 = vmatpush1.bf16.msra.mxu0 0
        %1076 = vmatprep.subr.bf16.mxu0 0
        %1077 = vmatpush1.bf16.msra.mxu0 0
        %1078 = vmatprep.subr.bf16.mxu0 0
        %1079 = vmatpush1.bf16.msra.mxu0 0
        %1080 = vmatprep.subr.bf16.mxu0 0
        %1081 = vmatpush1.bf16.msra.mxu0 0
        %1082 = vmatprep.subr.bf16.mxu0 0
        %1083 = vmatpush1.bf16.msra.mxu0 0
        %1084 = vmatprep.subr.bf16.mxu0 0
        %1085 = vmatpush1.bf16.msra.mxu0 0
        %1086 = vmatprep.subr.bf16.mxu0 0
        %1087 = vmatpush1.bf16.msra.mxu0 0
        %1088 = vmatprep.subr.bf16.mxu0 0
        %1089 = vmatpush1.bf16.msra.mxu0 0
        %1090 = vmatprep.subr.bf16.mxu0 0
        %1091 = vmatpush1.bf16.msra.mxu0 0
        %1092 = vmatprep.subr.bf16.mxu0 0
        %1093 = vmatpush1.bf16.msra.mxu0 0
        %1094 = vmatprep.subr.bf16.mxu0 0
        %1095 = vmatpush1.bf16.msra.mxu0 0
        %1096 = vmatprep.subr.bf16.mxu0 0
        %1097 = vmatpush1.bf16.msra.mxu0 0
        %1098 = vmatprep.subr.bf16.mxu0 0
        %1099 = vmatpush1.bf16.msra.mxu0 0
        %1100 = vmatprep.subr.bf16.mxu0 0
        %1101 = vmatpush1.bf16.msra.mxu0 0
        %1102 = vmatprep.mubr.bf16.mxu0 0
        %1103 = vmatmul.mubr.bf16.gmra.mrb[0].mxu0 %v1065
        %v1104 = vpop.f32.mrb[0].mxu0
        %v1105 = vadd.f32 0.0, %v1104
        %v1106 = vpop.f32.mrb[0].mxu0
        %v1107 = vpop.f32.mrb[0].mxu0
        %v1108 = vpop.f32.mrb[0].mxu0
        %1109 = vdwg.mxu0
        %1110 = vrot.lane.b32.xlu0 %v718, 64
        %v1111 = vpop.permute.xlu0 %1110
        %v1113 = vsel %vm726, %v964, 0
        %v1116 = vsel %vm970, %v1111, 0
        %1118 = vmatprep.subr.bf16.mxu0 0
        %1119 = vmatpush1.bf16.msra.mxu0 %v1116
        %1120 = vmatprep.subr.bf16.mxu0 0
        %1121 = vmatpush1.bf16.msra.mxu0 0
        %1122 = vmatprep.subr.bf16.mxu0 0
        %1123 = vmatpush1.bf16.msra.mxu0 0
        %1124 = vmatprep.subr.bf16.mxu0 0
        %1125 = vmatpush1.bf16.msra.mxu0 0
        %1126 = vmatprep.subr.bf16.mxu0 0
        %1127 = vmatpush1.bf16.msra.mxu0 0
        %1128 = vmatprep.subr.bf16.mxu0 0
        %1129 = vmatpush1.bf16.msra.mxu0 0
        %1130 = vmatprep.subr.bf16.mxu0 0
        %1131 = vmatpush1.bf16.msra.mxu0 0
        %1132 = vmatprep.subr.bf16.mxu0 0
        %1133 = vmatpush1.bf16.msra.mxu0 0
        %1134 = vmatprep.subr.bf16.mxu0 0
        %1135 = vmatpush1.bf16.msra.mxu0 0
        %1136 = vmatprep.subr.bf16.mxu0 0
        %1137 = vmatpush1.bf16.msra.mxu0 0
        %1138 = vmatprep.subr.bf16.mxu0 0
        %1139 = vmatpush1.bf16.msra.mxu0 0
        %1140 = vmatprep.subr.bf16.mxu0 0
        %1141 = vmatpush1.bf16.msra.mxu0 0
        %1142 = vmatprep.subr.bf16.mxu0 0
        %1143 = vmatpush1.bf16.msra.mxu0 0
        %1144 = vmatprep.subr.bf16.mxu0 0
        %1145 = vmatpush1.bf16.msra.mxu0 0
        %1146 = vmatprep.subr.bf16.mxu0 0
        %1147 = vmatpush1.bf16.msra.mxu0 0
        %1148 = vmatprep.subr.bf16.mxu0 0
        %1149 = vmatpush1.bf16.msra.mxu0 0
        %1150 = vmatprep.mubr.bf16.mxu0 0
        %1151 = vmatmul.mubr.bf16.gmra.mrb[0].mxu0 %v1113
        %v1152 = vpop.f32.mrb[0].mxu0
        %v1153 = vadd.f32 0.0, %v1152
        %v1154 = vpop.f32.mrb[0].mxu0
        %v1155 = vpop.f32.mrb[0].mxu0
        %v1156 = vpop.f32.mrb[0].mxu0
        %1157 = vdwg.mxu0
        %1159 = vrot.lane.b32.xlu0 %v1057, 8
        %v1160 = vpop.permute.xlu0 %1159
        %1163 = vrot.lane.b32.xlu0 %v1105, 16
        %v1164 = vpop.permute.xlu0 %1163
        %1167 = vrot.lane.b32.xlu0 %v1153, 24
        %v1168 = vpop.permute.xlu0 %1167
        %v1170 = vsel %vm726, %v1009, %v1160
        %vm1171 = vcmask 130048
        %v1172 = vsel %vm1171, %v1170, %v1164
        %vm1173 = vcmask 195584
        %v1174 = vsel %vm1173, %v1172, %v1168
        %v1175 = vpack.c.bf16 %v1174, %v1174
        %v1176 = vld [vmem:[#allocation7] sm:$0xf]
        %v1177 = vld [vmem:[#allocation7 + $0x4] sm:$0xf]
        %v1178 = vld [vmem:[#allocation7 + $0x8] sm:$0xf]
        %v1179 = vld [vmem:[#allocation7 + $0xc] sm:$0xf]
        %v1184 = vunpack.c.l.b16 %v1176
        %v1185 = vunpack.c.l.b16 %v1177
        %v1186 = vunpack.c.l.b16 %v1178
        %v1187 = vunpack.c.l.b16 %v1179
        %v1188 = vpack.c.b16 %v1185, %v1184
        %v1189 = vpack.c.b16 %v1187, %v1186
        %v1193 = vsel %vm620, %v1175, 0
        %1195 = vmatprep.subr.bf16.mxu0 0
        %1196 = vmatpush1.bf16.msra.mxu0 %v1188
        %1197 = vmatprep.subr.bf16.mxu0 0
        %1198 = vmatpush1.bf16.msra.mxu0 %v1189
        %1199 = vmatprep.subr.bf16.mxu0 0
        %1200 = vmatpush1.bf16.msra.mxu0 0
        %1201 = vmatprep.subr.bf16.mxu0 0
        %1202 = vmatpush1.bf16.msra.mxu0 0
        %1203 = vmatprep.subr.bf16.mxu0 0
        %1204 = vmatpush1.bf16.msra.mxu0 0
        %1205 = vmatprep.subr.bf16.mxu0 0
        %1206 = vmatpush1.bf16.msra.mxu0 0
        %1207 = vmatprep.subr.bf16.mxu0 0
        %1208 = vmatpush1.bf16.msra.mxu0 0
        %1209 = vmatprep.subr.bf16.mxu0 0
        %1210 = vmatpush1.bf16.msra.mxu0 0
        %1211 = vmatprep.subr.bf16.mxu0 0
        %1212 = vmatpush1.bf16.msra.mxu0 0
        %1213 = vmatprep.subr.bf16.mxu0 0
        %1214 = vmatpush1.bf16.msra.mxu0 0
        %1215 = vmatprep.subr.bf16.mxu0 0
        %1216 = vmatpush1.bf16.msra.mxu0 0
        %1217 = vmatprep.subr.bf16.mxu0 0
        %1218 = vmatpush1.bf16.msra.mxu0 0
        %1219 = vmatprep.subr.bf16.mxu0 0
        %1220 = vmatpush1.bf16.msra.mxu0 0
        %1221 = vmatprep.subr.bf16.mxu0 0
        %1222 = vmatpush1.bf16.msra.mxu0 0
        %1223 = vmatprep.subr.bf16.mxu0 0
        %1224 = vmatpush1.bf16.msra.mxu0 0
        %1225 = vmatprep.subr.bf16.mxu0 0
        %1226 = vmatpush1.bf16.msra.mxu0 0
        %1227 = vmatprep.mubr.bf16.mxu0 0
        %1228 = vmatmul.mubr.bf16.gmra.mrb[0].mxu0 %v1193
        %v1229 = vpop.f32.mrb[0].mxu0
        %v1230 = vadd.f32 0.0, %v1229
        %v1231 = vpop.f32.mrb[0].mxu0
        %v1232 = vpop.f32.mrb[0].mxu0
        %v1233 = vpop.f32.mrb[0].mxu0
        %1234 = vdwg.mxu0
        %v1235 = vadd.f32 %v617, %v1230
        %v1236 = vld [vmem:[#allocation11] sm:$0x1]
        %v1237 = vld [vmem:[#allocation13] sm:$0x1]
        %v1238 = vsel %vm620, %v1235, 0.0
        %1239 = vadd.xlane.f32.xlu0 %v1238
        %v1240 = vpop.xlane.xlu0 %1239
        %v1241 = vmul.f32 %v1240, %v624
        %v1242 = vsub.f32 %v1235, %v1241
        %v1243 = vmul.f32 %v1242, %v1242
        %v1244 = vsel %vm620, %v1243, 0.0
        %1245 = vadd.xlane.f32.xlu0 %v1244
        %v1246 = vpop.xlane.xlu0 %1245
        %v1247 = vmul.f32 %v1246, %v624
        %v1248 = vadd.f32 %v1247, 1e-06
        %v1249 = vrsqrt.pop %v1248
        %v1250 = vmul.f32 %v1242, %v1249
        %v1252 = vlaneseq
        %v1253 = vshrl.u32 %v1252, 7
        %v1254 = vsub.s32 0, %v1253
        %v1255 = vrot.slane %v1236, %v1254
        %v1257 = vmul.f32 %v1250, %v1255
        %v1259 = vlaneseq
        %v1260 = vshrl.u32 %v1259, 7
        %v1261 = vsub.s32 0, %v1260
        %v1262 = vrot.slane %v1237, %v1261
        %v1264 = vadd.f32 %v1257, %v1262
        %v1265 = vpack.c.bf16 %v1264, %v1264
        %v1266 = vld [vmem:[#allocation14] sm:$0xf]
        %v1267 = vld [vmem:[#allocation14 + $0x4] sm:$0xf]
        %v1268 = vld [vmem:[#allocation14 + $0x8] sm:$0xf]
        %v1269 = vld [vmem:[#allocation14 + $0xc] sm:$0xf]
        %v1270 = vld [vmem:[#allocation16] sm:$0x1]
        %v1272 = vlaneseq
        %v1273 = vshrl.u32 %v1272, 7
        %v1274 = vsub.s32 0, %v1273
        %v1275 = vrot.slane %v1270, %v1274
        %v1281 = vunpack.c.l.b16 %v1266
        %v1282 = vunpack.c.l.b16 %v1267
        %v1283 = vunpack.c.l.b16 %v1268
        %v1284 = vunpack.c.l.b16 %v1269
        %v1285 = vpack.c.b16 %v1282, %v1281
        %v1286 = vpack.c.b16 %v1284, %v1283
        %v1290 = vsel %vm620, %v1265, 0
        %1292 = vmatprep.subr.bf16.mxu0 0
        %1293 = vmatpush1.bf16.msra.mxu0 %v1285
        %1294 = vmatprep.subr.bf16.mxu0 0
        %1295 = vmatpush1.bf16.msra.mxu0 %v1286
        %1296 = vmatprep.subr.bf16.mxu0 0
        %1297 = vmatpush1.bf16.msra.mxu0 0
        %1298 = vmatprep.subr.bf16.mxu0 0
        %1299 = vmatpush1.bf16.msra.mxu0 0
        %1300 = vmatprep.subr.bf16.mxu0 0
        %1301 = vmatpush1.bf16.msra.mxu0 0
        %1302 = vmatprep.subr.bf16.mxu0 0
        %1303 = vmatpush1.bf16.msra.mxu0 0
        %1304 = vmatprep.subr.bf16.mxu0 0
        %1305 = vmatpush1.bf16.msra.mxu0 0
        %1306 = vmatprep.subr.bf16.mxu0 0
        %1307 = vmatpush1.bf16.msra.mxu0 0
        %1308 = vmatprep.subr.bf16.mxu0 0
        %1309 = vmatpush1.bf16.msra.mxu0 0
        %1310 = vmatprep.subr.bf16.mxu0 0
        %1311 = vmatpush1.bf16.msra.mxu0 0
        %1312 = vmatprep.subr.bf16.mxu0 0
        %1313 = vmatpush1.bf16.msra.mxu0 0
        %1314 = vmatprep.subr.bf16.mxu0 0
        %1315 = vmatpush1.bf16.msra.mxu0 0
        %1316 = vmatprep.subr.bf16.mxu0 0
        %1317 = vmatpush1.bf16.msra.mxu0 0
        %1318 = vmatprep.subr.bf16.mxu0 0
        %1319 = vmatpush1.bf16.msra.mxu0 0
        %1320 = vmatprep.subr.bf16.mxu0 0
        %1321 = vmatpush1.bf16.msra.mxu0 0
        %1322 = vmatprep.subr.bf16.mxu0 0
        %1323 = vmatpush1.bf16.msra.mxu0 0
        %1324 = vmatprep.mubr.bf16.mxu0 0
        %1325 = vmatmul.mubr.bf16.gmra.mrb[0].mxu0 %v1290
        %v1326 = vpop.f32.mrb[0].mxu0
        %v1327 = vadd.f32 %v1275, %v1326
        %v1328 = vpop.f32.mrb[0].mxu0
        %v1329 = vpop.f32.mrb[0].mxu0
        %v1330 = vpop.f32.mrb[0].mxu0
        %1331 = vdwg.mxu0
        %v1332 = vmax.f32 %v1327, 0.0
        %v1333 = vpack.c.bf16 %v1332, %v1332
        %v1334 = vld [vmem:[#allocation17] sm:$0xf]
        %v1335 = vld [vmem:[#allocation17 + $0x4] sm:$0xf]
        %v1336 = vld [vmem:[#allocation17 + $0x8] sm:$0xf]
        %v1337 = vld [vmem:[#allocation17 + $0xc] sm:$0xf]
        %v1338 = vld [vmem:[#allocation17 + $0x10] sm:$0xf]
        %v1339 = vld [vmem:[#allocation17 + $0x14] sm:$0xf]
        %v1340 = vld [vmem:[#allocation17 + $0x18] sm:$0xf]
        %v1341 = vld [vmem:[#allocation17 + $0x1c] sm:$0xf]
        %v1342 = vld [vmem:[#allocation19] sm:$0x1]
        %v1344 = vlaneseq
        %v1345 = vshrl.u32 %v1344, 7
        %v1346 = vsub.s32 0, %v1345
        %v1347 = vrot.slane %v1342, %v1346
        %v1357 = vunpack.c.l.b16 %v1334
        %v1358 = vunpack.c.l.b16 %v1335
        %v1359 = vunpack.c.l.b16 %v1336
        %v1360 = vunpack.c.l.b16 %v1337
        %v1361 = vunpack.c.l.b16 %v1338
        %v1362 = vunpack.c.l.b16 %v1339
        %v1363 = vunpack.c.l.b16 %v1340
        %v1364 = vunpack.c.l.b16 %v1341
        %v1365 = vpack.c.b16 %v1358, %v1357
        %v1366 = vpack.c.b16 %v1360, %v1359
        %v1367 = vpack.c.b16 %v1362, %v1361
        %v1368 = vpack.c.b16 %v1364, %v1363
        %vm1373 = vcmask 523264
        %v1375 = vsel %vm1373, %v1333, 0
        %1377 = vmatprep.subr.bf16.mxu0 0
        %1378 = vmatpush1.bf16.msra.mxu0 %v1365
        %1379 = vmatprep.subr.bf16.mxu0 0
        %1380 = vmatpush1.bf16.msra.mxu0 %v1366
        %1381 = vmatprep.subr.bf16.mxu0 0
        %1382 = vmatpush1.bf16.msra.mxu0 %v1367
        %1383 = vmatprep.subr.bf16.mxu0 0
        %1384 = vmatpush1.bf16.msra.mxu0 %v1368
        %1385 = vmatprep.subr.bf16.mxu0 0
        %1386 = vmatpush1.bf16.msra.mxu0 0
        %1387 = vmatprep.subr.bf16.mxu0 0
        %1388 = vmatpush1.bf16.msra.mxu0 0
        %1389 = vmatprep.subr.bf16.mxu0 0
        %1390 = vmatpush1.bf16.msra.mxu0 0
        %1391 = vmatprep.subr.bf16.mxu0 0
        %1392 = vmatpush1.bf16.msra.mxu0 0
        %1393 = vmatprep.subr.bf16.mxu0 0
        %1394 = vmatpush1.bf16.msra.mxu0 0
        %1395 = vmatprep.subr.bf16.mxu0 0
        %1396 = vmatpush1.bf16.msra.mxu0 0
        %1397 = vmatprep.subr.bf16.mxu0 0
        %1398 = vmatpush1.bf16.msra.mxu0 0
        %1399 = vmatprep.subr.bf16.mxu0 0
        %1400 = vmatpush1.bf16.msra.mxu0 0
        %1401 = vmatprep.subr.bf16.mxu0 0
        %1402 = vmatpush1.bf16.msra.mxu0 0
        %1403 = vmatprep.subr.bf16.mxu0 0
        %1404 = vmatpush1.bf16.msra.mxu0 0
        %1405 = vmatprep.subr.bf16.mxu0 0
        %1406 = vmatpush1.bf16.msra.mxu0 0
        %1407 = vmatprep.subr.bf16.mxu0 0
        %1408 = vmatpush1.bf16.msra.mxu0 0
        %1409 = vmatprep.mubr.bf16.mxu0 0
        %1410 = vmatmul.mubr.bf16.gmra.mrb[0].mxu0 %v1375
        %v1411 = vpop.f32.mrb[0].mxu0
        %v1412 = vadd.f32 %v1347, %v1411
        %v1413 = vpop.f32.mrb[0].mxu0
        %v1414 = vpop.f32.mrb[0].mxu0
        %v1415 = vpop.f32.mrb[0].mxu0
        %1416 = vdwg.mxu0
        %v1417 = vadd.f32 %v1235, %v1412
        %v1418 = vld [vmem:[#allocation20] sm:$0x1]
        %v1419 = vld [vmem:[#allocation22] sm:$0x1]
        %v1420 = vsel %vm620, %v1417, 0.0
        %1421 = vadd.xlane.f32.xlu0 %v1420
        %v1422 = vpop.xlane.xlu0 %1421
        %v1423 = vmul.f32 %v1422, %v624
        %v1424 = vsub.f32 %v1417, %v1423
        %v1425 = vmul.f32 %v1424, %v1424
        %v1426 = vsel %vm620, %v1425, 0.0
        %1427 = vadd.xlane.f32.xlu0 %v1426
        %v1428 = vpop.xlane.xlu0 %1427
        %v1429 = vmul.f32 %v1428, %v624
        %v1430 = vadd.f32 %v1429, 1e-06
        %v1431 = vrsqrt.pop %v1430
        %v1432 = vmul.f32 %v1424, %v1431
        %v1434 = vlaneseq
        %v1435 = vshrl.u32 %v1434, 7
        %v1436 = vsub.s32 0, %v1435
        %v1437 = vrot.slane %v1418, %v1436
        %v1439 = vmul.f32 %v1432, %v1437
        %v1441 = vlaneseq
        %v1442 = vshrl.u32 %v1441, 7
        %v1443 = vsub.s32 0, %v1442
        %v1444 = vrot.slane %v1419, %v1443
        %v1446 = vadd.f32 %v1439, %v1444
        %1447 = vst.msk [vmem:[%s613] sm:$0xff] %vm620, %v1446
        %s1448 = sand.u32 %s322, 1
        %s1449 = scalar_lea.sflag [#allocation4], %s1448
        %s1450 = sand.u32 %s322, 1
        %s1451 = smul.addr %s1450, 8
        %s1452 = scalar_lea.vmem [#allocation23], %s1451
        // Predicated region
        $region125: #{transformer_encoder.3} parent=71 // pred_check
          %p1453 = pneg %p332
        $region126: #{transformer_encoder.3} parent=71 // pred_check_branch
          %1455 = sbr.rel (%p1453) target = $region128
        $region127: #{transformer_encoder.3} parent=71 // pred_region
          %s1457 = ssub.s32 128, 128
          %1458 = vsyncadd %s1449, %s1457
          %s1459 = smul.addr %s36, 128
          %s1460 = scalar_lea.hbm %s13, %s1459
          %s1462 = sshll.u32 %s1452, 4
          %s1463 = int_to_ptr.vmem [resolvable:$true] %s1462
          %1465 = dma.vmem_to_hbm [thread:$0]  %s1463, 128, %s1460, %s1449
        $region128: #{transformer_encoder.3} parent=71 // pred_fallthru
          _
      $region72: #{transformer_encoder.3} parent=5 // pred_fallthru
        _
      %p1466 = scmp.le.s32.totalorder 2, %s31
      // Predicated region
      $region129: #{transformer_encoder.3} parent=5 // pred_check
        %p1467 = pneg %p1466
      $region130: #{transformer_encoder.3} parent=5 // pred_check_branch
        %1469 = sbr.rel (%p1467) target = $region132
      $region131: #{transformer_encoder.3} parent=5 // pred_region
        %s1470 = ssub.s32 %s31, 2
        // Predicated region
        $region133: #{transformer_encoder.3} parent=131 // pred_check
          %p1471 = pneg %p338
        $region134: #{transformer_encoder.3} parent=131 // pred_check_branch
          %1473 = sbr.rel (%p1471) target = $region136
        $region135: #{transformer_encoder.3} parent=131 // pred_region
          %s1474 = sand.u32 %s323, 1
          %s1475 = scalar_lea.sflag [#allocation4], %s1474
          %s1476 = sand.u32 %s323, 1
          %s1477 = smul.addr %s1476, 8
          %s1478 = scalar_lea.vmem [#allocation23], %s1477
          %1479 = dma.done %s1475, 128
        $region136: #{transformer_encoder.3} parent=131 // pred_fallthru
          _
      $region132: #{transformer_encoder.3} parent=5 // pred_fallthru
        _
    $region6: #{transformer_encoder.3} parent=1 // loop_footer
      %s35 = sadd.s32 1, %s31
    $region7: #{transformer_encoder.3} parent=1 // loop_footer_branch
      %30 = sbr.rel target = $region3
    $region8: #{transformer_encoder.3} parent=1 // loop_exit
      _
    %1480 = vsyncpa [#allocation3], 1
    %s1481 = scalar_lea.sflag [#allocation3], 1
    %1482 = vsyncpa %s1481, 1
    %1483 = vsyncpa [#allocation6], 1
    %1484 = vsyncpa [#allocation9], 1
    %1485 = vsyncpa [#allocation12], 1
    %1486 = vsyncpa [#allocation15], 1
    %1487 = vsyncpa [#allocation18], 1
    %1488 = vsyncpa [#allocation21], 1
    %1489 = vsyncpa [#allocation4], 1
    %s1490 = scalar_lea.sflag [#allocation4], 1
    %1491 = vsyncpa %s1490, 1

// kernel: transformer_encoder.2
$region0: #{transformer_encoder.2}
  #allocation0 [shape = 'u32[]', space=smem, size = 0x4, offset = 0x4, fixed_abs, tag = 'smem constant byte address 0x4 - core index']
  #allocation1 [shape = 'u32[144,128]{1,0:T(1,128)}', space=vmem, size = 0x12000, scoped, tag = 'internal scratch']
  %s0 = inlined_call_operand.hbm [shape: bf16[2,8,32], index: 0, kind: input, shape index: {}, may-alias: {0,13}]
  %s1 = inlined_call_operand.hbm [shape: bf16[32,96], index: 1, kind: input, shape index: {}]
  %s2 = inlined_call_operand.hbm [shape: bf16[32,32], index: 2, kind: input, shape index: {}]
  %s3 = inlined_call_operand.hbm [shape: f32[1,32], index: 3, kind: input, shape index: {}]
  %s4 = inlined_call_operand.hbm [shape: f32[1,32], index: 4, kind: input, shape index: {}]
  %s5 = inlined_call_operand.hbm [shape: f32[1,32], index: 5, kind: input, shape index: {}]
  %s6 = inlined_call_operand.hbm [shape: f32[1,32], index: 6, kind: input, shape index: {}]
  %s7 = inlined_call_operand.hbm [shape: bf16[32,64], index: 7, kind: input, shape index: {}]
  %s8 = inlined_call_operand.hbm [shape: f32[1,64], index: 8, kind: input, shape index: {}]
  %s9 = inlined_call_operand.hbm [shape: bf16[64,32], index: 9, kind: input, shape index: {}]
  %s10 = inlined_call_operand.hbm [shape: f32[1,32], index: 10, kind: input, shape index: {}]
  %s11 = inlined_call_operand.hbm [shape: f32[1,32], index: 11, kind: input, shape index: {}]
  %s12 = inlined_call_operand.hbm [shape: f32[1,32], index: 12, kind: input, shape index: {}]
  %s13 = inlined_call_operand.hbm [shape: bf16[2,8,32], index: 13, kind: output, shape index: {}, may-alias: {0,13}]
  %s14 = sld [smem:[#allocation0]]
  $region137: #{transformer_encoder.2} parent=0
    _
  %s16 = ssub.s32 1, %s14
  %s17 = scalar_select 0, %s16, %s14
  $region1: #{transformer_encoder.2} parent=0
    #allocation2 [shape = 'u8[4096]{0}', space=vmem, size = 0x1000, scoped, tag = 'input window, operand 0']
    #allocation3 [shape = 's32[2]{0}', space=sflag, size = 0x8, scoped, tag = 'scoped memory for transformer_encoder.2']
    #allocation4 [shape = 's32[2]{0}', space=sflag, size = 0x8, scoped, tag = 'scoped memory for transformer_encoder.2']
    #allocation5 [shape = 'u8[8192]{0}', space=vmem, size = 0x2000, scoped, tag = 'input window, operand 1, single buffered']
    #allocation6 [shape = 's32[1]{0}', space=sflag, size = 0x4, scoped, tag = 'scoped memory for transformer_encoder.2']
    #allocation7 [shape = 'u8[8192]{0}', space=vmem, size = 0x2000, scoped, tag = 'input window, operand 2, single buffered']
    #allocation8 [shape = 'u8[512]{0}', space=vmem, size = 0x400, scoped, tag = 'input window, operand 3, single buffered']
    #allocation9 [shape = 's32[1]{0}', space=sflag, size = 0x4, scoped, tag = 'scoped memory for transformer_encoder.2']
    #allocation10 [shape = 'u8[512]{0}', space=vmem, size = 0x400, scoped, tag = 'input window, operand 4, single buffered']
    #allocation11 [shape = 'u8[512]{0}', space=vmem, size = 0x400, scoped, tag = 'input window, operand 5, single buffered']
    #allocation12 [shape = 's32[1]{0}', space=sflag, size = 0x4, scoped, tag = 'scoped memory for transformer_encoder.2']
    #allocation13 [shape = 'u8[512]{0}', space=vmem, size = 0x400, scoped, tag = 'input window, operand 6, single buffered']
    #allocation14 [shape = 'u8[8192]{0}', space=vmem, size = 0x2000, scoped, tag = 'input window, operand 7, single buffered']
    #allocation15 [shape = 's32[1]{0}', space=sflag, size = 0x4, scoped, tag = 'scoped memory for transformer_encoder.2']
    #allocation16 [shape = 'u8[512]{0}', space=vmem, size = 0x400, scoped, tag = 'input window, operand 8, single buffered']
    #allocation17 [shape = 'u8[16384]{0}', space=vmem, size = 0x4000, scoped, tag = 'input window, operand 9, single buffered']
    #allocation18 [shape = 's32[1]{0}', space=sflag, size = 0x4, scoped, tag = 'scoped memory for transformer_encoder.2']
    #allocation19 [shape = 'u8[512]{0}', space=vmem, size = 0x400, scoped, tag = 'input window, operand 10, single buffered']
    #allocation20 [shape = 'u8[512]{0}', space=vmem, size = 0x400, scoped, tag = 'input window, operand 11, single buffered']
    #allocation21 [shape = 's32[1]{0}', space=sflag, size = 0x4, scoped, tag = 'scoped memory for transformer_encoder.2']
    #allocation22 [shape = 'u8[512]{0}', space=vmem, size = 0x400, scoped, tag = 'input window, operand 12, single buffered']
    #allocation23 [shape = 'u8[4096]{0}', space=vmem, size = 0x1000, scoped, tag = 'output window, operand 0']
    %18 = vsyncpa [#allocation3], 0
    %s19 = scalar_lea.sflag [#allocation3], 1
    %20 = vsyncpa %s19, 0
    %21 = vsyncpa [#allocation6], 0
    %22 = vsyncpa [#allocation9], 0
    %23 = vsyncpa [#allocation12], 0
    %24 = vsyncpa [#allocation15], 0
    %25 = vsyncpa [#allocation18], 0
    %26 = vsyncpa [#allocation21], 0
    %27 = vsyncpa [#allocation4], 0
    %s28 = scalar_lea.sflag [#allocation4], 1
    %29 = vsyncpa %s28, 0
    loop: start=0, step=1, limit=4
    $region2: #{transformer_encoder.2} parent=1 // loop_pre_header
      _
    $region3: #{transformer_encoder.2} parent=1 // loop_header
      %s31 = sphi 0, %s35
      %p32 = scmp.ge.s32.totalorder %s31, 4
      %s41 = sphi 0, %s43
      %s44 = sphi 0, %s41
      %s45 = sphi 0, %s44
      %s61 = sphi 0, %s45
      %s65 = sphi 0, %s65
      %s67 = sphi 0, %s65
      %s68 = sphi 0, %s67
      %s82 = sphi 0, %s68
      %s86 = sphi 0, %s86
      %s88 = sphi 0, %s86
      %s89 = sphi 0, %s88
      %s103 = sphi 0, %s89
      %s107 = sphi 0, %s107
      %s109 = sphi 0, %s107
      %s110 = sphi 0, %s109
      %s124 = sphi 0, %s110
      %s128 = sphi 0, %s128
      %s130 = sphi 0, %s128
      %s131 = sphi 0, %s130
      %s145 = sphi 0, %s131
      %s149 = sphi 0, %s149
      %s151 = sphi 0, %s149
      %s152 = sphi 0, %s151
      %s166 = sphi 0, %s152
      %s170 = sphi 0, %s170
      %s172 = sphi 0, %s170
      %s173 = sphi 0, %s172
      %s187 = sphi 0, %s173
      %s191 = sphi 0, %s191
      %s193 = sphi 0, %s191
      %s194 = sphi 0, %s193
      %s208 = sphi 0, %s194
      %s212 = sphi 0, %s212
      %s214 = sphi 0, %s212
      %s215 = sphi 0, %s214
      %s229 = sphi 0, %s215
      %s233 = sphi 0, %s233
      %s235 = sphi 0, %s233
      %s236 = sphi 0, %s235
      %s250 = sphi 0, %s236
      %s254 = sphi 0, %s254
      %s256 = sphi 0, %s254
      %s257 = sphi 0, %s256
      %s271 = sphi 0, %s257
      %s275 = sphi 0, %s275
      %s277 = sphi 0, %s275
      %s278 = sphi 0, %s277
      %s292 = sphi 0, %s278
      %s296 = sphi 0, %s296
      %s298 = sphi 0, %s296
      %s299 = sphi 0, %s298
      %s313 = sphi 0, %s299
      %s319 = sphi 0, %s321
      %s322 = sphi 0, %s319
      %s323 = sphi 0, %s322
      %s339 = sphi 0, %s323
    $region4: #{transformer_encoder.2} parent=1 // loop_header_branch
      %34 = sbr.rel (%p32) target = $region8
    $region5: #{transformer_encoder.2} parent=1 // loop_body
      %s36 = ssub.s32 %s31, 1
      %s37 = ssub.s32 %s31, 2
      %s38 = sadd.s32 %s31, 1
      %s39 = ssub.s32 %s31, %s38
      %p40 = scmp.eq.s32.totalorder %s39, 0
      %s42 = sadd.s32 %s41, 1
      %s43 = scalar_select %p40, %s41, %s42
      %p46 = pneg %p40
      %p47 = scmp.eq.s32.totalorder %s31, 1
      %p48 = por %p46, %p47
      %p49 = scmp.ne.s32.totalorder %s41, %s44
      %p50 = scmp.eq.s32.totalorder %s31, 0
      %p51 = por %p49, %p50
      %p52 = scmp.ne.s32.totalorder %s41, %s44
      %p53 = scmp.eq.s32.totalorder %s36, 1
      %p54 = por %p52, %p53
      %p55 = scmp.ne.s32.totalorder %s44, %s45
      %p56 = scmp.eq.s32.totalorder %s36, 0
      %p57 = por %p55, %p56
      %p58 = scmp.ne.s32.totalorder %s44, %s45
      %p59 = scmp.eq.s32.totalorder %s37, 1
      %p60 = por %p58, %p59
      %p62 = scmp.ne.s32.totalorder %s45, %s61
      %p63 = scmp.eq.s32.totalorder %s37, 0
      %p64 = por %p62, %p63
      %s66 = sadd.s32 %s65, 1
      %p69 = scmp.eq.s32.totalorder %s31, 1
      %p70 = scmp.ne.s32.totalorder %s65, %s67
      %p71 = scmp.eq.s32.totalorder %s31, 0
      %p72 = por %p70, %p71
      %p73 = scmp.ne.s32.totalorder %s65, %s67
      %p74 = scmp.eq.s32.totalorder %s36, 1
      %p75 = por %p73, %p74
      %p76 = scmp.ne.s32.totalorder %s67, %s68
      %p77 = scmp.eq.s32.totalorder %s36, 0
      %p78 = por %p76, %p77
      %p79 = scmp.ne.s32.totalorder %s67, %s68
      %p80 = scmp.eq.s32.totalorder %s37, 1
      %p81 = por %p79, %p80
      %p83 = scmp.ne.s32.totalorder %s68, %s82
      %p84 = scmp.eq.s32.totalorder %s37, 0
      %p85 = por %p83, %p84
      %s87 = sadd.s32 %s86, 1
      %p90 = scmp.eq.s32.totalorder %s31, 1
      %p91 = scmp.ne.s32.totalorder %s86, %s88
      %p92 = scmp.eq.s32.totalorder %s31, 0
      %p93 = por %p91, %p92
      %p94 = scmp.ne.s32.totalorder %s86, %s88
      %p95 = scmp.eq.s32.totalorder %s36, 1
      %p96 = por %p94, %p95
      %p97 = scmp.ne.s32.totalorder %s88, %s89
      %p98 = scmp.eq.s32.totalorder %s36, 0
      %p99 = por %p97, %p98
      %p100 = scmp.ne.s32.totalorder %s88, %s89
      %p101 = scmp.eq.s32.totalorder %s37, 1
      %p102 = por %p100, %p101
      %p104 = scmp.ne.s32.totalorder %s89, %s103
      %p105 = scmp.eq.s32.totalorder %s37, 0
      %p106 = por %p104, %p105
      %s108 = sadd.s32 %s107, 1
      %p111 = scmp.eq.s32.totalorder %s31, 1
      %p112 = scmp.ne.s32.totalorder %s107, %s109
      %p113 = scmp.eq.s32.totalorder %s31, 0
      %p114 = por %p112, %p113
      %p115 = scmp.ne.s32.totalorder %s107, %s109
      %p116 = scmp.eq.s32.totalorder %s36, 1
      %p117 = por %p115, %p116
      %p118 = scmp.ne.s32.totalorder %s109, %s110
      %p119 = scmp.eq.s32.totalorder %s36, 0
      %p120 = por %p118, %p119
      %p121 = scmp.ne.s32.totalorder %s109, %s110
      %p122 = scmp.eq.s32.totalorder %s37, 1
      %p123 = por %p121, %p122
      %p125 = scmp.ne.s32.totalorder %s110, %s124
      %p126 = scmp.eq.s32.totalorder %s37, 0
      %p127 = por %p125, %p126
      %s129 = sadd.s32 %s128, 1
      %p132 = scmp.eq.s32.totalorder %s31, 1
      %p133 = scmp.ne.s32.totalorder %s128, %s130
      %p134 = scmp.eq.s32.totalorder %s31, 0
      %p135 = por %p133, %p134
      %p136 = scmp.ne.s32.totalorder %s128, %s130
      %p137 = scmp.eq.s32.totalorder %s36, 1
      %p138 = por %p136, %p137
      %p139 = scmp.ne.s32.totalorder %s130, %s131
      %p140 = scmp.eq.s32.totalorder %s36, 0
      %p141 = por %p139, %p140
      %p142 = scmp.ne.s32.totalorder %s130, %s131
      %p143 = scmp.eq.s32.totalorder %s37, 1
      %p144 = por %p142, %p143
      %p146 = scmp.ne.s32.totalorder %s131, %s145
      %p147 = scmp.eq.s32.totalorder %s37, 0
      %p148 = por %p146, %p147
      %s150 = sadd.s32 %s149, 1
      %p153 = scmp.eq.s32.totalorder %s31, 1
      %p154 = scmp.ne.s32.totalorder %s149, %s151
      %p155 = scmp.eq.s32.totalorder %s31, 0
      %p156 = por %p154, %p155
      %p157 = scmp.ne.s32.totalorder %s149, %s151
      %p158 = scmp.eq.s32.totalorder %s36, 1
      %p159 = por %p157, %p158
      %p160 = scmp.ne.s32.totalorder %s151, %s152
      %p161 = scmp.eq.s32.totalorder %s36, 0
      %p162 = por %p160, %p161
      %p163 = scmp.ne.s32.totalorder %s151, %s152
      %p164 = scmp.eq.s32.totalorder %s37, 1
      %p165 = por %p163, %p164
      %p167 = scmp.ne.s32.totalorder %s152, %s166
      %p168 = scmp.eq.s32.totalorder %s37, 0
      %p169 = por %p167, %p168
      %s171 = sadd.s32 %s170, 1
      %p174 = scmp.eq.s32.totalorder %s31, 1
      %p175 = scmp.ne.s32.totalorder %s170, %s172
      %p176 = scmp.eq.s32.totalorder %s31, 0
      %p177 = por %p175, %p176
      %p178 = scmp.ne.s32.totalorder %s170, %s172
      %p179 = scmp.eq.s32.totalorder %s36, 1
      %p180 = por %p178, %p179
      %p181 = scmp.ne.s32.totalorder %s172, %s173
      %p182 = scmp.eq.s32.totalorder %s36, 0
      %p183 = por %p181, %p182
      %p184 = scmp.ne.s32.totalorder %s172, %s173
      %p185 = scmp.eq.s32.totalorder %s37, 1
      %p186 = por %p184, %p185
      %p188 = scmp.ne.s32.totalorder %s173, %s187
      %p189 = scmp.eq.s32.totalorder %s37, 0
      %p190 = por %p188, %p189
      %s192 = sadd.s32 %s191, 1
      %p195 = scmp.eq.s32.totalorder %s31, 1
      %p196 = scmp.ne.s32.totalorder %s191, %s193
      %p197 = scmp.eq.s32.totalorder %s31, 0
      %p198 = por %p196, %p197
      %p199 = scmp.ne.s32.totalorder %s191, %s193
      %p200 = scmp.eq.s32.totalorder %s36, 1
      %p201 = por %p199, %p200
      %p202 = scmp.ne.s32.totalorder %s193, %s194
      %p203 = scmp.eq.s32.totalorder %s36, 0
      %p204 = por %p202, %p203
      %p205 = scmp.ne.s32.totalorder %s193, %s194
      %p206 = scmp.eq.s32.totalorder %s37, 1
      %p207 = por %p205, %p206
      %p209 = scmp.ne.s32.totalorder %s194, %s208
      %p210 = scmp.eq.s32.totalorder %s37, 0
      %p211 = por %p209, %p210
      %s213 = sadd.s32 %s212, 1
      %p216 = scmp.eq.s32.totalorder %s31, 1
      %p217 = scmp.ne.s32.totalorder %s212, %s214
      %p218 = scmp.eq.s32.totalorder %s31, 0
      %p219 = por %p217, %p218
      %p220 = scmp.ne.s32.totalorder %s212, %s214
      %p221 = scmp.eq.s32.totalorder %s36, 1
      %p222 = por %p220, %p221
      %p223 = scmp.ne.s32.totalorder %s214, %s215
      %p224 = scmp.eq.s32.totalorder %s36, 0
      %p225 = por %p223, %p224
      %p226 = scmp.ne.s32.totalorder %s214, %s215
      %p227 = scmp.eq.s32.totalorder %s37, 1
      %p228 = por %p226, %p227
      %p230 = scmp.ne.s32.totalorder %s215, %s229
      %p231 = scmp.eq.s32.totalorder %s37, 0
      %p232 = por %p230, %p231
      %s234 = sadd.s32 %s233, 1
      %p237 = scmp.eq.s32.totalorder %s31, 1
      %p238 = scmp.ne.s32.totalorder %s233, %s235
      %p239 = scmp.eq.s32.totalorder %s31, 0
      %p240 = por %p238, %p239
      %p241 = scmp.ne.s32.totalorder %s233, %s235
      %p242 = scmp.eq.s32.totalorder %s36, 1
      %p243 = por %p241, %p242
      %p244 = scmp.ne.s32.totalorder %s235, %s236
      %p245 = scmp.eq.s32.totalorder %s36, 0
      %p246 = por %p244, %p245
      %p247 = scmp.ne.s32.totalorder %s235, %s236
      %p248 = scmp.eq.s32.totalorder %s37, 1
      %p249 = por %p247, %p248
      %p251 = scmp.ne.s32.totalorder %s236, %s250
      %p252 = scmp.eq.s32.totalorder %s37, 0
      %p253 = por %p251, %p252
      %s255 = sadd.s32 %s254, 1
      %p258 = scmp.eq.s32.totalorder %s31, 1
      %p259 = scmp.ne.s32.totalorder %s254, %s256
      %p260 = scmp.eq.s32.totalorder %s31, 0
      %p261 = por %p259, %p260
      %p262 = scmp.ne.s32.totalorder %s254, %s256
      %p263 = scmp.eq.s32.totalorder %s36, 1
      %p264 = por %p262, %p263
      %p265 = scmp.ne.s32.totalorder %s256, %s257
      %p266 = scmp.eq.s32.totalorder %s36, 0
      %p267 = por %p265, %p266
      %p268 = scmp.ne.s32.totalorder %s256, %s257
      %p269 = scmp.eq.s32.totalorder %s37, 1
      %p270 = por %p268, %p269
      %p272 = scmp.ne.s32.totalorder %s257, %s271
      %p273 = scmp.eq.s32.totalorder %s37, 0
      %p274 = por %p272, %p273
      %s276 = sadd.s32 %s275, 1
      %p279 = scmp.eq.s32.totalorder %s31, 1
      %p280 = scmp.ne.s32.totalorder %s275, %s277
      %p281 = scmp.eq.s32.totalorder %s31, 0
      %p282 = por %p280, %p281
      %p283 = scmp.ne.s32.totalorder %s275, %s277
      %p284 = scmp.eq.s32.totalorder %s36, 1
      %p285 = por %p283, %p284
      %p286 = scmp.ne.s32.totalorder %s277, %s278
      %p287 = scmp.eq.s32.totalorder %s36, 0
      %p288 = por %p286, %p287
      %p289 = scmp.ne.s32.totalorder %s277, %s278
      %p290 = scmp.eq.s32.totalorder %s37, 1
      %p291 = por %p289, %p290
      %p293 = scmp.ne.s32.totalorder %s278, %s292
      %p294 = scmp.eq.s32.totalorder %s37, 0
      %p295 = por %p293, %p294
      %s297 = sadd.s32 %s296, 1
      %p300 = scmp.eq.s32.totalorder %s31, 1
      %p301 = scmp.ne.s32.totalorder %s296, %s298
      %p302 = scmp.eq.s32.totalorder %s31, 0
      %p303 = por %p301, %p302
      %p304 = scmp.ne.s32.totalorder %s296, %s298
      %p305 = scmp.eq.s32.totalorder %s36, 1
      %p306 = por %p304, %p305
      %p307 = scmp.ne.s32.totalorder %s298, %s299
      %p308 = scmp.eq.s32.totalorder %s36, 0
      %p309 = por %p307, %p308
      %p310 = scmp.ne.s32.totalorder %s298, %s299
      %p311 = scmp.eq.s32.totalorder %s37, 1
      %p312 = por %p310, %p311
      %p314 = scmp.ne.s32.totalorder %s299, %s313
      %p315 = scmp.eq.s32.totalorder %s37, 0
      %p316 = por %p314, %p315
      %s317 = ssub.s32 %s31, %s38
      %p318 = scmp.eq.s32.totalorder %s317, 0
      %s320 = sadd.s32 %s319, 1
      %s321 = scalar_select %p318, %s319, %s320
      %p324 = pneg %p318
      %p325 = scmp.eq.s32.totalorder %s31, 1
      %p326 = por %p324, %p325
      %p327 = scmp.ne.s32.totalorder %s319, %s322
      %p328 = scmp.eq.s32.totalorder %s31, 0
      %p329 = por %p327, %p328
      %p330 = scmp.ne.s32.totalorder %s319, %s322
      %p331 = scmp.eq.s32.totalorder %s36, 1
      %p332 = por %p330, %p331
      %p333 = scmp.ne.s32.totalorder %s322, %s323
      %p334 = scmp.eq.s32.totalorder %s36, 0
      %p335 = por %p333, %p334
      %p336 = scmp.ne.s32.totalorder %s322, %s323
      %p337 = scmp.eq.s32.totalorder %s37, 1
      %p338 = por %p336, %p337
      %p340 = scmp.ne.s32.totalorder %s323, %s339
      %p341 = scmp.eq.s32.totalorder %s37, 0
      %p342 = por %p340, %p341
      %p343 = scmp.le.s32.totalorder 1, %s31
      %p344 = scmp.lt.s32.totalorder %s31, 3
      %p345 = pnand %p343, %p344
      %p346 = pneg %p345
      // Predicated region
      $region9: #{transformer_encoder.2} parent=5 // pred_check
        _
      $region10: #{transformer_encoder.2} parent=5 // pred_check_branch
        %348 = sbr.rel (%p345) target = $region12
      $region11: #{transformer_encoder.2} parent=5 // pred_region
        %s349 = ssub.s32 %s31, 1
        // Predicated region
        $region13: #{transformer_encoder.2} parent=11 // pred_check
          %p350 = pneg %p78
        $region14: #{transformer_encoder.2} parent=11 // pred_check_branch
          %352 = sbr.rel (%p350) target = $region16
        $region15: #{transformer_encoder.2} parent=11 // pred_region
          %s354 = ssub.s32 256, 256
          %355 = vsyncadd [#allocation6], %s354
          %s356 = sshll.u32 [#allocation5], 4
          %s357 = int_to_ptr.vmem [resolvable:$true] %s356
          %362 = dma.hbm_to_vmem [thread:$0]  %s1, 256, %s357, [#allocation6], 64, 64, 4
        $region16: #{transformer_encoder.2} parent=11 // pred_fallthru
          _
        // Predicated region
        $region17: #{transformer_encoder.2} parent=11 // pred_check
          %p363 = pneg %p99
        $region18: #{transformer_encoder.2} parent=11 // pred_check_branch
          %365 = sbr.rel (%p363) target = $region20
        $region19: #{transformer_encoder.2} parent=11 // pred_region
          %s367 = ssub.s32 256, 256
          %368 = vsyncadd [#allocation6], %s367
          %s369 = sshll.u32 [#allocation7], 4
          %s370 = int_to_ptr.vmem [resolvable:$true] %s369
          %375 = dma.hbm_to_vmem [thread:$0]  %s2, 256, %s370, [#allocation6], 64, 64, 4
        $region20: #{transformer_encoder.2} parent=11 // pred_fallthru
          _
        // Predicated region
        $region21: #{transformer_encoder.2} parent=11 // pred_check
          %p376 = pneg %p120
        $region22: #{transformer_encoder.2} parent=11 // pred_check_branch
          %378 = sbr.rel (%p376) target = $region24
        $region23: #{transformer_encoder.2} parent=11 // pred_region
          %s380 = ssub.s32 16, 16
          %381 = vsyncadd [#allocation9], %s380
          %s383 = sshll.u32 [#allocation8], 4
          %s384 = int_to_ptr.vmem [resolvable:$true] %s383
          %386 = dma.hbm_to_vmem [thread:$0]  %s3, 16, %s384, [#allocation9]
        $region24: #{transformer_encoder.2} parent=11 // pred_fallthru
          _
        // Predicated region
        $region25: #{transformer_encoder.2} parent=11 // pred_check
          %p387 = pneg %p141
        $region26: #{transformer_encoder.2} parent=11 // pred_check_branch
          %389 = sbr.rel (%p387) target = $region28
        $region27: #{transformer_encoder.2} parent=11 // pred_region
          %s391 = ssub.s32 16, 16
          %392 = vsyncadd [#allocation9], %s391
          %s394 = sshll.u32 [#allocation10], 4
          %s395 = int_to_ptr.vmem [resolvable:$true] %s394
          %397 = dma.hbm_to_vmem [thread:$0]  %s4, 16, %s395, [#allocation9]
        $region28: #{transformer_encoder.2} parent=11 // pred_fallthru
          _
        // Predicated region
        $region29: #{transformer_encoder.2} parent=11 // pred_check
          %p398 = pneg %p162
        $region30: #{transformer_encoder.2} parent=11 // pred_check_branch
          %400 = sbr.rel (%p398) target = $region32
        $region31: #{transformer_encoder.2} parent=11 // pred_region
          %s402 = ssub.s32 16, 16
          %403 = vsyncadd [#allocation12], %s402
          %s405 = sshll.u32 [#allocation11], 4
          %s406 = int_to_ptr.vmem [resolvable:$true] %s405
          %408 = dma.hbm_to_vmem [thread:$0]  %s5, 16, %s406, [#allocation12]
        $region32: #{transformer_encoder.2} parent=11 // pred_fallthru
          _
        // Predicated region
        $region33: #{transformer_encoder.2} parent=11 // pred_check
          %p409 = pneg %p183
        $region34: #{transformer_encoder.2} parent=11 // pred_check_branch
          %411 = sbr.rel (%p409) target = $region36
        $region35: #{transformer_encoder.2} parent=11 // pred_region
          %s413 = ssub.s32 16, 16
          %414 = vsyncadd [#allocation12], %s413
          %s416 = sshll.u32 [#allocation13], 4
          %s417 = int_to_ptr.vmem [resolvable:$true] %s416
          %419 = dma.hbm_to_vmem [thread:$0]  %s6, 16, %s417, [#allocation12]
        $region36: #{transformer_encoder.2} parent=11 // pred_fallthru
          _
        // Predicated region
        $region37: #{transformer_encoder.2} parent=11 // pred_check
          %p420 = pneg %p204
        $region38: #{transformer_encoder.2} parent=11 // pred_check_branch
          %422 = sbr.rel (%p420) target = $region40
        $region39: #{transformer_encoder.2} parent=11 // pred_region
          %s424 = ssub.s32 256, 256
          %425 = vsyncadd [#allocation15], %s424
          %s426 = sshll.u32 [#allocation14], 4
          %s427 = int_to_ptr.vmem [resolvable:$true] %s426
          %432 = dma.hbm_to_vmem [thread:$0]  %s7, 256, %s427, [#allocation15], 64, 64, 4
        $region40: #{transformer_encoder.2} parent=11 // pred_fallthru
          _
        // Predicated region
        $region41: #{transformer_encoder.2} parent=11 // pred_check
          %p433 = pneg %p225
        $region42: #{transformer_encoder.2} parent=11 // pred_check_branch
          %435 = sbr.rel (%p433) target = $region44
        $region43: #{transformer_encoder.2} parent=11 // pred_region
          %s437 = ssub.s32 16, 16
          %438 = vsyncadd [#allocation15], %s437
          %s440 = sshll.u32 [#allocation16], 4
          %s441 = int_to_ptr.vmem [resolvable:$true] %s440
          %443 = dma.hbm_to_vmem [thread:$0]  %s8, 16, %s441, [#allocation15]
        $region44: #{transformer_encoder.2} parent=11 // pred_fallthru
          _
        // Predicated region
        $region45: #{transformer_encoder.2} parent=11 // pred_check
          %p444 = pneg %p246
        $region46: #{transformer_encoder.2} parent=11 // pred_check_branch
          %446 = sbr.rel (%p444) target = $region48
        $region47: #{transformer_encoder.2} parent=11 // pred_region
          %s448 = ssub.s32 512, 512
          %449 = vsyncadd [#allocation18], %s448
          %s450 = sshll.u32 [#allocation17], 4
          %s451 = int_to_ptr.vmem [resolvable:$true] %s450
          %456 = dma.hbm_to_vmem [thread:$0]  %s9, 512, %s451, [#allocation18], 64, 64, 4
        $region48: #{transformer_encoder.2} parent=11 // pred_fallthru
          _
        // Predicated region
        $region49: #{transformer_encoder.2} parent=11 // pred_check
          %p457 = pneg %p267
        $region50: #{transformer_encoder.2} parent=11 // pred_check_branch
          %459 = sbr.rel (%p457) target = $region52
        $region51: #{transformer_encoder.2} parent=11 // pred_region
          %s461 = ssub.s32 16, 16
          %462 = vsyncadd [#allocation18], %s461
          %s464 = sshll.u32 [#allocation19], 4
          %s465 = int_to_ptr.vmem [resolvable:$true] %s464
          %467 = dma.hbm_to_vmem [thread:$0]  %s10, 16, %s465, [#allocation18]
        $region52: #{transformer_encoder.2} parent=11 // pred_fallthru
          _
        // Predicated region
        $region53: #{transformer_encoder.2} parent=11 // pred_check
          %p468 = pneg %p288
        $region54: #{transformer_encoder.2} parent=11 // pred_check_branch
          %470 = sbr.rel (%p468) target = $region56
        $region55: #{transformer_encoder.2} parent=11 // pred_region
          %s472 = ssub.s32 16, 16
          %473 = vsyncadd [#allocation21], %s472
          %s475 = sshll.u32 [#allocation20], 4
          %s476 = int_to_ptr.vmem [resolvable:$true] %s475
          %478 = dma.hbm_to_vmem [thread:$0]  %s11, 16, %s476, [#allocation21]
        $region56: #{transformer_encoder.2} parent=11 // pred_fallthru
          _
        // Predicated region
        $region57: #{transformer_encoder.2} parent=11 // pred_check
          %p479 = pneg %p309
        $region58: #{transformer_encoder.2} parent=11 // pred_check_branch
          %481 = sbr.rel (%p479) target = $region60
        $region59: #{transformer_encoder.2} parent=11 // pred_region
          %s483 = ssub.s32 16, 16
          %484 = vsyncadd [#allocation21], %s483
          %s486 = sshll.u32 [#allocation22], 4
          %s487 = int_to_ptr.vmem [resolvable:$true] %s486
          %489 = dma.hbm_to_vmem [thread:$0]  %s12, 16, %s487, [#allocation21]
        $region60: #{transformer_encoder.2} parent=11 // pred_fallthru
          _
      $region12: #{transformer_encoder.2} parent=5 // pred_fallthru
        _
      %p490 = scmp.lt.s32.totalorder %s31, 2
      // Predicated region
      $region61: #{transformer_encoder.2} parent=5 // pred_check
        %p491 = pneg %p490
      $region62: #{transformer_encoder.2} parent=5 // pred_check_branch
        %493 = sbr.rel (%p491) target = $region64
      $region63: #{transformer_encoder.2} parent=5 // pred_region
        // Predicated region
        $region65: #{transformer_encoder.2} parent=63 // pred_check
          %p494 = pneg %p51
        $region66: #{transformer_encoder.2} parent=63 // pred_check_branch
          %496 = sbr.rel (%p494) target = $region68
        $region67: #{transformer_encoder.2} parent=63 // pred_region
          %s497 = sand.u32 %s41, 1
          %s498 = scalar_lea.sflag [#allocation3], %s497
          %s499 = sand.u32 %s41, 1
          %s500 = smul.addr %s499, 4
          %s501 = scalar_lea.vmem [#allocation2], %s500
          %s503 = ssub.s32 64, 64
          %504 = vsyncadd %s498, %s503
          %s505 = smul.addr %s31, 64
          %s506 = scalar_lea.hbm %s0, %s505
          %s508 = sshll.u32 %s501, 4
          %s509 = int_to_ptr.vmem [resolvable:$true] %s508
          %511 = dma.hbm_to_vmem [thread:$0]  %s506, 64, %s509, %s498
        $region68: #{transformer_encoder.2} parent=63 // pred_fallthru
          _
      $region64: #{transformer_encoder.2} parent=5 // pred_fallthru
        _
      %p512 = scmp.le.s32.totalorder 1, %s31
      %p513 = scmp.lt.s32.totalorder %s31, 3
      %p514 = pnand %p512, %p513
      %p515 = pneg %p514
      // Predicated region
      $region69: #{transformer_encoder.2} parent=5 // pred_check
        _
      $region70: #{transformer_encoder.2} parent=5 // pred_check_branch
        %517 = sbr.rel (%p514) target = $region72
      $region71: #{transformer_encoder.2} parent=5 // pred_region
        %s518 = ssub.s32 %s31, 1
        %s519 = sand.u32 %s44, 1
        %s520 = scalar_lea.sflag [#allocation3], %s519
        %s521 = sand.u32 %s44, 1
        %s522 = smul.addr %s521, 4
        %s523 = scalar_lea.vmem [#allocation2], %s522
        // Predicated region
        $region73: #{transformer_encoder.2} parent=71 // pred_check
          %p524 = pneg %p57
        $region74: #{transformer_encoder.2} parent=71 // pred_check_branch
          %526 = sbr.rel (%p524) target = $region76
        $region75: #{transformer_encoder.2} parent=71 // pred_region
          %527 = dma.done %s520, 64
        $region76: #{transformer_encoder.2} parent=71 // pred_fallthru
          _
        // Predicated region
        $region77: #{transformer_encoder.2} parent=71 // pred_check
          %p528 = pneg %p78
        $region78: #{transformer_encoder.2} parent=71 // pred_check_branch
          %530 = sbr.rel (%p528) target = $region80
        $region79: #{transformer_encoder.2} parent=71 // pred_region
          %531 = dma.done [#allocation6], 256
        $region80: #{transformer_encoder.2} parent=71 // pred_fallthru
          _
        // Predicated region
        $region81: #{transformer_encoder.2} parent=71 // pred_check
          %p532 = pneg %p99
        $region82: #{transformer_encoder.2} parent=71 // pred_check_branch
          %534 = sbr.rel (%p532) target = $region84
        $region83: #{transformer_encoder.2} parent=71 // pred_region
          %535 = dma.done [#allocation6], 256
        $region84: #{transformer_encoder.2} parent=71 // pred_fallthru
          _
        // Predicated region
        $region85: #{transformer_encoder.2} parent=71 // pred_check
          %p536 = pneg %p120
        $region86: #{transformer_encoder.2} parent=71 // pred_check_branch
          %538 = sbr.rel (%p536) target = $region88
        $region87: #{transformer_encoder.2} parent=71 // pred_region
          %539 = dma.done [#allocation9], 16
        $region88: #{transformer_encoder.2} parent=71 // pred_fallthru
          _
        // Predicated region
        $region89: #{transformer_encoder.2} parent=71 // pred_check
          %p540 = pneg %p141
        $region90: #{transformer_encoder.2} parent=71 // pred_check_branch
          %542 = sbr.rel (%p540) target = $region92
        $region91: #{transformer_encoder.2} parent=71 // pred_region
          %543 = dma.done [#allocation9], 16
        $region92: #{transformer_encoder.2} parent=71 // pred_fallthru
          _
        // Predicated region
        $region93: #{transformer_encoder.2} parent=71 // pred_check
          %p544 = pneg %p162
        $region94: #{transformer_encoder.2} parent=71 // pred_check_branch
          %546 = sbr.rel (%p544) target = $region96
        $region95: #{transformer_encoder.2} parent=71 // pred_region
          %547 = dma.done [#allocation12], 16
        $region96: #{transformer_encoder.2} parent=71 // pred_fallthru
          _
        // Predicated region
        $region97: #{transformer_encoder.2} parent=71 // pred_check
          %p548 = pneg %p183
        $region98: #{transformer_encoder.2} parent=71 // pred_check_branch
          %550 = sbr.rel (%p548) target = $region100
        $region99: #{transformer_encoder.2} parent=71 // pred_region
          %551 = dma.done [#allocation12], 16
        $region100: #{transformer_encoder.2} parent=71 // pred_fallthru
          _
        // Predicated region
        $region101: #{transformer_encoder.2} parent=71 // pred_check
          %p552 = pneg %p204
        $region102: #{transformer_encoder.2} parent=71 // pred_check_branch
          %554 = sbr.rel (%p552) target = $region104
        $region103: #{transformer_encoder.2} parent=71 // pred_region
          %555 = dma.done [#allocation15], 256
        $region104: #{transformer_encoder.2} parent=71 // pred_fallthru
          _
        // Predicated region
        $region105: #{transformer_encoder.2} parent=71 // pred_check
          %p556 = pneg %p225
        $region106: #{transformer_encoder.2} parent=71 // pred_check_branch
          %558 = sbr.rel (%p556) target = $region108
        $region107: #{transformer_encoder.2} parent=71 // pred_region
          %559 = dma.done [#allocation15], 16
        $region108: #{transformer_encoder.2} parent=71 // pred_fallthru
          _
        // Predicated region
        $region109: #{transformer_encoder.2} parent=71 // pred_check
          %p560 = pneg %p246
        $region110: #{transformer_encoder.2} parent=71 // pred_check_branch
          %562 = sbr.rel (%p560) target = $region112
        $region111: #{transformer_encoder.2} parent=71 // pred_region
          %563 = dma.done [#allocation18], 512
        $region112: #{transformer_encoder.2} parent=71 // pred_fallthru
          _
        // Predicated region
        $region113: #{transformer_encoder.2} parent=71 // pred_check
          %p564 = pneg %p267
        $region114: #{transformer_encoder.2} parent=71 // pred_check_branch
          %566 = sbr.rel (%p564) target = $region116
        $region115: #{transformer_encoder.2} parent=71 // pred_region
          %567 = dma.done [#allocation18], 16
        $region116: #{transformer_encoder.2} parent=71 // pred_fallthru
          _
        // Predicated region
        $region117: #{transformer_encoder.2} parent=71 // pred_check
          %p568 = pneg %p288
        $region118: #{transformer_encoder.2} parent=71 // pred_check_branch
          %570 = sbr.rel (%p568) target = $region120
        $region119: #{transformer_encoder.2} parent=71 // pred_region
          %571 = dma.done [#allocation21], 16
        $region120: #{transformer_encoder.2} parent=71 // pred_fallthru
          _
        // Predicated region
        $region121: #{transformer_encoder.2} parent=71 // pred_check
          %p572 = pneg %p309
        $region122: #{transformer_encoder.2} parent=71 // pred_check_branch
          %574 = sbr.rel (%p572) target = $region124
        $region123: #{transformer_encoder.2} parent=71 // pred_region
          %575 = dma.done [#allocation21], 16
        $region124: #{transformer_encoder.2} parent=71 // pred_fallthru
          _
        %s576 = sand.u32 %s44, 1
        %s577 = scalar_lea.sflag [#allocation3], %s576
        %s578 = sand.u32 %s44, 1
        %s579 = smul.addr %s578, 4
        %s580 = scalar_lea.vmem [#allocation2], %s579
        %p581 = pneg %p57
        %p582 = pneg %p54
        %p583 = pneg %p78
        %p584 = pneg %p75
        %p585 = pneg %p99
        %p586 = pneg %p96
        %p587 = pneg %p120
        %p588 = pneg %p117
        %p589 = pneg %p141
        %p590 = pneg %p138
        %p591 = pneg %p162
        %p592 = pneg %p159
        %p593 = pneg %p183
        %p594 = pneg %p180
        %p595 = pneg %p204
        %p596 = pneg %p201
        %p597 = pneg %p225
        %p598 = pneg %p222
        %p599 = pneg %p246
        %p600 = pneg %p243
        %p601 = pneg %p267
        %p602 = pneg %p264
        %p603 = pneg %p288
        %p604 = pneg %p285
        %p605 = pneg %p309
        %p606 = pneg %p306
        %p607 = pneg %p335
        %p608 = pneg %p332
        %s609 = sand.u32 %s322, 1
        %s610 = scalar_lea.sflag [#allocation4], %s609
        %s611 = sand.u32 %s322, 1
        %s612 = smul.addr %s611, 4
        %s613 = scalar_lea.vmem [#allocation23], %s612
        %v616 = vld [vmem:[%s523] sm:$0xf]
        %v617 = vunpack.c.l.bf16 %v616
        %v618 = vld [vmem:[#allocation8] sm:$0x1]
        %v619 = vld [vmem:[#allocation10] sm:$0x1]
        %vm620 = vcmask 261120
        %v621 = vsel %vm620, %v617, 0.0
        %622 = vadd.xlane.f32.xlu0 %v621
        %v623 = vpop.xlane.xlu0 %622
        %v624 = vrcp.pop 32.0
        %v625 = vmul.f32 %v623, %v624
        %v626 = vsub.f32 %v617, %v625
        %v627 = vmul.f32 %v626, %v626
        %v628 = vsel %vm620, %v627, 0.0
        %629 = vadd.xlane.f32.xlu0 %v628
        %v630 = vpop.xlane.xlu0 %629
        %v631 = vmul.f32 %v630, %v624
        %v632 = vadd.f32 %v631, 1e-06
        %v633 = vrsqrt.pop %v632
        %v634 = vmul.f32 %v626, %v633
        %v636 = vlaneseq
        %v637 = vshrl.u32 %v636, 7
        %v638 = vsub.s32 0, %v637
        %v639 = vrot.slane %v618, %v638
        %v641 = vmul.f32 %v634, %v639
        %v643 = vlaneseq
        %v644 = vshrl.u32 %v643, 7
        %v645 = vsub.s32 0, %v644
        %v646 = vrot.slane %v619, %v645
        %v648 = vadd.f32 %v641, %v646
        %v649 = vpack.c.bf16 %v648, %v648
        %v650 = vld [vmem:[#allocation5] sm:$0xf]
        %v651 = vld [vmem:[#allocation5 + $0x4] sm:$0xf]
        %v652 = vld [vmem:[#allocation5 + $0x8] sm:$0xf]
        %v653 = vld [vmem:[#allocation5 + $0xc] sm:$0xf]
        %v658 = vunpack.c.l.b16 %v650
        %v659 = vunpack.c.l.b16 %v651
        %v660 = vunpack.c.l.b16 %v652
        %v661 = vunpack.c.l.b16 %v653
        %v662 = vpack.c.b16 %v659, %v658
        %v663 = vpack.c.b16 %v661, %v660
        %v667 = vsel %vm620, %v649, 0
        %669 = vmatprep.subr.bf16.mxu0 0
        %670 = vmatpush1.bf16.msra.mxu0 %v662
        %671 = vmatprep.subr.bf16.mxu0 0
        %672 = vmatpush1.bf16.msra.mxu0 %v663
        %673 = vmatprep.subr.bf16.mxu0 0
        %674 = vmatpush1.bf16.msra.mxu0 0
        %675 = vmatprep.subr.bf16.mxu0 0
        %676 = vmatpush1.bf16.msra.mxu0 0
        %677 = vmatprep.subr.bf16.mxu0 0
        %678 = vmatpush1.bf16.msra.mxu0 0
        %679 = vmatprep.subr.bf16.mxu0 0
        %680 = vmatpush1.bf16.msra.mxu0 0
        %681 = vmatprep.subr.bf16.mxu0 0
        %682 = vmatpush1.bf16.msra.mxu0 0
        %683 = vmatprep.subr.bf16.mxu0 0
        %684 = vmatpush1.bf16.msra.mxu0 0
        %685 = vmatprep.subr.bf16.mxu0 0
        %686 = vmatpush1.bf16.msra.mxu0 0
        %687 = vmatprep.subr.bf16.mxu0 0
        %688 = vmatpush1.bf16.msra.mxu0 0
        %689 = vmatprep.subr.bf16.mxu0 0
        %690 = vmatpush1.bf16.msra.mxu0 0
        %691 = vmatprep.subr.bf16.mxu0 0
        %692 = vmatpush1.bf16.msra.mxu0 0
        %693 = vmatprep.subr.bf16.mxu0 0
        %694 = vmatpush1.bf16.msra.mxu0 0
        %695 = vmatprep.subr.bf16.mxu0 0
        %696 = vmatpush1.bf16.msra.mxu0 0
        %697 = vmatprep.subr.bf16.mxu0 0
        %698 = vmatpush1.bf16.msra.mxu0 0
        %699 = vmatprep.subr.bf16.mxu0 0
        %700 = vmatpush1.bf16.msra.mxu0 0
        %701 = vmatprep.mubr.bf16.mxu0 0
        %702 = vmatmul.mubr.bf16.gmra.mrb[0].mxu0 %v667
        %v703 = vpop.f32.mrb[0].mxu0
        %v704 = vadd.f32 0.0, %v703
        %v705 = vpop.f32.mrb[0].mxu0
        %v706 = vpop.f32.mrb[0].mxu0
        %v707 = vpop.f32.mrb[0].mxu0
        %708 = vdwg.mxu0
        %v709 = vpack.c.bf16 %v704, %v704
        %711 = vrot.lane.b32.xlu0 %v709, 120
        %v712 = vpop.permute.xlu0 %711
        %714 = vrot.lane.b32.xlu0 %v709, 112
        %v715 = vpop.permute.xlu0 %714
        %717 = vrot.lane.b32.xlu0 %v709, 104
        %v718 = vpop.permute.xlu0 %717
        %v720 = vmul.bf16 %v709, 1052065461
        %v721 = vmul.bf16 %v712, 1052065461
        %v722 = vmul.bf16 %v715, 1052065461
        %v723 = vmul.bf16 %v718, 1052065461
        %724 = vrot.lane.b32.xlu0 %v709, 96
        %v725 = vpop.permute.xlu0 %724
        %vm726 = vcmask 64512
        %v728 = vsel %vm726, %v720, 0
        %v731 = vsel %vm726, %v725, 0
        %733 = vmatprep.subr.bf16.mxu0 0
        %734 = vmatpush1.bf16.xpose.msra.mxu0 %v731
        %735 = vmatprep.subr.bf16.mxu0 0
        %736 = vmatpush1.bf16.xpose.msra.mxu0 0
        %737 = vmatprep.subr.bf16.mxu0 0
        %738 = vmatpush1.bf16.xpose.msra.mxu0 0
        %739 = vmatprep.subr.bf16.mxu0 0
        %740 = vmatpush1.bf16.xpose.msra.mxu0 0
        %741 = vmatprep.subr.bf16.mxu0 0
        %742 = vmatpush1.bf16.xpose.msra.mxu0 0
        %743 = vmatprep.subr.bf16.mxu0 0
        %744 = vmatpush1.bf16.xpose.msra.mxu0 0
        %745 = vmatprep.subr.bf16.mxu0 0
        %746 = vmatpush1.bf16.xpose.msra.mxu0 0
        %747 = vmatprep.subr.bf16.mxu0 0
        %748 = vmatpush1.bf16.xpose.msra.mxu0 0
        %749 = vmatprep.subr.bf16.mxu0 0
        %750 = vmatpush1.bf16.xpose.msra.mxu0 0
        %751 = vmatprep.subr.bf16.mxu0 0
        %752 = vmatpush1.bf16.xpose.msra.mxu0 0
        %753 = vmatprep.subr.bf16.mxu0 0
        %754 = vmatpush1.bf16.xpose.msra.mxu0 0
        %755 = vmatprep.subr.bf16.mxu0 0
        %756 = vmatpush1.bf16.xpose.msra.mxu0 0
        %757 = vmatprep.subr.bf16.mxu0 0
        %758 = vmatpush1.bf16.xpose.msra.mxu0 0
        %759 = vmatprep.subr.bf16.mxu0 0
        %760 = vmatpush1.bf16.xpose.msra.mxu0 0
        %761 = vmatprep.subr.bf16.mxu0 0
        %762 = vmatpush1.bf16.xpose.msra.mxu0 0
        %763 = vmatprep.subr.bf16.mxu0 0
        %764 = vmatpush1.bf16.xpose.msra.mxu0 0
        %765 = vmatprep.mubr.bf16.mxu0 0
        %766 = vmatmul.mubr.bf16.gmra.mrb[0].mxu0 %v728
        %v767 = vpop.f32.mrb[0].mxu0
        %v768 = vadd.f32 0.0, %v767
        %v769 = vpop.f32.mrb[0].mxu0
        %v770 = vpop.f32.mrb[0].mxu0
        %v771 = vpop.f32.mrb[0].mxu0
        %772 = vdwg.mxu0
        %773 = vrot.lane.b32.xlu0 %v712, 96
        %v774 = vpop.permute.xlu0 %773
        %v776 = vsel %vm726, %v721, 0
        %v779 = vsel %vm726, %v774, 0
        %781 = vmatprep.subr.bf16.mxu0 0
        %782 = vmatpush1.bf16.xpose.msra.mxu0 %v779
        %783 = vmatprep.subr.bf16.mxu0 0
        %784 = vmatpush1.bf16.xpose.msra.mxu0 0
        %785 = vmatprep.subr.bf16.mxu0 0
        %786 = vmatpush1.bf16.xpose.msra.mxu0 0
        %787 = vmatprep.subr.bf16.mxu0 0
        %788 = vmatpush1.bf16.xpose.msra.mxu0 0
        %789 = vmatprep.subr.bf16.mxu0 0
        %790 = vmatpush1.bf16.xpose.msra.mxu0 0
        %791 = vmatprep.subr.bf16.mxu0 0
        %792 = vmatpush1.bf16.xpose.msra.mxu0 0
        %793 = vmatprep.subr.bf16.mxu0 0
        %794 = vmatpush1.bf16.xpose.msra.mxu0 0
        %795 = vmatprep.subr.bf16.mxu0 0
        %796 = vmatpush1.bf16.xpose.msra.mxu0 0
        %797 = vmatprep.subr.bf16.mxu0 0
        %798 = vmatpush1.bf16.xpose.msra.mxu0 0
        %799 = vmatprep.subr.bf16.mxu0 0
        %800 = vmatpush1.bf16.xpose.msra.mxu0 0
        %801 = vmatprep.subr.bf16.mxu0 0
        %802 = vmatpush1.bf16.xpose.msra.mxu0 0
        %803 = vmatprep.subr.bf16.mxu0 0
        %804 = vmatpush1.bf16.xpose.msra.mxu0 0
        %805 = vmatprep.subr.bf16.mxu0 0
        %806 = vmatpush1.bf16.xpose.msra.mxu0 0
        %807 = vmatprep.subr.bf16.mxu0 0
        %808 = vmatpush1.bf16.xpose.msra.mxu0 0
        %809 = vmatprep.subr.bf16.mxu0 0
        %810 = vmatpush1.bf16.xpose.msra.mxu0 0
        %811 = vmatprep.subr.bf16.mxu0 0
        %812 = vmatpush1.bf16.xpose.msra.mxu0 0
        %813 = vmatprep.mubr.bf16.mxu0 0
        %814 = vmatmul.mubr.bf16.gmra.mrb[0].mxu0 %v776
        %v815 = vpop.f32.mrb[0].mxu0
        %v816 = vadd.f32 0.0, %v815
        %v817 = vpop.f32.mrb[0].mxu0
        %v818 = vpop.f32.mrb[0].mxu0
        %v819 = vpop.f32.mrb[0].mxu0
        %820 = vdwg.mxu0
        %821 = vrot.lane.b32.xlu0 %v715, 96
        %v822 = vpop.permute.xlu0 %821
        %v824 = vsel %vm726, %v722, 0
        %v827 = vsel %vm726, %v822, 0
        %829 = vmatprep.subr.bf16.mxu0 0
        %830 = vmatpush1.bf16.xpose.msra.mxu0 %v827
        %831 = vmatprep.subr.bf16.mxu0 0
        %832 = vmatpush1.bf16.xpose.msra.mxu0 0
        %833 = vmatprep.subr.bf16.mxu0 0
        %834 = vmatpush1.bf16.xpose.msra.mxu0 0
        %835 = vmatprep.subr.bf16.mxu0 0
        %836 = vmatpush1.bf16.xpose.msra.mxu0 0
        %837 = vmatprep.subr.bf16.mxu0 0
        %838 = vmatpush1.bf16.xpose.msra.mxu0 0
        %839 = vmatprep.subr.bf16.mxu0 0
        %840 = vmatpush1.bf16.xpose.msra.mxu0 0
        %841 = vmatprep.subr.bf16.mxu0 0
        %842 = vmatpush1.bf16.xpose.msra.mxu0 0
        %843 = vmatprep.subr.bf16.mxu0 0
        %844 = vmatpush1.bf16.xpose.msra.mxu0 0
        %845 = vmatprep.subr.bf16.mxu0 0
        %846 = vmatpush1.bf16.xpose.msra.mxu0 0
        %847 = vmatprep.subr.bf16.mxu0 0
        %848 = vmatpush1.bf16.xpose.msra.mxu0 0
        %849 = vmatprep.subr.bf16.mxu0 0
        %850 = vmatpush1.bf16.xpose.msra.mxu0 0
        %851 = vmatprep.subr.bf16.mxu0 0
        %852 = vmatpush1.bf16.xpose.msra.mxu0 0
        %853 = vmatprep.subr.bf16.mxu0 0
        %854 = vmatpush1.bf16.xpose.msra.mxu0 0
        %855 = vmatprep.subr.bf16.mxu0 0
        %856 = vmatpush1.bf16.xpose.msra.mxu0 0
        %857 = vmatprep.subr.bf16.mxu0 0
        %858 = vmatpush1.bf16.xpose.msra.mxu0 0
        %859 = vmatprep.subr.bf16.mxu0 0
        %860 = vmatpush1.bf16.xpose.msra.mxu0 0
        %861 = vmatprep.mubr.bf16.mxu0 0
        %862 = vmatmul.mubr.bf16.gmra.mrb[0].mxu0 %v824
        %v863 = vpop.f32.mrb[0].mxu0
        %v864 = vadd.f32 0.0, %v863
        %v865 = vpop.f32.mrb[0].mxu0
        %v866 = vpop.f32.mrb[0].mxu0
        %v867 = vpop.f32.mrb[0].mxu0
        %868 = vdwg.mxu0
        %869 = vrot.lane.b32.xlu0 %v718, 96
        %v870 = vpop.permute.xlu0 %869
        %v872 = vsel %vm726, %v723, 0
        %v875 = vsel %vm726, %v870, 0
        %877 = vmatprep.subr.bf16.mxu0 0
        %878 = vmatpush1.bf16.xpose.msra.mxu0 %v875
        %879 = vmatprep.subr.bf16.mxu0 0
        %880 = vmatpush1.bf16.xpose.msra.mxu0 0
        %881 = vmatprep.subr.bf16.mxu0 0
        %882 = vmatpush1.bf16.xpose.msra.mxu0 0
        %883 = vmatprep.subr.bf16.mxu0 0
        %884 = vmatpush1.bf16.xpose.msra.mxu0 0
        %885 = vmatprep.subr.bf16.mxu0 0
        %886 = vmatpush1.bf16.xpose.msra.mxu0 0
        %887 = vmatprep.subr.bf16.mxu0 0
        %888 = vmatpush1.bf16.xpose.msra.mxu0 0
        %889 = vmatprep.subr.bf16.mxu0 0
        %890 = vmatpush1.bf16.xpose.msra.mxu0 0
        %891 = vmatprep.subr.bf16.mxu0 0
        %892 = vmatpush1.bf16.xpose.msra.mxu0 0
        %893 = vmatprep.subr.bf16.mxu0 0
        %894 = vmatpush1.bf16.xpose.msra.mxu0 0
        %895 = vmatprep.subr.bf16.mxu0 0
        %896 = vmatpush1.bf16.xpose.msra.mxu0 0
        %897 = vmatprep.subr.bf16.mxu0 0
        %898 = vmatpush1.bf16.xpose.msra.mxu0 0
        %899 = vmatprep.subr.bf16.mxu0 0
        %900 = vmatpush1.bf16.xpose.msra.mxu0 0
        %901 = vmatprep.subr.bf16.mxu0 0
        %902 = vmatpush1.bf16.xpose.msra.mxu0 0
        %903 = vmatprep.subr.bf16.mxu0 0
        %904 = vmatpush1.bf16.xpose.msra.mxu0 0
        %905 = vmatprep.subr.bf16.mxu0 0
        %906 = vmatpush1.bf16.xpose.msra.mxu0 0
        %907 = vmatprep.subr.bf16.mxu0 0
        %908 = vmatpush1.bf16.xpose.msra.mxu0 0
        %909 = vmatprep.mubr.bf16.mxu0 0
        %910 = vmatmul.mubr.bf16.gmra.mrb[0].mxu0 %v872
        %v911 = vpop.f32.mrb[0].mxu0
        %v912 = vadd.f32 0.0, %v911
        %v913 = vpop.f32.mrb[0].mxu0
        %v914 = vpop.f32.mrb[0].mxu0
        %v915 = vpop.f32.mrb[0].mxu0
        %916 = vdwg.mxu0
        %v917 = vsel %vm726, %v768, -inf
        %918 = vmax.xlane.f32.xlu0 %v917
        %v919 = vpop.xlane.xlu0 %918
        %v920 = vsel %vm726, %v816, -inf
        %921 = vmax.xlane.f32.xlu0 %v920
        %v922 = vpop.xlane.xlu0 %921
        %v923 = vsel %vm726, %v864, -inf
        %924 = vmax.xlane.f32.xlu0 %v923
        %v925 = vpop.xlane.xlu0 %924
        %v926 = vsel %vm726, %v912, -inf
        %927 = vmax.xlane.f32.xlu0 %v926
        %v928 = vpop.xlane.xlu0 %927
        %v929 = vsub.f32 %v768, %v919
        %v930 = vsub.f32 %v816, %v922
        %v931 = vsub.f32 %v864, %v925
        %v932 = vsub.f32 %v912, %v928
        %v933 = vmul.f32 %v929, 1.442695
        %v934 = vpow.pop %v933
        %v935 = vmul.f32 %v930, 1.442695
        %v936 = vpow.pop %v935
        %v937 = vmul.f32 %v931, 1.442695
        %v938 = vpow.pop %v937
        %v939 = vmul.f32 %v932, 1.442695
        %v940 = vpow.pop %v939
        %v941 = vsel %vm726, %v934, 0.0
        %942 = vadd.xlane.f32.xlu0 %v941
        %v943 = vpop.xlane.xlu0 %942
        %v944 = vsel %vm726, %v936, 0.0
        %945 = vadd.xlane.f32.xlu0 %v944
        %v946 = vpop.xlane.xlu0 %945
        %v947 = vsel %vm726, %v938, 0.0
        %948 = vadd.xlane.f32.xlu0 %v947
        %v949 = vpop.xlane.xlu0 %948
        %v950 = vsel %vm726, %v940, 0.0
        %951 = vadd.xlane.f32.xlu0 %v950
        %v952 = vpop.xlane.xlu0 %951
        %v953 = vrcp.pop %v943
        %v954 = vrcp.pop %v946
        %v955 = vrcp.pop %v949
        %v956 = vrcp.pop %v952
        %v957 = vmul.f32 %v934, %v953
        %v958 = vmul.f32 %v936, %v954
        %v959 = vmul.f32 %v938, %v955
        %v960 = vmul.f32 %v940, %v956
        %v961 = vpack.c.bf16 %v957, %v957
        %v962 = vpack.c.bf16 %v958, %v958
        %v963 = vpack.c.bf16 %v959, %v959
        %v964 = vpack.c.bf16 %v960, %v960
        %965 = vrot.lane.b32.xlu0 %v709, 64
        %v966 = vpop.permute.xlu0 %965
        %v968 = vsel %vm726, %v961, 0
        %vm970 = vcmask 1043456
        %v972 = vsel %vm970, %v966, 0
        %974 = vmatprep.subr.bf16.mxu0 0
        %975 = vmatpush1.bf16.msra.mxu0 %v972
        %976 = vmatprep.subr.bf16.mxu0 0
        %977 = vmatpush1.bf16.msra.mxu0 0
        %978 = vmatprep.subr.bf16.mxu0 0
        %979 = vmatpush1.bf16.msra.mxu0 0
        %980 = vmatprep.subr.bf16.mxu0 0
        %981 = vmatpush1.bf16.msra.mxu0 0
        %982 = vmatprep.subr.bf16.mxu0 0
        %983 = vmatpush1.bf16.msra.mxu0 0
        %984 = vmatprep.subr.bf16.mxu0 0
        %985 = vmatpush1.bf16.msra.mxu0 0
        %986 = vmatprep.subr.bf16.mxu0 0
        %987 = vmatpush1.bf16.msra.mxu0 0
        %988 = vmatprep.subr.bf16.mxu0 0
        %989 = vmatpush1.bf16.msra.mxu0 0
        %990 = vmatprep.subr.bf16.mxu0 0
        %991 = vmatpush1.bf16.msra.mxu0 0
        %992 = vmatprep.subr.bf16.mxu0 0
        %993 = vmatpush1.bf16.msra.mxu0 0
        %994 = vmatprep.subr.bf16.mxu0 0
        %995 = vmatpush1.bf16.msra.mxu0 0
        %996 = vmatprep.subr.bf16.mxu0 0
        %997 = vmatpush1.bf16.msra.mxu0 0
        %998 = vmatprep.subr.bf16.mxu0 0
        %999 = vmatpush1.bf16.msra.mxu0 0
        %1000 = vmatprep.subr.bf16.mxu0 0
        %1001 = vmatpush1.bf16.msra.mxu0 0
        %1002 = vmatprep.subr.bf16.mxu0 0
        %1003 = vmatpush1.bf16.msra.mxu0 0
        %1004 = vmatprep.subr.bf16.mxu0 0
        %1005 = vmatpush1.bf16.msra.mxu0 0
        %1006 = vmatprep.mubr.bf16.mxu0 0
        %1007 = vmatmul.mubr.bf16.gmra.mrb[0].mxu0 %v968
        %v1008 = vpop.f32.mrb[0].mxu0
        %v1009 = vadd.f32 0.0, %v1008
        %v1010 = vpop.f32.mrb[0].mxu0
        %v1011 = vpop.f32.mrb[0].mxu0
        %v1012 = vpop.f32.mrb[0].mxu0
        %1013 = vdwg.mxu0
        %1014 = vrot.lane.b32.xlu0 %v712, 64
        %v1015 = vpop.permute.xlu0 %1014
        %v1017 = vsel %vm726, %v962, 0
        %v1020 = vsel %vm970, %v1015, 0
        %1022 = vmatprep.subr.bf16.mxu0 0
        %1023 = vmatpush1.bf16.msra.mxu0 %v1020
        %1024 = vmatprep.subr.bf16.mxu0 0
        %1025 = vmatpush1.bf16.msra.mxu0 0
        %1026 = vmatprep.subr.bf16.mxu0 0
        %1027 = vmatpush1.bf16.msra.mxu0 0
        %1028 = vmatprep.subr.bf16.mxu0 0
        %1029 = vmatpush1.bf16.msra.mxu0 0
        %1030 = vmatprep.subr.bf16.mxu0 0
        %1031 = vmatpush1.bf16.msra.mxu0 0
        %1032 = vmatprep.subr.bf16.mxu0 0
        %1033 = vmatpush1.bf16.msra.mxu0 0
        %1034 = vmatprep.subr.bf16.mxu0 0
        %1035 = vmatpush1.bf16.msra.mxu0 0
        %1036 = vmatprep.subr.bf16.mxu0 0
        %1037 = vmatpush1.bf16.msra.mxu0 0
        %1038 = vmatprep.subr.bf16.mxu0 0
        %1039 = vmatpush1.bf16.msra.mxu0 0
        %1040 = vmatprep.subr.bf16.mxu0 0
        %1041 = vmatpush1.bf16.msra.mxu0 0
        %1042 = vmatprep.subr.bf16.mxu0 0
        %1043 = vmatpush1.bf16.msra.mxu0 0
        %1044 = vmatprep.subr.bf16.mxu0 0
        %1045 = vmatpush1.bf16.msra.mxu0 0
        %1046 = vmatprep.subr.bf16.mxu0 0
        %1047 = vmatpush1.bf16.msra.mxu0 0
        %1048 = vmatprep.subr.bf16.mxu0 0
        %1049 = vmatpush1.bf16.msra.mxu0 0
        %1050 = vmatprep.subr.bf16.mxu0 0
        %1051 = vmatpush1.bf16.msra.mxu0 0
        %1052 = vmatprep.subr.bf16.mxu0 0
        %1053 = vmatpush1.bf16.msra.mxu0 0
        %1054 = vmatprep.mubr.bf16.mxu0 0
        %1055 = vmatmul.mubr.bf16.gmra.mrb[0].mxu0 %v1017
        %v1056 = vpop.f32.mrb[0].mxu0
        %v1057 = vadd.f32 0.0, %v1056
        %v1058 = vpop.f32.mrb[0].mxu0
        %v1059 = vpop.f32.mrb[0].mxu0
        %v1060 = vpop.f32.mrb[0].mxu0
        %1061 = vdwg.mxu0
        %1062 = vrot.lane.b32.xlu0 %v715, 64
        %v1063 = vpop.permute.xlu0 %1062
        %v1065 = vsel %vm726, %v963, 0
        %v1068 = vsel %vm970, %v1063, 0
        %1070 = vmatprep.subr.bf16.mxu0 0
        %1071 = vmatpush1.bf16.msra.mxu0 %v1068
        %1072 = vmatprep.subr.bf16.mxu0 0
        %1073 = vmatpush1.bf16.msra.mxu0 0
        %1074 = vmatprep.subr.bf16.mxu0 0
        %1075 = vmatpush1.bf16.msra.mxu0 0
        %1076 = vmatprep.subr.bf16.mxu0 0
        %1077 = vmatpush1.bf16.msra.mxu0 0
        %1078 = vmatprep.subr.bf16.mxu0 0
        %1079 = vmatpush1.bf16.msra.mxu0 0
        %1080 = vmatprep.subr.bf16.mxu0 0
        %1081 = vmatpush1.bf16.msra.mxu0 0
        %1082 = vmatprep.subr.bf16.mxu0 0
        %1083 = vmatpush1.bf16.msra.mxu0 0
        %1084 = vmatprep.subr.bf16.mxu0 0
        %1085 = vmatpush1.bf16.msra.mxu0 0
        %1086 = vmatprep.subr.bf16.mxu0 0
        %1087 = vmatpush1.bf16.msra.mxu0 0
        %1088 = vmatprep.subr.bf16.mxu0 0
        %1089 = vmatpush1.bf16.msra.mxu0 0
        %1090 = vmatprep.subr.bf16.mxu0 0
        %1091 = vmatpush1.bf16.msra.mxu0 0
        %1092 = vmatprep.subr.bf16.mxu0 0
        %1093 = vmatpush1.bf16.msra.mxu0 0
        %1094 = vmatprep.subr.bf16.mxu0 0
        %1095 = vmatpush1.bf16.msra.mxu0 0
        %1096 = vmatprep.subr.bf16.mxu0 0
        %1097 = vmatpush1.bf16.msra.mxu0 0
        %1098 = vmatprep.subr.bf16.mxu0 0
        %1099 = vmatpush1.bf16.msra.mxu0 0
        %1100 = vmatprep.subr.bf16.mxu0 0
        %1101 = vmatpush1.bf16.msra.mxu0 0
        %1102 = vmatprep.mubr.bf16.mxu0 0
        %1103 = vmatmul.mubr.bf16.gmra.mrb[0].mxu0 %v1065
        %v1104 = vpop.f32.mrb[0].mxu0
        %v1105 = vadd.f32 0.0, %v1104
        %v1106 = vpop.f32.mrb[0].mxu0
        %v1107 = vpop.f32.mrb[0].mxu0
        %v1108 = vpop.f32.mrb[0].mxu0
        %1109 = vdwg.mxu0
        %1110 = vrot.lane.b32.xlu0 %v718, 64
        %v1111 = vpop.permute.xlu0 %1110
        %v1113 = vsel %vm726, %v964, 0
        %v1116 = vsel %vm970, %v1111, 0
        %1118 = vmatprep.subr.bf16.mxu0 0
        %1119 = vmatpush1.bf16.msra.mxu0 %v1116
        %1120 = vmatprep.subr.bf16.mxu0 0
        %1121 = vmatpush1.bf16.msra.mxu0 0
        %1122 = vmatprep.subr.bf16.mxu0 0
        %1123 = vmatpush1.bf16.msra.mxu0 0
        %1124 = vmatprep.subr.bf16.mxu0 0
        %1125 = vmatpush1.bf16.msra.mxu0 0
        %1126 = vmatprep.subr.bf16.mxu0 0
        %1127 = vmatpush1.bf16.msra.mxu0 0
        %1128 = vmatprep.subr.bf16.mxu0 0
        %1129 = vmatpush1.bf16.msra.mxu0 0
        %1130 = vmatprep.subr.bf16.mxu0 0
        %1131 = vmatpush1.bf16.msra.mxu0 0
        %1132 = vmatprep.subr.bf16.mxu0 0
        %1133 = vmatpush1.bf16.msra.mxu0 0
        %1134 = vmatprep.subr.bf16.mxu0 0
        %1135 = vmatpush1.bf16.msra.mxu0 0
        %1136 = vmatprep.subr.bf16.mxu0 0
        %1137 = vmatpush1.bf16.msra.mxu0 0
        %1138 = vmatprep.subr.bf16.mxu0 0
        %1139 = vmatpush1.bf16.msra.mxu0 0
        %1140 = vmatprep.subr.bf16.mxu0 0
        %1141 = vmatpush1.bf16.msra.mxu0 0
        %1142 = vmatprep.subr.bf16.mxu0 0
        %1143 = vmatpush1.bf16.msra.mxu0 0
        %1144 = vmatprep.subr.bf16.mxu0 0
        %1145 = vmatpush1.bf16.msra.mxu0 0
        %1146 = vmatprep.subr.bf16.mxu0 0
        %1147 = vmatpush1.bf16.msra.mxu0 0
        %1148 = vmatprep.subr.bf16.mxu0 0
        %1149 = vmatpush1.bf16.msra.mxu0 0
        %1150 = vmatprep.mubr.bf16.mxu0 0
        %1151 = vmatmul.mubr.bf16.gmra.mrb[0].mxu0 %v1113
        %v1152 = vpop.f32.mrb[0].mxu0
        %v1153 = vadd.f32 0.0, %v1152
        %v1154 = vpop.f32.mrb[0].mxu0
        %v1155 = vpop.f32.mrb[0].mxu0
        %v1156 = vpop.f32.mrb[0].mxu0
        %1157 = vdwg.mxu0
        %1159 = vrot.lane.b32.xlu0 %v1057, 8
        %v1160 = vpop.permute.xlu0 %1159
        %1163 = vrot.lane.b32.xlu0 %v1105, 16
        %v1164 = vpop.permute.xlu0 %1163
        %1167 = vrot.lane.b32.xlu0 %v1153, 24
        %v1168 = vpop.permute.xlu0 %1167
        %v1170 = vsel %vm726, %v1009, %v1160
        %vm1171 = vcmask 130048
        %v1172 = vsel %vm1171, %v1170, %v1164
        %vm1173 = vcmask 195584
        %v1174 = vsel %vm1173, %v1172, %v1168
        %v1175 = vpack.c.bf16 %v1174, %v1174
        %v1176 = vld [vmem:[#allocation7] sm:$0xf]
        %v1177 = vld [vmem:[#allocation7 + $0x4] sm:$0xf]
        %v1178 = vld [vmem:[#allocation7 + $0x8] sm:$0xf]
        %v1179 = vld [vmem:[#allocation7 + $0xc] sm:$0xf]
        %v1184 = vunpack.c.l.b16 %v1176
        %v1185 = vunpack.c.l.b16 %v1177
        %v1186 = vunpack.c.l.b16 %v1178
        %v1187 = vunpack.c.l.b16 %v1179
        %v1188 = vpack.c.b16 %v1185, %v1184
        %v1189 = vpack.c.b16 %v1187, %v1186
        %v1193 = vsel %vm620, %v1175, 0
        %1195 = vmatprep.subr.bf16.mxu0 0
        %1196 = vmatpush1.bf16.msra.mxu0 %v1188
        %1197 = vmatprep.subr.bf16.mxu0 0
        %1198 = vmatpush1.bf16.msra.mxu0 %v1189
        %1199 = vmatprep.subr.bf16.mxu0 0
        %1200 = vmatpush1.bf16.msra.mxu0 0
        %1201 = vmatprep.subr.bf16.mxu0 0
        %1202 = vmatpush1.bf16.msra.mxu0 0
        %1203 = vmatprep.subr.bf16.mxu0 0
        %1204 = vmatpush1.bf16.msra.mxu0 0
        %1205 = vmatprep.subr.bf16.mxu0 0
        %1206 = vmatpush1.bf16.msra.mxu0 0
        %1207 = vmatprep.subr.bf16.mxu0 0
        %1208 = vmatpush1.bf16.msra.mxu0 0
        %1209 = vmatprep.subr.bf16.mxu0 0
        %1210 = vmatpush1.bf16.msra.mxu0 0
        %1211 = vmatprep.subr.bf16.mxu0 0
        %1212 = vmatpush1.bf16.msra.mxu0 0
        %1213 = vmatprep.subr.bf16.mxu0 0
        %1214 = vmatpush1.bf16.msra.mxu0 0
        %1215 = vmatprep.subr.bf16.mxu0 0
        %1216 = vmatpush1.bf16.msra.mxu0 0
        %1217 = vmatprep.subr.bf16.mxu0 0
        %1218 = vmatpush1.bf16.msra.mxu0 0
        %1219 = vmatprep.subr.bf16.mxu0 0
        %1220 = vmatpush1.bf16.msra.mxu0 0
        %1221 = vmatprep.subr.bf16.mxu0 0
        %1222 = vmatpush1.bf16.msra.mxu0 0
        %1223 = vmatprep.subr.bf16.mxu0 0
        %1224 = vmatpush1.bf16.msra.mxu0 0
        %1225 = vmatprep.subr.bf16.mxu0 0
        %1226 = vmatpush1.bf16.msra.mxu0 0
        %1227 = vmatprep.mubr.bf16.mxu0 0
        %1228 = vmatmul.mubr.bf16.gmra.mrb[0].mxu0 %v1193
        %v1229 = vpop.f32.mrb[0].mxu0
        %v1230 = vadd.f32 0.0, %v1229
        %v1231 = vpop.f32.mrb[0].mxu0
        %v1232 = vpop.f32.mrb[0].mxu0
        %v1233 = vpop.f32.mrb[0].mxu0
        %1234 = vdwg.mxu0
        %v1235 = vadd.f32 %v617, %v1230
        %v1236 = vld [vmem:[#allocation11] sm:$0x1]
        %v1237 = vld [vmem:[#allocation13] sm:$0x1]
        %v1238 = vsel %vm620, %v1235, 0.0
        %1239 = vadd.xlane.f32.xlu0 %v1238
        %v1240 = vpop.xlane.xlu0 %1239
        %v1241 = vmul.f32 %v1240, %v624
        %v1242 = vsub.f32 %v1235, %v1241
        %v1243 = vmul.f32 %v1242, %v1242
        %v1244 = vsel %vm620, %v1243, 0.0
        %1245 = vadd.xlane.f32.xlu0 %v1244
        %v1246 = vpop.xlane.xlu0 %1245
        %v1247 = vmul.f32 %v1246, %v624
        %v1248 = vadd.f32 %v1247, 1e-06
        %v1249 = vrsqrt.pop %v1248
        %v1250 = vmul.f32 %v1242, %v1249
        %v1252 = vlaneseq
        %v1253 = vshrl.u32 %v1252, 7
        %v1254 = vsub.s32 0, %v1253
        %v1255 = vrot.slane %v1236, %v1254
        %v1257 = vmul.f32 %v1250, %v1255
        %v1259 = vlaneseq
        %v1260 = vshrl.u32 %v1259, 7
        %v1261 = vsub.s32 0, %v1260
        %v1262 = vrot.slane %v1237, %v1261
        %v1264 = vadd.f32 %v1257, %v1262
        %v1265 = vpack.c.bf16 %v1264, %v1264
        %v1266 = vld [vmem:[#allocation14] sm:$0xf]
        %v1267 = vld [vmem:[#allocation14 + $0x4] sm:$0xf]
        %v1268 = vld [vmem:[#allocation14 + $0x8] sm:$0xf]
        %v1269 = vld [vmem:[#allocation14 + $0xc] sm:$0xf]
        %v1270 = vld [vmem:[#allocation16] sm:$0x1]
        %v1272 = vlaneseq
        %v1273 = vshrl.u32 %v1272, 7
        %v1274 = vsub.s32 0, %v1273
        %v1275 = vrot.slane %v1270, %v1274
        %v1281 = vunpack.c.l.b16 %v1266
        %v1282 = vunpack.c.l.b16 %v1267
        %v1283 = vunpack.c.l.b16 %v1268
        %v1284 = vunpack.c.l.b16 %v1269
        %v1285 = vpack.c.b16 %v1282, %v1281
        %v1286 = vpack.c.b16 %v1284, %v1283
        %v1290 = vsel %vm620, %v1265, 0
        %1292 = vmatprep.subr.bf16.mxu0 0
        %1293 = vmatpush1.bf16.msra.mxu0 %v1285
        %1294 = vmatprep.subr.bf16.mxu0 0
        %1295 = vmatpush1.bf16.msra.mxu0 %v1286
        %1296 = vmatprep.subr.bf16.mxu0 0
        %1297 = vmatpush1.bf16.msra.mxu0 0
        %1298 = vmatprep.subr.bf16.mxu0 0
        %1299 = vmatpush1.bf16.msra.mxu0 0
        %1300 = vmatprep.subr.bf16.mxu0 0
        %1301 = vmatpush1.bf16.msra.mxu0 0
        %1302 = vmatprep.subr.bf16.mxu0 0
        %1303 = vmatpush1.bf16.msra.mxu0 0
        %1304 = vmatprep.subr.bf16.mxu0 0
        %1305 = vmatpush1.bf16.msra.mxu0 0
        %1306 = vmatprep.subr.bf16.mxu0 0
        %1307 = vmatpush1.bf16.msra.mxu0 0
        %1308 = vmatprep.subr.bf16.mxu0 0
        %1309 = vmatpush1.bf16.msra.mxu0 0
        %1310 = vmatprep.subr.bf16.mxu0 0
        %1311 = vmatpush1.bf16.msra.mxu0 0
        %1312 = vmatprep.subr.bf16.mxu0 0
        %1313 = vmatpush1.bf16.msra.mxu0 0
        %1314 = vmatprep.subr.bf16.mxu0 0
        %1315 = vmatpush1.bf16.msra.mxu0 0
        %1316 = vmatprep.subr.bf16.mxu0 0
        %1317 = vmatpush1.bf16.msra.mxu0 0
        %1318 = vmatprep.subr.bf16.mxu0 0
        %1319 = vmatpush1.bf16.msra.mxu0 0
        %1320 = vmatprep.subr.bf16.mxu0 0
        %1321 = vmatpush1.bf16.msra.mxu0 0
        %1322 = vmatprep.subr.bf16.mxu0 0
        %1323 = vmatpush1.bf16.msra.mxu0 0
        %1324 = vmatprep.mubr.bf16.mxu0 0
        %1325 = vmatmul.mubr.bf16.gmra.mrb[0].mxu0 %v1290
        %v1326 = vpop.f32.mrb[0].mxu0
        %v1327 = vadd.f32 %v1275, %v1326
        %v1328 = vpop.f32.mrb[0].mxu0
        %v1329 = vpop.f32.mrb[0].mxu0
        %v1330 = vpop.f32.mrb[0].mxu0
        %1331 = vdwg.mxu0
        %v1332 = vmax.f32 %v1327, 0.0
        %v1333 = vpack.c.bf16 %v1332, %v1332
        %v1334 = vld [vmem:[#allocation17] sm:$0xf]
        %v1335 = vld [vmem:[#allocation17 + $0x4] sm:$0xf]
        %v1336 = vld [vmem:[#allocation17 + $0x8] sm:$0xf]
        %v1337 = vld [vmem:[#allocation17 + $0xc] sm:$0xf]
        %v1338 = vld [vmem:[#allocation17 + $0x10] sm:$0xf]
        %v1339 = vld [vmem:[#allocation17 + $0x14] sm:$0xf]
        %v1340 = vld [vmem:[#allocation17 + $0x18] sm:$0xf]
        %v1341 = vld [vmem:[#allocation17 + $0x1c] sm:$0xf]
        %v1342 = vld [vmem:[#allocation19] sm:$0x1]
        %v1344 = vlaneseq
        %v1345 = vshrl.u32 %v1344, 7
        %v1346 = vsub.s32 0, %v1345
        %v1347 = vrot.slane %v1342, %v1346
        %v1357 = vunpack.c.l.b16 %v1334
        %v1358 = vunpack.c.l.b16 %v1335
        %v1359 = vunpack.c.l.b16 %v1336
        %v1360 = vunpack.c.l.b16 %v1337
        %v1361 = vunpack.c.l.b16 %v1338
        %v1362 = vunpack.c.l.b16 %v1339
        %v1363 = vunpack.c.l.b16 %v1340
        %v1364 = vunpack.c.l.b16 %v1341
        %v1365 = vpack.c.b16 %v1358, %v1357
        %v1366 = vpack.c.b16 %v1360, %v1359
        %v1367 = vpack.c.b16 %v1362, %v1361
        %v1368 = vpack.c.b16 %v1364, %v1363
        %vm1373 = vcmask 523264
        %v1375 = vsel %vm1373, %v1333, 0
        %1377 = vmatprep.subr.bf16.mxu0 0
        %1378 = vmatpush1.bf16.msra.mxu0 %v1365
        %1379 = vmatprep.subr.bf16.mxu0 0
        %1380 = vmatpush1.bf16.msra.mxu0 %v1366
        %1381 = vmatprep.subr.bf16.mxu0 0
        %1382 = vmatpush1.bf16.msra.mxu0 %v1367
        %1383 = vmatprep.subr.bf16.mxu0 0
        %1384 = vmatpush1.bf16.msra.mxu0 %v1368
        %1385 = vmatprep.subr.bf16.mxu0 0
        %1386 = vmatpush1.bf16.msra.mxu0 0
        %1387 = vmatprep.subr.bf16.mxu0 0
        %1388 = vmatpush1.bf16.msra.mxu0 0
        %1389 = vmatprep.subr.bf16.mxu0 0
        %1390 = vmatpush1.bf16.msra.mxu0 0
        %1391 = vmatprep.subr.bf16.mxu0 0
        %1392 = vmatpush1.bf16.msra.mxu0 0
        %1393 = vmatprep.subr.bf16.mxu0 0
        %1394 = vmatpush1.bf16.msra.mxu0 0
        %1395 = vmatprep.subr.bf16.mxu0 0
        %1396 = vmatpush1.bf16.msra.mxu0 0
        %1397 = vmatprep.subr.bf16.mxu0 0
        %1398 = vmatpush1.bf16.msra.mxu0 0
        %1399 = vmatprep.subr.bf16.mxu0 0
        %1400 = vmatpush1.bf16.msra.mxu0 0
        %1401 = vmatprep.subr.bf16.mxu0 0
        %1402 = vmatpush1.bf16.msra.mxu0 0
        %1403 = vmatprep.subr.bf16.mxu0 0
        %1404 = vmatpush1.bf16.msra.mxu0 0
        %1405 = vmatprep.subr.bf16.mxu0 0
        %1406 = vmatpush1.bf16.msra.mxu0 0
        %1407 = vmatprep.subr.bf16.mxu0 0
        %1408 = vmatpush1.bf16.msra.mxu0 0
        %1409 = vmatprep.mubr.bf16.mxu0 0
        %1410 = vmatmul.mubr.bf16.gmra.mrb[0].mxu0 %v1375
        %v1411 = vpop.f32.mrb[0].mxu0
        %v1412 = vadd.f32 %v1347, %v1411
        %v1413 = vpop.f32.mrb[0].mxu0
        %v1414 = vpop.f32.mrb[0].mxu0
        %v1415 = vpop.f32.mrb[0].mxu0
        %1416 = vdwg.mxu0
        %v1417 = vadd.f32 %v1235, %v1412
        %v1418 = vpack.c.bf16 %v1417, %v1417
        %vm1419 = vcmask 257024
        %1420 = vst.msk [vmem:[%s613] sm:$0xf] %vm1419, %v1418
        %s1421 = sand.u32 %s322, 1
        %s1422 = scalar_lea.sflag [#allocation4], %s1421
        %s1423 = sand.u32 %s322, 1
        %s1424 = smul.addr %s1423, 4
        %s1425 = scalar_lea.vmem [#allocation23], %s1424
        // Predicated region
        $region125: #{transformer_encoder.2} parent=71 // pred_check
          %p1426 = pneg %p332
        $region126: #{transformer_encoder.2} parent=71 // pred_check_branch
          %1428 = sbr.rel (%p1426) target = $region128
        $region127: #{transformer_encoder.2} parent=71 // pred_region
          %s1430 = ssub.s32 64, 64
          %1431 = vsyncadd %s1422, %s1430
          %s1432 = smul.addr %s36, 64
          %s1433 = scalar_lea.hbm %s13, %s1432
          %s1435 = sshll.u32 %s1425, 4
          %s1436 = int_to_ptr.vmem [resolvable:$true] %s1435
          %1438 = dma.vmem_to_hbm [thread:$0]  %s1436, 64, %s1433, %s1422
        $region128: #{transformer_encoder.2} parent=71 // pred_fallthru
          _
      $region72: #{transformer_encoder.2} parent=5 // pred_fallthru
        _
      %p1439 = scmp.le.s32.totalorder 2, %s31
      // Predicated region
      $region129: #{transformer_encoder.2} parent=5 // pred_check
        %p1440 = pneg %p1439
      $region130: #{transformer_encoder.2} parent=5 // pred_check_branch
        %1442 = sbr.rel (%p1440) target = $region132
      $region131: #{transformer_encoder.2} parent=5 // pred_region
        %s1443 = ssub.s32 %s31, 2
        // Predicated region
        $region133: #{transformer_encoder.2} parent=131 // pred_check
          %p1444 = pneg %p338
        $region134: #{transformer_encoder.2} parent=131 // pred_check_branch
          %1446 = sbr.rel (%p1444) target = $region136
        $region135: #{transformer_encoder.2} parent=131 // pred_region
          %s1447 = sand.u32 %s323, 1
          %s1448 = scalar_lea.sflag [#allocation4], %s1447
          %s1449 = sand.u32 %s323, 1
          %s1450 = smul.addr %s1449, 4
          %s1451 = scalar_lea.vmem [#allocation23], %s1450
          %1452 = dma.done %s1448, 64
        $region136: #{transformer_encoder.2} parent=131 // pred_fallthru
          _
      $region132: #{transformer_encoder.2} parent=5 // pred_fallthru
        _
    $region6: #{transformer_encoder.2} parent=1 // loop_footer
      %s35 = sadd.s32 1, %s31
    $region7: #{transformer_encoder.2} parent=1 // loop_footer_branch
      %30 = sbr.rel target = $region3
    $region8: #{transformer_encoder.2} parent=1 // loop_exit
      _
    %1453 = vsyncpa [#allocation3], 1
    %s1454 = scalar_lea.sflag [#allocation3], 1
    %1455 = vsyncpa %s1454, 1
    %1456 = vsyncpa [#allocation6], 1
    %1457 = vsyncpa [#allocation9], 1
    %1458 = vsyncpa [#allocation12], 1
    %1459 = vsyncpa [#allocation15], 1
    %1460 = vsyncpa [#allocation18], 1
    %1461 = vsyncpa [#allocation21], 1
    %1462 = vsyncpa [#allocation4], 1
    %s1463 = scalar_lea.sflag [#allocation4], 1
    %1464 = vsyncpa %s1463, 1

</llo_original>
